<compile_context>
chip_gen: v6e
topology: v6e:2x2x1
jax: 0.10.0
libtpu: 0.0.40
codegen_flags: <defaults>
</compile_context>

<pallas_src>
import math

import jax
import jax.numpy as jnp
from jax.experimental import pallas as pl
from jax.experimental.pallas import tpu as pltpu

EPS = 1e-5  # nn.LayerNorm default eps


# --------------------------------------------------------------------------- #
# In-kernel math helpers (f32)
# --------------------------------------------------------------------------- #
def _layernorm(x, gamma, beta):
    """LayerNorm over the channel axis, biased variance (PyTorch)."""
    mu = jnp.mean(x, axis=-1, keepdims=True)
    var = jnp.mean((x - mu) ** 2, axis=-1, keepdims=True)
    return (x - mu) * jax.lax.rsqrt(var + EPS) * gamma + beta


def _gelu_tanh(x):
    # tanh-approx GELU (EUP tanh). nn.GELU() default is exact erf; max abs
    # deviation ~3e-4, in line with the bf16 MXU inputs used elsewhere.
    c = 0.7978845608028654  # sqrt(2/pi)
    return 0.5 * x * (1.0 + jnp.tanh(c * (x + 0.044715 * x * x * x)))


# --------------------------------------------------------------------------- #
# Pallas kernel: one depth of the stage for one group of WB windows.
# Grid = (window_groups ["parallel"], depths ["arbitrary"]).
# --------------------------------------------------------------------------- #
def _stage_kernel(tgt_ref, ref_ref,
                  wq_ref, wkv_ref, wo_ref, w1_ref, w2_ref,
                  relb_ref, vec_ref, bm1_ref,
                  out_ref,
                  tgt_acc, ref_acc, attn_acc):
    WBN, C = tgt_ref.shape
    heads, N = relb_ref.shape[1], relb_ref.shape[2]
    WB = WBN // N
    hc = C // heads
    bf16 = jnp.bfloat16
    f32 = jnp.float32

    d = pl.program_id(1)

    # ---- depth 0: load this window group's slabs into the VMEM carries -----
    @pl.when(d == 0)
    def _():
        tgt_acc[...] = tgt_ref[...].astype(f32)   # residual stream
        ref_acc[...] = ref_ref[...].astype(f32)   # normalized-ref carry

    vd = vec_ref[0]                               # (9, C) packed vectors, f32
    g1, b1 = vd[0:1], vd[1:2]
    bq, bk, bv = vd[2:3], vd[3:4], vd[4:5]        # bq already pre-scaled
    bo, g2, b2, bm2 = vd[5:6], vd[6:7], vd[7:8], vd[8:9]

    # ---- LN (shared params for tgt and ref, as in the module) --------------
    x0 = tgt_acc[...]
    xt = _layernorm(x0, g1, b1)
    rn = _layernorm(ref_acc[...], g1, b1)
    ref_acc[...] = rn                             # feat_ref <- normalized value

    # ---- projections: Q from tgt, fused K/V from ref (scale folded) --------
    q = (jnp.dot(xt.astype(bf16), wq_ref[0],
                 preferred_element_type=f32) + bq).astype(bf16)      # (WBN, C)
    kv = jnp.dot(rn.astype(bf16), wkv_ref[0],
                 preferred_element_type=f32)                         # (WBN, 2C)
    k = (kv[:, :C] + bk).astype(bf16)
    v = (kv[:, C:] + bv).astype(bf16)

    # ---- per-head attention; heads assembled into one (WBN, C) scratch -----
    for h in range(heads):
        sl = slice(h * hc, (h + 1) * hc)
        qh = q[:, sl].reshape(WB, N, hc)          # leading-dim split: layout-free
        kh = k[:, sl].reshape(WB, N, hc)
        vh = v[:, sl].reshape(WB, N, hc)
        s = jnp.einsum('bnd,bmd->bnm', qh, kh,
                       preferred_element_type=f32)                   # (WB,N,N)
        s = s + relb_ref[0, h]
        s = s - jnp.max(s, axis=-1, keepdims=True)
        p = jnp.exp(s)
        p = p * pl.reciprocal(jnp.sum(p, axis=-1, keepdims=True), approx=True)
        oh = jnp.einsum('bnm,bmd->bnd', p.astype(bf16), vh,
                        preferred_element_type=f32)                  # (WB,N,hc)
        attn_acc[:, sl] = oh.reshape(WBN, hc).astype(bf16)

    # ---- single K=C output projection (head-merge already in the scratch) --
    proj = jnp.dot(attn_acc[...], wo_ref[0],
                   preferred_element_type=f32) + bo                  # (WBN, C)
    x1 = proj + x0                                 # drop_path = identity

    # ---- MLP block ----------------------------------------------------------
    xn = _layernorm(x1, g2, b2)
    h1 = jnp.dot(xn.astype(bf16), w1_ref[0],
                 preferred_element_type=f32) + bm1_ref[0]
    h1 = _gelu_tanh(h1)
    h2 = jnp.dot(h1.astype(bf16), w2_ref[0],
                 preferred_element_type=f32) + bm2
    tgt_new = x1 + h2
    tgt_acc[...] = tgt_new

    # ---- last depth: flush the residual stream to the output block ---------
    @pl.when(d == pl.num_programs(1) - 1)
    def _():
        out_ref[...] = tgt_new


def _choose_split(NW, N, target_rows=256):
    """Deepest even division of the window axis that keeps >= target_rows rows
    per grid step (M per matmul); gives megacore an even split when possible
    and single-TC chips some grid depth for DMA pipelining."""
    best = 1
    for s in range(1, NW + 1):
        if NW % s == 0 and (NW // s) * N >= target_rows:
            best = s
    return best


def _run_stage(tgt_w, ref_w, packed, depths):
    """One pallas_call: grid = (window groups, depths)."""
    NW, N, C = tgt_w.shape
    nsplit = _choose_split(NW, N)
    WB = NW // nsplit
    WBN = WB * N

    # Flat lane-major 2-D presentation of the window slabs, bf16 on the wire.
    tgt2 = tgt_w.reshape(NW * N, C).astype(jnp.bfloat16)
    ref2 = ref_w.reshape(NW * N, C).astype(jnp.bfloat16)

    win_spec = pl.BlockSpec((WBN, C), lambda i, d: (i, 0))

    def depth_spec(arr):
        nd_rest = arr.ndim - 1
        return pl.BlockSpec((1,) + arr.shape[1:],
                            lambda i, d, _n=nd_rest: (d,) + (0,) * _n)

    names = ("wq", "wkv", "wo", "w1", "w2", "relb", "vecs", "bm1")
    in_specs = [win_spec, win_spec] + [depth_spec(packed[k]) for k in names]

    out2 = pl.pallas_call(
        _stage_kernel,
        grid=(nsplit, depths),
        in_specs=in_specs,
        out_specs=pl.BlockSpec((WBN, C), lambda i, d: (i, 0)),
        out_shape=jax.ShapeDtypeStruct((NW * N, C), jnp.float32),
        scratch_shapes=[
            pltpu.VMEM((WBN, C), jnp.float32),    # residual-stream carry
            pltpu.VMEM((WBN, C), jnp.float32),    # normalized-ref carry
            pltpu.VMEM((WBN, C), jnp.bfloat16),   # per-head attn assembly
        ],
        compiler_params=pltpu.CompilerParams(
            dimension_semantics=("parallel", "arbitrary"),
            vmem_limit_bytes=32 * 1024 * 1024),
    )(tgt2, ref2, *[packed[k] for k in names])
    return out2.reshape(NW, N, C)


# --------------------------------------------------------------------------- #
# JAX glue: layout conversion, parameter init / packing
# --------------------------------------------------------------------------- #
def _to_windows(x, wh, ww):
    # 'b c (r1 h1) (r2 w1) -> (b r1 r2) (h1 w1) c'
    B, C, H, W = x.shape
    r1, r2 = H // wh, W // ww
    x = x.reshape(B, C, r1, wh, r2, ww)
    x = x.transpose(0, 2, 4, 3, 5, 1)
    return x.reshape(B * r1 * r2, wh * ww, C)


def _from_windows(x, B, C, H, W, wh, ww):
    r1, r2 = H // wh, W // ww
    x = x.reshape(B, r1, r2, wh, ww, C)
    x = x.transpose(0, 5, 1, 3, 2, 4)
    return x.reshape(B, C, H, W)


def _rel_pos_bias(key, heads, wh, ww):
    """Swin/DAT-style relative position bias table gathered to (heads, N, N)."""
    table = 0.01 * jax.random.normal(
        key, ((2 * wh - 1) * (2 * ww - 1), heads), jnp.float32)
    ch = jnp.arange(wh)
    cw = jnp.arange(ww)
    coords = jnp.stack(jnp.meshgrid(ch, cw, indexing="ij"))          # (2,wh,ww)
    flat = coords.reshape(2, -1)                                     # (2, N)
    rel = flat[:, :, None] - flat[:, None, :]                        # (2, N, N)
    rel = rel.transpose(1, 2, 0) + jnp.array([wh - 1, ww - 1])
    idx = rel[..., 0] * (2 * ww - 1) + rel[..., 1]                   # (N, N)
    bias = table[idx]                                                # (N,N,heads)
    return jnp.transpose(bias, (2, 0, 1))                            # (heads,N,N)


def _init_depth_params(key, C, heads, expansion, wh, ww):
    Ch = C * expansion
    ks = jax.random.split(key, 8)

    def lin(k, fan_in, fan_out):
        return (1.0 / math.sqrt(fan_in)) * jax.random.normal(
            k, (fan_in, fan_out), jnp.float32)

    return {
        "g1": jnp.ones((1, C), jnp.float32),
        "b1": jnp.zeros((1, C), jnp.float32),
        "wq": lin(ks[0], C, C), "bq": jnp.zeros((1, C), jnp.float32),
        "wk": lin(ks[1], C, C), "bk": jnp.zeros((1, C), jnp.float32),
        "wv": lin(ks[2], C, C), "bv": jnp.zeros((1, C), jnp.float32),
        "wo": lin(ks[3], C, C), "bo": jnp.zeros((1, C), jnp.float32),
        "relb": _rel_pos_bias(ks[4], heads, wh, ww),
        "g2": jnp.ones((1, C), jnp.float32),
        "b2": jnp.zeros((1, C), jnp.float32),
        "w1": lin(ks[5], C, Ch), "bm1": jnp.zeros((1, Ch), jnp.float32),
        "w2": lin(ks[6], Ch, C), "bm2": jnp.zeros((1, C), jnp.float32),
    }


def _pack_stage_params(params, heads):
    """Stack per-depth params, fold the attention scale, cast weights to bf16,
    and pack the small bias/LN vectors into two arrays (fewer kernel inputs).
    Wo stays un-split (D, C, C) so the kernel can run one K=C projection."""
    C = params[0]["wq"].shape[0]
    hc = C // heads
    scale = hc ** -0.5
    bf16 = jnp.bfloat16
    packed = {
        "wq": jnp.stack([p["wq"] * scale for p in params]).astype(bf16),
        "wkv": jnp.stack([jnp.concatenate([p["wk"], p["wv"]], axis=1)
                          for p in params]).astype(bf16),
        "wo": jnp.stack([p["wo"] for p in params]).astype(bf16),     # (D, C, C)
        "w1": jnp.stack([p["w1"] for p in params]).astype(bf16),
        "w2": jnp.stack([p["w2"] for p in params]).astype(bf16),
        "relb": jnp.stack([p["relb"] for p in params]).astype(jnp.float32),
        "vecs": jnp.stack([jnp.concatenate(
            [p["g1"], p["b1"], p["bq"] * scale, p["bk"], p["bv"],
             p["bo"], p["g2"], p["b2"], p["bm2"]], axis=0)
            for p in params]).astype(jnp.float32),                   # (D, 9, C)
        "bm1": jnp.stack([p["bm1"] for p in params]).astype(jnp.float32),
    }
    return packed


def transformer_stage(feat_tgt, feat_ref, params, *, heads, wh, ww):
    """Mirrors TransformerStage.forward for stage_spec='L'*depths, eval mode."""
    B, C, H, W = feat_tgt.shape
    depths = len(params)
    tgt_w = _to_windows(feat_tgt, wh, ww)
    ref_w = _to_windows(feat_ref, wh, ww)

    packed = _pack_stage_params(params, heads)
    tgt_w = _run_stage(tgt_w, ref_w, packed, depths)   # single fused launch

    positions = [None] * depths        # LocalAttention -> (x, None, None)
    references = [None] * depths
    out = _from_windows(tgt_w, B, C, H, W, wh, ww)
    return out, positions, references


# --------------------------------------------------------------------------- #
# Main
# --------------------------------------------------------------------------- #
if __name__ == "__main__":
    # Small but consistent config: fmap_size=16, window_size=8, dim_embed=32,
    # heads=4, depths=2, expansion=2, stage_spec='LL', all drop rates 0.
    B, C, H, W = 2, 32, 16, 16
    heads, wh, ww = 4, 8, 8
    depths, expansion = 2, 2

    root = jax.random.PRNGKey(0)
    k_tgt, k_ref, k_par = jax.random.split(root, 3)
    feat_tgt = jax.random.normal(k_tgt, (B, C, H, W), jnp.float32)
    feat_ref = jax.random.normal(k_ref, (B, C, H, W), jnp.float32)

    depth_keys = jax.random.split(k_par, depths)
    params = [_init_depth_params(depth_keys[d], C, heads, expansion, wh, ww)
              for d in range(depths)]

    out_tgt, positions, references = transformer_stage(
        feat_tgt, feat_ref, params, heads=heads, wh=wh, ww=ww)

    out_tgt = jax.block_until_ready(out_tgt)
    assert out_tgt.shape == (B, C, H, W)
    assert len(positions) == depths and len(references) == depths
    assert bool(jnp.all(jnp.isfinite(out_tgt)))
    print("KERNEL_OK")
</pallas_src>

<mosaic_0001>
module attributes {stable_mosaic.version = 11 : i64} {
  func.func @_stage_kernel(%arg0: i32, %arg1: i32, %arg2: memref<256x32xbf16, #tpu.memory_space<vmem>>, %arg3: memref<256x32xbf16, #tpu.memory_space<vmem>>, %arg4: memref<1x32x32xbf16, #tpu.memory_space<vmem>>, %arg5: memref<1x32x64xbf16, #tpu.memory_space<vmem>>, %arg6: memref<1x32x32xbf16, #tpu.memory_space<vmem>>, %arg7: memref<1x32x64xbf16, #tpu.memory_space<vmem>>, %arg8: memref<1x64x32xbf16, #tpu.memory_space<vmem>>, %arg9: memref<1x4x64x64xf32, #tpu.memory_space<vmem>>, %arg10: memref<1x9x32xf32, #tpu.memory_space<vmem>>, %arg11: memref<1x1x64xf32, #tpu.memory_space<vmem>>, %arg12: memref<256x32xf32, #tpu.memory_space<vmem>>, %arg13: memref<256x32xf32, #tpu.memory_space<vmem>>, %arg14: memref<256x32xf32, #tpu.memory_space<vmem>>, %arg15: memref<256x32xbf16, #tpu.memory_space<vmem>>) attributes {dimension_semantics = [#tpu.dimension_semantics<parallel>, #tpu.dimension_semantics<arbitrary>], iteration_bounds = array<i64: 2, 2>, scalar_prefetch = 0 : i64, scratch_operands = 3 : i64, tpu.core_type = #tpu.core_type<tc>, window_params = [{transform_indices = @transform_0, window_bounds = array<i64: 256, 32>}, {transform_indices = @transform_1, window_bounds = array<i64: 256, 32>}, {transform_indices = @transform_2, window_bounds = array<i64: 1, 32, 32>}, {transform_indices = @transform_3, window_bounds = array<i64: 1, 32, 64>}, {transform_indices = @transform_4, window_bounds = array<i64: 1, 32, 32>}, {transform_indices = @transform_5, window_bounds = array<i64: 1, 32, 64>}, {transform_indices = @transform_6, window_bounds = array<i64: 1, 64, 32>}, {transform_indices = @transform_7, window_bounds = array<i64: 1, 4, 64, 64>}, {transform_indices = @transform_8, window_bounds = array<i64: 1, 9, 32>}, {transform_indices = @transform_9, window_bounds = array<i64: 1, 1, 64>}, {transform_indices = @transform_10, window_bounds = array<i64: 256, 32>}]} {
    %c0_i32 = arith.constant 0 : i32
    %0 = arith.cmpi eq, %arg1, %c0_i32 : i32
    %1 = arith.extui %0 : i1 to i32
    %c0_i32_0 = arith.constant 0 : i32
    %2 = arith.cmpi ne, %1, %c0_i32_0 : i32
    scf.if %2 {
      %c0_89 = arith.constant 0 : index
      %c0_90 = arith.constant 0 : index
      %249 = vector.load %arg2[%c0_89, %c0_90] : memref<256x32xbf16, #tpu.memory_space<vmem>>, vector<256x32xbf16>
      %250 = arith.extf %249 : vector<256x32xbf16> to vector<256x32xf32>
      %c0_91 = arith.constant 0 : index
      %c0_92 = arith.constant 0 : index
      %251 = vector.load %arg13[%c0_91, %c0_92] : memref<256x32xf32, #tpu.memory_space<vmem>>, vector<256x32xf32>
      tpu.vector_store %arg13[%c0_91, %c0_92], %250 {strides = array<i32>} : memref<256x32xf32, #tpu.memory_space<vmem>>, vector<256x32xf32>,
      %c0_93 = arith.constant 0 : index
      %c0_94 = arith.constant 0 : index
      %252 = vector.load %arg3[%c0_93, %c0_94] : memref<256x32xbf16, #tpu.memory_space<vmem>>, vector<256x32xbf16>
      %253 = arith.extf %252 : vector<256x32xbf16> to vector<256x32xf32>
      %c0_95 = arith.constant 0 : index
      %c0_96 = arith.constant 0 : index
      %254 = vector.load %arg14[%c0_95, %c0_96] : memref<256x32xf32, #tpu.memory_space<vmem>>, vector<256x32xf32>
      tpu.vector_store %arg14[%c0_95, %c0_96], %253 {strides = array<i32>} : memref<256x32xf32, #tpu.memory_space<vmem>>, vector<256x32xf32>,
    } else {
    }
    %c0 = arith.constant 0 : index
    %c0_1 = arith.constant 0 : index
    %c0_2 = arith.constant 0 : index
    %3 = vector.load %arg10[%c0, %c0_1, %c0_2] : memref<1x9x32xf32, #tpu.memory_space<vmem>>, vector<1x9x32xf32>
    %4 = vector.shape_cast %3 : vector<1x9x32xf32> to vector<9x32xf32>
    %5 = vector.extract_strided_slice %4 {offsets = [0, 0], sizes = [1, 32], strides = [1, 1]} : vector<9x32xf32> to vector<1x32xf32>
    %6 = vector.extract_strided_slice %4 {offsets = [1, 0], sizes = [1, 32], strides = [1, 1]} : vector<9x32xf32> to vector<1x32xf32>
    %7 = vector.extract_strided_slice %4 {offsets = [2, 0], sizes = [1, 32], strides = [1, 1]} : vector<9x32xf32> to vector<1x32xf32>
    %8 = vector.extract_strided_slice %4 {offsets = [3, 0], sizes = [1, 32], strides = [1, 1]} : vector<9x32xf32> to vector<1x32xf32>
    %9 = vector.extract_strided_slice %4 {offsets = [4, 0], sizes = [1, 32], strides = [1, 1]} : vector<9x32xf32> to vector<1x32xf32>
    %10 = vector.extract_strided_slice %4 {offsets = [5, 0], sizes = [1, 32], strides = [1, 1]} : vector<9x32xf32> to vector<1x32xf32>
    %11 = vector.extract_strided_slice %4 {offsets = [6, 0], sizes = [1, 32], strides = [1, 1]} : vector<9x32xf32> to vector<1x32xf32>
    %12 = vector.extract_strided_slice %4 {offsets = [7, 0], sizes = [1, 32], strides = [1, 1]} : vector<9x32xf32> to vector<1x32xf32>
    %13 = vector.extract_strided_slice %4 {offsets = [8, 0], sizes = [1, 32], strides = [1, 1]} : vector<9x32xf32> to vector<1x32xf32>
    %c0_3 = arith.constant 0 : index
    %c0_4 = arith.constant 0 : index
    %14 = vector.load %arg13[%c0_3, %c0_4] : memref<256x32xf32, #tpu.memory_space<vmem>>, vector<256x32xf32>
    %cst = arith.constant dense<0.000000e+00> : vector<256xf32>
    %15 = vector.multi_reduction <add>, %14, %cst [1] : vector<256x32xf32> to vector<256xf32>
    %16 = vector.shape_cast %15 : vector<256xf32> to vector<256x1xf32>
    %cst_5 = arith.constant 3.200000e+01 : f32
    %17 = vector.broadcast %cst_5 : f32 to vector<256x1xf32>
    %18 = arith.divf %16, %17 : vector<256x1xf32>
    %19 = vector.broadcast %18 : vector<256x1xf32> to vector<256x32xf32>
    %20 = arith.subf %14, %19 : vector<256x32xf32>
    %21 = arith.mulf %20, %20 : vector<256x32xf32>
    %cst_6 = arith.constant dense<0.000000e+00> : vector<256xf32>
    %22 = vector.multi_reduction <add>, %21, %cst_6 [1] : vector<256x32xf32> to vector<256xf32>
    %23 = vector.shape_cast %22 : vector<256xf32> to vector<256x1xf32>
    %cst_7 = arith.constant 3.200000e+01 : f32
    %24 = vector.broadcast %cst_7 : f32 to vector<256x1xf32>
    %25 = arith.divf %23, %24 : vector<256x1xf32>
    %26 = vector.broadcast %18 : vector<256x1xf32> to vector<256x32xf32>
    %27 = arith.subf %14, %26 : vector<256x32xf32>
    %cst_8 = arith.constant 9.99999974E-6 : f32
    %28 = vector.broadcast %cst_8 : f32 to vector<256x1xf32>
    %29 = arith.addf %25, %28 : vector<256x1xf32>
    %30 = math.rsqrt %29 : vector<256x1xf32>
    %31 = vector.broadcast %30 : vector<256x1xf32> to vector<256x32xf32>
    %32 = arith.mulf %27, %31 : vector<256x32xf32>
    %33 = vector.broadcast %5 : vector<1x32xf32> to vector<256x32xf32>
    %34 = arith.mulf %32, %33 : vector<256x32xf32>
    %35 = vector.broadcast %6 : vector<1x32xf32> to vector<256x32xf32>
    %36 = arith.addf %34, %35 : vector<256x32xf32>
    %c0_9 = arith.constant 0 : index
    %c0_10 = arith.constant 0 : index
    %37 = vector.load %arg14[%c0_9, %c0_10] : memref<256x32xf32, #tpu.memory_space<vmem>>, vector<256x32xf32>
    %cst_11 = arith.constant dense<0.000000e+00> : vector<256xf32>
    %38 = vector.multi_reduction <add>, %37, %cst_11 [1] : vector<256x32xf32> to vector<256xf32>
    %39 = vector.shape_cast %38 : vector<256xf32> to vector<256x1xf32>
    %cst_12 = arith.constant 3.200000e+01 : f32
    %40 = vector.broadcast %cst_12 : f32 to vector<256x1xf32>
    %41 = arith.divf %39, %40 : vector<256x1xf32>
    %42 = vector.broadcast %41 : vector<256x1xf32> to vector<256x32xf32>
    %43 = arith.subf %37, %42 : vector<256x32xf32>
    %44 = arith.mulf %43, %43 : vector<256x32xf32>
    %cst_13 = arith.constant dense<0.000000e+00> : vector<256xf32>
    %45 = vector.multi_reduction <add>, %44, %cst_13 [1] : vector<256x32xf32> to vector<256xf32>
    %46 = vector.shape_cast %45 : vector<256xf32> to vector<256x1xf32>
    %cst_14 = arith.constant 3.200000e+01 : f32
    %47 = vector.broadcast %cst_14 : f32 to vector<256x1xf32>
    %48 = arith.divf %46, %47 : vector<256x1xf32>
    %49 = vector.broadcast %41 : vector<256x1xf32> to vector<256x32xf32>
    %50 = arith.subf %37, %49 : vector<256x32xf32>
    %cst_15 = arith.constant 9.99999974E-6 : f32
    %51 = vector.broadcast %cst_15 : f32 to vector<256x1xf32>
    %52 = arith.addf %48, %51 : vector<256x1xf32>
    %53 = math.rsqrt %52 : vector<256x1xf32>
    %54 = vector.broadcast %53 : vector<256x1xf32> to vector<256x32xf32>
    %55 = arith.mulf %50, %54 : vector<256x32xf32>
    %56 = vector.broadcast %5 : vector<1x32xf32> to vector<256x32xf32>
    %57 = arith.mulf %55, %56 : vector<256x32xf32>
    %58 = vector.broadcast %6 : vector<1x32xf32> to vector<256x32xf32>
    %59 = arith.addf %57, %58 : vector<256x32xf32>
    %c0_16 = arith.constant 0 : index
    %c0_17 = arith.constant 0 : index
    %60 = vector.load %arg14[%c0_16, %c0_17] : memref<256x32xf32, #tpu.memory_space<vmem>>, vector<256x32xf32>
    tpu.vector_store %arg14[%c0_16, %c0_17], %59 {strides = array<i32>} : memref<256x32xf32, #tpu.memory_space<vmem>>, vector<256x32xf32>,
    %61 = arith.truncf %36 : vector<256x32xf32> to vector<256x32xbf16>
    %c0_18 = arith.constant 0 : index
    %c0_19 = arith.constant 0 : index
    %c0_20 = arith.constant 0 : index
    %62 = vector.load %arg4[%c0_18, %c0_19, %c0_20] : memref<1x32x32xbf16, #tpu.memory_space<vmem>>, vector<1x32x32xbf16>
    %63 = vector.shape_cast %62 : vector<1x32x32xbf16> to vector<32x32xbf16>
    %cst_21 = arith.constant dense<0.000000e+00> : vector<256x32xf32>
    %64 = tpu.matmul %61, %63, %cst_21 {dimension_numbers = #tpu.dot_dimension_numbers<[1], [0], [0], [1], [0, 0, 1, 1], [], []>} : vector<256x32xbf16>, vector<32x32xbf16>, vector<256x32xf32> -> vector<256x32xf32>
    %65 = vector.broadcast %7 : vector<1x32xf32> to vector<256x32xf32>
    %66 = arith.addf %64, %65 : vector<256x32xf32>
    %67 = arith.truncf %66 : vector<256x32xf32> to vector<256x32xbf16>
    %68 = arith.truncf %59 : vector<256x32xf32> to vector<256x32xbf16>
    %c0_22 = arith.constant 0 : index
    %c0_23 = arith.constant 0 : index
    %c0_24 = arith.constant 0 : index
    %69 = vector.load %arg5[%c0_22, %c0_23, %c0_24] : memref<1x32x64xbf16, #tpu.memory_space<vmem>>, vector<1x32x64xbf16>
    %70 = vector.shape_cast %69 : vector<1x32x64xbf16> to vector<32x64xbf16>
    %cst_25 = arith.constant dense<0.000000e+00> : vector<256x64xf32>
    %71 = tpu.matmul %68, %70, %cst_25 {dimension_numbers = #tpu.dot_dimension_numbers<[1], [0], [0], [1], [0, 0, 1, 1], [], []>} : vector<256x32xbf16>, vector<32x64xbf16>, vector<256x64xf32> -> vector<256x64xf32>
    %72 = vector.extract_strided_slice %71 {offsets = [0, 0], sizes = [256, 32], strides = [1, 1]} : vector<256x64xf32> to vector<256x32xf32>
    %73 = vector.broadcast %8 : vector<1x32xf32> to vector<256x32xf32>
    %74 = arith.addf %72, %73 : vector<256x32xf32>
    %75 = arith.truncf %74 : vector<256x32xf32> to vector<256x32xbf16>
    %76 = vector.extract_strided_slice %71 {offsets = [0, 32], sizes = [256, 32], strides = [1, 1]} : vector<256x64xf32> to vector<256x32xf32>
    %77 = vector.broadcast %9 : vector<1x32xf32> to vector<256x32xf32>
    %78 = arith.addf %76, %77 : vector<256x32xf32>
    %79 = arith.truncf %78 : vector<256x32xf32> to vector<256x32xbf16>
    %80 = vector.extract_strided_slice %67 {offsets = [0, 0], sizes = [256, 8], strides = [1, 1]} : vector<256x32xbf16> to vector<256x8xbf16>
    %81 = vector.shape_cast %80 : vector<256x8xbf16> to vector<4x64x8xbf16>
    %82 = vector.extract_strided_slice %75 {offsets = [0, 0], sizes = [256, 8], strides = [1, 1]} : vector<256x32xbf16> to vector<256x8xbf16>
    %83 = vector.shape_cast %82 : vector<256x8xbf16> to vector<4x64x8xbf16>
    %84 = vector.extract_strided_slice %79 {offsets = [0, 0], sizes = [256, 8], strides = [1, 1]} : vector<256x32xbf16> to vector<256x8xbf16>
    %85 = vector.shape_cast %84 : vector<256x8xbf16> to vector<4x64x8xbf16>
    "tpu.trace_start"() <{level = 10 : i32, message = "bnd,bmd->bnm"}> : () -> ()
    %cst_26 = arith.constant dense<0.000000e+00> : vector<4x64x64xf32>
    %86 = tpu.matmul %81, %83, %cst_26 {dimension_numbers = #tpu.dot_dimension_numbers<[2], [2], [1], [1], [0, 0, 0, 1, 1, 1], [0], [0]>} : vector<4x64x8xbf16>, vector<4x64x8xbf16>, vector<4x64x64xf32> -> vector<4x64x64xf32>
    "tpu.trace_stop"() : () -> ()
    %c0_27 = arith.constant 0 : index
    %c0_28 = arith.constant 0 : index
    %c0_29 = arith.constant 0 : index
    %c0_30 = arith.constant 0 : index
    %87 = vector.load %arg9[%c0_27, %c0_28, %c0_29, %c0_30] : memref<1x4x64x64xf32, #tpu.memory_space<vmem>>, vector<1x1x64x64xf32>
    %88 = vector.shape_cast %87 : vector<1x1x64x64xf32> to vector<64x64xf32>
    %89 = vector.shape_cast %88 : vector<64x64xf32> to vector<1x64x64xf32>
    %90 = vector.broadcast %89 : vector<1x64x64xf32> to vector<4x64x64xf32>
    %91 = arith.addf %86, %90 : vector<4x64x64xf32>
    %cst_31 = arith.constant dense<0xFF800000> : vector<4x64xf32>
    %92 = vector.multi_reduction <maximumf>, %91, %cst_31 [2] : vector<4x64x64xf32> to vector<4x64xf32>
    %93 = vector.shape_cast %92 : vector<4x64xf32> to vector<4x64x1xf32>
    %94 = vector.broadcast %93 : vector<4x64x1xf32> to vector<4x64x64xf32>
    %95 = arith.subf %91, %94 : vector<4x64x64xf32>
    %96 = math.exp %95 : vector<4x64x64xf32>
    %cst_32 = arith.constant dense<0.000000e+00> : vector<4x64xf32>
    %97 = vector.multi_reduction <add>, %96, %cst_32 [2] : vector<4x64x64xf32> to vector<4x64xf32>
    %98 = vector.shape_cast %97 : vector<4x64xf32> to vector<4x64x1xf32>
    %99 = tpu.reciprocal %98 {approx = true} : vector<4x64x1xf32> -> vector<4x64x1xf32>
    %100 = vector.broadcast %99 : vector<4x64x1xf32> to vector<4x64x64xf32>
    %101 = arith.mulf %96, %100 : vector<4x64x64xf32>
    %102 = arith.truncf %101 : vector<4x64x64xf32> to vector<4x64x64xbf16>
    "tpu.trace_start"() <{level = 10 : i32, message = "bnm,bmd->bnd"}> : () -> ()
    %cst_33 = arith.constant dense<0.000000e+00> : vector<4x64x8xf32>
    %103 = tpu.matmul %102, %85, %cst_33 {dimension_numbers = #tpu.dot_dimension_numbers<[2], [1], [1], [2], [0, 0, 0, 1, 1, 2], [0], [0]>} : vector<4x64x64xbf16>, vector<4x64x8xbf16>, vector<4x64x8xf32> -> vector<4x64x8xf32>
    "tpu.trace_stop"() : () -> ()
    %104 = vector.shape_cast %103 : vector<4x64x8xf32> to vector<256x8xf32>
    %105 = arith.truncf %104 : vector<256x8xf32> to vector<256x8xbf16>
    %c0_34 = arith.constant 0 : index
    %c0_35 = arith.constant 0 : index
    %106 = vector.load %arg15[%c0_34, %c0_35] : memref<256x32xbf16, #tpu.memory_space<vmem>>, vector<256x8xbf16>
    tpu.vector_store %arg15[%c0_34, %c0_35], %105 {strides = array<i32>} : memref<256x32xbf16, #tpu.memory_space<vmem>>, vector<256x8xbf16>,
    %107 = vector.extract_strided_slice %67 {offsets = [0, 8], sizes = [256, 8], strides = [1, 1]} : vector<256x32xbf16> to vector<256x8xbf16>
    %108 = vector.shape_cast %107 : vector<256x8xbf16> to vector<4x64x8xbf16>
    %109 = vector.extract_strided_slice %75 {offsets = [0, 8], sizes = [256, 8], strides = [1, 1]} : vector<256x32xbf16> to vector<256x8xbf16>
    %110 = vector.shape_cast %109 : vector<256x8xbf16> to vector<4x64x8xbf16>
    %111 = vector.extract_strided_slice %79 {offsets = [0, 8], sizes = [256, 8], strides = [1, 1]} : vector<256x32xbf16> to vector<256x8xbf16>
    %112 = vector.shape_cast %111 : vector<256x8xbf16> to vector<4x64x8xbf16>
    "tpu.trace_start"() <{level = 10 : i32, message = "bnd,bmd->bnm"}> : () -> ()
    %cst_36 = arith.constant dense<0.000000e+00> : vector<4x64x64xf32>
    %113 = tpu.matmul %108, %110, %cst_36 {dimension_numbers = #tpu.dot_dimension_numbers<[2], [2], [1], [1], [0, 0, 0, 1, 1, 1], [0], [0]>} : vector<4x64x8xbf16>, vector<4x64x8xbf16>, vector<4x64x64xf32> -> vector<4x64x64xf32>
    "tpu.trace_stop"() : () -> ()
    %c0_37 = arith.constant 0 : index
    %c1 = arith.constant 1 : index
    %c0_38 = arith.constant 0 : index
    %c0_39 = arith.constant 0 : index
    %114 = vector.load %arg9[%c0_37, %c1, %c0_38, %c0_39] : memref<1x4x64x64xf32, #tpu.memory_space<vmem>>, vector<1x1x64x64xf32>
    %115 = vector.shape_cast %114 : vector<1x1x64x64xf32> to vector<64x64xf32>
    %116 = vector.shape_cast %115 : vector<64x64xf32> to vector<1x64x64xf32>
    %117 = vector.broadcast %116 : vector<1x64x64xf32> to vector<4x64x64xf32>
    %118 = arith.addf %113, %117 : vector<4x64x64xf32>
    %cst_40 = arith.constant dense<0xFF800000> : vector<4x64xf32>
    %119 = vector.multi_reduction <maximumf>, %118, %cst_40 [2] : vector<4x64x64xf32> to vector<4x64xf32>
    %120 = vector.shape_cast %119 : vector<4x64xf32> to vector<4x64x1xf32>
    %121 = vector.broadcast %120 : vector<4x64x1xf32> to vector<4x64x64xf32>
    %122 = arith.subf %118, %121 : vector<4x64x64xf32>
    %123 = math.exp %122 : vector<4x64x64xf32>
    %cst_41 = arith.constant dense<0.000000e+00> : vector<4x64xf32>
    %124 = vector.multi_reduction <add>, %123, %cst_41 [2] : vector<4x64x64xf32> to vector<4x64xf32>
    %125 = vector.shape_cast %124 : vector<4x64xf32> to vector<4x64x1xf32>
    %126 = tpu.reciprocal %125 {approx = true} : vector<4x64x1xf32> -> vector<4x64x1xf32>
    %127 = vector.broadcast %126 : vector<4x64x1xf32> to vector<4x64x64xf32>
    %128 = arith.mulf %123, %127 : vector<4x64x64xf32>
    %129 = arith.truncf %128 : vector<4x64x64xf32> to vector<4x64x64xbf16>
    "tpu.trace_start"() <{level = 10 : i32, message = "bnm,bmd->bnd"}> : () -> ()
    %cst_42 = arith.constant dense<0.000000e+00> : vector<4x64x8xf32>
    %130 = tpu.matmul %129, %112, %cst_42 {dimension_numbers = #tpu.dot_dimension_numbers<[2], [1], [1], [2], [0, 0, 0, 1, 1, 2], [0], [0]>} : vector<4x64x64xbf16>, vector<4x64x8xbf16>, vector<4x64x8xf32> -> vector<4x64x8xf32>
    "tpu.trace_stop"() : () -> ()
    %131 = vector.shape_cast %130 : vector<4x64x8xf32> to vector<256x8xf32>
    %132 = arith.truncf %131 : vector<256x8xf32> to vector<256x8xbf16>
    %c0_43 = arith.constant 0 : index
    %c8 = arith.constant 8 : index
    %133 = vector.load %arg15[%c0_43, %c8] : memref<256x32xbf16, #tpu.memory_space<vmem>>, vector<256x8xbf16>
    tpu.vector_store %arg15[%c0_43, %c8], %132 {strides = array<i32>} : memref<256x32xbf16, #tpu.memory_space<vmem>>, vector<256x8xbf16>,
    %134 = vector.extract_strided_slice %67 {offsets = [0, 16], sizes = [256, 8], strides = [1, 1]} : vector<256x32xbf16> to vector<256x8xbf16>
    %135 = vector.shape_cast %134 : vector<256x8xbf16> to vector<4x64x8xbf16>
    %136 = vector.extract_strided_slice %75 {offsets = [0, 16], sizes = [256, 8], strides = [1, 1]} : vector<256x32xbf16> to vector<256x8xbf16>
    %137 = vector.shape_cast %136 : vector<256x8xbf16> to vector<4x64x8xbf16>
    %138 = vector.extract_strided_slice %79 {offsets = [0, 16], sizes = [256, 8], strides = [1, 1]} : vector<256x32xbf16> to vector<256x8xbf16>
    %139 = vector.shape_cast %138 : vector<256x8xbf16> to vector<4x64x8xbf16>
    "tpu.trace_start"() <{level = 10 : i32, message = "bnd,bmd->bnm"}> : () -> ()
    %cst_44 = arith.constant dense<0.000000e+00> : vector<4x64x64xf32>
    %140 = tpu.matmul %135, %137, %cst_44 {dimension_numbers = #tpu.dot_dimension_numbers<[2], [2], [1], [1], [0, 0, 0, 1, 1, 1], [0], [0]>} : vector<4x64x8xbf16>, vector<4x64x8xbf16>, vector<4x64x64xf32> -> vector<4x64x64xf32>
    "tpu.trace_stop"() : () -> ()
    %c0_45 = arith.constant 0 : index
    %c2 = arith.constant 2 : index
    %c0_46 = arith.constant 0 : index
    %c0_47 = arith.constant 0 : index
    %141 = vector.load %arg9[%c0_45, %c2, %c0_46, %c0_47] : memref<1x4x64x64xf32, #tpu.memory_space<vmem>>, vector<1x1x64x64xf32>
    %142 = vector.shape_cast %141 : vector<1x1x64x64xf32> to vector<64x64xf32>
    %143 = vector.shape_cast %142 : vector<64x64xf32> to vector<1x64x64xf32>
    %144 = vector.broadcast %143 : vector<1x64x64xf32> to vector<4x64x64xf32>
    %145 = arith.addf %140, %144 : vector<4x64x64xf32>
    %cst_48 = arith.constant dense<0xFF800000> : vector<4x64xf32>
    %146 = vector.multi_reduction <maximumf>, %145, %cst_48 [2] : vector<4x64x64xf32> to vector<4x64xf32>
    %147 = vector.shape_cast %146 : vector<4x64xf32> to vector<4x64x1xf32>
    %148 = vector.broadcast %147 : vector<4x64x1xf32> to vector<4x64x64xf32>
    %149 = arith.subf %145, %148 : vector<4x64x64xf32>
    %150 = math.exp %149 : vector<4x64x64xf32>
    %cst_49 = arith.constant dense<0.000000e+00> : vector<4x64xf32>
    %151 = vector.multi_reduction <add>, %150, %cst_49 [2] : vector<4x64x64xf32> to vector<4x64xf32>
    %152 = vector.shape_cast %151 : vector<4x64xf32> to vector<4x64x1xf32>
    %153 = tpu.reciprocal %152 {approx = true} : vector<4x64x1xf32> -> vector<4x64x1xf32>
    %154 = vector.broadcast %153 : vector<4x64x1xf32> to vector<4x64x64xf32>
    %155 = arith.mulf %150, %154 : vector<4x64x64xf32>
    %156 = arith.truncf %155 : vector<4x64x64xf32> to vector<4x64x64xbf16>
    "tpu.trace_start"() <{level = 10 : i32, message = "bnm,bmd->bnd"}> : () -> ()
    %cst_50 = arith.constant dense<0.000000e+00> : vector<4x64x8xf32>
    %157 = tpu.matmul %156, %139, %cst_50 {dimension_numbers = #tpu.dot_dimension_numbers<[2], [1], [1], [2], [0, 0, 0, 1, 1, 2], [0], [0]>} : vector<4x64x64xbf16>, vector<4x64x8xbf16>, vector<4x64x8xf32> -> vector<4x64x8xf32>
    "tpu.trace_stop"() : () -> ()
    %158 = vector.shape_cast %157 : vector<4x64x8xf32> to vector<256x8xf32>
    %159 = arith.truncf %158 : vector<256x8xf32> to vector<256x8xbf16>
    %c0_51 = arith.constant 0 : index
    %c16 = arith.constant 16 : index
    %160 = vector.load %arg15[%c0_51, %c16] : memref<256x32xbf16, #tpu.memory_space<vmem>>, vector<256x8xbf16>
    tpu.vector_store %arg15[%c0_51, %c16], %159 {strides = array<i32>} : memref<256x32xbf16, #tpu.memory_space<vmem>>, vector<256x8xbf16>,
    %161 = vector.extract_strided_slice %67 {offsets = [0, 24], sizes = [256, 8], strides = [1, 1]} : vector<256x32xbf16> to vector<256x8xbf16>
    %162 = vector.shape_cast %161 : vector<256x8xbf16> to vector<4x64x8xbf16>
    %163 = vector.extract_strided_slice %75 {offsets = [0, 24], sizes = [256, 8], strides = [1, 1]} : vector<256x32xbf16> to vector<256x8xbf16>
    %164 = vector.shape_cast %163 : vector<256x8xbf16> to vector<4x64x8xbf16>
    %165 = vector.extract_strided_slice %79 {offsets = [0, 24], sizes = [256, 8], strides = [1, 1]} : vector<256x32xbf16> to vector<256x8xbf16>
    %166 = vector.shape_cast %165 : vector<256x8xbf16> to vector<4x64x8xbf16>
    "tpu.trace_start"() <{level = 10 : i32, message = "bnd,bmd->bnm"}> : () -> ()
    %cst_52 = arith.constant dense<0.000000e+00> : vector<4x64x64xf32>
    %167 = tpu.matmul %162, %164, %cst_52 {dimension_numbers = #tpu.dot_dimension_numbers<[2], [2], [1], [1], [0, 0, 0, 1, 1, 1], [0], [0]>} : vector<4x64x8xbf16>, vector<4x64x8xbf16>, vector<4x64x64xf32> -> vector<4x64x64xf32>
    "tpu.trace_stop"() : () -> ()
    %c0_53 = arith.constant 0 : index
    %c3 = arith.constant 3 : index
    %c0_54 = arith.constant 0 : index
    %c0_55 = arith.constant 0 : index
    %168 = vector.load %arg9[%c0_53, %c3, %c0_54, %c0_55] : memref<1x4x64x64xf32, #tpu.memory_space<vmem>>, vector<1x1x64x64xf32>
    %169 = vector.shape_cast %168 : vector<1x1x64x64xf32> to vector<64x64xf32>
    %170 = vector.shape_cast %169 : vector<64x64xf32> to vector<1x64x64xf32>
    %171 = vector.broadcast %170 : vector<1x64x64xf32> to vector<4x64x64xf32>
    %172 = arith.addf %167, %171 : vector<4x64x64xf32>
    %cst_56 = arith.constant dense<0xFF800000> : vector<4x64xf32>
    %173 = vector.multi_reduction <maximumf>, %172, %cst_56 [2] : vector<4x64x64xf32> to vector<4x64xf32>
    %174 = vector.shape_cast %173 : vector<4x64xf32> to vector<4x64x1xf32>
    %175 = vector.broadcast %174 : vector<4x64x1xf32> to vector<4x64x64xf32>
    %176 = arith.subf %172, %175 : vector<4x64x64xf32>
    %177 = math.exp %176 : vector<4x64x64xf32>
    %cst_57 = arith.constant dense<0.000000e+00> : vector<4x64xf32>
    %178 = vector.multi_reduction <add>, %177, %cst_57 [2] : vector<4x64x64xf32> to vector<4x64xf32>
    %179 = vector.shape_cast %178 : vector<4x64xf32> to vector<4x64x1xf32>
    %180 = tpu.reciprocal %179 {approx = true} : vector<4x64x1xf32> -> vector<4x64x1xf32>
    %181 = vector.broadcast %180 : vector<4x64x1xf32> to vector<4x64x64xf32>
    %182 = arith.mulf %177, %181 : vector<4x64x64xf32>
    %183 = arith.truncf %182 : vector<4x64x64xf32> to vector<4x64x64xbf16>
    "tpu.trace_start"() <{level = 10 : i32, message = "bnm,bmd->bnd"}> : () -> ()
    %cst_58 = arith.constant dense<0.000000e+00> : vector<4x64x8xf32>
    %184 = tpu.matmul %183, %166, %cst_58 {dimension_numbers = #tpu.dot_dimension_numbers<[2], [1], [1], [2], [0, 0, 0, 1, 1, 2], [0], [0]>} : vector<4x64x64xbf16>, vector<4x64x8xbf16>, vector<4x64x8xf32> -> vector<4x64x8xf32>
    "tpu.trace_stop"() : () -> ()
    %185 = vector.shape_cast %184 : vector<4x64x8xf32> to vector<256x8xf32>
    %186 = arith.truncf %185 : vector<256x8xf32> to vector<256x8xbf16>
    %c0_59 = arith.constant 0 : index
    %c24 = arith.constant 24 : index
    %187 = vector.load %arg15[%c0_59, %c24] : memref<256x32xbf16, #tpu.memory_space<vmem>>, vector<256x8xbf16>
    tpu.vector_store %arg15[%c0_59, %c24], %186 {strides = array<i32>} : memref<256x32xbf16, #tpu.memory_space<vmem>>, vector<256x8xbf16>,
    %c0_60 = arith.constant 0 : index
    %c0_61 = arith.constant 0 : index
    %188 = vector.load %arg15[%c0_60, %c0_61] : memref<256x32xbf16, #tpu.memory_space<vmem>>, vector<256x32xbf16>
    %c0_62 = arith.constant 0 : index
    %c0_63 = arith.constant 0 : index
    %c0_64 = arith.constant 0 : index
    %189 = vector.load %arg6[%c0_62, %c0_63, %c0_64] : memref<1x32x32xbf16, #tpu.memory_space<vmem>>, vector<1x32x32xbf16>
    %190 = vector.shape_cast %189 : vector<1x32x32xbf16> to vector<32x32xbf16>
    %cst_65 = arith.constant dense<0.000000e+00> : vector<256x32xf32>
    %191 = tpu.matmul %188, %190, %cst_65 {dimension_numbers = #tpu.dot_dimension_numbers<[1], [0], [0], [1], [0, 0, 1, 1], [], []>} : vector<256x32xbf16>, vector<32x32xbf16>, vector<256x32xf32> -> vector<256x32xf32>
    %192 = vector.broadcast %10 : vector<1x32xf32> to vector<256x32xf32>
    %193 = arith.addf %191, %192 : vector<256x32xf32>
    %194 = arith.addf %193, %14 : vector<256x32xf32>
    %cst_66 = arith.constant dense<0.000000e+00> : vector<256xf32>
    %195 = vector.multi_reduction <add>, %194, %cst_66 [1] : vector<256x32xf32> to vector<256xf32>
    %196 = vector.shape_cast %195 : vector<256xf32> to vector<256x1xf32>
    %cst_67 = arith.constant 3.200000e+01 : f32
    %197 = vector.broadcast %cst_67 : f32 to vector<256x1xf32>
    %198 = arith.divf %196, %197 : vector<256x1xf32>
    %199 = vector.broadcast %198 : vector<256x1xf32> to vector<256x32xf32>
    %200 = arith.subf %194, %199 : vector<256x32xf32>
    %201 = arith.mulf %200, %200 : vector<256x32xf32>
    %cst_68 = arith.constant dense<0.000000e+00> : vector<256xf32>
    %202 = vector.multi_reduction <add>, %201, %cst_68 [1] : vector<256x32xf32> to vector<256xf32>
    %203 = vector.shape_cast %202 : vector<256xf32> to vector<256x1xf32>
    %cst_69 = arith.constant 3.200000e+01 : f32
    %204 = vector.broadcast %cst_69 : f32 to vector<256x1xf32>
    %205 = arith.divf %203, %204 : vector<256x1xf32>
    %206 = vector.broadcast %198 : vector<256x1xf32> to vector<256x32xf32>
    %207 = arith.subf %194, %206 : vector<256x32xf32>
    %cst_70 = arith.constant 9.99999974E-6 : f32
    %208 = vector.broadcast %cst_70 : f32 to vector<256x1xf32>
    %209 = arith.addf %205, %208 : vector<256x1xf32>
    %210 = math.rsqrt %209 : vector<256x1xf32>
    %211 = vector.broadcast %210 : vector<256x1xf32> to vector<256x32xf32>
    %212 = arith.mulf %207, %211 : vector<256x32xf32>
    %213 = vector.broadcast %11 : vector<1x32xf32> to vector<256x32xf32>
    %214 = arith.mulf %212, %213 : vector<256x32xf32>
    %215 = vector.broadcast %12 : vector<1x32xf32> to vector<256x32xf32>
    %216 = arith.addf %214, %215 : vector<256x32xf32>
    %217 = arith.truncf %216 : vector<256x32xf32> to vector<256x32xbf16>
    %c0_71 = arith.constant 0 : index
    %c0_72 = arith.constant 0 : index
    %c0_73 = arith.constant 0 : index
    %218 = vector.load %arg7[%c0_71, %c0_72, %c0_73] : memref<1x32x64xbf16, #tpu.memory_space<vmem>>, vector<1x32x64xbf16>
    %219 = vector.shape_cast %218 : vector<1x32x64xbf16> to vector<32x64xbf16>
    %cst_74 = arith.constant dense<0.000000e+00> : vector<256x64xf32>
    %220 = tpu.matmul %217, %219, %cst_74 {dimension_numbers = #tpu.dot_dimension_numbers<[1], [0], [0], [1], [0, 0, 1, 1], [], []>} : vector<256x32xbf16>, vector<32x64xbf16>, vector<256x64xf32> -> vector<256x64xf32>
    %c0_75 = arith.constant 0 : index
    %c0_76 = arith.constant 0 : index
    %c0_77 = arith.constant 0 : index
    %221 = vector.load %arg11[%c0_75, %c0_76, %c0_77] : memref<1x1x64xf32, #tpu.memory_space<vmem>>, vector<1x1x64xf32>
    %222 = vector.shape_cast %221 : vector<1x1x64xf32> to vector<1x64xf32>
    %223 = vector.broadcast %222 : vector<1x64xf32> to vector<256x64xf32>
    %224 = arith.addf %220, %223 : vector<256x64xf32>
    %cst_78 = arith.constant 5.000000e-01 : f32
    %225 = vector.broadcast %cst_78 : f32 to vector<256x64xf32>
    %226 = arith.mulf %225, %224 : vector<256x64xf32>
    %cst_79 = arith.constant 4.471500e-02 : f32
    %227 = vector.broadcast %cst_79 : f32 to vector<256x64xf32>
    %228 = arith.mulf %227, %224 : vector<256x64xf32>
    %229 = arith.mulf %228, %224 : vector<256x64xf32>
    %230 = arith.mulf %229, %224 : vector<256x64xf32>
    %231 = arith.addf %224, %230 : vector<256x64xf32>
    %cst_80 = arith.constant 0.797884583 : f32
    %232 = vector.broadcast %cst_80 : f32 to vector<256x64xf32>
    %233 = arith.mulf %232, %231 : vector<256x64xf32>
    %234 = math.tanh %233 : vector<256x64xf32>
    %cst_81 = arith.constant 1.000000e+00 : f32
    %235 = vector.broadcast %cst_81 : f32 to vector<256x64xf32>
    %236 = arith.addf %235, %234 : vector<256x64xf32>
    %237 = arith.mulf %226, %236 : vector<256x64xf32>
    %238 = arith.truncf %237 : vector<256x64xf32> to vector<256x64xbf16>
    %c0_82 = arith.constant 0 : index
    %c0_83 = arith.constant 0 : index
    %c0_84 = arith.constant 0 : index
    %239 = vector.load %arg8[%c0_82, %c0_83, %c0_84] : memref<1x64x32xbf16, #tpu.memory_space<vmem>>, vector<1x64x32xbf16>
    %240 = vector.shape_cast %239 : vector<1x64x32xbf16> to vector<64x32xbf16>
    %cst_85 = arith.constant dense<0.000000e+00> : vector<256x32xf32>
    %241 = tpu.matmul %238, %240, %cst_85 {dimension_numbers = #tpu.dot_dimension_numbers<[1], [0], [0], [1], [0, 0, 1, 1], [], []>} : vector<256x64xbf16>, vector<64x32xbf16>, vector<256x32xf32> -> vector<256x32xf32>
    %242 = vector.broadcast %13 : vector<1x32xf32> to vector<256x32xf32>
    %243 = arith.addf %241, %242 : vector<256x32xf32>
    %244 = arith.addf %194, %243 : vector<256x32xf32>
    %c0_86 = arith.constant 0 : index
    %c0_87 = arith.constant 0 : index
    %245 = vector.load %arg13[%c0_86, %c0_87] : memref<256x32xf32, #tpu.memory_space<vmem>>, vector<256x32xf32>
    tpu.vector_store %arg13[%c0_86, %c0_87], %244 {strides = array<i32>} : memref<256x32xf32, #tpu.memory_space<vmem>>, vector<256x32xf32>,
    %c1_i32 = arith.constant 1 : i32
    %246 = arith.cmpi eq, %arg1, %c1_i32 : i32
    %247 = arith.extui %246 : i1 to i32
    %c0_i32_88 = arith.constant 0 : i32
    %248 = arith.cmpi ne, %247, %c0_i32_88 : i32
    scf.if %248 {
      %c0_89 = arith.constant 0 : index
      %c0_90 = arith.constant 0 : index
      %249 = vector.load %arg12[%c0_89, %c0_90] : memref<256x32xf32, #tpu.memory_space<vmem>>, vector<256x32xf32>
      tpu.vector_store %arg12[%c0_89, %c0_90], %244 {strides = array<i32>} : memref<256x32xf32, #tpu.memory_space<vmem>>, vector<256x32xf32>,
    } else {
    }
    return
  }
  func.func @transform_0(%arg0: i32, %arg1: i32) -> (i32, i32) {
    %c0_i32 = arith.constant 0 : i32
    %c0_i32_0 = arith.constant 0 : i32
    return %arg0, %c0_i32 : i32, i32
  }
  func.func @transform_1(%arg0: i32, %arg1: i32) -> (i32, i32) {
    %c0_i32 = arith.constant 0 : i32
    %c0_i32_0 = arith.constant 0 : i32
    return %arg0, %c0_i32 : i32, i32
  }
  func.func @transform_2(%arg0: i32, %arg1: i32) -> (i32, i32, i32) {
    %c0_i32 = arith.constant 0 : i32
    %c0_i32_0 = arith.constant 0 : i32
    %c0_i32_1 = arith.constant 0 : i32
    return %arg1, %c0_i32, %c0_i32_0 : i32, i32, i32
  }
  func.func @transform_3(%arg0: i32, %arg1: i32) -> (i32, i32, i32) {
    %c0_i32 = arith.constant 0 : i32
    %c0_i32_0 = arith.constant 0 : i32
    %c0_i32_1 = arith.constant 0 : i32
    return %arg1, %c0_i32, %c0_i32_0 : i32, i32, i32
  }
  func.func @transform_4(%arg0: i32, %arg1: i32) -> (i32, i32, i32) {
    %c0_i32 = arith.constant 0 : i32
    %c0_i32_0 = arith.constant 0 : i32
    %c0_i32_1 = arith.constant 0 : i32
    return %arg1, %c0_i32, %c0_i32_0 : i32, i32, i32
  }
  func.func @transform_5(%arg0: i32, %arg1: i32) -> (i32, i32, i32) {
    %c0_i32 = arith.constant 0 : i32
    %c0_i32_0 = arith.constant 0 : i32
    %c0_i32_1 = arith.constant 0 : i32
    return %arg1, %c0_i32, %c0_i32_0 : i32, i32, i32
  }
  func.func @transform_6(%arg0: i32, %arg1: i32) -> (i32, i32, i32) {
    %c0_i32 = arith.constant 0 : i32
    %c0_i32_0 = arith.constant 0 : i32
    %c0_i32_1 = arith.constant 0 : i32
    return %arg1, %c0_i32, %c0_i32_0 : i32, i32, i32
  }
  func.func @transform_7(%arg0: i32, %arg1: i32) -> (i32, i32, i32, i32) {
    %c0_i32 = arith.constant 0 : i32
    %c0_i32_0 = arith.constant 0 : i32
    %c0_i32_1 = arith.constant 0 : i32
    %c0_i32_2 = arith.constant 0 : i32
    return %arg1, %c0_i32, %c0_i32_0, %c0_i32_1 : i32, i32, i32, i32
  }
  func.func @transform_8(%arg0: i32, %arg1: i32) -> (i32, i32, i32) {
    %c0_i32 = arith.constant 0 : i32
    %c0_i32_0 = arith.constant 0 : i32
    %c0_i32_1 = arith.constant 0 : i32
    return %arg1, %c0_i32, %c0_i32_0 : i32, i32, i32
  }
  func.func @transform_9(%arg0: i32, %arg1: i32) -> (i32, i32, i32) {
    %c0_i32 = arith.constant 0 : i32
    %c0_i32_0 = arith.constant 0 : i32
    %c0_i32_1 = arith.constant 0 : i32
    return %arg1, %c0_i32, %c0_i32_0 : i32, i32, i32
  }
  func.func @transform_10(%arg0: i32, %arg1: i32) -> (i32, i32) {
    %c0_i32 = arith.constant 0 : i32
    %c0_i32_0 = arith.constant 0 : i32
    return %arg0, %c0_i32 : i32, i32
  }
}

</mosaic_0001>

<llo_original>
// kernel: tpu_custom_call.1
$region0: #{tpu_custom_call.1}
  #allocation0 [shape = 'u32[]', space=smem, size = 0x4, offset = 0x4, fixed_abs, tag = 'smem constant byte address 0x4 - core index']
  #allocation1 [shape = 'u32[144,128]{1,0:T(1,128)}', space=vmem, size = 0x12000, scoped, tag = 'internal scratch']
  #allocation2 [shape = 'f32[256,32]{1,0:T(8,128)}', space=vmem, size = 0x20000, scoped, tag = 'scratch operand']
  #allocation3 [shape = 'f32[256,32]{1,0:T(8,128)}', space=vmem, size = 0x20000, scoped, tag = 'scratch operand']
  #allocation4 [shape = 'bf16[256,32]{1,0:T(8,128)(2,1)}', space=vmem, size = 0x10000, scoped, tag = 'scratch operand']
  %s0 = inlined_call_operand.vmem [shape: bf16[512,32], index: 0, kind: input, shape index: {}]
  %s1 = inlined_call_operand.vmem [shape: bf16[512,32], index: 1, kind: input, shape index: {}]
  %s2 = inlined_call_operand.vmem [shape: bf16[2,32,32], index: 2, kind: input, shape index: {}]
  %s3 = inlined_call_operand.vmem [shape: bf16[2,32,64], index: 3, kind: input, shape index: {}]
  %s4 = inlined_call_operand.vmem [shape: bf16[2,32,32], index: 4, kind: input, shape index: {}]
  %s5 = inlined_call_operand.vmem [shape: bf16[2,32,64], index: 5, kind: input, shape index: {}]
  %s6 = inlined_call_operand.vmem [shape: bf16[2,64,32], index: 6, kind: input, shape index: {}]
  %s7 = inlined_call_operand.vmem [shape: f32[2,4,64,64], index: 7, kind: input, shape index: {}]
  %s8 = inlined_call_operand.vmem [shape: f32[2,9,32], index: 8, kind: input, shape index: {}]
  %s9 = inlined_call_operand.vmem [shape: f32[2,1,64], index: 9, kind: input, shape index: {}]
  %s10 = inlined_call_operand.vmem [shape: f32[512,32], index: 10, kind: output, shape index: {}]
  %s11 = sld [smem:[#allocation0]]
  $region81: #{tpu_custom_call.1} parent=0
    _
  %s13 = ssub.s32 1, %s11
  %s14 = scalar_select 0, %s13, %s11
  loop: start=0, step=1, limit=6
  $region2: #{tpu_custom_call.1} parent=0 // loop_pre_header
    _
  $region3: #{tpu_custom_call.1} parent=0 // loop_header
    %s16 = sphi 0, %s20
    %p17 = scmp.ge.s32.totalorder %s16, 6
    %s23 = sphi 0, %s35
    %s24 = sphi 0, %s31
    %s25 = sphi 0, %s23
    %s26 = sphi 0, %s24
    %s27 = sphi 0, %s25
    %s28 = sphi 0, %s26
    %s38 = sphi 0, %s40
    %s41 = sphi 0, %s38
    %s42 = sphi 0, %s41
    %s58 = sphi 0, %s42
    %s64 = sphi 0, %s66
    %s67 = sphi 0, %s64
    %s68 = sphi 0, %s67
    %s84 = sphi 0, %s68
    %s90 = sphi 0, %s92
    %s93 = sphi 0, %s90
    %s94 = sphi 0, %s93
    %s110 = sphi 0, %s94
    %s116 = sphi 0, %s118
    %s119 = sphi 0, %s116
    %s120 = sphi 0, %s119
    %s136 = sphi 0, %s120
    %s142 = sphi 0, %s144
    %s145 = sphi 0, %s142
    %s146 = sphi 0, %s145
    %s162 = sphi 0, %s146
    %s168 = sphi 0, %s170
    %s171 = sphi 0, %s168
    %s172 = sphi 0, %s171
    %s188 = sphi 0, %s172
    %s194 = sphi 0, %s196
    %s197 = sphi 0, %s194
    %s198 = sphi 0, %s197
    %s214 = sphi 0, %s198
    %s220 = sphi 0, %s222
    %s223 = sphi 0, %s220
    %s224 = sphi 0, %s223
    %s240 = sphi 0, %s224
    %s246 = sphi 0, %s248
    %s249 = sphi 0, %s246
    %s250 = sphi 0, %s249
    %s266 = sphi 0, %s250
    %s272 = sphi 0, %s274
    %s275 = sphi 0, %s272
    %s276 = sphi 0, %s275
    %s292 = sphi 0, %s276
    %s298 = sphi 0, %s300
    %s301 = sphi 0, %s298
    %s302 = sphi 0, %s301
    %s318 = sphi 0, %s302
  $region4: #{tpu_custom_call.1} parent=0 // loop_header_branch
    %19 = sbr.rel (%p17) target = $region8
  $region5: #{tpu_custom_call.1} parent=0 // loop_body
    %s21 = ssub.s32 %s16, 1
    %s22 = ssub.s32 %s16, 2
    %s29 = sadd.s32 1, %s24
    %p30 = scmp.ge.s32.totalorder %s29, 2
    %s31 = scalar_select %p30, 0, %s29
    %s32 = sadd.s32 1, %s23
    %s33 = scalar_select %p30, %s32, %s23
    %p34 = scmp.ge.s32.totalorder %s33, 2
    %s35 = scalar_select %p34, 0, %s33
    %s36 = ssub.s32 %s23, %s35
    %p37 = scmp.eq.s32.totalorder %s36, 0
    %s39 = sadd.s32 %s38, 1
    %s40 = scalar_select %p37, %s38, %s39
    %p43 = pneg %p37
    %p44 = scmp.eq.s32.totalorder %s16, 3
    %p45 = por %p43, %p44
    %p46 = scmp.ne.s32.totalorder %s38, %s41
    %p47 = scmp.eq.s32.totalorder %s16, 0
    %p48 = por %p46, %p47
    %p49 = scmp.ne.s32.totalorder %s38, %s41
    %p50 = scmp.eq.s32.totalorder %s21, 3
    %p51 = por %p49, %p50
    %p52 = scmp.ne.s32.totalorder %s41, %s42
    %p53 = scmp.eq.s32.totalorder %s21, 0
    %p54 = por %p52, %p53
    %p55 = scmp.ne.s32.totalorder %s41, %s42
    %p56 = scmp.eq.s32.totalorder %s22, 3
    %p57 = por %p55, %p56
    %p59 = scmp.ne.s32.totalorder %s42, %s58
    %p60 = scmp.eq.s32.totalorder %s22, 0
    %p61 = por %p59, %p60
    %s62 = ssub.s32 %s23, %s35
    %p63 = scmp.eq.s32.totalorder %s62, 0
    %s65 = sadd.s32 %s64, 1
    %s66 = scalar_select %p63, %s64, %s65
    %p69 = pneg %p63
    %p70 = scmp.eq.s32.totalorder %s16, 3
    %p71 = por %p69, %p70
    %p72 = scmp.ne.s32.totalorder %s64, %s67
    %p73 = scmp.eq.s32.totalorder %s16, 0
    %p74 = por %p72, %p73
    %p75 = scmp.ne.s32.totalorder %s64, %s67
    %p76 = scmp.eq.s32.totalorder %s21, 3
    %p77 = por %p75, %p76
    %p78 = scmp.ne.s32.totalorder %s67, %s68
    %p79 = scmp.eq.s32.totalorder %s21, 0
    %p80 = por %p78, %p79
    %p81 = scmp.ne.s32.totalorder %s67, %s68
    %p82 = scmp.eq.s32.totalorder %s22, 3
    %p83 = por %p81, %p82
    %p85 = scmp.ne.s32.totalorder %s68, %s84
    %p86 = scmp.eq.s32.totalorder %s22, 0
    %p87 = por %p85, %p86
    %s88 = ssub.s32 %s24, %s31
    %p89 = scmp.eq.s32.totalorder %s88, 0
    %s91 = sadd.s32 %s90, 1
    %s92 = scalar_select %p89, %s90, %s91
    %p95 = pneg %p89
    %p96 = scmp.eq.s32.totalorder %s16, 3
    %p97 = por %p95, %p96
    %p98 = scmp.ne.s32.totalorder %s90, %s93
    %p99 = scmp.eq.s32.totalorder %s16, 0
    %p100 = por %p98, %p99
    %p101 = scmp.ne.s32.totalorder %s90, %s93
    %p102 = scmp.eq.s32.totalorder %s21, 3
    %p103 = por %p101, %p102
    %p104 = scmp.ne.s32.totalorder %s93, %s94
    %p105 = scmp.eq.s32.totalorder %s21, 0
    %p106 = por %p104, %p105
    %p107 = scmp.ne.s32.totalorder %s93, %s94
    %p108 = scmp.eq.s32.totalorder %s22, 3
    %p109 = por %p107, %p108
    %p111 = scmp.ne.s32.totalorder %s94, %s110
    %p112 = scmp.eq.s32.totalorder %s22, 0
    %p113 = por %p111, %p112
    %s114 = ssub.s32 %s24, %s31
    %p115 = scmp.eq.s32.totalorder %s114, 0
    %s117 = sadd.s32 %s116, 1
    %s118 = scalar_select %p115, %s116, %s117
    %p121 = pneg %p115
    %p122 = scmp.eq.s32.totalorder %s16, 3
    %p123 = por %p121, %p122
    %p124 = scmp.ne.s32.totalorder %s116, %s119
    %p125 = scmp.eq.s32.totalorder %s16, 0
    %p126 = por %p124, %p125
    %p127 = scmp.ne.s32.totalorder %s116, %s119
    %p128 = scmp.eq.s32.totalorder %s21, 3
    %p129 = por %p127, %p128
    %p130 = scmp.ne.s32.totalorder %s119, %s120
    %p131 = scmp.eq.s32.totalorder %s21, 0
    %p132 = por %p130, %p131
    %p133 = scmp.ne.s32.totalorder %s119, %s120
    %p134 = scmp.eq.s32.totalorder %s22, 3
    %p135 = por %p133, %p134
    %p137 = scmp.ne.s32.totalorder %s120, %s136
    %p138 = scmp.eq.s32.totalorder %s22, 0
    %p139 = por %p137, %p138
    %s140 = ssub.s32 %s24, %s31
    %p141 = scmp.eq.s32.totalorder %s140, 0
    %s143 = sadd.s32 %s142, 1
    %s144 = scalar_select %p141, %s142, %s143
    %p147 = pneg %p141
    %p148 = scmp.eq.s32.totalorder %s16, 3
    %p149 = por %p147, %p148
    %p150 = scmp.ne.s32.totalorder %s142, %s145
    %p151 = scmp.eq.s32.totalorder %s16, 0
    %p152 = por %p150, %p151
    %p153 = scmp.ne.s32.totalorder %s142, %s145
    %p154 = scmp.eq.s32.totalorder %s21, 3
    %p155 = por %p153, %p154
    %p156 = scmp.ne.s32.totalorder %s145, %s146
    %p157 = scmp.eq.s32.totalorder %s21, 0
    %p158 = por %p156, %p157
    %p159 = scmp.ne.s32.totalorder %s145, %s146
    %p160 = scmp.eq.s32.totalorder %s22, 3
    %p161 = por %p159, %p160
    %p163 = scmp.ne.s32.totalorder %s146, %s162
    %p164 = scmp.eq.s32.totalorder %s22, 0
    %p165 = por %p163, %p164
    %s166 = ssub.s32 %s24, %s31
    %p167 = scmp.eq.s32.totalorder %s166, 0
    %s169 = sadd.s32 %s168, 1
    %s170 = scalar_select %p167, %s168, %s169
    %p173 = pneg %p167
    %p174 = scmp.eq.s32.totalorder %s16, 3
    %p175 = por %p173, %p174
    %p176 = scmp.ne.s32.totalorder %s168, %s171
    %p177 = scmp.eq.s32.totalorder %s16, 0
    %p178 = por %p176, %p177
    %p179 = scmp.ne.s32.totalorder %s168, %s171
    %p180 = scmp.eq.s32.totalorder %s21, 3
    %p181 = por %p179, %p180
    %p182 = scmp.ne.s32.totalorder %s171, %s172
    %p183 = scmp.eq.s32.totalorder %s21, 0
    %p184 = por %p182, %p183
    %p185 = scmp.ne.s32.totalorder %s171, %s172
    %p186 = scmp.eq.s32.totalorder %s22, 3
    %p187 = por %p185, %p186
    %p189 = scmp.ne.s32.totalorder %s172, %s188
    %p190 = scmp.eq.s32.totalorder %s22, 0
    %p191 = por %p189, %p190
    %s192 = ssub.s32 %s24, %s31
    %p193 = scmp.eq.s32.totalorder %s192, 0
    %s195 = sadd.s32 %s194, 1
    %s196 = scalar_select %p193, %s194, %s195
    %p199 = pneg %p193
    %p200 = scmp.eq.s32.totalorder %s16, 3
    %p201 = por %p199, %p200
    %p202 = scmp.ne.s32.totalorder %s194, %s197
    %p203 = scmp.eq.s32.totalorder %s16, 0
    %p204 = por %p202, %p203
    %p205 = scmp.ne.s32.totalorder %s194, %s197
    %p206 = scmp.eq.s32.totalorder %s21, 3
    %p207 = por %p205, %p206
    %p208 = scmp.ne.s32.totalorder %s197, %s198
    %p209 = scmp.eq.s32.totalorder %s21, 0
    %p210 = por %p208, %p209
    %p211 = scmp.ne.s32.totalorder %s197, %s198
    %p212 = scmp.eq.s32.totalorder %s22, 3
    %p213 = por %p211, %p212
    %p215 = scmp.ne.s32.totalorder %s198, %s214
    %p216 = scmp.eq.s32.totalorder %s22, 0
    %p217 = por %p215, %p216
    %s218 = ssub.s32 %s24, %s31
    %p219 = scmp.eq.s32.totalorder %s218, 0
    %s221 = sadd.s32 %s220, 1
    %s222 = scalar_select %p219, %s220, %s221
    %p225 = pneg %p219
    %p226 = scmp.eq.s32.totalorder %s16, 3
    %p227 = por %p225, %p226
    %p228 = scmp.ne.s32.totalorder %s220, %s223
    %p229 = scmp.eq.s32.totalorder %s16, 0
    %p230 = por %p228, %p229
    %p231 = scmp.ne.s32.totalorder %s220, %s223
    %p232 = scmp.eq.s32.totalorder %s21, 3
    %p233 = por %p231, %p232
    %p234 = scmp.ne.s32.totalorder %s223, %s224
    %p235 = scmp.eq.s32.totalorder %s21, 0
    %p236 = por %p234, %p235
    %p237 = scmp.ne.s32.totalorder %s223, %s224
    %p238 = scmp.eq.s32.totalorder %s22, 3
    %p239 = por %p237, %p238
    %p241 = scmp.ne.s32.totalorder %s224, %s240
    %p242 = scmp.eq.s32.totalorder %s22, 0
    %p243 = por %p241, %p242
    %s244 = ssub.s32 %s24, %s31
    %p245 = scmp.eq.s32.totalorder %s244, 0
    %s247 = sadd.s32 %s246, 1
    %s248 = scalar_select %p245, %s246, %s247
    %p251 = pneg %p245
    %p252 = scmp.eq.s32.totalorder %s16, 3
    %p253 = por %p251, %p252
    %p254 = scmp.ne.s32.totalorder %s246, %s249
    %p255 = scmp.eq.s32.totalorder %s16, 0
    %p256 = por %p254, %p255
    %p257 = scmp.ne.s32.totalorder %s246, %s249
    %p258 = scmp.eq.s32.totalorder %s21, 3
    %p259 = por %p257, %p258
    %p260 = scmp.ne.s32.totalorder %s249, %s250
    %p261 = scmp.eq.s32.totalorder %s21, 0
    %p262 = por %p260, %p261
    %p263 = scmp.ne.s32.totalorder %s249, %s250
    %p264 = scmp.eq.s32.totalorder %s22, 3
    %p265 = por %p263, %p264
    %p267 = scmp.ne.s32.totalorder %s250, %s266
    %p268 = scmp.eq.s32.totalorder %s22, 0
    %p269 = por %p267, %p268
    %s270 = ssub.s32 %s24, %s31
    %p271 = scmp.eq.s32.totalorder %s270, 0
    %s273 = sadd.s32 %s272, 1
    %s274 = scalar_select %p271, %s272, %s273
    %p277 = pneg %p271
    %p278 = scmp.eq.s32.totalorder %s16, 3
    %p279 = por %p277, %p278
    %p280 = scmp.ne.s32.totalorder %s272, %s275
    %p281 = scmp.eq.s32.totalorder %s16, 0
    %p282 = por %p280, %p281
    %p283 = scmp.ne.s32.totalorder %s272, %s275
    %p284 = scmp.eq.s32.totalorder %s21, 3
    %p285 = por %p283, %p284
    %p286 = scmp.ne.s32.totalorder %s275, %s276
    %p287 = scmp.eq.s32.totalorder %s21, 0
    %p288 = por %p286, %p287
    %p289 = scmp.ne.s32.totalorder %s275, %s276
    %p290 = scmp.eq.s32.totalorder %s22, 3
    %p291 = por %p289, %p290
    %p293 = scmp.ne.s32.totalorder %s276, %s292
    %p294 = scmp.eq.s32.totalorder %s22, 0
    %p295 = por %p293, %p294
    %s296 = ssub.s32 %s23, %s35
    %p297 = scmp.eq.s32.totalorder %s296, 0
    %s299 = sadd.s32 %s298, 1
    %s300 = scalar_select %p297, %s298, %s299
    %p303 = pneg %p297
    %p304 = scmp.eq.s32.totalorder %s16, 3
    %p305 = por %p303, %p304
    %p306 = scmp.ne.s32.totalorder %s298, %s301
    %p307 = scmp.eq.s32.totalorder %s16, 0
    %p308 = por %p306, %p307
    %p309 = scmp.ne.s32.totalorder %s298, %s301
    %p310 = scmp.eq.s32.totalorder %s21, 3
    %p311 = por %p309, %p310
    %p312 = scmp.ne.s32.totalorder %s301, %s302
    %p313 = scmp.eq.s32.totalorder %s21, 0
    %p314 = por %p312, %p313
    %p315 = scmp.ne.s32.totalorder %s301, %s302
    %p316 = scmp.eq.s32.totalorder %s22, 3
    %p317 = por %p315, %p316
    %p319 = scmp.ne.s32.totalorder %s302, %s318
    %p320 = scmp.eq.s32.totalorder %s22, 0
    %p321 = por %p319, %p320
    %p322 = scmp.le.s32.totalorder 1, %s16
    %p323 = scmp.lt.s32.totalorder %s16, 5
    %p324 = pnand %p322, %p323
    %p325 = pneg %p324
    // Predicated region
    $region9: #{tpu_custom_call.1} parent=5 // pred_check
      _
    $region10: #{tpu_custom_call.1} parent=5 // pred_check_branch
      %327 = sbr.rel (%p324) target = $region12
    $region11: #{tpu_custom_call.1} parent=5 // pred_region
      %s328 = ssub.s32 %s16, 1
    $region12: #{tpu_custom_call.1} parent=5 // pred_fallthru
      _
    %p329 = scmp.lt.s32.totalorder %s16, 4
    // Predicated region
    $region13: #{tpu_custom_call.1} parent=5 // pred_check
      %p330 = pneg %p329
    $region14: #{tpu_custom_call.1} parent=5 // pred_check_branch
      %332 = sbr.rel (%p330) target = $region16
    $region15: #{tpu_custom_call.1} parent=5 // pred_region
      // Predicated region
      $region17: #{tpu_custom_call.1} parent=15 // pred_check
        %p333 = pneg %p48
      $region18: #{tpu_custom_call.1} parent=15 // pred_check_branch
        %335 = sbr.rel (%p333) target = $region20
      $region19: #{tpu_custom_call.1} parent=15 // pred_region
        %s336 = smul.u32 32, %s23
        %p337 = scmp.lt.s32.totalorder %s336, 63
        %s338 = scalar_select %p337, %s336, 63
        %s339 = smul.addr %s338, 4
        %s340 = scalar_lea.vmem %s0, %s339
        %s341 = smul.u32 32, %s23
      $region20: #{tpu_custom_call.1} parent=15 // pred_fallthru
        _
      // Predicated region
      $region21: #{tpu_custom_call.1} parent=15 // pred_check
        %p342 = pneg %p74
      $region22: #{tpu_custom_call.1} parent=15 // pred_check_branch
        %344 = sbr.rel (%p342) target = $region24
      $region23: #{tpu_custom_call.1} parent=15 // pred_region
        %s345 = smul.u32 32, %s23
        %p346 = scmp.lt.s32.totalorder %s345, 63
        %s347 = scalar_select %p346, %s345, 63
        %s348 = smul.addr %s347, 4
        %s349 = scalar_lea.vmem %s1, %s348
        %s350 = smul.u32 32, %s23
      $region24: #{tpu_custom_call.1} parent=15 // pred_fallthru
        _
      // Predicated region
      $region25: #{tpu_custom_call.1} parent=15 // pred_check
        %p351 = pneg %p100
      $region26: #{tpu_custom_call.1} parent=15 // pred_check_branch
        %353 = sbr.rel (%p351) target = $region28
      $region27: #{tpu_custom_call.1} parent=15 // pred_region
        %p354 = scmp.lt.s32.totalorder %s24, 1
        %s355 = scalar_select %p354, %s24, 1
        %s356 = smul.addr %s355, 4
        %s357 = smul.addr %s356, 4
        %s358 = scalar_lea.vmem %s2, %s357
      $region28: #{tpu_custom_call.1} parent=15 // pred_fallthru
        _
      // Predicated region
      $region29: #{tpu_custom_call.1} parent=15 // pred_check
        %p359 = pneg %p126
      $region30: #{tpu_custom_call.1} parent=15 // pred_check_branch
        %361 = sbr.rel (%p359) target = $region32
      $region31: #{tpu_custom_call.1} parent=15 // pred_region
        %p362 = scmp.lt.s32.totalorder %s24, 1
        %s363 = scalar_select %p362, %s24, 1
        %s364 = smul.addr %s363, 4
        %s365 = smul.addr %s364, 4
        %s366 = scalar_lea.vmem %s3, %s365
      $region32: #{tpu_custom_call.1} parent=15 // pred_fallthru
        _
      // Predicated region
      $region33: #{tpu_custom_call.1} parent=15 // pred_check
        %p367 = pneg %p152
      $region34: #{tpu_custom_call.1} parent=15 // pred_check_branch
        %369 = sbr.rel (%p367) target = $region36
      $region35: #{tpu_custom_call.1} parent=15 // pred_region
        %p370 = scmp.lt.s32.totalorder %s24, 1
        %s371 = scalar_select %p370, %s24, 1
        %s372 = smul.addr %s371, 4
        %s373 = smul.addr %s372, 4
        %s374 = scalar_lea.vmem %s4, %s373
      $region36: #{tpu_custom_call.1} parent=15 // pred_fallthru
        _
      // Predicated region
      $region37: #{tpu_custom_call.1} parent=15 // pred_check
        %p375 = pneg %p178
      $region38: #{tpu_custom_call.1} parent=15 // pred_check_branch
        %377 = sbr.rel (%p375) target = $region40
      $region39: #{tpu_custom_call.1} parent=15 // pred_region
        %p378 = scmp.lt.s32.totalorder %s24, 1
        %s379 = scalar_select %p378, %s24, 1
        %s380 = smul.addr %s379, 4
        %s381 = smul.addr %s380, 4
        %s382 = scalar_lea.vmem %s5, %s381
      $region40: #{tpu_custom_call.1} parent=15 // pred_fallthru
        _
      // Predicated region
      $region41: #{tpu_custom_call.1} parent=15 // pred_check
        %p383 = pneg %p204
      $region42: #{tpu_custom_call.1} parent=15 // pred_check_branch
        %385 = sbr.rel (%p383) target = $region44
      $region43: #{tpu_custom_call.1} parent=15 // pred_region
        %p386 = scmp.lt.s32.totalorder %s24, 1
        %s387 = scalar_select %p386, %s24, 1
        %s388 = smul.addr %s387, 8
        %s389 = smul.addr %s388, 4
        %s390 = scalar_lea.vmem %s6, %s389
      $region44: #{tpu_custom_call.1} parent=15 // pred_fallthru
        _
      // Predicated region
      $region45: #{tpu_custom_call.1} parent=15 // pred_check
        %p391 = pneg %p230
      $region46: #{tpu_custom_call.1} parent=15 // pred_check_branch
        %393 = sbr.rel (%p391) target = $region48
      $region47: #{tpu_custom_call.1} parent=15 // pred_region
        %p394 = scmp.lt.s32.totalorder %s24, 1
        %s395 = scalar_select %p394, %s24, 1
        %s396 = smul.addr %s395, 32
        %s397 = smul.addr %s396, 8
        %s398 = scalar_lea.vmem %s7, %s397
      $region48: #{tpu_custom_call.1} parent=15 // pred_fallthru
        _
      // Predicated region
      $region49: #{tpu_custom_call.1} parent=15 // pred_check
        %p399 = pneg %p256
      $region50: #{tpu_custom_call.1} parent=15 // pred_check_branch
        %401 = sbr.rel (%p399) target = $region52
      $region51: #{tpu_custom_call.1} parent=15 // pred_region
        %p402 = scmp.lt.s32.totalorder %s24, 1
        %s403 = scalar_select %p402, %s24, 1
        %s404 = smul.addr %s403, 2
        %s405 = smul.addr %s404, 8
        %s406 = scalar_lea.vmem %s8, %s405
      $region52: #{tpu_custom_call.1} parent=15 // pred_fallthru
        _
      // Predicated region
      $region53: #{tpu_custom_call.1} parent=15 // pred_check
        %p407 = pneg %p282
      $region54: #{tpu_custom_call.1} parent=15 // pred_check_branch
        %409 = sbr.rel (%p407) target = $region56
      $region55: #{tpu_custom_call.1} parent=15 // pred_region
        %p410 = scmp.lt.s32.totalorder %s24, 1
        %s411 = scalar_select %p410, %s24, 1
        %s412 = scalar_lea.vmem %s9, %s411
      $region56: #{tpu_custom_call.1} parent=15 // pred_fallthru
        _
    $region16: #{tpu_custom_call.1} parent=5 // pred_fallthru
      _
    %p413 = scmp.le.s32.totalorder 1, %s16
    %p414 = scmp.lt.s32.totalorder %s16, 5
    %p415 = pnand %p413, %p414
    %p416 = pneg %p415
    // Predicated region
    $region57: #{tpu_custom_call.1} parent=5 // pred_check
      _
    $region58: #{tpu_custom_call.1} parent=5 // pred_check_branch
      %418 = sbr.rel (%p415) target = $region60
    $region59: #{tpu_custom_call.1} parent=5 // pred_region
      %s419 = ssub.s32 %s16, 1
      %s420 = smul.u32 32, %s25
      %p421 = scmp.lt.s32.totalorder %s420, 63
      %s422 = scalar_select %p421, %s420, 63
      %s423 = smul.addr %s422, 4
      %s424 = scalar_lea.vmem %s0, %s423
      %p425 = pneg %p54
      %p426 = pneg %p51
      %s427 = smul.u32 32, %s25
      %p428 = scmp.lt.s32.totalorder %s427, 63
      %s429 = scalar_select %p428, %s427, 63
      %s430 = smul.addr %s429, 4
      %s431 = scalar_lea.vmem %s1, %s430
      %p432 = pneg %p80
      %p433 = pneg %p77
      %p434 = scmp.lt.s32.totalorder %s26, 1
      %s435 = scalar_select %p434, %s26, 1
      %s436 = smul.addr %s435, 4
      %s437 = smul.addr %s436, 4
      %s438 = scalar_lea.vmem %s2, %s437
      %p439 = pneg %p106
      %p440 = pneg %p103
      %p441 = scmp.lt.s32.totalorder %s26, 1
      %s442 = scalar_select %p441, %s26, 1
      %s443 = smul.addr %s442, 4
      %s444 = smul.addr %s443, 4
      %s445 = scalar_lea.vmem %s3, %s444
      %p446 = pneg %p132
      %p447 = pneg %p129
      %p448 = scmp.lt.s32.totalorder %s26, 1
      %s449 = scalar_select %p448, %s26, 1
      %s450 = smul.addr %s449, 4
      %s451 = smul.addr %s450, 4
      %s452 = scalar_lea.vmem %s4, %s451
      %p453 = pneg %p158
      %p454 = pneg %p155
      %p455 = scmp.lt.s32.totalorder %s26, 1
      %s456 = scalar_select %p455, %s26, 1
      %s457 = smul.addr %s456, 4
      %s458 = smul.addr %s457, 4
      %s459 = scalar_lea.vmem %s5, %s458
      %p460 = pneg %p184
      %p461 = pneg %p181
      %p462 = scmp.lt.s32.totalorder %s26, 1
      %s463 = scalar_select %p462, %s26, 1
      %s464 = smul.addr %s463, 8
      %s465 = smul.addr %s464, 4
      %s466 = scalar_lea.vmem %s6, %s465
      %p467 = pneg %p210
      %p468 = pneg %p207
      %p469 = scmp.lt.s32.totalorder %s26, 1
      %s470 = scalar_select %p469, %s26, 1
      %s471 = smul.addr %s470, 32
      %s472 = smul.addr %s471, 8
      %s473 = scalar_lea.vmem %s7, %s472
      %p474 = pneg %p236
      %p475 = pneg %p233
      %p476 = scmp.lt.s32.totalorder %s26, 1
      %s477 = scalar_select %p476, %s26, 1
      %s478 = smul.addr %s477, 2
      %s479 = smul.addr %s478, 8
      %s480 = scalar_lea.vmem %s8, %s479
      %p481 = pneg %p262
      %p482 = pneg %p259
      %p483 = scmp.lt.s32.totalorder %s26, 1
      %s484 = scalar_select %p483, %s26, 1
      %s485 = scalar_lea.vmem %s9, %s484
      %p486 = pneg %p288
      %p487 = pneg %p285
      %p488 = pneg %p314
      %p489 = pneg %p311
      %s490 = smul.u32 32, %s25
      %p491 = scmp.lt.s32.totalorder %s490, 63
      %s492 = scalar_select %p491, %s490, 63
      %s493 = smul.addr %s492, 8
      %s494 = scalar_lea.vmem %s10, %s493
      %s495 = smul.u32 32, %s25
      %p496 = scmp.lt.s32.totalorder %s495, 63
      %s497 = scalar_select %p496, %s495, 63
      %s498 = smul.addr %s497, 4
      %s499 = scalar_lea.vmem %s0, %s498
      %s500 = smul.u32 32, %s25
      %s501 = smul.u32 32, %s25
      %p502 = scmp.lt.s32.totalorder %s501, 63
      %s503 = scalar_select %p502, %s501, 63
      %s504 = smul.addr %s503, 4
      %s505 = scalar_lea.vmem %s1, %s504
      %s506 = smul.u32 32, %s25
      %p507 = scmp.lt.s32.totalorder %s26, 1
      %s508 = scalar_select %p507, %s26, 1
      %s509 = smul.addr %s508, 4
      %s510 = smul.addr %s509, 4
      %s511 = scalar_lea.vmem %s2, %s510
      %p512 = scmp.lt.s32.totalorder %s26, 1
      %s513 = scalar_select %p512, %s26, 1
      %s514 = smul.addr %s513, 4
      %s515 = smul.addr %s514, 4
      %s516 = scalar_lea.vmem %s3, %s515
      %p517 = scmp.lt.s32.totalorder %s26, 1
      %s518 = scalar_select %p517, %s26, 1
      %s519 = smul.addr %s518, 4
      %s520 = smul.addr %s519, 4
      %s521 = scalar_lea.vmem %s4, %s520
      %p522 = scmp.lt.s32.totalorder %s26, 1
      %s523 = scalar_select %p522, %s26, 1
      %s524 = smul.addr %s523, 4
      %s525 = smul.addr %s524, 4
      %s526 = scalar_lea.vmem %s5, %s525
      %p527 = scmp.lt.s32.totalorder %s26, 1
      %s528 = scalar_select %p527, %s26, 1
      %s529 = smul.addr %s528, 8
      %s530 = smul.addr %s529, 4
      %s531 = scalar_lea.vmem %s6, %s530
      %p532 = scmp.lt.s32.totalorder %s26, 1
      %s533 = scalar_select %p532, %s26, 1
      %s534 = smul.addr %s533, 32
      %s535 = smul.addr %s534, 8
      %s536 = scalar_lea.vmem %s7, %s535
      %p537 = scmp.lt.s32.totalorder %s26, 1
      %s538 = scalar_select %p537, %s26, 1
      %s539 = smul.addr %s538, 2
      %s540 = smul.addr %s539, 8
      %s541 = scalar_lea.vmem %s8, %s540
      %p542 = scmp.lt.s32.totalorder %s26, 1
      %s543 = scalar_select %p542, %s26, 1
      %s544 = scalar_lea.vmem %s9, %s543
      %s545 = smul.u32 32, %s25
      %p546 = scmp.lt.s32.totalorder %s545, 63
      %s547 = scalar_select %p546, %s545, 63
      %s548 = smul.addr %s547, 8
      %s549 = scalar_lea.vmem %s10, %s548
      %s550 = smul.u32 32, %s25
      %p552 = scmp.eq.s32.totalorder %s26, 0
      // Predicated region
      $region61: #{tpu_custom_call.1} parent=59 // pred_check
        %p553 = pneg %p552
      $region62: #{tpu_custom_call.1} parent=59 // pred_check_branch
        %555 = sbr.rel (%p553) target = $region64
      $region63: #{tpu_custom_call.1} parent=59 // pred_region
        %v556 = vld [vmem:[%s499] sm:$0xf]
        %v557 = vld [vmem:[%s499 + $0x4] sm:$0xf]
        %v558 = vld [vmem:[%s499 + $0x8] sm:$0xf]
        %v559 = vld [vmem:[%s499 + $0xc] sm:$0xf]
        %v560 = vld [vmem:[%s499 + $0x10] sm:$0xf]
        %v561 = vld [vmem:[%s499 + $0x14] sm:$0xf]
        %v562 = vld [vmem:[%s499 + $0x18] sm:$0xf]
        %v563 = vld [vmem:[%s499 + $0x1c] sm:$0xf]
        %v564 = vld [vmem:[%s499 + $0x20] sm:$0xf]
        %v565 = vld [vmem:[%s499 + $0x24] sm:$0xf]
        %v566 = vld [vmem:[%s499 + $0x28] sm:$0xf]
        %v567 = vld [vmem:[%s499 + $0x2c] sm:$0xf]
        %v568 = vld [vmem:[%s499 + $0x30] sm:$0xf]
        %v569 = vld [vmem:[%s499 + $0x34] sm:$0xf]
        %v570 = vld [vmem:[%s499 + $0x38] sm:$0xf]
        %v571 = vld [vmem:[%s499 + $0x3c] sm:$0xf]
        %v572 = vld [vmem:[%s499 + $0x40] sm:$0xf]
        %v573 = vld [vmem:[%s499 + $0x44] sm:$0xf]
        %v574 = vld [vmem:[%s499 + $0x48] sm:$0xf]
        %v575 = vld [vmem:[%s499 + $0x4c] sm:$0xf]
        %v576 = vld [vmem:[%s499 + $0x50] sm:$0xf]
        %v577 = vld [vmem:[%s499 + $0x54] sm:$0xf]
        %v578 = vld [vmem:[%s499 + $0x58] sm:$0xf]
        %v579 = vld [vmem:[%s499 + $0x5c] sm:$0xf]
        %v580 = vld [vmem:[%s499 + $0x60] sm:$0xf]
        %v581 = vld [vmem:[%s499 + $0x64] sm:$0xf]
        %v582 = vld [vmem:[%s499 + $0x68] sm:$0xf]
        %v583 = vld [vmem:[%s499 + $0x6c] sm:$0xf]
        %v584 = vld [vmem:[%s499 + $0x70] sm:$0xf]
        %v585 = vld [vmem:[%s499 + $0x74] sm:$0xf]
        %v586 = vld [vmem:[%s499 + $0x78] sm:$0xf]
        %v587 = vld [vmem:[%s499 + $0x7c] sm:$0xf]
        %v588 = vunpack.c.l.bf16 %v556
        %v589 = vunpack.c.l.bf16 %v557
        %v590 = vunpack.c.l.bf16 %v558
        %v591 = vunpack.c.l.bf16 %v559
        %v592 = vunpack.c.l.bf16 %v560
        %v593 = vunpack.c.l.bf16 %v561
        %v594 = vunpack.c.l.bf16 %v562
        %v595 = vunpack.c.l.bf16 %v563
        %v596 = vunpack.c.l.bf16 %v564
        %v597 = vunpack.c.l.bf16 %v565
        %v598 = vunpack.c.l.bf16 %v566
        %v599 = vunpack.c.l.bf16 %v567
        %v600 = vunpack.c.l.bf16 %v568
        %v601 = vunpack.c.l.bf16 %v569
        %v602 = vunpack.c.l.bf16 %v570
        %v603 = vunpack.c.l.bf16 %v571
        %v604 = vunpack.c.l.bf16 %v572
        %v605 = vunpack.c.l.bf16 %v573
        %v606 = vunpack.c.l.bf16 %v574
        %v607 = vunpack.c.l.bf16 %v575
        %v608 = vunpack.c.l.bf16 %v576
        %v609 = vunpack.c.l.bf16 %v577
        %v610 = vunpack.c.l.bf16 %v578
        %v611 = vunpack.c.l.bf16 %v579
        %v612 = vunpack.c.l.bf16 %v580
        %v613 = vunpack.c.l.bf16 %v581
        %v614 = vunpack.c.l.bf16 %v582
        %v615 = vunpack.c.l.bf16 %v583
        %v616 = vunpack.c.l.bf16 %v584
        %v617 = vunpack.c.l.bf16 %v585
        %v618 = vunpack.c.l.bf16 %v586
        %v619 = vunpack.c.l.bf16 %v587
        %vm620 = vcmask 261120
        %621 = vst.msk [vmem:[#allocation2] sm:$0xff] %vm620, %v588
        %622 = vst.msk [vmem:[#allocation2 + $0x8] sm:$0xff] %vm620, %v589
        %623 = vst.msk [vmem:[#allocation2 + $0x10] sm:$0xff] %vm620, %v590
        %624 = vst.msk [vmem:[#allocation2 + $0x18] sm:$0xff] %vm620, %v591
        %625 = vst.msk [vmem:[#allocation2 + $0x20] sm:$0xff] %vm620, %v592
        %626 = vst.msk [vmem:[#allocation2 + $0x28] sm:$0xff] %vm620, %v593
        %627 = vst.msk [vmem:[#allocation2 + $0x30] sm:$0xff] %vm620, %v594
        %628 = vst.msk [vmem:[#allocation2 + $0x38] sm:$0xff] %vm620, %v595
        %629 = vst.msk [vmem:[#allocation2 + $0x40] sm:$0xff] %vm620, %v596
        %630 = vst.msk [vmem:[#allocation2 + $0x48] sm:$0xff] %vm620, %v597
        %631 = vst.msk [vmem:[#allocation2 + $0x50] sm:$0xff] %vm620, %v598
        %632 = vst.msk [vmem:[#allocation2 + $0x58] sm:$0xff] %vm620, %v599
        %633 = vst.msk [vmem:[#allocation2 + $0x60] sm:$0xff] %vm620, %v600
        %634 = vst.msk [vmem:[#allocation2 + $0x68] sm:$0xff] %vm620, %v601
        %635 = vst.msk [vmem:[#allocation2 + $0x70] sm:$0xff] %vm620, %v602
        %636 = vst.msk [vmem:[#allocation2 + $0x78] sm:$0xff] %vm620, %v603
        %637 = vst.msk [vmem:[#allocation2 + $0x80] sm:$0xff] %vm620, %v604
        %638 = vst.msk [vmem:[#allocation2 + $0x88] sm:$0xff] %vm620, %v605
        %639 = vst.msk [vmem:[#allocation2 + $0x90] sm:$0xff] %vm620, %v606
        %640 = vst.msk [vmem:[#allocation2 + $0x98] sm:$0xff] %vm620, %v607
        %641 = vst.msk [vmem:[#allocation2 + $0xa0] sm:$0xff] %vm620, %v608
        %642 = vst.msk [vmem:[#allocation2 + $0xa8] sm:$0xff] %vm620, %v609
        %643 = vst.msk [vmem:[#allocation2 + $0xb0] sm:$0xff] %vm620, %v610
        %644 = vst.msk [vmem:[#allocation2 + $0xb8] sm:$0xff] %vm620, %v611
        %645 = vst.msk [vmem:[#allocation2 + $0xc0] sm:$0xff] %vm620, %v612
        %646 = vst.msk [vmem:[#allocation2 + $0xc8] sm:$0xff] %vm620, %v613
        %647 = vst.msk [vmem:[#allocation2 + $0xd0] sm:$0xff] %vm620, %v614
        %648 = vst.msk [vmem:[#allocation2 + $0xd8] sm:$0xff] %vm620, %v615
        %649 = vst.msk [vmem:[#allocation2 + $0xe0] sm:$0xff] %vm620, %v616
        %650 = vst.msk [vmem:[#allocation2 + $0xe8] sm:$0xff] %vm620, %v617
        %651 = vst.msk [vmem:[#allocation2 + $0xf0] sm:$0xff] %vm620, %v618
        %652 = vst.msk [vmem:[#allocation2 + $0xf8] sm:$0xff] %vm620, %v619
        %v653 = vld [vmem:[%s505] sm:$0xf]
        %v654 = vld [vmem:[%s505 + $0x4] sm:$0xf]
        %v655 = vld [vmem:[%s505 + $0x8] sm:$0xf]
        %v656 = vld [vmem:[%s505 + $0xc] sm:$0xf]
        %v657 = vld [vmem:[%s505 + $0x10] sm:$0xf]
        %v658 = vld [vmem:[%s505 + $0x14] sm:$0xf]
        %v659 = vld [vmem:[%s505 + $0x18] sm:$0xf]
        %v660 = vld [vmem:[%s505 + $0x1c] sm:$0xf]
        %v661 = vld [vmem:[%s505 + $0x20] sm:$0xf]
        %v662 = vld [vmem:[%s505 + $0x24] sm:$0xf]
        %v663 = vld [vmem:[%s505 + $0x28] sm:$0xf]
        %v664 = vld [vmem:[%s505 + $0x2c] sm:$0xf]
        %v665 = vld [vmem:[%s505 + $0x30] sm:$0xf]
        %v666 = vld [vmem:[%s505 + $0x34] sm:$0xf]
        %v667 = vld [vmem:[%s505 + $0x38] sm:$0xf]
        %v668 = vld [vmem:[%s505 + $0x3c] sm:$0xf]
        %v669 = vld [vmem:[%s505 + $0x40] sm:$0xf]
        %v670 = vld [vmem:[%s505 + $0x44] sm:$0xf]
        %v671 = vld [vmem:[%s505 + $0x48] sm:$0xf]
        %v672 = vld [vmem:[%s505 + $0x4c] sm:$0xf]
        %v673 = vld [vmem:[%s505 + $0x50] sm:$0xf]
        %v674 = vld [vmem:[%s505 + $0x54] sm:$0xf]
        %v675 = vld [vmem:[%s505 + $0x58] sm:$0xf]
        %v676 = vld [vmem:[%s505 + $0x5c] sm:$0xf]
        %v677 = vld [vmem:[%s505 + $0x60] sm:$0xf]
        %v678 = vld [vmem:[%s505 + $0x64] sm:$0xf]
        %v679 = vld [vmem:[%s505 + $0x68] sm:$0xf]
        %v680 = vld [vmem:[%s505 + $0x6c] sm:$0xf]
        %v681 = vld [vmem:[%s505 + $0x70] sm:$0xf]
        %v682 = vld [vmem:[%s505 + $0x74] sm:$0xf]
        %v683 = vld [vmem:[%s505 + $0x78] sm:$0xf]
        %v684 = vld [vmem:[%s505 + $0x7c] sm:$0xf]
        %v685 = vunpack.c.l.bf16 %v653
        %v686 = vunpack.c.l.bf16 %v654
        %v687 = vunpack.c.l.bf16 %v655
        %v688 = vunpack.c.l.bf16 %v656
        %v689 = vunpack.c.l.bf16 %v657
        %v690 = vunpack.c.l.bf16 %v658
        %v691 = vunpack.c.l.bf16 %v659
        %v692 = vunpack.c.l.bf16 %v660
        %v693 = vunpack.c.l.bf16 %v661
        %v694 = vunpack.c.l.bf16 %v662
        %v695 = vunpack.c.l.bf16 %v663
        %v696 = vunpack.c.l.bf16 %v664
        %v697 = vunpack.c.l.bf16 %v665
        %v698 = vunpack.c.l.bf16 %v666
        %v699 = vunpack.c.l.bf16 %v667
        %v700 = vunpack.c.l.bf16 %v668
        %v701 = vunpack.c.l.bf16 %v669
        %v702 = vunpack.c.l.bf16 %v670
        %v703 = vunpack.c.l.bf16 %v671
        %v704 = vunpack.c.l.bf16 %v672
        %v705 = vunpack.c.l.bf16 %v673
        %v706 = vunpack.c.l.bf16 %v674
        %v707 = vunpack.c.l.bf16 %v675
        %v708 = vunpack.c.l.bf16 %v676
        %v709 = vunpack.c.l.bf16 %v677
        %v710 = vunpack.c.l.bf16 %v678
        %v711 = vunpack.c.l.bf16 %v679
        %v712 = vunpack.c.l.bf16 %v680
        %v713 = vunpack.c.l.bf16 %v681
        %v714 = vunpack.c.l.bf16 %v682
        %v715 = vunpack.c.l.bf16 %v683
        %v716 = vunpack.c.l.bf16 %v684
        %717 = vst.msk [vmem:[#allocation3] sm:$0xff] %vm620, %v685
        %718 = vst.msk [vmem:[#allocation3 + $0x8] sm:$0xff] %vm620, %v686
        %719 = vst.msk [vmem:[#allocation3 + $0x10] sm:$0xff] %vm620, %v687
        %720 = vst.msk [vmem:[#allocation3 + $0x18] sm:$0xff] %vm620, %v688
        %721 = vst.msk [vmem:[#allocation3 + $0x20] sm:$0xff] %vm620, %v689
        %722 = vst.msk [vmem:[#allocation3 + $0x28] sm:$0xff] %vm620, %v690
        %723 = vst.msk [vmem:[#allocation3 + $0x30] sm:$0xff] %vm620, %v691
        %724 = vst.msk [vmem:[#allocation3 + $0x38] sm:$0xff] %vm620, %v692
        %725 = vst.msk [vmem:[#allocation3 + $0x40] sm:$0xff] %vm620, %v693
        %726 = vst.msk [vmem:[#allocation3 + $0x48] sm:$0xff] %vm620, %v694
        %727 = vst.msk [vmem:[#allocation3 + $0x50] sm:$0xff] %vm620, %v695
        %728 = vst.msk [vmem:[#allocation3 + $0x58] sm:$0xff] %vm620, %v696
        %729 = vst.msk [vmem:[#allocation3 + $0x60] sm:$0xff] %vm620, %v697
        %730 = vst.msk [vmem:[#allocation3 + $0x68] sm:$0xff] %vm620, %v698
        %731 = vst.msk [vmem:[#allocation3 + $0x70] sm:$0xff] %vm620, %v699
        %732 = vst.msk [vmem:[#allocation3 + $0x78] sm:$0xff] %vm620, %v700
        %733 = vst.msk [vmem:[#allocation3 + $0x80] sm:$0xff] %vm620, %v701
        %734 = vst.msk [vmem:[#allocation3 + $0x88] sm:$0xff] %vm620, %v702
        %735 = vst.msk [vmem:[#allocation3 + $0x90] sm:$0xff] %vm620, %v703
        %736 = vst.msk [vmem:[#allocation3 + $0x98] sm:$0xff] %vm620, %v704
        %737 = vst.msk [vmem:[#allocation3 + $0xa0] sm:$0xff] %vm620, %v705
        %738 = vst.msk [vmem:[#allocation3 + $0xa8] sm:$0xff] %vm620, %v706
        %739 = vst.msk [vmem:[#allocation3 + $0xb0] sm:$0xff] %vm620, %v707
        %740 = vst.msk [vmem:[#allocation3 + $0xb8] sm:$0xff] %vm620, %v708
        %741 = vst.msk [vmem:[#allocation3 + $0xc0] sm:$0xff] %vm620, %v709
        %742 = vst.msk [vmem:[#allocation3 + $0xc8] sm:$0xff] %vm620, %v710
        %743 = vst.msk [vmem:[#allocation3 + $0xd0] sm:$0xff] %vm620, %v711
        %744 = vst.msk [vmem:[#allocation3 + $0xd8] sm:$0xff] %vm620, %v712
        %745 = vst.msk [vmem:[#allocation3 + $0xe0] sm:$0xff] %vm620, %v713
        %746 = vst.msk [vmem:[#allocation3 + $0xe8] sm:$0xff] %vm620, %v714
        %747 = vst.msk [vmem:[#allocation3 + $0xf0] sm:$0xff] %vm620, %v715
        %748 = vst.msk [vmem:[#allocation3 + $0xf8] sm:$0xff] %vm620, %v716
      $region64: #{tpu_custom_call.1} parent=59 // pred_fallthru
        _
      %v749 = vld [vmem:[%s541] sm:$0xff]
      %v750 = vld [vmem:[%s541 + $0x8] sm:$0x1]
      %v751 = vld [vmem:[#allocation2] sm:$0xff]
      %v752 = vld [vmem:[#allocation2 + $0x8] sm:$0xff]
      %v753 = vld [vmem:[#allocation2 + $0x10] sm:$0xff]
      %v754 = vld [vmem:[#allocation2 + $0x18] sm:$0xff]
      %v755 = vld [vmem:[#allocation2 + $0x20] sm:$0xff]
      %v756 = vld [vmem:[#allocation2 + $0x28] sm:$0xff]
      %v757 = vld [vmem:[#allocation2 + $0x30] sm:$0xff]
      %v758 = vld [vmem:[#allocation2 + $0x38] sm:$0xff]
      %v759 = vld [vmem:[#allocation2 + $0x40] sm:$0xff]
      %v760 = vld [vmem:[#allocation2 + $0x48] sm:$0xff]
      %v761 = vld [vmem:[#allocation2 + $0x50] sm:$0xff]
      %v762 = vld [vmem:[#allocation2 + $0x58] sm:$0xff]
      %v763 = vld [vmem:[#allocation2 + $0x60] sm:$0xff]
      %v764 = vld [vmem:[#allocation2 + $0x68] sm:$0xff]
      %v765 = vld [vmem:[#allocation2 + $0x70] sm:$0xff]
      %v766 = vld [vmem:[#allocation2 + $0x78] sm:$0xff]
      %v767 = vld [vmem:[#allocation2 + $0x80] sm:$0xff]
      %v768 = vld [vmem:[#allocation2 + $0x88] sm:$0xff]
      %v769 = vld [vmem:[#allocation2 + $0x90] sm:$0xff]
      %v770 = vld [vmem:[#allocation2 + $0x98] sm:$0xff]
      %v771 = vld [vmem:[#allocation2 + $0xa0] sm:$0xff]
      %v772 = vld [vmem:[#allocation2 + $0xa8] sm:$0xff]
      %v773 = vld [vmem:[#allocation2 + $0xb0] sm:$0xff]
      %v774 = vld [vmem:[#allocation2 + $0xb8] sm:$0xff]
      %v775 = vld [vmem:[#allocation2 + $0xc0] sm:$0xff]
      %v776 = vld [vmem:[#allocation2 + $0xc8] sm:$0xff]
      %v777 = vld [vmem:[#allocation2 + $0xd0] sm:$0xff]
      %v778 = vld [vmem:[#allocation2 + $0xd8] sm:$0xff]
      %v779 = vld [vmem:[#allocation2 + $0xe0] sm:$0xff]
      %v780 = vld [vmem:[#allocation2 + $0xe8] sm:$0xff]
      %v781 = vld [vmem:[#allocation2 + $0xf0] sm:$0xff]
      %v782 = vld [vmem:[#allocation2 + $0xf8] sm:$0xff]
      %vm783 = vcmask 261120
      %v784 = vsel %vm783, %v751, 0.0
      %785 = vadd.xlane.f32.xlu0 %v784
      %v786 = vpop.xlane.xlu0 %785
      %v787 = vsel %vm783, %v752, 0.0
      %788 = vadd.xlane.f32.xlu0 %v787
      %v789 = vpop.xlane.xlu0 %788
      %v790 = vsel %vm783, %v753, 0.0
      %791 = vadd.xlane.f32.xlu0 %v790
      %v792 = vpop.xlane.xlu0 %791
      %v793 = vsel %vm783, %v754, 0.0
      %794 = vadd.xlane.f32.xlu0 %v793
      %v795 = vpop.xlane.xlu0 %794
      %v796 = vsel %vm783, %v755, 0.0
      %797 = vadd.xlane.f32.xlu0 %v796
      %v798 = vpop.xlane.xlu0 %797
      %v799 = vsel %vm783, %v756, 0.0
      %800 = vadd.xlane.f32.xlu0 %v799
      %v801 = vpop.xlane.xlu0 %800
      %v802 = vsel %vm783, %v757, 0.0
      %803 = vadd.xlane.f32.xlu0 %v802
      %v804 = vpop.xlane.xlu0 %803
      %v805 = vsel %vm783, %v758, 0.0
      %806 = vadd.xlane.f32.xlu0 %v805
      %v807 = vpop.xlane.xlu0 %806
      %v808 = vsel %vm783, %v759, 0.0
      %809 = vadd.xlane.f32.xlu0 %v808
      %v810 = vpop.xlane.xlu0 %809
      %v811 = vsel %vm783, %v760, 0.0
      %812 = vadd.xlane.f32.xlu0 %v811
      %v813 = vpop.xlane.xlu0 %812
      %v814 = vsel %vm783, %v761, 0.0
      %815 = vadd.xlane.f32.xlu0 %v814
      %v816 = vpop.xlane.xlu0 %815
      %v817 = vsel %vm783, %v762, 0.0
      %818 = vadd.xlane.f32.xlu0 %v817
      %v819 = vpop.xlane.xlu0 %818
      %v820 = vsel %vm783, %v763, 0.0
      %821 = vadd.xlane.f32.xlu0 %v820
      %v822 = vpop.xlane.xlu0 %821
      %v823 = vsel %vm783, %v764, 0.0
      %824 = vadd.xlane.f32.xlu0 %v823
      %v825 = vpop.xlane.xlu0 %824
      %v826 = vsel %vm783, %v765, 0.0
      %827 = vadd.xlane.f32.xlu0 %v826
      %v828 = vpop.xlane.xlu0 %827
      %v829 = vsel %vm783, %v766, 0.0
      %830 = vadd.xlane.f32.xlu0 %v829
      %v831 = vpop.xlane.xlu0 %830
      %v832 = vsel %vm783, %v767, 0.0
      %833 = vadd.xlane.f32.xlu0 %v832
      %v834 = vpop.xlane.xlu0 %833
      %v835 = vsel %vm783, %v768, 0.0
      %836 = vadd.xlane.f32.xlu0 %v835
      %v837 = vpop.xlane.xlu0 %836
      %v838 = vsel %vm783, %v769, 0.0
      %839 = vadd.xlane.f32.xlu0 %v838
      %v840 = vpop.xlane.xlu0 %839
      %v841 = vsel %vm783, %v770, 0.0
      %842 = vadd.xlane.f32.xlu0 %v841
      %v843 = vpop.xlane.xlu0 %842
      %v844 = vsel %vm783, %v771, 0.0
      %845 = vadd.xlane.f32.xlu0 %v844
      %v846 = vpop.xlane.xlu0 %845
      %v847 = vsel %vm783, %v772, 0.0
      %848 = vadd.xlane.f32.xlu0 %v847
      %v849 = vpop.xlane.xlu0 %848
      %v850 = vsel %vm783, %v773, 0.0
      %851 = vadd.xlane.f32.xlu0 %v850
      %v852 = vpop.xlane.xlu0 %851
      %v853 = vsel %vm783, %v774, 0.0
      %854 = vadd.xlane.f32.xlu0 %v853
      %v855 = vpop.xlane.xlu0 %854
      %v856 = vsel %vm783, %v775, 0.0
      %857 = vadd.xlane.f32.xlu0 %v856
      %v858 = vpop.xlane.xlu0 %857
      %v859 = vsel %vm783, %v776, 0.0
      %860 = vadd.xlane.f32.xlu0 %v859
      %v861 = vpop.xlane.xlu0 %860
      %v862 = vsel %vm783, %v777, 0.0
      %863 = vadd.xlane.f32.xlu0 %v862
      %v864 = vpop.xlane.xlu0 %863
      %v865 = vsel %vm783, %v778, 0.0
      %866 = vadd.xlane.f32.xlu0 %v865
      %v867 = vpop.xlane.xlu0 %866
      %v868 = vsel %vm783, %v779, 0.0
      %869 = vadd.xlane.f32.xlu0 %v868
      %v870 = vpop.xlane.xlu0 %869
      %v871 = vsel %vm783, %v780, 0.0
      %872 = vadd.xlane.f32.xlu0 %v871
      %v873 = vpop.xlane.xlu0 %872
      %v874 = vsel %vm783, %v781, 0.0
      %875 = vadd.xlane.f32.xlu0 %v874
      %v876 = vpop.xlane.xlu0 %875
      %v877 = vsel %vm783, %v782, 0.0
      %878 = vadd.xlane.f32.xlu0 %v877
      %v879 = vpop.xlane.xlu0 %878
      %v880 = vrcp.pop 32.0
      %v881 = vmul.f32 %v786, %v880
      %v882 = vmul.f32 %v789, %v880
      %v883 = vmul.f32 %v792, %v880
      %v884 = vmul.f32 %v795, %v880
      %v885 = vmul.f32 %v798, %v880
      %v886 = vmul.f32 %v801, %v880
      %v887 = vmul.f32 %v804, %v880
      %v888 = vmul.f32 %v807, %v880
      %v889 = vmul.f32 %v810, %v880
      %v890 = vmul.f32 %v813, %v880
      %v891 = vmul.f32 %v816, %v880
      %v892 = vmul.f32 %v819, %v880
      %v893 = vmul.f32 %v822, %v880
      %v894 = vmul.f32 %v825, %v880
      %v895 = vmul.f32 %v828, %v880
      %v896 = vmul.f32 %v831, %v880
      %v897 = vmul.f32 %v834, %v880
      %v898 = vmul.f32 %v837, %v880
      %v899 = vmul.f32 %v840, %v880
      %v900 = vmul.f32 %v843, %v880
      %v901 = vmul.f32 %v846, %v880
      %v902 = vmul.f32 %v849, %v880
      %v903 = vmul.f32 %v852, %v880
      %v904 = vmul.f32 %v855, %v880
      %v905 = vmul.f32 %v858, %v880
      %v906 = vmul.f32 %v861, %v880
      %v907 = vmul.f32 %v864, %v880
      %v908 = vmul.f32 %v867, %v880
      %v909 = vmul.f32 %v870, %v880
      %v910 = vmul.f32 %v873, %v880
      %v911 = vmul.f32 %v876, %v880
      %v912 = vmul.f32 %v879, %v880
      %v913 = vsub.f32 %v751, %v881
      %v914 = vsub.f32 %v752, %v882
      %v915 = vsub.f32 %v753, %v883
      %v916 = vsub.f32 %v754, %v884
      %v917 = vsub.f32 %v755, %v885
      %v918 = vsub.f32 %v756, %v886
      %v919 = vsub.f32 %v757, %v887
      %v920 = vsub.f32 %v758, %v888
      %v921 = vsub.f32 %v759, %v889
      %v922 = vsub.f32 %v760, %v890
      %v923 = vsub.f32 %v761, %v891
      %v924 = vsub.f32 %v762, %v892
      %v925 = vsub.f32 %v763, %v893
      %v926 = vsub.f32 %v764, %v894
      %v927 = vsub.f32 %v765, %v895
      %v928 = vsub.f32 %v766, %v896
      %v929 = vsub.f32 %v767, %v897
      %v930 = vsub.f32 %v768, %v898
      %v931 = vsub.f32 %v769, %v899
      %v932 = vsub.f32 %v770, %v900
      %v933 = vsub.f32 %v771, %v901
      %v934 = vsub.f32 %v772, %v902
      %v935 = vsub.f32 %v773, %v903
      %v936 = vsub.f32 %v774, %v904
      %v937 = vsub.f32 %v775, %v905
      %v938 = vsub.f32 %v776, %v906
      %v939 = vsub.f32 %v777, %v907
      %v940 = vsub.f32 %v778, %v908
      %v941 = vsub.f32 %v779, %v909
      %v942 = vsub.f32 %v780, %v910
      %v943 = vsub.f32 %v781, %v911
      %v944 = vsub.f32 %v782, %v912
      %v945 = vmul.f32 %v913, %v913
      %v946 = vmul.f32 %v914, %v914
      %v947 = vmul.f32 %v915, %v915
      %v948 = vmul.f32 %v916, %v916
      %v949 = vmul.f32 %v917, %v917
      %v950 = vmul.f32 %v918, %v918
      %v951 = vmul.f32 %v919, %v919
      %v952 = vmul.f32 %v920, %v920
      %v953 = vmul.f32 %v921, %v921
      %v954 = vmul.f32 %v922, %v922
      %v955 = vmul.f32 %v923, %v923
      %v956 = vmul.f32 %v924, %v924
      %v957 = vmul.f32 %v925, %v925
      %v958 = vmul.f32 %v926, %v926
      %v959 = vmul.f32 %v927, %v927
      %v960 = vmul.f32 %v928, %v928
      %v961 = vmul.f32 %v929, %v929
      %v962 = vmul.f32 %v930, %v930
      %v963 = vmul.f32 %v931, %v931
      %v964 = vmul.f32 %v932, %v932
      %v965 = vmul.f32 %v933, %v933
      %v966 = vmul.f32 %v934, %v934
      %v967 = vmul.f32 %v935, %v935
      %v968 = vmul.f32 %v936, %v936
      %v969 = vmul.f32 %v937, %v937
      %v970 = vmul.f32 %v938, %v938
      %v971 = vmul.f32 %v939, %v939
      %v972 = vmul.f32 %v940, %v940
      %v973 = vmul.f32 %v941, %v941
      %v974 = vmul.f32 %v942, %v942
      %v975 = vmul.f32 %v943, %v943
      %v976 = vmul.f32 %v944, %v944
      %v977 = vsel %vm783, %v945, 0.0
      %978 = vadd.xlane.f32.xlu0 %v977
      %v979 = vpop.xlane.xlu0 %978
      %v980 = vsel %vm783, %v946, 0.0
      %981 = vadd.xlane.f32.xlu0 %v980
      %v982 = vpop.xlane.xlu0 %981
      %v983 = vsel %vm783, %v947, 0.0
      %984 = vadd.xlane.f32.xlu0 %v983
      %v985 = vpop.xlane.xlu0 %984
      %v986 = vsel %vm783, %v948, 0.0
      %987 = vadd.xlane.f32.xlu0 %v986
      %v988 = vpop.xlane.xlu0 %987
      %v989 = vsel %vm783, %v949, 0.0
      %990 = vadd.xlane.f32.xlu0 %v989
      %v991 = vpop.xlane.xlu0 %990
      %v992 = vsel %vm783, %v950, 0.0
      %993 = vadd.xlane.f32.xlu0 %v992
      %v994 = vpop.xlane.xlu0 %993
      %v995 = vsel %vm783, %v951, 0.0
      %996 = vadd.xlane.f32.xlu0 %v995
      %v997 = vpop.xlane.xlu0 %996
      %v998 = vsel %vm783, %v952, 0.0
      %999 = vadd.xlane.f32.xlu0 %v998
      %v1000 = vpop.xlane.xlu0 %999
      %v1001 = vsel %vm783, %v953, 0.0
      %1002 = vadd.xlane.f32.xlu0 %v1001
      %v1003 = vpop.xlane.xlu0 %1002
      %v1004 = vsel %vm783, %v954, 0.0
      %1005 = vadd.xlane.f32.xlu0 %v1004
      %v1006 = vpop.xlane.xlu0 %1005
      %v1007 = vsel %vm783, %v955, 0.0
      %1008 = vadd.xlane.f32.xlu0 %v1007
      %v1009 = vpop.xlane.xlu0 %1008
      %v1010 = vsel %vm783, %v956, 0.0
      %1011 = vadd.xlane.f32.xlu0 %v1010
      %v1012 = vpop.xlane.xlu0 %1011
      %v1013 = vsel %vm783, %v957, 0.0
      %1014 = vadd.xlane.f32.xlu0 %v1013
      %v1015 = vpop.xlane.xlu0 %1014
      %v1016 = vsel %vm783, %v958, 0.0
      %1017 = vadd.xlane.f32.xlu0 %v1016
      %v1018 = vpop.xlane.xlu0 %1017
      %v1019 = vsel %vm783, %v959, 0.0
      %1020 = vadd.xlane.f32.xlu0 %v1019
      %v1021 = vpop.xlane.xlu0 %1020
      %v1022 = vsel %vm783, %v960, 0.0
      %1023 = vadd.xlane.f32.xlu0 %v1022
      %v1024 = vpop.xlane.xlu0 %1023
      %v1025 = vsel %vm783, %v961, 0.0
      %1026 = vadd.xlane.f32.xlu0 %v1025
      %v1027 = vpop.xlane.xlu0 %1026
      %v1028 = vsel %vm783, %v962, 0.0
      %1029 = vadd.xlane.f32.xlu0 %v1028
      %v1030 = vpop.xlane.xlu0 %1029
      %v1031 = vsel %vm783, %v963, 0.0
      %1032 = vadd.xlane.f32.xlu0 %v1031
      %v1033 = vpop.xlane.xlu0 %1032
      %v1034 = vsel %vm783, %v964, 0.0
      %1035 = vadd.xlane.f32.xlu0 %v1034
      %v1036 = vpop.xlane.xlu0 %1035
      %v1037 = vsel %vm783, %v965, 0.0
      %1038 = vadd.xlane.f32.xlu0 %v1037
      %v1039 = vpop.xlane.xlu0 %1038
      %v1040 = vsel %vm783, %v966, 0.0
      %1041 = vadd.xlane.f32.xlu0 %v1040
      %v1042 = vpop.xlane.xlu0 %1041
      %v1043 = vsel %vm783, %v967, 0.0
      %1044 = vadd.xlane.f32.xlu0 %v1043
      %v1045 = vpop.xlane.xlu0 %1044
      %v1046 = vsel %vm783, %v968, 0.0
      %1047 = vadd.xlane.f32.xlu0 %v1046
      %v1048 = vpop.xlane.xlu0 %1047
      %v1049 = vsel %vm783, %v969, 0.0
      %1050 = vadd.xlane.f32.xlu0 %v1049
      %v1051 = vpop.xlane.xlu0 %1050
      %v1052 = vsel %vm783, %v970, 0.0
      %1053 = vadd.xlane.f32.xlu0 %v1052
      %v1054 = vpop.xlane.xlu0 %1053
      %v1055 = vsel %vm783, %v971, 0.0
      %1056 = vadd.xlane.f32.xlu0 %v1055
      %v1057 = vpop.xlane.xlu0 %1056
      %v1058 = vsel %vm783, %v972, 0.0
      %1059 = vadd.xlane.f32.xlu0 %v1058
      %v1060 = vpop.xlane.xlu0 %1059
      %v1061 = vsel %vm783, %v973, 0.0
      %1062 = vadd.xlane.f32.xlu0 %v1061
      %v1063 = vpop.xlane.xlu0 %1062
      %v1064 = vsel %vm783, %v974, 0.0
      %1065 = vadd.xlane.f32.xlu0 %v1064
      %v1066 = vpop.xlane.xlu0 %1065
      %v1067 = vsel %vm783, %v975, 0.0
      %1068 = vadd.xlane.f32.xlu0 %v1067
      %v1069 = vpop.xlane.xlu0 %1068
      %v1070 = vsel %vm783, %v976, 0.0
      %1071 = vadd.xlane.f32.xlu0 %v1070
      %v1072 = vpop.xlane.xlu0 %1071
      %v1073 = vmul.f32 %v979, %v880
      %v1074 = vmul.f32 %v982, %v880
      %v1075 = vmul.f32 %v985, %v880
      %v1076 = vmul.f32 %v988, %v880
      %v1077 = vmul.f32 %v991, %v880
      %v1078 = vmul.f32 %v994, %v880
      %v1079 = vmul.f32 %v997, %v880
      %v1080 = vmul.f32 %v1000, %v880
      %v1081 = vmul.f32 %v1003, %v880
      %v1082 = vmul.f32 %v1006, %v880
      %v1083 = vmul.f32 %v1009, %v880
      %v1084 = vmul.f32 %v1012, %v880
      %v1085 = vmul.f32 %v1015, %v880
      %v1086 = vmul.f32 %v1018, %v880
      %v1087 = vmul.f32 %v1021, %v880
      %v1088 = vmul.f32 %v1024, %v880
      %v1089 = vmul.f32 %v1027, %v880
      %v1090 = vmul.f32 %v1030, %v880
      %v1091 = vmul.f32 %v1033, %v880
      %v1092 = vmul.f32 %v1036, %v880
      %v1093 = vmul.f32 %v1039, %v880
      %v1094 = vmul.f32 %v1042, %v880
      %v1095 = vmul.f32 %v1045, %v880
      %v1096 = vmul.f32 %v1048, %v880
      %v1097 = vmul.f32 %v1051, %v880
      %v1098 = vmul.f32 %v1054, %v880
      %v1099 = vmul.f32 %v1057, %v880
      %v1100 = vmul.f32 %v1060, %v880
      %v1101 = vmul.f32 %v1063, %v880
      %v1102 = vmul.f32 %v1066, %v880
      %v1103 = vmul.f32 %v1069, %v880
      %v1104 = vmul.f32 %v1072, %v880
      %v1105 = vadd.f32 %v1073, 1e-05
      %v1106 = vadd.f32 %v1074, 1e-05
      %v1107 = vadd.f32 %v1075, 1e-05
      %v1108 = vadd.f32 %v1076, 1e-05
      %v1109 = vadd.f32 %v1077, 1e-05
      %v1110 = vadd.f32 %v1078, 1e-05
      %v1111 = vadd.f32 %v1079, 1e-05
      %v1112 = vadd.f32 %v1080, 1e-05
      %v1113 = vadd.f32 %v1081, 1e-05
      %v1114 = vadd.f32 %v1082, 1e-05
      %v1115 = vadd.f32 %v1083, 1e-05
      %v1116 = vadd.f32 %v1084, 1e-05
      %v1117 = vadd.f32 %v1085, 1e-05
      %v1118 = vadd.f32 %v1086, 1e-05
      %v1119 = vadd.f32 %v1087, 1e-05
      %v1120 = vadd.f32 %v1088, 1e-05
      %v1121 = vadd.f32 %v1089, 1e-05
      %v1122 = vadd.f32 %v1090, 1e-05
      %v1123 = vadd.f32 %v1091, 1e-05
      %v1124 = vadd.f32 %v1092, 1e-05
      %v1125 = vadd.f32 %v1093, 1e-05
      %v1126 = vadd.f32 %v1094, 1e-05
      %v1127 = vadd.f32 %v1095, 1e-05
      %v1128 = vadd.f32 %v1096, 1e-05
      %v1129 = vadd.f32 %v1097, 1e-05
      %v1130 = vadd.f32 %v1098, 1e-05
      %v1131 = vadd.f32 %v1099, 1e-05
      %v1132 = vadd.f32 %v1100, 1e-05
      %v1133 = vadd.f32 %v1101, 1e-05
      %v1134 = vadd.f32 %v1102, 1e-05
      %v1135 = vadd.f32 %v1103, 1e-05
      %v1136 = vadd.f32 %v1104, 1e-05
      %v1137 = vrsqrt.pop %v1105
      %v1138 = vrsqrt.pop %v1106
      %v1139 = vrsqrt.pop %v1107
      %v1140 = vrsqrt.pop %v1108
      %v1141 = vrsqrt.pop %v1109
      %v1142 = vrsqrt.pop %v1110
      %v1143 = vrsqrt.pop %v1111
      %v1144 = vrsqrt.pop %v1112
      %v1145 = vrsqrt.pop %v1113
      %v1146 = vrsqrt.pop %v1114
      %v1147 = vrsqrt.pop %v1115
      %v1148 = vrsqrt.pop %v1116
      %v1149 = vrsqrt.pop %v1117
      %v1150 = vrsqrt.pop %v1118
      %v1151 = vrsqrt.pop %v1119
      %v1152 = vrsqrt.pop %v1120
      %v1153 = vrsqrt.pop %v1121
      %v1154 = vrsqrt.pop %v1122
      %v1155 = vrsqrt.pop %v1123
      %v1156 = vrsqrt.pop %v1124
      %v1157 = vrsqrt.pop %v1125
      %v1158 = vrsqrt.pop %v1126
      %v1159 = vrsqrt.pop %v1127
      %v1160 = vrsqrt.pop %v1128
      %v1161 = vrsqrt.pop %v1129
      %v1162 = vrsqrt.pop %v1130
      %v1163 = vrsqrt.pop %v1131
      %v1164 = vrsqrt.pop %v1132
      %v1165 = vrsqrt.pop %v1133
      %v1166 = vrsqrt.pop %v1134
      %v1167 = vrsqrt.pop %v1135
      %v1168 = vrsqrt.pop %v1136
      %v1169 = vmul.f32 %v913, %v1137
      %v1170 = vmul.f32 %v914, %v1138
      %v1171 = vmul.f32 %v915, %v1139
      %v1172 = vmul.f32 %v916, %v1140
      %v1173 = vmul.f32 %v917, %v1141
      %v1174 = vmul.f32 %v918, %v1142
      %v1175 = vmul.f32 %v919, %v1143
      %v1176 = vmul.f32 %v920, %v1144
      %v1177 = vmul.f32 %v921, %v1145
      %v1178 = vmul.f32 %v922, %v1146
      %v1179 = vmul.f32 %v923, %v1147
      %v1180 = vmul.f32 %v924, %v1148
      %v1181 = vmul.f32 %v925, %v1149
      %v1182 = vmul.f32 %v926, %v1150
      %v1183 = vmul.f32 %v927, %v1151
      %v1184 = vmul.f32 %v928, %v1152
      %v1185 = vmul.f32 %v929, %v1153
      %v1186 = vmul.f32 %v930, %v1154
      %v1187 = vmul.f32 %v931, %v1155
      %v1188 = vmul.f32 %v932, %v1156
      %v1189 = vmul.f32 %v933, %v1157
      %v1190 = vmul.f32 %v934, %v1158
      %v1191 = vmul.f32 %v935, %v1159
      %v1192 = vmul.f32 %v936, %v1160
      %v1193 = vmul.f32 %v937, %v1161
      %v1194 = vmul.f32 %v938, %v1162
      %v1195 = vmul.f32 %v939, %v1163
      %v1196 = vmul.f32 %v940, %v1164
      %v1197 = vmul.f32 %v941, %v1165
      %v1198 = vmul.f32 %v942, %v1166
      %v1199 = vmul.f32 %v943, %v1167
      %v1200 = vmul.f32 %v944, %v1168
      %v1201 = vlaneseq
      %v1202 = vshrl.u32 %v1201, 7
      %v1203 = vsub.s32 0, %v1202
      %v1204 = vrot.slane %v749, %v1203
      %v1205 = vmul.f32 %v1169, %v1204
      %v1206 = vmul.f32 %v1170, %v1204
      %v1207 = vmul.f32 %v1171, %v1204
      %v1208 = vmul.f32 %v1172, %v1204
      %v1209 = vmul.f32 %v1173, %v1204
      %v1210 = vmul.f32 %v1174, %v1204
      %v1211 = vmul.f32 %v1175, %v1204
      %v1212 = vmul.f32 %v1176, %v1204
      %v1213 = vmul.f32 %v1177, %v1204
      %v1214 = vmul.f32 %v1178, %v1204
      %v1215 = vmul.f32 %v1179, %v1204
      %v1216 = vmul.f32 %v1180, %v1204
      %v1217 = vmul.f32 %v1181, %v1204
      %v1218 = vmul.f32 %v1182, %v1204
      %v1219 = vmul.f32 %v1183, %v1204
      %v1220 = vmul.f32 %v1184, %v1204
      %v1221 = vmul.f32 %v1185, %v1204
      %v1222 = vmul.f32 %v1186, %v1204
      %v1223 = vmul.f32 %v1187, %v1204
      %v1224 = vmul.f32 %v1188, %v1204
      %v1225 = vmul.f32 %v1189, %v1204
      %v1226 = vmul.f32 %v1190, %v1204
      %v1227 = vmul.f32 %v1191, %v1204
      %v1228 = vmul.f32 %v1192, %v1204
      %v1229 = vmul.f32 %v1193, %v1204
      %v1230 = vmul.f32 %v1194, %v1204
      %v1231 = vmul.f32 %v1195, %v1204
      %v1232 = vmul.f32 %v1196, %v1204
      %v1233 = vmul.f32 %v1197, %v1204
      %v1234 = vmul.f32 %v1198, %v1204
      %v1235 = vmul.f32 %v1199, %v1204
      %v1236 = vmul.f32 %v1200, %v1204
      %v1237 = vlaneseq
      %v1238 = vshrl.u32 %v1237, 7
      %v1239 = vsub.s32 1, %v1238
      %v1240 = vrot.slane %v749, %v1239
      %v1241 = vadd.f32 %v1205, %v1240
      %v1242 = vadd.f32 %v1206, %v1240
      %v1243 = vadd.f32 %v1207, %v1240
      %v1244 = vadd.f32 %v1208, %v1240
      %v1245 = vadd.f32 %v1209, %v1240
      %v1246 = vadd.f32 %v1210, %v1240
      %v1247 = vadd.f32 %v1211, %v1240
      %v1248 = vadd.f32 %v1212, %v1240
      %v1249 = vadd.f32 %v1213, %v1240
      %v1250 = vadd.f32 %v1214, %v1240
      %v1251 = vadd.f32 %v1215, %v1240
      %v1252 = vadd.f32 %v1216, %v1240
      %v1253 = vadd.f32 %v1217, %v1240
      %v1254 = vadd.f32 %v1218, %v1240
      %v1255 = vadd.f32 %v1219, %v1240
      %v1256 = vadd.f32 %v1220, %v1240
      %v1257 = vadd.f32 %v1221, %v1240
      %v1258 = vadd.f32 %v1222, %v1240
      %v1259 = vadd.f32 %v1223, %v1240
      %v1260 = vadd.f32 %v1224, %v1240
      %v1261 = vadd.f32 %v1225, %v1240
      %v1262 = vadd.f32 %v1226, %v1240
      %v1263 = vadd.f32 %v1227, %v1240
      %v1264 = vadd.f32 %v1228, %v1240
      %v1265 = vadd.f32 %v1229, %v1240
      %v1266 = vadd.f32 %v1230, %v1240
      %v1267 = vadd.f32 %v1231, %v1240
      %v1268 = vadd.f32 %v1232, %v1240
      %v1269 = vadd.f32 %v1233, %v1240
      %v1270 = vadd.f32 %v1234, %v1240
      %v1271 = vadd.f32 %v1235, %v1240
      %v1272 = vadd.f32 %v1236, %v1240
      %v1273 = vld [vmem:[#allocation3] sm:$0xff]
      %v1274 = vld [vmem:[#allocation3 + $0x8] sm:$0xff]
      %v1275 = vld [vmem:[#allocation3 + $0x10] sm:$0xff]
      %v1276 = vld [vmem:[#allocation3 + $0x18] sm:$0xff]
      %v1277 = vld [vmem:[#allocation3 + $0x20] sm:$0xff]
      %v1278 = vld [vmem:[#allocation3 + $0x28] sm:$0xff]
      %v1279 = vld [vmem:[#allocation3 + $0x30] sm:$0xff]
      %v1280 = vld [vmem:[#allocation3 + $0x38] sm:$0xff]
      %v1281 = vld [vmem:[#allocation3 + $0x40] sm:$0xff]
      %v1282 = vld [vmem:[#allocation3 + $0x48] sm:$0xff]
      %v1283 = vld [vmem:[#allocation3 + $0x50] sm:$0xff]
      %v1284 = vld [vmem:[#allocation3 + $0x58] sm:$0xff]
      %v1285 = vld [vmem:[#allocation3 + $0x60] sm:$0xff]
      %v1286 = vld [vmem:[#allocation3 + $0x68] sm:$0xff]
      %v1287 = vld [vmem:[#allocation3 + $0x70] sm:$0xff]
      %v1288 = vld [vmem:[#allocation3 + $0x78] sm:$0xff]
      %v1289 = vld [vmem:[#allocation3 + $0x80] sm:$0xff]
      %v1290 = vld [vmem:[#allocation3 + $0x88] sm:$0xff]
      %v1291 = vld [vmem:[#allocation3 + $0x90] sm:$0xff]
      %v1292 = vld [vmem:[#allocation3 + $0x98] sm:$0xff]
      %v1293 = vld [vmem:[#allocation3 + $0xa0] sm:$0xff]
      %v1294 = vld [vmem:[#allocation3 + $0xa8] sm:$0xff]
      %v1295 = vld [vmem:[#allocation3 + $0xb0] sm:$0xff]
      %v1296 = vld [vmem:[#allocation3 + $0xb8] sm:$0xff]
      %v1297 = vld [vmem:[#allocation3 + $0xc0] sm:$0xff]
      %v1298 = vld [vmem:[#allocation3 + $0xc8] sm:$0xff]
      %v1299 = vld [vmem:[#allocation3 + $0xd0] sm:$0xff]
      %v1300 = vld [vmem:[#allocation3 + $0xd8] sm:$0xff]
      %v1301 = vld [vmem:[#allocation3 + $0xe0] sm:$0xff]
      %v1302 = vld [vmem:[#allocation3 + $0xe8] sm:$0xff]
      %v1303 = vld [vmem:[#allocation3 + $0xf0] sm:$0xff]
      %v1304 = vld [vmem:[#allocation3 + $0xf8] sm:$0xff]
      %v1305 = vsel %vm783, %v1273, 0.0
      %1306 = vadd.xlane.f32.xlu0 %v1305
      %v1307 = vpop.xlane.xlu0 %1306
      %v1308 = vsel %vm783, %v1274, 0.0
      %1309 = vadd.xlane.f32.xlu0 %v1308
      %v1310 = vpop.xlane.xlu0 %1309
      %v1311 = vsel %vm783, %v1275, 0.0
      %1312 = vadd.xlane.f32.xlu0 %v1311
      %v1313 = vpop.xlane.xlu0 %1312
      %v1314 = vsel %vm783, %v1276, 0.0
      %1315 = vadd.xlane.f32.xlu0 %v1314
      %v1316 = vpop.xlane.xlu0 %1315
      %v1317 = vsel %vm783, %v1277, 0.0
      %1318 = vadd.xlane.f32.xlu0 %v1317
      %v1319 = vpop.xlane.xlu0 %1318
      %v1320 = vsel %vm783, %v1278, 0.0
      %1321 = vadd.xlane.f32.xlu0 %v1320
      %v1322 = vpop.xlane.xlu0 %1321
      %v1323 = vsel %vm783, %v1279, 0.0
      %1324 = vadd.xlane.f32.xlu0 %v1323
      %v1325 = vpop.xlane.xlu0 %1324
      %v1326 = vsel %vm783, %v1280, 0.0
      %1327 = vadd.xlane.f32.xlu0 %v1326
      %v1328 = vpop.xlane.xlu0 %1327
      %v1329 = vsel %vm783, %v1281, 0.0
      %1330 = vadd.xlane.f32.xlu0 %v1329
      %v1331 = vpop.xlane.xlu0 %1330
      %v1332 = vsel %vm783, %v1282, 0.0
      %1333 = vadd.xlane.f32.xlu0 %v1332
      %v1334 = vpop.xlane.xlu0 %1333
      %v1335 = vsel %vm783, %v1283, 0.0
      %1336 = vadd.xlane.f32.xlu0 %v1335
      %v1337 = vpop.xlane.xlu0 %1336
      %v1338 = vsel %vm783, %v1284, 0.0
      %1339 = vadd.xlane.f32.xlu0 %v1338
      %v1340 = vpop.xlane.xlu0 %1339
      %v1341 = vsel %vm783, %v1285, 0.0
      %1342 = vadd.xlane.f32.xlu0 %v1341
      %v1343 = vpop.xlane.xlu0 %1342
      %v1344 = vsel %vm783, %v1286, 0.0
      %1345 = vadd.xlane.f32.xlu0 %v1344
      %v1346 = vpop.xlane.xlu0 %1345
      %v1347 = vsel %vm783, %v1287, 0.0
      %1348 = vadd.xlane.f32.xlu0 %v1347
      %v1349 = vpop.xlane.xlu0 %1348
      %v1350 = vsel %vm783, %v1288, 0.0
      %1351 = vadd.xlane.f32.xlu0 %v1350
      %v1352 = vpop.xlane.xlu0 %1351
      %v1353 = vsel %vm783, %v1289, 0.0
      %1354 = vadd.xlane.f32.xlu0 %v1353
      %v1355 = vpop.xlane.xlu0 %1354
      %v1356 = vsel %vm783, %v1290, 0.0
      %1357 = vadd.xlane.f32.xlu0 %v1356
      %v1358 = vpop.xlane.xlu0 %1357
      %v1359 = vsel %vm783, %v1291, 0.0
      %1360 = vadd.xlane.f32.xlu0 %v1359
      %v1361 = vpop.xlane.xlu0 %1360
      %v1362 = vsel %vm783, %v1292, 0.0
      %1363 = vadd.xlane.f32.xlu0 %v1362
      %v1364 = vpop.xlane.xlu0 %1363
      %v1365 = vsel %vm783, %v1293, 0.0
      %1366 = vadd.xlane.f32.xlu0 %v1365
      %v1367 = vpop.xlane.xlu0 %1366
      %v1368 = vsel %vm783, %v1294, 0.0
      %1369 = vadd.xlane.f32.xlu0 %v1368
      %v1370 = vpop.xlane.xlu0 %1369
      %v1371 = vsel %vm783, %v1295, 0.0
      %1372 = vadd.xlane.f32.xlu0 %v1371
      %v1373 = vpop.xlane.xlu0 %1372
      %v1374 = vsel %vm783, %v1296, 0.0
      %1375 = vadd.xlane.f32.xlu0 %v1374
      %v1376 = vpop.xlane.xlu0 %1375
      %v1377 = vsel %vm783, %v1297, 0.0
      %1378 = vadd.xlane.f32.xlu0 %v1377
      %v1379 = vpop.xlane.xlu0 %1378
      %v1380 = vsel %vm783, %v1298, 0.0
      %1381 = vadd.xlane.f32.xlu0 %v1380
      %v1382 = vpop.xlane.xlu0 %1381
      %v1383 = vsel %vm783, %v1299, 0.0
      %1384 = vadd.xlane.f32.xlu0 %v1383
      %v1385 = vpop.xlane.xlu0 %1384
      %v1386 = vsel %vm783, %v1300, 0.0
      %1387 = vadd.xlane.f32.xlu0 %v1386
      %v1388 = vpop.xlane.xlu0 %1387
      %v1389 = vsel %vm783, %v1301, 0.0
      %1390 = vadd.xlane.f32.xlu0 %v1389
      %v1391 = vpop.xlane.xlu0 %1390
      %v1392 = vsel %vm783, %v1302, 0.0
      %1393 = vadd.xlane.f32.xlu0 %v1392
      %v1394 = vpop.xlane.xlu0 %1393
      %v1395 = vsel %vm783, %v1303, 0.0
      %1396 = vadd.xlane.f32.xlu0 %v1395
      %v1397 = vpop.xlane.xlu0 %1396
      %v1398 = vsel %vm783, %v1304, 0.0
      %1399 = vadd.xlane.f32.xlu0 %v1398
      %v1400 = vpop.xlane.xlu0 %1399
      %v1401 = vmul.f32 %v1307, %v880
      %v1402 = vmul.f32 %v1310, %v880
      %v1403 = vmul.f32 %v1313, %v880
      %v1404 = vmul.f32 %v1316, %v880
      %v1405 = vmul.f32 %v1319, %v880
      %v1406 = vmul.f32 %v1322, %v880
      %v1407 = vmul.f32 %v1325, %v880
      %v1408 = vmul.f32 %v1328, %v880
      %v1409 = vmul.f32 %v1331, %v880
      %v1410 = vmul.f32 %v1334, %v880
      %v1411 = vmul.f32 %v1337, %v880
      %v1412 = vmul.f32 %v1340, %v880
      %v1413 = vmul.f32 %v1343, %v880
      %v1414 = vmul.f32 %v1346, %v880
      %v1415 = vmul.f32 %v1349, %v880
      %v1416 = vmul.f32 %v1352, %v880
      %v1417 = vmul.f32 %v1355, %v880
      %v1418 = vmul.f32 %v1358, %v880
      %v1419 = vmul.f32 %v1361, %v880
      %v1420 = vmul.f32 %v1364, %v880
      %v1421 = vmul.f32 %v1367, %v880
      %v1422 = vmul.f32 %v1370, %v880
      %v1423 = vmul.f32 %v1373, %v880
      %v1424 = vmul.f32 %v1376, %v880
      %v1425 = vmul.f32 %v1379, %v880
      %v1426 = vmul.f32 %v1382, %v880
      %v1427 = vmul.f32 %v1385, %v880
      %v1428 = vmul.f32 %v1388, %v880
      %v1429 = vmul.f32 %v1391, %v880
      %v1430 = vmul.f32 %v1394, %v880
      %v1431 = vmul.f32 %v1397, %v880
      %v1432 = vmul.f32 %v1400, %v880
      %v1433 = vsub.f32 %v1273, %v1401
      %v1434 = vsub.f32 %v1274, %v1402
      %v1435 = vsub.f32 %v1275, %v1403
      %v1436 = vsub.f32 %v1276, %v1404
      %v1437 = vsub.f32 %v1277, %v1405
      %v1438 = vsub.f32 %v1278, %v1406
      %v1439 = vsub.f32 %v1279, %v1407
      %v1440 = vsub.f32 %v1280, %v1408
      %v1441 = vsub.f32 %v1281, %v1409
      %v1442 = vsub.f32 %v1282, %v1410
      %v1443 = vsub.f32 %v1283, %v1411
      %v1444 = vsub.f32 %v1284, %v1412
      %v1445 = vsub.f32 %v1285, %v1413
      %v1446 = vsub.f32 %v1286, %v1414
      %v1447 = vsub.f32 %v1287, %v1415
      %v1448 = vsub.f32 %v1288, %v1416
      %v1449 = vsub.f32 %v1289, %v1417
      %v1450 = vsub.f32 %v1290, %v1418
      %v1451 = vsub.f32 %v1291, %v1419
      %v1452 = vsub.f32 %v1292, %v1420
      %v1453 = vsub.f32 %v1293, %v1421
      %v1454 = vsub.f32 %v1294, %v1422
      %v1455 = vsub.f32 %v1295, %v1423
      %v1456 = vsub.f32 %v1296, %v1424
      %v1457 = vsub.f32 %v1297, %v1425
      %v1458 = vsub.f32 %v1298, %v1426
      %v1459 = vsub.f32 %v1299, %v1427
      %v1460 = vsub.f32 %v1300, %v1428
      %v1461 = vsub.f32 %v1301, %v1429
      %v1462 = vsub.f32 %v1302, %v1430
      %v1463 = vsub.f32 %v1303, %v1431
      %v1464 = vsub.f32 %v1304, %v1432
      %v1465 = vmul.f32 %v1433, %v1433
      %v1466 = vmul.f32 %v1434, %v1434
      %v1467 = vmul.f32 %v1435, %v1435
      %v1468 = vmul.f32 %v1436, %v1436
      %v1469 = vmul.f32 %v1437, %v1437
      %v1470 = vmul.f32 %v1438, %v1438
      %v1471 = vmul.f32 %v1439, %v1439
      %v1472 = vmul.f32 %v1440, %v1440
      %v1473 = vmul.f32 %v1441, %v1441
      %v1474 = vmul.f32 %v1442, %v1442
      %v1475 = vmul.f32 %v1443, %v1443
      %v1476 = vmul.f32 %v1444, %v1444
      %v1477 = vmul.f32 %v1445, %v1445
      %v1478 = vmul.f32 %v1446, %v1446
      %v1479 = vmul.f32 %v1447, %v1447
      %v1480 = vmul.f32 %v1448, %v1448
      %v1481 = vmul.f32 %v1449, %v1449
      %v1482 = vmul.f32 %v1450, %v1450
      %v1483 = vmul.f32 %v1451, %v1451
      %v1484 = vmul.f32 %v1452, %v1452
      %v1485 = vmul.f32 %v1453, %v1453
      %v1486 = vmul.f32 %v1454, %v1454
      %v1487 = vmul.f32 %v1455, %v1455
      %v1488 = vmul.f32 %v1456, %v1456
      %v1489 = vmul.f32 %v1457, %v1457
      %v1490 = vmul.f32 %v1458, %v1458
      %v1491 = vmul.f32 %v1459, %v1459
      %v1492 = vmul.f32 %v1460, %v1460
      %v1493 = vmul.f32 %v1461, %v1461
      %v1494 = vmul.f32 %v1462, %v1462
      %v1495 = vmul.f32 %v1463, %v1463
      %v1496 = vmul.f32 %v1464, %v1464
      %v1497 = vsel %vm783, %v1465, 0.0
      %1498 = vadd.xlane.f32.xlu0 %v1497
      %v1499 = vpop.xlane.xlu0 %1498
      %v1500 = vsel %vm783, %v1466, 0.0
      %1501 = vadd.xlane.f32.xlu0 %v1500
      %v1502 = vpop.xlane.xlu0 %1501
      %v1503 = vsel %vm783, %v1467, 0.0
      %1504 = vadd.xlane.f32.xlu0 %v1503
      %v1505 = vpop.xlane.xlu0 %1504
      %v1506 = vsel %vm783, %v1468, 0.0
      %1507 = vadd.xlane.f32.xlu0 %v1506
      %v1508 = vpop.xlane.xlu0 %1507
      %v1509 = vsel %vm783, %v1469, 0.0
      %1510 = vadd.xlane.f32.xlu0 %v1509
      %v1511 = vpop.xlane.xlu0 %1510
      %v1512 = vsel %vm783, %v1470, 0.0
      %1513 = vadd.xlane.f32.xlu0 %v1512
      %v1514 = vpop.xlane.xlu0 %1513
      %v1515 = vsel %vm783, %v1471, 0.0
      %1516 = vadd.xlane.f32.xlu0 %v1515
      %v1517 = vpop.xlane.xlu0 %1516
      %v1518 = vsel %vm783, %v1472, 0.0
      %1519 = vadd.xlane.f32.xlu0 %v1518
      %v1520 = vpop.xlane.xlu0 %1519
      %v1521 = vsel %vm783, %v1473, 0.0
      %1522 = vadd.xlane.f32.xlu0 %v1521
      %v1523 = vpop.xlane.xlu0 %1522
      %v1524 = vsel %vm783, %v1474, 0.0
      %1525 = vadd.xlane.f32.xlu0 %v1524
      %v1526 = vpop.xlane.xlu0 %1525
      %v1527 = vsel %vm783, %v1475, 0.0
      %1528 = vadd.xlane.f32.xlu0 %v1527
      %v1529 = vpop.xlane.xlu0 %1528
      %v1530 = vsel %vm783, %v1476, 0.0
      %1531 = vadd.xlane.f32.xlu0 %v1530
      %v1532 = vpop.xlane.xlu0 %1531
      %v1533 = vsel %vm783, %v1477, 0.0
      %1534 = vadd.xlane.f32.xlu0 %v1533
      %v1535 = vpop.xlane.xlu0 %1534
      %v1536 = vsel %vm783, %v1478, 0.0
      %1537 = vadd.xlane.f32.xlu0 %v1536
      %v1538 = vpop.xlane.xlu0 %1537
      %v1539 = vsel %vm783, %v1479, 0.0
      %1540 = vadd.xlane.f32.xlu0 %v1539
      %v1541 = vpop.xlane.xlu0 %1540
      %v1542 = vsel %vm783, %v1480, 0.0
      %1543 = vadd.xlane.f32.xlu0 %v1542
      %v1544 = vpop.xlane.xlu0 %1543
      %v1545 = vsel %vm783, %v1481, 0.0
      %1546 = vadd.xlane.f32.xlu0 %v1545
      %v1547 = vpop.xlane.xlu0 %1546
      %v1548 = vsel %vm783, %v1482, 0.0
      %1549 = vadd.xlane.f32.xlu0 %v1548
      %v1550 = vpop.xlane.xlu0 %1549
      %v1551 = vsel %vm783, %v1483, 0.0
      %1552 = vadd.xlane.f32.xlu0 %v1551
      %v1553 = vpop.xlane.xlu0 %1552
      %v1554 = vsel %vm783, %v1484, 0.0
      %1555 = vadd.xlane.f32.xlu0 %v1554
      %v1556 = vpop.xlane.xlu0 %1555
      %v1557 = vsel %vm783, %v1485, 0.0
      %1558 = vadd.xlane.f32.xlu0 %v1557
      %v1559 = vpop.xlane.xlu0 %1558
      %v1560 = vsel %vm783, %v1486, 0.0
      %1561 = vadd.xlane.f32.xlu0 %v1560
      %v1562 = vpop.xlane.xlu0 %1561
      %v1563 = vsel %vm783, %v1487, 0.0
      %1564 = vadd.xlane.f32.xlu0 %v1563
      %v1565 = vpop.xlane.xlu0 %1564
      %v1566 = vsel %vm783, %v1488, 0.0
      %1567 = vadd.xlane.f32.xlu0 %v1566
      %v1568 = vpop.xlane.xlu0 %1567
      %v1569 = vsel %vm783, %v1489, 0.0
      %1570 = vadd.xlane.f32.xlu0 %v1569
      %v1571 = vpop.xlane.xlu0 %1570
      %v1572 = vsel %vm783, %v1490, 0.0
      %1573 = vadd.xlane.f32.xlu0 %v1572
      %v1574 = vpop.xlane.xlu0 %1573
      %v1575 = vsel %vm783, %v1491, 0.0
      %1576 = vadd.xlane.f32.xlu0 %v1575
      %v1577 = vpop.xlane.xlu0 %1576
      %v1578 = vsel %vm783, %v1492, 0.0
      %1579 = vadd.xlane.f32.xlu0 %v1578
      %v1580 = vpop.xlane.xlu0 %1579
      %v1581 = vsel %vm783, %v1493, 0.0
      %1582 = vadd.xlane.f32.xlu0 %v1581
      %v1583 = vpop.xlane.xlu0 %1582
      %v1584 = vsel %vm783, %v1494, 0.0
      %1585 = vadd.xlane.f32.xlu0 %v1584
      %v1586 = vpop.xlane.xlu0 %1585
      %v1587 = vsel %vm783, %v1495, 0.0
      %1588 = vadd.xlane.f32.xlu0 %v1587
      %v1589 = vpop.xlane.xlu0 %1588
      %v1590 = vsel %vm783, %v1496, 0.0
      %1591 = vadd.xlane.f32.xlu0 %v1590
      %v1592 = vpop.xlane.xlu0 %1591
      %v1593 = vmul.f32 %v1499, %v880
      %v1594 = vmul.f32 %v1502, %v880
      %v1595 = vmul.f32 %v1505, %v880
      %v1596 = vmul.f32 %v1508, %v880
      %v1597 = vmul.f32 %v1511, %v880
      %v1598 = vmul.f32 %v1514, %v880
      %v1599 = vmul.f32 %v1517, %v880
      %v1600 = vmul.f32 %v1520, %v880
      %v1601 = vmul.f32 %v1523, %v880
      %v1602 = vmul.f32 %v1526, %v880
      %v1603 = vmul.f32 %v1529, %v880
      %v1604 = vmul.f32 %v1532, %v880
      %v1605 = vmul.f32 %v1535, %v880
      %v1606 = vmul.f32 %v1538, %v880
      %v1607 = vmul.f32 %v1541, %v880
      %v1608 = vmul.f32 %v1544, %v880
      %v1609 = vmul.f32 %v1547, %v880
      %v1610 = vmul.f32 %v1550, %v880
      %v1611 = vmul.f32 %v1553, %v880
      %v1612 = vmul.f32 %v1556, %v880
      %v1613 = vmul.f32 %v1559, %v880
      %v1614 = vmul.f32 %v1562, %v880
      %v1615 = vmul.f32 %v1565, %v880
      %v1616 = vmul.f32 %v1568, %v880
      %v1617 = vmul.f32 %v1571, %v880
      %v1618 = vmul.f32 %v1574, %v880
      %v1619 = vmul.f32 %v1577, %v880
      %v1620 = vmul.f32 %v1580, %v880
      %v1621 = vmul.f32 %v1583, %v880
      %v1622 = vmul.f32 %v1586, %v880
      %v1623 = vmul.f32 %v1589, %v880
      %v1624 = vmul.f32 %v1592, %v880
      %v1625 = vadd.f32 %v1593, 1e-05
      %v1626 = vadd.f32 %v1594, 1e-05
      %v1627 = vadd.f32 %v1595, 1e-05
      %v1628 = vadd.f32 %v1596, 1e-05
      %v1629 = vadd.f32 %v1597, 1e-05
      %v1630 = vadd.f32 %v1598, 1e-05
      %v1631 = vadd.f32 %v1599, 1e-05
      %v1632 = vadd.f32 %v1600, 1e-05
      %v1633 = vadd.f32 %v1601, 1e-05
      %v1634 = vadd.f32 %v1602, 1e-05
      %v1635 = vadd.f32 %v1603, 1e-05
      %v1636 = vadd.f32 %v1604, 1e-05
      %v1637 = vadd.f32 %v1605, 1e-05
      %v1638 = vadd.f32 %v1606, 1e-05
      %v1639 = vadd.f32 %v1607, 1e-05
      %v1640 = vadd.f32 %v1608, 1e-05
      %v1641 = vadd.f32 %v1609, 1e-05
      %v1642 = vadd.f32 %v1610, 1e-05
      %v1643 = vadd.f32 %v1611, 1e-05
      %v1644 = vadd.f32 %v1612, 1e-05
      %v1645 = vadd.f32 %v1613, 1e-05
      %v1646 = vadd.f32 %v1614, 1e-05
      %v1647 = vadd.f32 %v1615, 1e-05
      %v1648 = vadd.f32 %v1616, 1e-05
      %v1649 = vadd.f32 %v1617, 1e-05
      %v1650 = vadd.f32 %v1618, 1e-05
      %v1651 = vadd.f32 %v1619, 1e-05
      %v1652 = vadd.f32 %v1620, 1e-05
      %v1653 = vadd.f32 %v1621, 1e-05
      %v1654 = vadd.f32 %v1622, 1e-05
      %v1655 = vadd.f32 %v1623, 1e-05
      %v1656 = vadd.f32 %v1624, 1e-05
      %v1657 = vrsqrt.pop %v1625
      %v1658 = vrsqrt.pop %v1626
      %v1659 = vrsqrt.pop %v1627
      %v1660 = vrsqrt.pop %v1628
      %v1661 = vrsqrt.pop %v1629
      %v1662 = vrsqrt.pop %v1630
      %v1663 = vrsqrt.pop %v1631
      %v1664 = vrsqrt.pop %v1632
      %v1665 = vrsqrt.pop %v1633
      %v1666 = vrsqrt.pop %v1634
      %v1667 = vrsqrt.pop %v1635
      %v1668 = vrsqrt.pop %v1636
      %v1669 = vrsqrt.pop %v1637
      %v1670 = vrsqrt.pop %v1638
      %v1671 = vrsqrt.pop %v1639
      %v1672 = vrsqrt.pop %v1640
      %v1673 = vrsqrt.pop %v1641
      %v1674 = vrsqrt.pop %v1642
      %v1675 = vrsqrt.pop %v1643
      %v1676 = vrsqrt.pop %v1644
      %v1677 = vrsqrt.pop %v1645
      %v1678 = vrsqrt.pop %v1646
      %v1679 = vrsqrt.pop %v1647
      %v1680 = vrsqrt.pop %v1648
      %v1681 = vrsqrt.pop %v1649
      %v1682 = vrsqrt.pop %v1650
      %v1683 = vrsqrt.pop %v1651
      %v1684 = vrsqrt.pop %v1652
      %v1685 = vrsqrt.pop %v1653
      %v1686 = vrsqrt.pop %v1654
      %v1687 = vrsqrt.pop %v1655
      %v1688 = vrsqrt.pop %v1656
      %v1689 = vmul.f32 %v1433, %v1657
      %v1690 = vmul.f32 %v1434, %v1658
      %v1691 = vmul.f32 %v1435, %v1659
      %v1692 = vmul.f32 %v1436, %v1660
      %v1693 = vmul.f32 %v1437, %v1661
      %v1694 = vmul.f32 %v1438, %v1662
      %v1695 = vmul.f32 %v1439, %v1663
      %v1696 = vmul.f32 %v1440, %v1664
      %v1697 = vmul.f32 %v1441, %v1665
      %v1698 = vmul.f32 %v1442, %v1666
      %v1699 = vmul.f32 %v1443, %v1667
      %v1700 = vmul.f32 %v1444, %v1668
      %v1701 = vmul.f32 %v1445, %v1669
      %v1702 = vmul.f32 %v1446, %v1670
      %v1703 = vmul.f32 %v1447, %v1671
      %v1704 = vmul.f32 %v1448, %v1672
      %v1705 = vmul.f32 %v1449, %v1673
      %v1706 = vmul.f32 %v1450, %v1674
      %v1707 = vmul.f32 %v1451, %v1675
      %v1708 = vmul.f32 %v1452, %v1676
      %v1709 = vmul.f32 %v1453, %v1677
      %v1710 = vmul.f32 %v1454, %v1678
      %v1711 = vmul.f32 %v1455, %v1679
      %v1712 = vmul.f32 %v1456, %v1680
      %v1713 = vmul.f32 %v1457, %v1681
      %v1714 = vmul.f32 %v1458, %v1682
      %v1715 = vmul.f32 %v1459, %v1683
      %v1716 = vmul.f32 %v1460, %v1684
      %v1717 = vmul.f32 %v1461, %v1685
      %v1718 = vmul.f32 %v1462, %v1686
      %v1719 = vmul.f32 %v1463, %v1687
      %v1720 = vmul.f32 %v1464, %v1688
      %v1721 = vmul.f32 %v1689, %v1204
      %v1722 = vmul.f32 %v1690, %v1204
      %v1723 = vmul.f32 %v1691, %v1204
      %v1724 = vmul.f32 %v1692, %v1204
      %v1725 = vmul.f32 %v1693, %v1204
      %v1726 = vmul.f32 %v1694, %v1204
      %v1727 = vmul.f32 %v1695, %v1204
      %v1728 = vmul.f32 %v1696, %v1204
      %v1729 = vmul.f32 %v1697, %v1204
      %v1730 = vmul.f32 %v1698, %v1204
      %v1731 = vmul.f32 %v1699, %v1204
      %v1732 = vmul.f32 %v1700, %v1204
      %v1733 = vmul.f32 %v1701, %v1204
      %v1734 = vmul.f32 %v1702, %v1204
      %v1735 = vmul.f32 %v1703, %v1204
      %v1736 = vmul.f32 %v1704, %v1204
      %v1737 = vmul.f32 %v1705, %v1204
      %v1738 = vmul.f32 %v1706, %v1204
      %v1739 = vmul.f32 %v1707, %v1204
      %v1740 = vmul.f32 %v1708, %v1204
      %v1741 = vmul.f32 %v1709, %v1204
      %v1742 = vmul.f32 %v1710, %v1204
      %v1743 = vmul.f32 %v1711, %v1204
      %v1744 = vmul.f32 %v1712, %v1204
      %v1745 = vmul.f32 %v1713, %v1204
      %v1746 = vmul.f32 %v1714, %v1204
      %v1747 = vmul.f32 %v1715, %v1204
      %v1748 = vmul.f32 %v1716, %v1204
      %v1749 = vmul.f32 %v1717, %v1204
      %v1750 = vmul.f32 %v1718, %v1204
      %v1751 = vmul.f32 %v1719, %v1204
      %v1752 = vmul.f32 %v1720, %v1204
      %v1753 = vadd.f32 %v1721, %v1240
      %v1754 = vadd.f32 %v1722, %v1240
      %v1755 = vadd.f32 %v1723, %v1240
      %v1756 = vadd.f32 %v1724, %v1240
      %v1757 = vadd.f32 %v1725, %v1240
      %v1758 = vadd.f32 %v1726, %v1240
      %v1759 = vadd.f32 %v1727, %v1240
      %v1760 = vadd.f32 %v1728, %v1240
      %v1761 = vadd.f32 %v1729, %v1240
      %v1762 = vadd.f32 %v1730, %v1240
      %v1763 = vadd.f32 %v1731, %v1240
      %v1764 = vadd.f32 %v1732, %v1240
      %v1765 = vadd.f32 %v1733, %v1240
      %v1766 = vadd.f32 %v1734, %v1240
      %v1767 = vadd.f32 %v1735, %v1240
      %v1768 = vadd.f32 %v1736, %v1240
      %v1769 = vadd.f32 %v1737, %v1240
      %v1770 = vadd.f32 %v1738, %v1240
      %v1771 = vadd.f32 %v1739, %v1240
      %v1772 = vadd.f32 %v1740, %v1240
      %v1773 = vadd.f32 %v1741, %v1240
      %v1774 = vadd.f32 %v1742, %v1240
      %v1775 = vadd.f32 %v1743, %v1240
      %v1776 = vadd.f32 %v1744, %v1240
      %v1777 = vadd.f32 %v1745, %v1240
      %v1778 = vadd.f32 %v1746, %v1240
      %v1779 = vadd.f32 %v1747, %v1240
      %v1780 = vadd.f32 %v1748, %v1240
      %v1781 = vadd.f32 %v1749, %v1240
      %v1782 = vadd.f32 %v1750, %v1240
      %v1783 = vadd.f32 %v1751, %v1240
      %v1784 = vadd.f32 %v1752, %v1240
      %1785 = vst.msk [vmem:[#allocation3] sm:$0xff] %vm783, %v1753
      %1786 = vst.msk [vmem:[#allocation3 + $0x8] sm:$0xff] %vm783, %v1754
      %1787 = vst.msk [vmem:[#allocation3 + $0x10] sm:$0xff] %vm783, %v1755
      %1788 = vst.msk [vmem:[#allocation3 + $0x18] sm:$0xff] %vm783, %v1756
      %1789 = vst.msk [vmem:[#allocation3 + $0x20] sm:$0xff] %vm783, %v1757
      %1790 = vst.msk [vmem:[#allocation3 + $0x28] sm:$0xff] %vm783, %v1758
      %1791 = vst.msk [vmem:[#allocation3 + $0x30] sm:$0xff] %vm783, %v1759
      %1792 = vst.msk [vmem:[#allocation3 + $0x38] sm:$0xff] %vm783, %v1760
      %1793 = vst.msk [vmem:[#allocation3 + $0x40] sm:$0xff] %vm783, %v1761
      %1794 = vst.msk [vmem:[#allocation3 + $0x48] sm:$0xff] %vm783, %v1762
      %1795 = vst.msk [vmem:[#allocation3 + $0x50] sm:$0xff] %vm783, %v1763
      %1796 = vst.msk [vmem:[#allocation3 + $0x58] sm:$0xff] %vm783, %v1764
      %1797 = vst.msk [vmem:[#allocation3 + $0x60] sm:$0xff] %vm783, %v1765
      %1798 = vst.msk [vmem:[#allocation3 + $0x68] sm:$0xff] %vm783, %v1766
      %1799 = vst.msk [vmem:[#allocation3 + $0x70] sm:$0xff] %vm783, %v1767
      %1800 = vst.msk [vmem:[#allocation3 + $0x78] sm:$0xff] %vm783, %v1768
      %1801 = vst.msk [vmem:[#allocation3 + $0x80] sm:$0xff] %vm783, %v1769
      %1802 = vst.msk [vmem:[#allocation3 + $0x88] sm:$0xff] %vm783, %v1770
      %1803 = vst.msk [vmem:[#allocation3 + $0x90] sm:$0xff] %vm783, %v1771
      %1804 = vst.msk [vmem:[#allocation3 + $0x98] sm:$0xff] %vm783, %v1772
      %1805 = vst.msk [vmem:[#allocation3 + $0xa0] sm:$0xff] %vm783, %v1773
      %1806 = vst.msk [vmem:[#allocation3 + $0xa8] sm:$0xff] %vm783, %v1774
      %1807 = vst.msk [vmem:[#allocation3 + $0xb0] sm:$0xff] %vm783, %v1775
      %1808 = vst.msk [vmem:[#allocation3 + $0xb8] sm:$0xff] %vm783, %v1776
      %1809 = vst.msk [vmem:[#allocation3 + $0xc0] sm:$0xff] %vm783, %v1777
      %1810 = vst.msk [vmem:[#allocation3 + $0xc8] sm:$0xff] %vm783, %v1778
      %1811 = vst.msk [vmem:[#allocation3 + $0xd0] sm:$0xff] %vm783, %v1779
      %1812 = vst.msk [vmem:[#allocation3 + $0xd8] sm:$0xff] %vm783, %v1780
      %1813 = vst.msk [vmem:[#allocation3 + $0xe0] sm:$0xff] %vm783, %v1781
      %1814 = vst.msk [vmem:[#allocation3 + $0xe8] sm:$0xff] %vm783, %v1782
      %1815 = vst.msk [vmem:[#allocation3 + $0xf0] sm:$0xff] %vm783, %v1783
      %1816 = vst.msk [vmem:[#allocation3 + $0xf8] sm:$0xff] %vm783, %v1784
      %v1817 = vpack.c.bf16 %v1242, %v1241
      %v1818 = vpack.c.bf16 %v1244, %v1243
      %v1819 = vpack.c.bf16 %v1246, %v1245
      %v1820 = vpack.c.bf16 %v1248, %v1247
      %v1821 = vpack.c.bf16 %v1250, %v1249
      %v1822 = vpack.c.bf16 %v1252, %v1251
      %v1823 = vpack.c.bf16 %v1254, %v1253
      %v1824 = vpack.c.bf16 %v1256, %v1255
      %v1825 = vpack.c.bf16 %v1258, %v1257
      %v1826 = vpack.c.bf16 %v1260, %v1259
      %v1827 = vpack.c.bf16 %v1262, %v1261
      %v1828 = vpack.c.bf16 %v1264, %v1263
      %v1829 = vpack.c.bf16 %v1266, %v1265
      %v1830 = vpack.c.bf16 %v1268, %v1267
      %v1831 = vpack.c.bf16 %v1270, %v1269
      %v1832 = vpack.c.bf16 %v1272, %v1271
      %v1833 = vld [vmem:[%s511] sm:$0xf]
      %v1834 = vld [vmem:[%s511 + $0x4] sm:$0xf]
      %v1835 = vld [vmem:[%s511 + $0x8] sm:$0xf]
      %v1836 = vld [vmem:[%s511 + $0xc] sm:$0xf]
      %v1837 = vlaneseq
      %v1838 = vshrl.u32 %v1837, 7
      %v1839 = vsub.s32 2, %v1838
      %v1840 = vrot.slane %v749, %v1839
      %v1845 = vunpack.c.l.b16 %v1833
      %v1846 = vunpack.c.l.b16 %v1834
      %v1847 = vunpack.c.l.b16 %v1835
      %v1848 = vunpack.c.l.b16 %v1836
      %v1849 = vpack.c.b16 %v1846, %v1845
      %v1850 = vpack.c.b16 %v1848, %v1847
      %v1854 = vsel %vm783, %v1817, 0
      %v1857 = vsel %vm783, %v1818, 0
      %v1860 = vsel %vm783, %v1819, 0
      %v1863 = vsel %vm783, %v1820, 0
      %v1866 = vsel %vm783, %v1821, 0
      %v1869 = vsel %vm783, %v1822, 0
      %v1872 = vsel %vm783, %v1823, 0
      %v1875 = vsel %vm783, %v1824, 0
      %v1878 = vsel %vm783, %v1825, 0
      %v1881 = vsel %vm783, %v1826, 0
      %v1884 = vsel %vm783, %v1827, 0
      %v1887 = vsel %vm783, %v1828, 0
      %v1890 = vsel %vm783, %v1829, 0
      %v1893 = vsel %vm783, %v1830, 0
      %v1896 = vsel %vm783, %v1831, 0
      %v1899 = vsel %vm783, %v1832, 0
      %1901 = vmatprep.subr.bf16.mxu0 0
      %1902 = vmatpush1.bf16.msra.mxu0 0
      %1903 = vmatprep.subr.bf16.mxu0 0
      %1904 = vmatpush1.bf16.msra.mxu0 0
      %1905 = vmatprep.subr.bf16.mxu0 0
      %1906 = vmatpush1.bf16.msra.mxu0 0
      %1907 = vmatprep.subr.bf16.mxu0 0
      %1908 = vmatpush1.bf16.msra.mxu0 0
      %1909 = vmatprep.subr.bf16.mxu0 0
      %1910 = vmatpush1.bf16.msra.mxu0 0
      %1911 = vmatprep.subr.bf16.mxu0 0
      %1912 = vmatpush1.bf16.msra.mxu0 0
      %1913 = vmatprep.subr.bf16.mxu0 0
      %1914 = vmatpush1.bf16.msra.mxu0 %v1850
      %1915 = vmatprep.subr.bf16.mxu0 0
      %1916 = vmatpush1.bf16.msra.mxu0 %v1849
      %1917 = vmatprep.subr.bf16.mxu0 0
      %1918 = vmatpush2.bf16.msra.mxu0 0
      %1919 = vmatprep.subr.bf16.mxu0 0
      %1920 = vmatpush2.bf16.msra.mxu0 0
      %1921 = vmatprep.subr.bf16.mxu0 0
      %1922 = vmatpush2.bf16.msra.mxu0 0
      %1923 = vmatprep.subr.bf16.mxu0 0
      %1924 = vmatpush2.bf16.msra.mxu0 0
      %1925 = vmatprep.subr.bf16.mxu0 0
      %1926 = vmatpush2.bf16.msra.mxu0 0
      %1927 = vmatprep.subr.bf16.mxu0 0
      %1928 = vmatpush2.bf16.msra.mxu0 0
      %1929 = vmatprep.subr.bf16.mxu0 0
      %1930 = vmatpush2.bf16.msra.mxu0 0
      %1931 = vmatprep.subr.bf16.mxu0 0
      %1932 = vmatpush2.bf16.msra.mxu0 0
      %1933 = vmatprep.mubr.bf16.mxu0 0
      %1934 = vmatmul.mubr.bf16.gmra.mxu0 %v1854
      %v1935 = vpop.f32.mrf.mxu0
      %v1936 = vadd.f32 %v1840, %v1935
      %v1937 = vpop.f32.mrf.mxu0
      %v1938 = vpop.f32.mrf.mxu0
      %v1939 = vadd.f32 %v1840, %v1938
      %v1940 = vpop.f32.mrf.mxu0
      %1941 = vmatprep.mubr.bf16.mxu0 0
      %1942 = vmatmul.mubr.bf16.gmra.mxu0 %v1857
      %v1943 = vpop.f32.mrf.mxu0
      %v1944 = vadd.f32 %v1840, %v1943
      %v1945 = vpop.f32.mrf.mxu0
      %v1946 = vpop.f32.mrf.mxu0
      %v1947 = vadd.f32 %v1840, %v1946
      %v1948 = vpop.f32.mrf.mxu0
      %1949 = vmatprep.mubr.bf16.mxu0 0
      %1950 = vmatmul.mubr.bf16.gmra.mxu0 %v1860
      %v1951 = vpop.f32.mrf.mxu0
      %v1952 = vadd.f32 %v1840, %v1951
      %v1953 = vpop.f32.mrf.mxu0
      %v1954 = vpop.f32.mrf.mxu0
      %v1955 = vadd.f32 %v1840, %v1954
      %v1956 = vpop.f32.mrf.mxu0
      %1957 = vmatprep.mubr.bf16.mxu0 0
      %1958 = vmatmul.mubr.bf16.gmra.mxu0 %v1863
      %v1959 = vpop.f32.mrf.mxu0
      %v1960 = vadd.f32 %v1840, %v1959
      %v1961 = vpop.f32.mrf.mxu0
      %v1962 = vpop.f32.mrf.mxu0
      %v1963 = vadd.f32 %v1840, %v1962
      %v1964 = vpop.f32.mrf.mxu0
      %1965 = vmatprep.mubr.bf16.mxu0 0
      %1966 = vmatmul.mubr.bf16.gmra.mxu0 %v1866
      %v1967 = vpop.f32.mrf.mxu0
      %v1968 = vadd.f32 %v1840, %v1967
      %v1969 = vpop.f32.mrf.mxu0
      %v1970 = vpop.f32.mrf.mxu0
      %v1971 = vadd.f32 %v1840, %v1970
      %v1972 = vpop.f32.mrf.mxu0
      %1973 = vmatprep.mubr.bf16.mxu0 0
      %1974 = vmatmul.mubr.bf16.gmra.mxu0 %v1869
      %v1975 = vpop.f32.mrf.mxu0
      %v1976 = vadd.f32 %v1840, %v1975
      %v1977 = vpop.f32.mrf.mxu0
      %v1978 = vpop.f32.mrf.mxu0
      %v1979 = vadd.f32 %v1840, %v1978
      %v1980 = vpop.f32.mrf.mxu0
      %1981 = vmatprep.mubr.bf16.mxu0 0
      %1982 = vmatmul.mubr.bf16.gmra.mxu0 %v1872
      %v1983 = vpop.f32.mrf.mxu0
      %v1984 = vadd.f32 %v1840, %v1983
      %v1985 = vpop.f32.mrf.mxu0
      %v1986 = vpop.f32.mrf.mxu0
      %v1987 = vadd.f32 %v1840, %v1986
      %v1988 = vpop.f32.mrf.mxu0
      %1989 = vmatprep.mubr.bf16.mxu0 0
      %1990 = vmatmul.mubr.bf16.gmra.mxu0 %v1875
      %v1991 = vpop.f32.mrf.mxu0
      %v1992 = vadd.f32 %v1840, %v1991
      %v1993 = vpop.f32.mrf.mxu0
      %v1994 = vpop.f32.mrf.mxu0
      %v1995 = vadd.f32 %v1840, %v1994
      %v1996 = vpop.f32.mrf.mxu0
      %1997 = vmatprep.mubr.bf16.mxu0 0
      %1998 = vmatmul.mubr.bf16.gmra.mxu0 %v1878
      %v1999 = vpop.f32.mrf.mxu0
      %v2000 = vadd.f32 %v1840, %v1999
      %v2001 = vpop.f32.mrf.mxu0
      %v2002 = vpop.f32.mrf.mxu0
      %v2003 = vadd.f32 %v1840, %v2002
      %v2004 = vpop.f32.mrf.mxu0
      %2005 = vmatprep.mubr.bf16.mxu0 0
      %2006 = vmatmul.mubr.bf16.gmra.mxu0 %v1881
      %v2007 = vpop.f32.mrf.mxu0
      %v2008 = vadd.f32 %v1840, %v2007
      %v2009 = vpop.f32.mrf.mxu0
      %v2010 = vpop.f32.mrf.mxu0
      %v2011 = vadd.f32 %v1840, %v2010
      %v2012 = vpop.f32.mrf.mxu0
      %2013 = vmatprep.mubr.bf16.mxu0 0
      %2014 = vmatmul.mubr.bf16.gmra.mxu0 %v1884
      %v2015 = vpop.f32.mrf.mxu0
      %v2016 = vadd.f32 %v1840, %v2015
      %v2017 = vpop.f32.mrf.mxu0
      %v2018 = vpop.f32.mrf.mxu0
      %v2019 = vadd.f32 %v1840, %v2018
      %v2020 = vpop.f32.mrf.mxu0
      %2021 = vmatprep.mubr.bf16.mxu0 0
      %2022 = vmatmul.mubr.bf16.gmra.mxu0 %v1887
      %v2023 = vpop.f32.mrf.mxu0
      %v2024 = vadd.f32 %v1840, %v2023
      %v2025 = vpop.f32.mrf.mxu0
      %v2026 = vpop.f32.mrf.mxu0
      %v2027 = vadd.f32 %v1840, %v2026
      %v2028 = vpop.f32.mrf.mxu0
      %2029 = vmatprep.mubr.bf16.mxu0 0
      %2030 = vmatmul.mubr.bf16.gmra.mxu0 %v1890
      %v2031 = vpop.f32.mrf.mxu0
      %v2032 = vadd.f32 %v1840, %v2031
      %v2033 = vpop.f32.mrf.mxu0
      %v2034 = vpop.f32.mrf.mxu0
      %v2035 = vadd.f32 %v1840, %v2034
      %v2036 = vpop.f32.mrf.mxu0
      %2037 = vmatprep.mubr.bf16.mxu0 0
      %2038 = vmatmul.mubr.bf16.gmra.mxu0 %v1893
      %v2039 = vpop.f32.mrf.mxu0
      %v2040 = vadd.f32 %v1840, %v2039
      %v2041 = vpop.f32.mrf.mxu0
      %v2042 = vpop.f32.mrf.mxu0
      %v2043 = vadd.f32 %v1840, %v2042
      %v2044 = vpop.f32.mrf.mxu0
      %2045 = vmatprep.mubr.bf16.mxu0 0
      %2046 = vmatmul.mubr.bf16.gmra.mxu0 %v1896
      %v2047 = vpop.f32.mrf.mxu0
      %v2048 = vadd.f32 %v1840, %v2047
      %v2049 = vpop.f32.mrf.mxu0
      %v2050 = vpop.f32.mrf.mxu0
      %v2051 = vadd.f32 %v1840, %v2050
      %v2052 = vpop.f32.mrf.mxu0
      %2053 = vmatprep.mubr.bf16.mxu0 0
      %2054 = vmatmul.mubr.bf16.gmra.mxu0 %v1899
      %v2055 = vpop.f32.mrf.mxu0
      %v2056 = vadd.f32 %v1840, %v2055
      %v2057 = vpop.f32.mrf.mxu0
      %v2058 = vpop.f32.mrf.mxu0
      %v2059 = vadd.f32 %v1840, %v2058
      %v2060 = vpop.f32.mrf.mxu0
      %2061 = vdwg.mxu0
      %v2062 = vpack.c.bf16 %v1939, %v1936
      %v2063 = vpack.c.bf16 %v1947, %v1944
      %v2064 = vpack.c.bf16 %v1955, %v1952
      %v2065 = vpack.c.bf16 %v1963, %v1960
      %v2066 = vpack.c.bf16 %v1971, %v1968
      %v2067 = vpack.c.bf16 %v1979, %v1976
      %v2068 = vpack.c.bf16 %v1987, %v1984
      %v2069 = vpack.c.bf16 %v1995, %v1992
      %v2070 = vpack.c.bf16 %v2003, %v2000
      %v2071 = vpack.c.bf16 %v2011, %v2008
      %v2072 = vpack.c.bf16 %v2019, %v2016
      %v2073 = vpack.c.bf16 %v2027, %v2024
      %v2074 = vpack.c.bf16 %v2035, %v2032
      %v2075 = vpack.c.bf16 %v2043, %v2040
      %v2076 = vpack.c.bf16 %v2051, %v2048
      %v2077 = vpack.c.bf16 %v2059, %v2056
      %v2078 = vpack.c.bf16 %v1754, %v1753
      %v2079 = vpack.c.bf16 %v1756, %v1755
      %v2080 = vpack.c.bf16 %v1758, %v1757
      %v2081 = vpack.c.bf16 %v1760, %v1759
      %v2082 = vpack.c.bf16 %v1762, %v1761
      %v2083 = vpack.c.bf16 %v1764, %v1763
      %v2084 = vpack.c.bf16 %v1766, %v1765
      %v2085 = vpack.c.bf16 %v1768, %v1767
      %v2086 = vpack.c.bf16 %v1770, %v1769
      %v2087 = vpack.c.bf16 %v1772, %v1771
      %v2088 = vpack.c.bf16 %v1774, %v1773
      %v2089 = vpack.c.bf16 %v1776, %v1775
      %v2090 = vpack.c.bf16 %v1778, %v1777
      %v2091 = vpack.c.bf16 %v1780, %v1779
      %v2092 = vpack.c.bf16 %v1782, %v1781
      %v2093 = vpack.c.bf16 %v1784, %v1783
      %v2094 = vld [vmem:[%s516] sm:$0xf]
      %v2095 = vld [vmem:[%s516 + $0x4] sm:$0xf]
      %v2096 = vld [vmem:[%s516 + $0x8] sm:$0xf]
      %v2097 = vld [vmem:[%s516 + $0xc] sm:$0xf]
      %v2102 = vunpack.c.l.b16 %v2094
      %v2103 = vunpack.c.l.b16 %v2095
      %v2104 = vunpack.c.l.b16 %v2096
      %v2105 = vunpack.c.l.b16 %v2097
      %v2106 = vpack.c.b16 %v2103, %v2102
      %v2107 = vpack.c.b16 %v2105, %v2104
      %v2111 = vsel %vm783, %v2078, 0
      %v2114 = vsel %vm783, %v2079, 0
      %v2117 = vsel %vm783, %v2080, 0
      %v2120 = vsel %vm783, %v2081, 0
      %v2123 = vsel %vm783, %v2082, 0
      %v2126 = vsel %vm783, %v2083, 0
      %v2129 = vsel %vm783, %v2084, 0
      %v2132 = vsel %vm783, %v2085, 0
      %v2135 = vsel %vm783, %v2086, 0
      %v2138 = vsel %vm783, %v2087, 0
      %v2141 = vsel %vm783, %v2088, 0
      %v2144 = vsel %vm783, %v2089, 0
      %v2147 = vsel %vm783, %v2090, 0
      %v2150 = vsel %vm783, %v2091, 0
      %v2153 = vsel %vm783, %v2092, 0
      %v2156 = vsel %vm783, %v2093, 0
      %2158 = vmatprep.subr.bf16.mxu0 0
      %2159 = vmatpush1.bf16.msra.mxu0 0
      %2160 = vmatprep.subr.bf16.mxu0 0
      %2161 = vmatpush1.bf16.msra.mxu0 0
      %2162 = vmatprep.subr.bf16.mxu0 0
      %2163 = vmatpush1.bf16.msra.mxu0 0
      %2164 = vmatprep.subr.bf16.mxu0 0
      %2165 = vmatpush1.bf16.msra.mxu0 0
      %2166 = vmatprep.subr.bf16.mxu0 0
      %2167 = vmatpush1.bf16.msra.mxu0 0
      %2168 = vmatprep.subr.bf16.mxu0 0
      %2169 = vmatpush1.bf16.msra.mxu0 0
      %2170 = vmatprep.subr.bf16.mxu0 0
      %2171 = vmatpush1.bf16.msra.mxu0 %v2107
      %2172 = vmatprep.subr.bf16.mxu0 0
      %2173 = vmatpush1.bf16.msra.mxu0 %v2106
      %2174 = vmatprep.subr.bf16.mxu0 0
      %2175 = vmatpush2.bf16.msra.mxu0 0
      %2176 = vmatprep.subr.bf16.mxu0 0
      %2177 = vmatpush2.bf16.msra.mxu0 0
      %2178 = vmatprep.subr.bf16.mxu0 0
      %2179 = vmatpush2.bf16.msra.mxu0 0
      %2180 = vmatprep.subr.bf16.mxu0 0
      %2181 = vmatpush2.bf16.msra.mxu0 0
      %2182 = vmatprep.subr.bf16.mxu0 0
      %2183 = vmatpush2.bf16.msra.mxu0 0
      %2184 = vmatprep.subr.bf16.mxu0 0
      %2185 = vmatpush2.bf16.msra.mxu0 0
      %2186 = vmatprep.subr.bf16.mxu0 0
      %2187 = vmatpush2.bf16.msra.mxu0 0
      %2188 = vmatprep.subr.bf16.mxu0 0
      %2189 = vmatpush2.bf16.msra.mxu0 0
      %2190 = vmatprep.mubr.bf16.mxu0 0
      %2191 = vmatmul.mubr.bf16.gmra.mxu0 %v2111
      %v2192 = vpop.f32.mrf.mxu0
      %v2193 = vadd.f32 0.0, %v2192
      %v2194 = vpop.f32.mrf.mxu0
      %v2195 = vpop.f32.mrf.mxu0
      %v2196 = vadd.f32 0.0, %v2195
      %v2197 = vpop.f32.mrf.mxu0
      %2198 = vmatprep.mubr.bf16.mxu0 0
      %2199 = vmatmul.mubr.bf16.gmra.mxu0 %v2114
      %v2200 = vpop.f32.mrf.mxu0
      %v2201 = vadd.f32 0.0, %v2200
      %v2202 = vpop.f32.mrf.mxu0
      %v2203 = vpop.f32.mrf.mxu0
      %v2204 = vadd.f32 0.0, %v2203
      %v2205 = vpop.f32.mrf.mxu0
      %2206 = vmatprep.mubr.bf16.mxu0 0
      %2207 = vmatmul.mubr.bf16.gmra.mxu0 %v2117
      %v2208 = vpop.f32.mrf.mxu0
      %v2209 = vadd.f32 0.0, %v2208
      %v2210 = vpop.f32.mrf.mxu0
      %v2211 = vpop.f32.mrf.mxu0
      %v2212 = vadd.f32 0.0, %v2211
      %v2213 = vpop.f32.mrf.mxu0
      %2214 = vmatprep.mubr.bf16.mxu0 0
      %2215 = vmatmul.mubr.bf16.gmra.mxu0 %v2120
      %v2216 = vpop.f32.mrf.mxu0
      %v2217 = vadd.f32 0.0, %v2216
      %v2218 = vpop.f32.mrf.mxu0
      %v2219 = vpop.f32.mrf.mxu0
      %v2220 = vadd.f32 0.0, %v2219
      %v2221 = vpop.f32.mrf.mxu0
      %2222 = vmatprep.mubr.bf16.mxu0 0
      %2223 = vmatmul.mubr.bf16.gmra.mxu0 %v2123
      %v2224 = vpop.f32.mrf.mxu0
      %v2225 = vadd.f32 0.0, %v2224
      %v2226 = vpop.f32.mrf.mxu0
      %v2227 = vpop.f32.mrf.mxu0
      %v2228 = vadd.f32 0.0, %v2227
      %v2229 = vpop.f32.mrf.mxu0
      %2230 = vmatprep.mubr.bf16.mxu0 0
      %2231 = vmatmul.mubr.bf16.gmra.mxu0 %v2126
      %v2232 = vpop.f32.mrf.mxu0
      %v2233 = vadd.f32 0.0, %v2232
      %v2234 = vpop.f32.mrf.mxu0
      %v2235 = vpop.f32.mrf.mxu0
      %v2236 = vadd.f32 0.0, %v2235
      %v2237 = vpop.f32.mrf.mxu0
      %2238 = vmatprep.mubr.bf16.mxu0 0
      %2239 = vmatmul.mubr.bf16.gmra.mxu0 %v2129
      %v2240 = vpop.f32.mrf.mxu0
      %v2241 = vadd.f32 0.0, %v2240
      %v2242 = vpop.f32.mrf.mxu0
      %v2243 = vpop.f32.mrf.mxu0
      %v2244 = vadd.f32 0.0, %v2243
      %v2245 = vpop.f32.mrf.mxu0
      %2246 = vmatprep.mubr.bf16.mxu0 0
      %2247 = vmatmul.mubr.bf16.gmra.mxu0 %v2132
      %v2248 = vpop.f32.mrf.mxu0
      %v2249 = vadd.f32 0.0, %v2248
      %v2250 = vpop.f32.mrf.mxu0
      %v2251 = vpop.f32.mrf.mxu0
      %v2252 = vadd.f32 0.0, %v2251
      %v2253 = vpop.f32.mrf.mxu0
      %2254 = vmatprep.mubr.bf16.mxu0 0
      %2255 = vmatmul.mubr.bf16.gmra.mxu0 %v2135
      %v2256 = vpop.f32.mrf.mxu0
      %v2257 = vadd.f32 0.0, %v2256
      %v2258 = vpop.f32.mrf.mxu0
      %v2259 = vpop.f32.mrf.mxu0
      %v2260 = vadd.f32 0.0, %v2259
      %v2261 = vpop.f32.mrf.mxu0
      %2262 = vmatprep.mubr.bf16.mxu0 0
      %2263 = vmatmul.mubr.bf16.gmra.mxu0 %v2138
      %v2264 = vpop.f32.mrf.mxu0
      %v2265 = vadd.f32 0.0, %v2264
      %v2266 = vpop.f32.mrf.mxu0
      %v2267 = vpop.f32.mrf.mxu0
      %v2268 = vadd.f32 0.0, %v2267
      %v2269 = vpop.f32.mrf.mxu0
      %2270 = vmatprep.mubr.bf16.mxu0 0
      %2271 = vmatmul.mubr.bf16.gmra.mxu0 %v2141
      %v2272 = vpop.f32.mrf.mxu0
      %v2273 = vadd.f32 0.0, %v2272
      %v2274 = vpop.f32.mrf.mxu0
      %v2275 = vpop.f32.mrf.mxu0
      %v2276 = vadd.f32 0.0, %v2275
      %v2277 = vpop.f32.mrf.mxu0
      %2278 = vmatprep.mubr.bf16.mxu0 0
      %2279 = vmatmul.mubr.bf16.gmra.mxu0 %v2144
      %v2280 = vpop.f32.mrf.mxu0
      %v2281 = vadd.f32 0.0, %v2280
      %v2282 = vpop.f32.mrf.mxu0
      %v2283 = vpop.f32.mrf.mxu0
      %v2284 = vadd.f32 0.0, %v2283
      %v2285 = vpop.f32.mrf.mxu0
      %2286 = vmatprep.mubr.bf16.mxu0 0
      %2287 = vmatmul.mubr.bf16.gmra.mxu0 %v2147
      %v2288 = vpop.f32.mrf.mxu0
      %v2289 = vadd.f32 0.0, %v2288
      %v2290 = vpop.f32.mrf.mxu0
      %v2291 = vpop.f32.mrf.mxu0
      %v2292 = vadd.f32 0.0, %v2291
      %v2293 = vpop.f32.mrf.mxu0
      %2294 = vmatprep.mubr.bf16.mxu0 0
      %2295 = vmatmul.mubr.bf16.gmra.mxu0 %v2150
      %v2296 = vpop.f32.mrf.mxu0
      %v2297 = vadd.f32 0.0, %v2296
      %v2298 = vpop.f32.mrf.mxu0
      %v2299 = vpop.f32.mrf.mxu0
      %v2300 = vadd.f32 0.0, %v2299
      %v2301 = vpop.f32.mrf.mxu0
      %2302 = vmatprep.mubr.bf16.mxu0 0
      %2303 = vmatmul.mubr.bf16.gmra.mxu0 %v2153
      %v2304 = vpop.f32.mrf.mxu0
      %v2305 = vadd.f32 0.0, %v2304
      %v2306 = vpop.f32.mrf.mxu0
      %v2307 = vpop.f32.mrf.mxu0
      %v2308 = vadd.f32 0.0, %v2307
      %v2309 = vpop.f32.mrf.mxu0
      %2310 = vmatprep.mubr.bf16.mxu0 0
      %2311 = vmatmul.mubr.bf16.gmra.mxu0 %v2156
      %v2312 = vpop.f32.mrf.mxu0
      %v2313 = vadd.f32 0.0, %v2312
      %v2314 = vpop.f32.mrf.mxu0
      %v2315 = vpop.f32.mrf.mxu0
      %v2316 = vadd.f32 0.0, %v2315
      %v2317 = vpop.f32.mrf.mxu0
      %2318 = vdwg.mxu0
      %v2319 = vlaneseq
      %v2320 = vshrl.u32 %v2319, 7
      %v2321 = vsub.s32 3, %v2320
      %v2322 = vrot.slane %v749, %v2321
      %v2323 = vadd.f32 %v2193, %v2322
      %v2324 = vadd.f32 %v2196, %v2322
      %v2325 = vadd.f32 %v2201, %v2322
      %v2326 = vadd.f32 %v2204, %v2322
      %v2327 = vadd.f32 %v2209, %v2322
      %v2328 = vadd.f32 %v2212, %v2322
      %v2329 = vadd.f32 %v2217, %v2322
      %v2330 = vadd.f32 %v2220, %v2322
      %v2331 = vadd.f32 %v2225, %v2322
      %v2332 = vadd.f32 %v2228, %v2322
      %v2333 = vadd.f32 %v2233, %v2322
      %v2334 = vadd.f32 %v2236, %v2322
      %v2335 = vadd.f32 %v2241, %v2322
      %v2336 = vadd.f32 %v2244, %v2322
      %v2337 = vadd.f32 %v2249, %v2322
      %v2338 = vadd.f32 %v2252, %v2322
      %v2339 = vadd.f32 %v2257, %v2322
      %v2340 = vadd.f32 %v2260, %v2322
      %v2341 = vadd.f32 %v2265, %v2322
      %v2342 = vadd.f32 %v2268, %v2322
      %v2343 = vadd.f32 %v2273, %v2322
      %v2344 = vadd.f32 %v2276, %v2322
      %v2345 = vadd.f32 %v2281, %v2322
      %v2346 = vadd.f32 %v2284, %v2322
      %v2347 = vadd.f32 %v2289, %v2322
      %v2348 = vadd.f32 %v2292, %v2322
      %v2349 = vadd.f32 %v2297, %v2322
      %v2350 = vadd.f32 %v2300, %v2322
      %v2351 = vadd.f32 %v2305, %v2322
      %v2352 = vadd.f32 %v2308, %v2322
      %v2353 = vadd.f32 %v2313, %v2322
      %v2354 = vadd.f32 %v2316, %v2322
      %v2355 = vpack.c.bf16 %v2324, %v2323
      %v2356 = vpack.c.bf16 %v2326, %v2325
      %v2357 = vpack.c.bf16 %v2328, %v2327
      %v2358 = vpack.c.bf16 %v2330, %v2329
      %v2359 = vpack.c.bf16 %v2332, %v2331
      %v2360 = vpack.c.bf16 %v2334, %v2333
      %v2361 = vpack.c.bf16 %v2336, %v2335
      %v2362 = vpack.c.bf16 %v2338, %v2337
      %v2363 = vpack.c.bf16 %v2340, %v2339
      %v2364 = vpack.c.bf16 %v2342, %v2341
      %v2365 = vpack.c.bf16 %v2344, %v2343
      %v2366 = vpack.c.bf16 %v2346, %v2345
      %v2367 = vpack.c.bf16 %v2348, %v2347
      %v2368 = vpack.c.bf16 %v2350, %v2349
      %v2369 = vpack.c.bf16 %v2352, %v2351
      %v2370 = vpack.c.bf16 %v2354, %v2353
      %v2371 = vlaneseq
      %v2372 = vshrl.u32 %v2371, 7
      %v2373 = vsub.s32 4, %v2372
      %v2374 = vrot.slane %v749, %v2373
      %2376 = vrot.lane.b32.xlu0 %v2374, 32
      %v2377 = vpop.permute.xlu0 %2376
      %v2379 = vadd.f32 %v2193, %v2377
      %v2380 = vadd.f32 %v2196, %v2377
      %v2381 = vadd.f32 %v2201, %v2377
      %v2382 = vadd.f32 %v2204, %v2377
      %v2383 = vadd.f32 %v2209, %v2377
      %v2384 = vadd.f32 %v2212, %v2377
      %v2385 = vadd.f32 %v2217, %v2377
      %v2386 = vadd.f32 %v2220, %v2377
      %v2387 = vadd.f32 %v2225, %v2377
      %v2388 = vadd.f32 %v2228, %v2377
      %v2389 = vadd.f32 %v2233, %v2377
      %v2390 = vadd.f32 %v2236, %v2377
      %v2391 = vadd.f32 %v2241, %v2377
      %v2392 = vadd.f32 %v2244, %v2377
      %v2393 = vadd.f32 %v2249, %v2377
      %v2394 = vadd.f32 %v2252, %v2377
      %v2395 = vadd.f32 %v2257, %v2377
      %v2396 = vadd.f32 %v2260, %v2377
      %v2397 = vadd.f32 %v2265, %v2377
      %v2398 = vadd.f32 %v2268, %v2377
      %v2399 = vadd.f32 %v2273, %v2377
      %v2400 = vadd.f32 %v2276, %v2377
      %v2401 = vadd.f32 %v2281, %v2377
      %v2402 = vadd.f32 %v2284, %v2377
      %v2403 = vadd.f32 %v2289, %v2377
      %v2404 = vadd.f32 %v2292, %v2377
      %v2405 = vadd.f32 %v2297, %v2377
      %v2406 = vadd.f32 %v2300, %v2377
      %v2407 = vadd.f32 %v2305, %v2377
      %v2408 = vadd.f32 %v2308, %v2377
      %v2409 = vadd.f32 %v2313, %v2377
      %v2410 = vadd.f32 %v2316, %v2377
      %v2411 = vpack.c.bf16 %v2380, %v2379
      %v2412 = vpack.c.bf16 %v2382, %v2381
      %v2413 = vpack.c.bf16 %v2384, %v2383
      %v2414 = vpack.c.bf16 %v2386, %v2385
      %v2415 = vpack.c.bf16 %v2388, %v2387
      %v2416 = vpack.c.bf16 %v2390, %v2389
      %v2417 = vpack.c.bf16 %v2392, %v2391
      %v2418 = vpack.c.bf16 %v2394, %v2393
      %v2419 = vpack.c.bf16 %v2396, %v2395
      %v2420 = vpack.c.bf16 %v2398, %v2397
      %v2421 = vpack.c.bf16 %v2400, %v2399
      %v2422 = vpack.c.bf16 %v2402, %v2401
      %v2423 = vpack.c.bf16 %v2404, %v2403
      %v2424 = vpack.c.bf16 %v2406, %v2405
      %v2425 = vpack.c.bf16 %v2408, %v2407
      %v2426 = vpack.c.bf16 %v2410, %v2409
      %v2427 = vld [vmem:[%s536] sm:$0xff]
      %v2428 = vld [vmem:[%s536 + $0x8] sm:$0xff]
      %v2429 = vld [vmem:[%s536 + $0x10] sm:$0xff]
      %v2430 = vld [vmem:[%s536 + $0x18] sm:$0xff]
      %v2431 = vld [vmem:[%s536 + $0x20] sm:$0xff]
      %v2432 = vld [vmem:[%s536 + $0x28] sm:$0xff]
      %v2433 = vld [vmem:[%s536 + $0x30] sm:$0xff]
      %v2434 = vld [vmem:[%s536 + $0x38] sm:$0xff]
      %vm2435 = vcmask 64512
      %v2437 = vsel %vm2435, %v2062, 0
      %v2440 = vsel %vm2435, %v2063, 0
      %v2443 = vsel %vm2435, %v2064, 0
      %v2446 = vsel %vm2435, %v2065, 0
      %v2449 = vsel %vm2435, %v2355, 0
      %v2452 = vsel %vm2435, %v2356, 0
      %v2455 = vsel %vm2435, %v2357, 0
      %v2458 = vsel %vm2435, %v2358, 0
      %2460 = vmatprep.subr.bf16.mxu0 0
      %2461 = vmatpush1.bf16.xpose.msra.mxu0 0
      %2462 = vmatprep.subr.bf16.mxu0 0
      %2463 = vmatpush1.bf16.xpose.msra.mxu0 0
      %2464 = vmatprep.subr.bf16.mxu0 0
      %2465 = vmatpush1.bf16.xpose.msra.mxu0 0
      %2466 = vmatprep.subr.bf16.mxu0 0
      %2467 = vmatpush1.bf16.xpose.msra.mxu0 0
      %2468 = vmatprep.subr.bf16.mxu0 0
      %2469 = vmatpush1.bf16.xpose.msra.mxu0 %v2458
      %2470 = vmatprep.subr.bf16.mxu0 0
      %2471 = vmatpush1.bf16.xpose.msra.mxu0 %v2455
      %2472 = vmatprep.subr.bf16.mxu0 0
      %2473 = vmatpush1.bf16.xpose.msra.mxu0 %v2452
      %2474 = vmatprep.subr.bf16.mxu0 0
      %2475 = vmatpush1.bf16.xpose.msra.mxu0 %v2449
      %2476 = vmatprep.subr.bf16.mxu0 0
      %2477 = vmatpush2.bf16.xpose.msra.mxu0 0
      %2478 = vmatprep.subr.bf16.mxu0 0
      %2479 = vmatpush2.bf16.xpose.msra.mxu0 0
      %2480 = vmatprep.subr.bf16.mxu0 0
      %2481 = vmatpush2.bf16.xpose.msra.mxu0 0
      %2482 = vmatprep.subr.bf16.mxu0 0
      %2483 = vmatpush2.bf16.xpose.msra.mxu0 0
      %2484 = vmatprep.subr.bf16.mxu0 0
      %2485 = vmatpush2.bf16.xpose.msra.mxu0 0
      %2486 = vmatprep.subr.bf16.mxu0 0
      %2487 = vmatpush2.bf16.xpose.msra.mxu0 0
      %2488 = vmatprep.subr.bf16.mxu0 0
      %2489 = vmatpush2.bf16.xpose.msra.mxu0 0
      %2490 = vmatprep.subr.bf16.mxu0 0
      %2491 = vmatpush2.bf16.xpose.msra.mxu0 0
      %2492 = vmatprep.mubr.bf16.mxu0 0
      %2493 = vmatmul.mubr.bf16.gmra.mxu0 %v2437
      %v2494 = vpop.f32.mrf.mxu0
      %v2495 = vadd.f32 %v2427, %v2494
      %v2496 = vpop.f32.mrf.mxu0
      %v2497 = vpop.f32.mrf.mxu0
      %v2498 = vadd.f32 %v2428, %v2497
      %v2499 = vpop.f32.mrf.mxu0
      %2500 = vmatprep.mubr.bf16.mxu0 0
      %2501 = vmatmul.mubr.bf16.gmra.mxu0 %v2440
      %v2502 = vpop.f32.mrf.mxu0
      %v2503 = vadd.f32 %v2429, %v2502
      %v2504 = vpop.f32.mrf.mxu0
      %v2505 = vpop.f32.mrf.mxu0
      %v2506 = vadd.f32 %v2430, %v2505
      %v2507 = vpop.f32.mrf.mxu0
      %2508 = vmatprep.mubr.bf16.mxu0 0
      %2509 = vmatmul.mubr.bf16.gmra.mxu0 %v2443
      %v2510 = vpop.f32.mrf.mxu0
      %v2511 = vadd.f32 %v2431, %v2510
      %v2512 = vpop.f32.mrf.mxu0
      %v2513 = vpop.f32.mrf.mxu0
      %v2514 = vadd.f32 %v2432, %v2513
      %v2515 = vpop.f32.mrf.mxu0
      %2516 = vmatprep.mubr.bf16.mxu0 0
      %2517 = vmatmul.mubr.bf16.gmra.mxu0 %v2446
      %v2518 = vpop.f32.mrf.mxu0
      %v2519 = vadd.f32 %v2433, %v2518
      %v2520 = vpop.f32.mrf.mxu0
      %v2521 = vpop.f32.mrf.mxu0
      %v2522 = vadd.f32 %v2434, %v2521
      %v2523 = vpop.f32.mrf.mxu0
      %2524 = vdwg.mxu0
      %v2526 = vsel %vm2435, %v2066, 0
      %v2529 = vsel %vm2435, %v2067, 0
      %v2532 = vsel %vm2435, %v2068, 0
      %v2535 = vsel %vm2435, %v2069, 0
      %v2538 = vsel %vm2435, %v2359, 0
      %v2541 = vsel %vm2435, %v2360, 0
      %v2544 = vsel %vm2435, %v2361, 0
      %v2547 = vsel %vm2435, %v2362, 0
      %2549 = vmatprep.subr.bf16.mxu0 0
      %2550 = vmatpush1.bf16.xpose.msra.mxu0 0
      %2551 = vmatprep.subr.bf16.mxu0 0
      %2552 = vmatpush1.bf16.xpose.msra.mxu0 0
      %2553 = vmatprep.subr.bf16.mxu0 0
      %2554 = vmatpush1.bf16.xpose.msra.mxu0 0
      %2555 = vmatprep.subr.bf16.mxu0 0
      %2556 = vmatpush1.bf16.xpose.msra.mxu0 0
      %2557 = vmatprep.subr.bf16.mxu0 0
      %2558 = vmatpush1.bf16.xpose.msra.mxu0 %v2547
      %2559 = vmatprep.subr.bf16.mxu0 0
      %2560 = vmatpush1.bf16.xpose.msra.mxu0 %v2544
      %2561 = vmatprep.subr.bf16.mxu0 0
      %2562 = vmatpush1.bf16.xpose.msra.mxu0 %v2541
      %2563 = vmatprep.subr.bf16.mxu0 0
      %2564 = vmatpush1.bf16.xpose.msra.mxu0 %v2538
      %2565 = vmatprep.subr.bf16.mxu0 0
      %2566 = vmatpush2.bf16.xpose.msra.mxu0 0
      %2567 = vmatprep.subr.bf16.mxu0 0
      %2568 = vmatpush2.bf16.xpose.msra.mxu0 0
      %2569 = vmatprep.subr.bf16.mxu0 0
      %2570 = vmatpush2.bf16.xpose.msra.mxu0 0
      %2571 = vmatprep.subr.bf16.mxu0 0
      %2572 = vmatpush2.bf16.xpose.msra.mxu0 0
      %2573 = vmatprep.subr.bf16.mxu0 0
      %2574 = vmatpush2.bf16.xpose.msra.mxu0 0
      %2575 = vmatprep.subr.bf16.mxu0 0
      %2576 = vmatpush2.bf16.xpose.msra.mxu0 0
      %2577 = vmatprep.subr.bf16.mxu0 0
      %2578 = vmatpush2.bf16.xpose.msra.mxu0 0
      %2579 = vmatprep.subr.bf16.mxu0 0
      %2580 = vmatpush2.bf16.xpose.msra.mxu0 0
      %2581 = vmatprep.mubr.bf16.mxu0 0
      %2582 = vmatmul.mubr.bf16.gmra.mxu0 %v2526
      %v2583 = vpop.f32.mrf.mxu0
      %v2584 = vadd.f32 %v2427, %v2583
      %v2585 = vpop.f32.mrf.mxu0
      %v2586 = vpop.f32.mrf.mxu0
      %v2587 = vadd.f32 %v2428, %v2586
      %v2588 = vpop.f32.mrf.mxu0
      %2589 = vmatprep.mubr.bf16.mxu0 0
      %2590 = vmatmul.mubr.bf16.gmra.mxu0 %v2529
      %v2591 = vpop.f32.mrf.mxu0
      %v2592 = vadd.f32 %v2429, %v2591
      %v2593 = vpop.f32.mrf.mxu0
      %v2594 = vpop.f32.mrf.mxu0
      %v2595 = vadd.f32 %v2430, %v2594
      %v2596 = vpop.f32.mrf.mxu0
      %2597 = vmatprep.mubr.bf16.mxu0 0
      %2598 = vmatmul.mubr.bf16.gmra.mxu0 %v2532
      %v2599 = vpop.f32.mrf.mxu0
      %v2600 = vadd.f32 %v2431, %v2599
      %v2601 = vpop.f32.mrf.mxu0
      %v2602 = vpop.f32.mrf.mxu0
      %v2603 = vadd.f32 %v2432, %v2602
      %v2604 = vpop.f32.mrf.mxu0
      %2605 = vmatprep.mubr.bf16.mxu0 0
      %2606 = vmatmul.mubr.bf16.gmra.mxu0 %v2535
      %v2607 = vpop.f32.mrf.mxu0
      %v2608 = vadd.f32 %v2433, %v2607
      %v2609 = vpop.f32.mrf.mxu0
      %v2610 = vpop.f32.mrf.mxu0
      %v2611 = vadd.f32 %v2434, %v2610
      %v2612 = vpop.f32.mrf.mxu0
      %2613 = vdwg.mxu0
      %v2615 = vsel %vm2435, %v2070, 0
      %v2618 = vsel %vm2435, %v2071, 0
      %v2621 = vsel %vm2435, %v2072, 0
      %v2624 = vsel %vm2435, %v2073, 0
      %v2627 = vsel %vm2435, %v2363, 0
      %v2630 = vsel %vm2435, %v2364, 0
      %v2633 = vsel %vm2435, %v2365, 0
      %v2636 = vsel %vm2435, %v2366, 0
      %2638 = vmatprep.subr.bf16.mxu0 0
      %2639 = vmatpush1.bf16.xpose.msra.mxu0 0
      %2640 = vmatprep.subr.bf16.mxu0 0
      %2641 = vmatpush1.bf16.xpose.msra.mxu0 0
      %2642 = vmatprep.subr.bf16.mxu0 0
      %2643 = vmatpush1.bf16.xpose.msra.mxu0 0
      %2644 = vmatprep.subr.bf16.mxu0 0
      %2645 = vmatpush1.bf16.xpose.msra.mxu0 0
      %2646 = vmatprep.subr.bf16.mxu0 0
      %2647 = vmatpush1.bf16.xpose.msra.mxu0 %v2636
      %2648 = vmatprep.subr.bf16.mxu0 0
      %2649 = vmatpush1.bf16.xpose.msra.mxu0 %v2633
      %2650 = vmatprep.subr.bf16.mxu0 0
      %2651 = vmatpush1.bf16.xpose.msra.mxu0 %v2630
      %2652 = vmatprep.subr.bf16.mxu0 0
      %2653 = vmatpush1.bf16.xpose.msra.mxu0 %v2627
      %2654 = vmatprep.subr.bf16.mxu0 0
      %2655 = vmatpush2.bf16.xpose.msra.mxu0 0
      %2656 = vmatprep.subr.bf16.mxu0 0
      %2657 = vmatpush2.bf16.xpose.msra.mxu0 0
      %2658 = vmatprep.subr.bf16.mxu0 0
      %2659 = vmatpush2.bf16.xpose.msra.mxu0 0
      %2660 = vmatprep.subr.bf16.mxu0 0
      %2661 = vmatpush2.bf16.xpose.msra.mxu0 0
      %2662 = vmatprep.subr.bf16.mxu0 0
      %2663 = vmatpush2.bf16.xpose.msra.mxu0 0
      %2664 = vmatprep.subr.bf16.mxu0 0
      %2665 = vmatpush2.bf16.xpose.msra.mxu0 0
      %2666 = vmatprep.subr.bf16.mxu0 0
      %2667 = vmatpush2.bf16.xpose.msra.mxu0 0
      %2668 = vmatprep.subr.bf16.mxu0 0
      %2669 = vmatpush2.bf16.xpose.msra.mxu0 0
      %2670 = vmatprep.mubr.bf16.mxu0 0
      %2671 = vmatmul.mubr.bf16.gmra.mxu0 %v2615
      %v2672 = vpop.f32.mrf.mxu0
      %v2673 = vadd.f32 %v2427, %v2672
      %v2674 = vpop.f32.mrf.mxu0
      %v2675 = vpop.f32.mrf.mxu0
      %v2676 = vadd.f32 %v2428, %v2675
      %v2677 = vpop.f32.mrf.mxu0
      %2678 = vmatprep.mubr.bf16.mxu0 0
      %2679 = vmatmul.mubr.bf16.gmra.mxu0 %v2618
      %v2680 = vpop.f32.mrf.mxu0
      %v2681 = vadd.f32 %v2429, %v2680
      %v2682 = vpop.f32.mrf.mxu0
      %v2683 = vpop.f32.mrf.mxu0
      %v2684 = vadd.f32 %v2430, %v2683
      %v2685 = vpop.f32.mrf.mxu0
      %2686 = vmatprep.mubr.bf16.mxu0 0
      %2687 = vmatmul.mubr.bf16.gmra.mxu0 %v2621
      %v2688 = vpop.f32.mrf.mxu0
      %v2689 = vadd.f32 %v2431, %v2688
      %v2690 = vpop.f32.mrf.mxu0
      %v2691 = vpop.f32.mrf.mxu0
      %v2692 = vadd.f32 %v2432, %v2691
      %v2693 = vpop.f32.mrf.mxu0
      %2694 = vmatprep.mubr.bf16.mxu0 0
      %2695 = vmatmul.mubr.bf16.gmra.mxu0 %v2624
      %v2696 = vpop.f32.mrf.mxu0
      %v2697 = vadd.f32 %v2433, %v2696
      %v2698 = vpop.f32.mrf.mxu0
      %v2699 = vpop.f32.mrf.mxu0
      %v2700 = vadd.f32 %v2434, %v2699
      %v2701 = vpop.f32.mrf.mxu0
      %2702 = vdwg.mxu0
      %v2704 = vsel %vm2435, %v2074, 0
      %v2707 = vsel %vm2435, %v2075, 0
      %v2710 = vsel %vm2435, %v2076, 0
      %v2713 = vsel %vm2435, %v2077, 0
      %v2716 = vsel %vm2435, %v2367, 0
      %v2719 = vsel %vm2435, %v2368, 0
      %v2722 = vsel %vm2435, %v2369, 0
      %v2725 = vsel %vm2435, %v2370, 0
      %2727 = vmatprep.subr.bf16.mxu0 0
      %2728 = vmatpush1.bf16.xpose.msra.mxu0 0
      %2729 = vmatprep.subr.bf16.mxu0 0
      %2730 = vmatpush1.bf16.xpose.msra.mxu0 0
      %2731 = vmatprep.subr.bf16.mxu0 0
      %2732 = vmatpush1.bf16.xpose.msra.mxu0 0
      %2733 = vmatprep.subr.bf16.mxu0 0
      %2734 = vmatpush1.bf16.xpose.msra.mxu0 0
      %2735 = vmatprep.subr.bf16.mxu0 0
      %2736 = vmatpush1.bf16.xpose.msra.mxu0 %v2725
      %2737 = vmatprep.subr.bf16.mxu0 0
      %2738 = vmatpush1.bf16.xpose.msra.mxu0 %v2722
      %2739 = vmatprep.subr.bf16.mxu0 0
      %2740 = vmatpush1.bf16.xpose.msra.mxu0 %v2719
      %2741 = vmatprep.subr.bf16.mxu0 0
      %2742 = vmatpush1.bf16.xpose.msra.mxu0 %v2716
      %2743 = vmatprep.subr.bf16.mxu0 0
      %2744 = vmatpush2.bf16.xpose.msra.mxu0 0
      %2745 = vmatprep.subr.bf16.mxu0 0
      %2746 = vmatpush2.bf16.xpose.msra.mxu0 0
      %2747 = vmatprep.subr.bf16.mxu0 0
      %2748 = vmatpush2.bf16.xpose.msra.mxu0 0
      %2749 = vmatprep.subr.bf16.mxu0 0
      %2750 = vmatpush2.bf16.xpose.msra.mxu0 0
      %2751 = vmatprep.subr.bf16.mxu0 0
      %2752 = vmatpush2.bf16.xpose.msra.mxu0 0
      %2753 = vmatprep.subr.bf16.mxu0 0
      %2754 = vmatpush2.bf16.xpose.msra.mxu0 0
      %2755 = vmatprep.subr.bf16.mxu0 0
      %2756 = vmatpush2.bf16.xpose.msra.mxu0 0
      %2757 = vmatprep.subr.bf16.mxu0 0
      %2758 = vmatpush2.bf16.xpose.msra.mxu0 0
      %2759 = vmatprep.mubr.bf16.mxu0 0
      %2760 = vmatmul.mubr.bf16.gmra.mxu0 %v2704
      %v2761 = vpop.f32.mrf.mxu0
      %v2762 = vadd.f32 %v2427, %v2761
      %v2763 = vpop.f32.mrf.mxu0
      %v2764 = vpop.f32.mrf.mxu0
      %v2765 = vadd.f32 %v2428, %v2764
      %v2766 = vpop.f32.mrf.mxu0
      %2767 = vmatprep.mubr.bf16.mxu0 0
      %2768 = vmatmul.mubr.bf16.gmra.mxu0 %v2707
      %v2769 = vpop.f32.mrf.mxu0
      %v2770 = vadd.f32 %v2429, %v2769
      %v2771 = vpop.f32.mrf.mxu0
      %v2772 = vpop.f32.mrf.mxu0
      %v2773 = vadd.f32 %v2430, %v2772
      %v2774 = vpop.f32.mrf.mxu0
      %2775 = vmatprep.mubr.bf16.mxu0 0
      %2776 = vmatmul.mubr.bf16.gmra.mxu0 %v2710
      %v2777 = vpop.f32.mrf.mxu0
      %v2778 = vadd.f32 %v2431, %v2777
      %v2779 = vpop.f32.mrf.mxu0
      %v2780 = vpop.f32.mrf.mxu0
      %v2781 = vadd.f32 %v2432, %v2780
      %v2782 = vpop.f32.mrf.mxu0
      %2783 = vmatprep.mubr.bf16.mxu0 0
      %2784 = vmatmul.mubr.bf16.gmra.mxu0 %v2713
      %v2785 = vpop.f32.mrf.mxu0
      %v2786 = vadd.f32 %v2433, %v2785
      %v2787 = vpop.f32.mrf.mxu0
      %v2788 = vpop.f32.mrf.mxu0
      %v2789 = vadd.f32 %v2434, %v2788
      %v2790 = vpop.f32.mrf.mxu0
      %2791 = vdwg.mxu0
      %vm2792 = vcmask 523264
      %v2793 = vsel %vm2792, %v2495, -inf
      %2794 = vmax.xlane.f32.xlu0 %v2793
      %v2795 = vpop.xlane.xlu0 %2794
      %v2796 = vsel %vm2792, %v2498, -inf
      %2797 = vmax.xlane.f32.xlu0 %v2796
      %v2798 = vpop.xlane.xlu0 %2797
      %v2799 = vsel %vm2792, %v2503, -inf
      %2800 = vmax.xlane.f32.xlu0 %v2799
      %v2801 = vpop.xlane.xlu0 %2800
      %v2802 = vsel %vm2792, %v2506, -inf
      %2803 = vmax.xlane.f32.xlu0 %v2802
      %v2804 = vpop.xlane.xlu0 %2803
      %v2805 = vsel %vm2792, %v2511, -inf
      %2806 = vmax.xlane.f32.xlu0 %v2805
      %v2807 = vpop.xlane.xlu0 %2806
      %v2808 = vsel %vm2792, %v2514, -inf
      %2809 = vmax.xlane.f32.xlu0 %v2808
      %v2810 = vpop.xlane.xlu0 %2809
      %v2811 = vsel %vm2792, %v2519, -inf
      %2812 = vmax.xlane.f32.xlu0 %v2811
      %v2813 = vpop.xlane.xlu0 %2812
      %v2814 = vsel %vm2792, %v2522, -inf
      %2815 = vmax.xlane.f32.xlu0 %v2814
      %v2816 = vpop.xlane.xlu0 %2815
      %v2817 = vsel %vm2792, %v2584, -inf
      %2818 = vmax.xlane.f32.xlu0 %v2817
      %v2819 = vpop.xlane.xlu0 %2818
      %v2820 = vsel %vm2792, %v2587, -inf
      %2821 = vmax.xlane.f32.xlu0 %v2820
      %v2822 = vpop.xlane.xlu0 %2821
      %v2823 = vsel %vm2792, %v2592, -inf
      %2824 = vmax.xlane.f32.xlu0 %v2823
      %v2825 = vpop.xlane.xlu0 %2824
      %v2826 = vsel %vm2792, %v2595, -inf
      %2827 = vmax.xlane.f32.xlu0 %v2826
      %v2828 = vpop.xlane.xlu0 %2827
      %v2829 = vsel %vm2792, %v2600, -inf
      %2830 = vmax.xlane.f32.xlu0 %v2829
      %v2831 = vpop.xlane.xlu0 %2830
      %v2832 = vsel %vm2792, %v2603, -inf
      %2833 = vmax.xlane.f32.xlu0 %v2832
      %v2834 = vpop.xlane.xlu0 %2833
      %v2835 = vsel %vm2792, %v2608, -inf
      %2836 = vmax.xlane.f32.xlu0 %v2835
      %v2837 = vpop.xlane.xlu0 %2836
      %v2838 = vsel %vm2792, %v2611, -inf
      %2839 = vmax.xlane.f32.xlu0 %v2838
      %v2840 = vpop.xlane.xlu0 %2839
      %v2841 = vsel %vm2792, %v2673, -inf
      %2842 = vmax.xlane.f32.xlu0 %v2841
      %v2843 = vpop.xlane.xlu0 %2842
      %v2844 = vsel %vm2792, %v2676, -inf
      %2845 = vmax.xlane.f32.xlu0 %v2844
      %v2846 = vpop.xlane.xlu0 %2845
      %v2847 = vsel %vm2792, %v2681, -inf
      %2848 = vmax.xlane.f32.xlu0 %v2847
      %v2849 = vpop.xlane.xlu0 %2848
      %v2850 = vsel %vm2792, %v2684, -inf
      %2851 = vmax.xlane.f32.xlu0 %v2850
      %v2852 = vpop.xlane.xlu0 %2851
      %v2853 = vsel %vm2792, %v2689, -inf
      %2854 = vmax.xlane.f32.xlu0 %v2853
      %v2855 = vpop.xlane.xlu0 %2854
      %v2856 = vsel %vm2792, %v2692, -inf
      %2857 = vmax.xlane.f32.xlu0 %v2856
      %v2858 = vpop.xlane.xlu0 %2857
      %v2859 = vsel %vm2792, %v2697, -inf
      %2860 = vmax.xlane.f32.xlu0 %v2859
      %v2861 = vpop.xlane.xlu0 %2860
      %v2862 = vsel %vm2792, %v2700, -inf
      %2863 = vmax.xlane.f32.xlu0 %v2862
      %v2864 = vpop.xlane.xlu0 %2863
      %v2865 = vsel %vm2792, %v2762, -inf
      %2866 = vmax.xlane.f32.xlu0 %v2865
      %v2867 = vpop.xlane.xlu0 %2866
      %v2868 = vsel %vm2792, %v2765, -inf
      %2869 = vmax.xlane.f32.xlu0 %v2868
      %v2870 = vpop.xlane.xlu0 %2869
      %v2871 = vsel %vm2792, %v2770, -inf
      %2872 = vmax.xlane.f32.xlu0 %v2871
      %v2873 = vpop.xlane.xlu0 %2872
      %v2874 = vsel %vm2792, %v2773, -inf
      %2875 = vmax.xlane.f32.xlu0 %v2874
      %v2876 = vpop.xlane.xlu0 %2875
      %v2877 = vsel %vm2792, %v2778, -inf
      %2878 = vmax.xlane.f32.xlu0 %v2877
      %v2879 = vpop.xlane.xlu0 %2878
      %v2880 = vsel %vm2792, %v2781, -inf
      %2881 = vmax.xlane.f32.xlu0 %v2880
      %v2882 = vpop.xlane.xlu0 %2881
      %v2883 = vsel %vm2792, %v2786, -inf
      %2884 = vmax.xlane.f32.xlu0 %v2883
      %v2885 = vpop.xlane.xlu0 %2884
      %v2886 = vsel %vm2792, %v2789, -inf
      %2887 = vmax.xlane.f32.xlu0 %v2886
      %v2888 = vpop.xlane.xlu0 %2887
      %v2889 = vsub.f32 %v2495, %v2795
      %v2890 = vsub.f32 %v2498, %v2798
      %v2891 = vsub.f32 %v2503, %v2801
      %v2892 = vsub.f32 %v2506, %v2804
      %v2893 = vsub.f32 %v2511, %v2807
      %v2894 = vsub.f32 %v2514, %v2810
      %v2895 = vsub.f32 %v2519, %v2813
      %v2896 = vsub.f32 %v2522, %v2816
      %v2897 = vsub.f32 %v2584, %v2819
      %v2898 = vsub.f32 %v2587, %v2822
      %v2899 = vsub.f32 %v2592, %v2825
      %v2900 = vsub.f32 %v2595, %v2828
      %v2901 = vsub.f32 %v2600, %v2831
      %v2902 = vsub.f32 %v2603, %v2834
      %v2903 = vsub.f32 %v2608, %v2837
      %v2904 = vsub.f32 %v2611, %v2840
      %v2905 = vsub.f32 %v2673, %v2843
      %v2906 = vsub.f32 %v2676, %v2846
      %v2907 = vsub.f32 %v2681, %v2849
      %v2908 = vsub.f32 %v2684, %v2852
      %v2909 = vsub.f32 %v2689, %v2855
      %v2910 = vsub.f32 %v2692, %v2858
      %v2911 = vsub.f32 %v2697, %v2861
      %v2912 = vsub.f32 %v2700, %v2864
      %v2913 = vsub.f32 %v2762, %v2867
      %v2914 = vsub.f32 %v2765, %v2870
      %v2915 = vsub.f32 %v2770, %v2873
      %v2916 = vsub.f32 %v2773, %v2876
      %v2917 = vsub.f32 %v2778, %v2879
      %v2918 = vsub.f32 %v2781, %v2882
      %v2919 = vsub.f32 %v2786, %v2885
      %v2920 = vsub.f32 %v2789, %v2888
      %v2921 = vmul.f32 %v2889, 1.442695
      %v2922 = vpow.pop %v2921
      %v2923 = vmul.f32 %v2890, 1.442695
      %v2924 = vpow.pop %v2923
      %v2925 = vmul.f32 %v2891, 1.442695
      %v2926 = vpow.pop %v2925
      %v2927 = vmul.f32 %v2892, 1.442695
      %v2928 = vpow.pop %v2927
      %v2929 = vmul.f32 %v2893, 1.442695
      %v2930 = vpow.pop %v2929
      %v2931 = vmul.f32 %v2894, 1.442695
      %v2932 = vpow.pop %v2931
      %v2933 = vmul.f32 %v2895, 1.442695
      %v2934 = vpow.pop %v2933
      %v2935 = vmul.f32 %v2896, 1.442695
      %v2936 = vpow.pop %v2935
      %v2937 = vmul.f32 %v2897, 1.442695
      %v2938 = vpow.pop %v2937
      %v2939 = vmul.f32 %v2898, 1.442695
      %v2940 = vpow.pop %v2939
      %v2941 = vmul.f32 %v2899, 1.442695
      %v2942 = vpow.pop %v2941
      %v2943 = vmul.f32 %v2900, 1.442695
      %v2944 = vpow.pop %v2943
      %v2945 = vmul.f32 %v2901, 1.442695
      %v2946 = vpow.pop %v2945
      %v2947 = vmul.f32 %v2902, 1.442695
      %v2948 = vpow.pop %v2947
      %v2949 = vmul.f32 %v2903, 1.442695
      %v2950 = vpow.pop %v2949
      %v2951 = vmul.f32 %v2904, 1.442695
      %v2952 = vpow.pop %v2951
      %v2953 = vmul.f32 %v2905, 1.442695
      %v2954 = vpow.pop %v2953
      %v2955 = vmul.f32 %v2906, 1.442695
      %v2956 = vpow.pop %v2955
      %v2957 = vmul.f32 %v2907, 1.442695
      %v2958 = vpow.pop %v2957
      %v2959 = vmul.f32 %v2908, 1.442695
      %v2960 = vpow.pop %v2959
      %v2961 = vmul.f32 %v2909, 1.442695
      %v2962 = vpow.pop %v2961
      %v2963 = vmul.f32 %v2910, 1.442695
      %v2964 = vpow.pop %v2963
      %v2965 = vmul.f32 %v2911, 1.442695
      %v2966 = vpow.pop %v2965
      %v2967 = vmul.f32 %v2912, 1.442695
      %v2968 = vpow.pop %v2967
      %v2969 = vmul.f32 %v2913, 1.442695
      %v2970 = vpow.pop %v2969
      %v2971 = vmul.f32 %v2914, 1.442695
      %v2972 = vpow.pop %v2971
      %v2973 = vmul.f32 %v2915, 1.442695
      %v2974 = vpow.pop %v2973
      %v2975 = vmul.f32 %v2916, 1.442695
      %v2976 = vpow.pop %v2975
      %v2977 = vmul.f32 %v2917, 1.442695
      %v2978 = vpow.pop %v2977
      %v2979 = vmul.f32 %v2918, 1.442695
      %v2980 = vpow.pop %v2979
      %v2981 = vmul.f32 %v2919, 1.442695
      %v2982 = vpow.pop %v2981
      %v2983 = vmul.f32 %v2920, 1.442695
      %v2984 = vpow.pop %v2983
      %v2985 = vsel %vm2792, %v2922, 0.0
      %2986 = vadd.xlane.f32.xlu0 %v2985
      %v2987 = vpop.xlane.xlu0 %2986
      %v2988 = vsel %vm2792, %v2924, 0.0
      %2989 = vadd.xlane.f32.xlu0 %v2988
      %v2990 = vpop.xlane.xlu0 %2989
      %v2991 = vsel %vm2792, %v2926, 0.0
      %2992 = vadd.xlane.f32.xlu0 %v2991
      %v2993 = vpop.xlane.xlu0 %2992
      %v2994 = vsel %vm2792, %v2928, 0.0
      %2995 = vadd.xlane.f32.xlu0 %v2994
      %v2996 = vpop.xlane.xlu0 %2995
      %v2997 = vsel %vm2792, %v2930, 0.0
      %2998 = vadd.xlane.f32.xlu0 %v2997
      %v2999 = vpop.xlane.xlu0 %2998
      %v3000 = vsel %vm2792, %v2932, 0.0
      %3001 = vadd.xlane.f32.xlu0 %v3000
      %v3002 = vpop.xlane.xlu0 %3001
      %v3003 = vsel %vm2792, %v2934, 0.0
      %3004 = vadd.xlane.f32.xlu0 %v3003
      %v3005 = vpop.xlane.xlu0 %3004
      %v3006 = vsel %vm2792, %v2936, 0.0
      %3007 = vadd.xlane.f32.xlu0 %v3006
      %v3008 = vpop.xlane.xlu0 %3007
      %v3009 = vsel %vm2792, %v2938, 0.0
      %3010 = vadd.xlane.f32.xlu0 %v3009
      %v3011 = vpop.xlane.xlu0 %3010
      %v3012 = vsel %vm2792, %v2940, 0.0
      %3013 = vadd.xlane.f32.xlu0 %v3012
      %v3014 = vpop.xlane.xlu0 %3013
      %v3015 = vsel %vm2792, %v2942, 0.0
      %3016 = vadd.xlane.f32.xlu0 %v3015
      %v3017 = vpop.xlane.xlu0 %3016
      %v3018 = vsel %vm2792, %v2944, 0.0
      %3019 = vadd.xlane.f32.xlu0 %v3018
      %v3020 = vpop.xlane.xlu0 %3019
      %v3021 = vsel %vm2792, %v2946, 0.0
      %3022 = vadd.xlane.f32.xlu0 %v3021
      %v3023 = vpop.xlane.xlu0 %3022
      %v3024 = vsel %vm2792, %v2948, 0.0
      %3025 = vadd.xlane.f32.xlu0 %v3024
      %v3026 = vpop.xlane.xlu0 %3025
      %v3027 = vsel %vm2792, %v2950, 0.0
      %3028 = vadd.xlane.f32.xlu0 %v3027
      %v3029 = vpop.xlane.xlu0 %3028
      %v3030 = vsel %vm2792, %v2952, 0.0
      %3031 = vadd.xlane.f32.xlu0 %v3030
      %v3032 = vpop.xlane.xlu0 %3031
      %v3033 = vsel %vm2792, %v2954, 0.0
      %3034 = vadd.xlane.f32.xlu0 %v3033
      %v3035 = vpop.xlane.xlu0 %3034
      %v3036 = vsel %vm2792, %v2956, 0.0
      %3037 = vadd.xlane.f32.xlu0 %v3036
      %v3038 = vpop.xlane.xlu0 %3037
      %v3039 = vsel %vm2792, %v2958, 0.0
      %3040 = vadd.xlane.f32.xlu0 %v3039
      %v3041 = vpop.xlane.xlu0 %3040
      %v3042 = vsel %vm2792, %v2960, 0.0
      %3043 = vadd.xlane.f32.xlu0 %v3042
      %v3044 = vpop.xlane.xlu0 %3043
      %v3045 = vsel %vm2792, %v2962, 0.0
      %3046 = vadd.xlane.f32.xlu0 %v3045
      %v3047 = vpop.xlane.xlu0 %3046
      %v3048 = vsel %vm2792, %v2964, 0.0
      %3049 = vadd.xlane.f32.xlu0 %v3048
      %v3050 = vpop.xlane.xlu0 %3049
      %v3051 = vsel %vm2792, %v2966, 0.0
      %3052 = vadd.xlane.f32.xlu0 %v3051
      %v3053 = vpop.xlane.xlu0 %3052
      %v3054 = vsel %vm2792, %v2968, 0.0
      %3055 = vadd.xlane.f32.xlu0 %v3054
      %v3056 = vpop.xlane.xlu0 %3055
      %v3057 = vsel %vm2792, %v2970, 0.0
      %3058 = vadd.xlane.f32.xlu0 %v3057
      %v3059 = vpop.xlane.xlu0 %3058
      %v3060 = vsel %vm2792, %v2972, 0.0
      %3061 = vadd.xlane.f32.xlu0 %v3060
      %v3062 = vpop.xlane.xlu0 %3061
      %v3063 = vsel %vm2792, %v2974, 0.0
      %3064 = vadd.xlane.f32.xlu0 %v3063
      %v3065 = vpop.xlane.xlu0 %3064
      %v3066 = vsel %vm2792, %v2976, 0.0
      %3067 = vadd.xlane.f32.xlu0 %v3066
      %v3068 = vpop.xlane.xlu0 %3067
      %v3069 = vsel %vm2792, %v2978, 0.0
      %3070 = vadd.xlane.f32.xlu0 %v3069
      %v3071 = vpop.xlane.xlu0 %3070
      %v3072 = vsel %vm2792, %v2980, 0.0
      %3073 = vadd.xlane.f32.xlu0 %v3072
      %v3074 = vpop.xlane.xlu0 %3073
      %v3075 = vsel %vm2792, %v2982, 0.0
      %3076 = vadd.xlane.f32.xlu0 %v3075
      %v3077 = vpop.xlane.xlu0 %3076
      %v3078 = vsel %vm2792, %v2984, 0.0
      %3079 = vadd.xlane.f32.xlu0 %v3078
      %v3080 = vpop.xlane.xlu0 %3079
      %v3081 = vrcp.pop %v2987
      %v3082 = vrcp.pop %v2990
      %v3083 = vrcp.pop %v2993
      %v3084 = vrcp.pop %v2996
      %v3085 = vrcp.pop %v2999
      %v3086 = vrcp.pop %v3002
      %v3087 = vrcp.pop %v3005
      %v3088 = vrcp.pop %v3008
      %v3089 = vrcp.pop %v3011
      %v3090 = vrcp.pop %v3014
      %v3091 = vrcp.pop %v3017
      %v3092 = vrcp.pop %v3020
      %v3093 = vrcp.pop %v3023
      %v3094 = vrcp.pop %v3026
      %v3095 = vrcp.pop %v3029
      %v3096 = vrcp.pop %v3032
      %v3097 = vrcp.pop %v3035
      %v3098 = vrcp.pop %v3038
      %v3099 = vrcp.pop %v3041
      %v3100 = vrcp.pop %v3044
      %v3101 = vrcp.pop %v3047
      %v3102 = vrcp.pop %v3050
      %v3103 = vrcp.pop %v3053
      %v3104 = vrcp.pop %v3056
      %v3105 = vrcp.pop %v3059
      %v3106 = vrcp.pop %v3062
      %v3107 = vrcp.pop %v3065
      %v3108 = vrcp.pop %v3068
      %v3109 = vrcp.pop %v3071
      %v3110 = vrcp.pop %v3074
      %v3111 = vrcp.pop %v3077
      %v3112 = vrcp.pop %v3080
      %v3113 = vmul.f32 %v2922, %v3081
      %v3114 = vmul.f32 %v2924, %v3082
      %v3115 = vmul.f32 %v2926, %v3083
      %v3116 = vmul.f32 %v2928, %v3084
      %v3117 = vmul.f32 %v2930, %v3085
      %v3118 = vmul.f32 %v2932, %v3086
      %v3119 = vmul.f32 %v2934, %v3087
      %v3120 = vmul.f32 %v2936, %v3088
      %v3121 = vmul.f32 %v2938, %v3089
      %v3122 = vmul.f32 %v2940, %v3090
      %v3123 = vmul.f32 %v2942, %v3091
      %v3124 = vmul.f32 %v2944, %v3092
      %v3125 = vmul.f32 %v2946, %v3093
      %v3126 = vmul.f32 %v2948, %v3094
      %v3127 = vmul.f32 %v2950, %v3095
      %v3128 = vmul.f32 %v2952, %v3096
      %v3129 = vmul.f32 %v2954, %v3097
      %v3130 = vmul.f32 %v2956, %v3098
      %v3131 = vmul.f32 %v2958, %v3099
      %v3132 = vmul.f32 %v2960, %v3100
      %v3133 = vmul.f32 %v2962, %v3101
      %v3134 = vmul.f32 %v2964, %v3102
      %v3135 = vmul.f32 %v2966, %v3103
      %v3136 = vmul.f32 %v2968, %v3104
      %v3137 = vmul.f32 %v2970, %v3105
      %v3138 = vmul.f32 %v2972, %v3106
      %v3139 = vmul.f32 %v2974, %v3107
      %v3140 = vmul.f32 %v2976, %v3108
      %v3141 = vmul.f32 %v2978, %v3109
      %v3142 = vmul.f32 %v2980, %v3110
      %v3143 = vmul.f32 %v2982, %v3111
      %v3144 = vmul.f32 %v2984, %v3112
      %v3145 = vpack.c.bf16 %v3114, %v3113
      %v3146 = vpack.c.bf16 %v3116, %v3115
      %v3147 = vpack.c.bf16 %v3118, %v3117
      %v3148 = vpack.c.bf16 %v3120, %v3119
      %v3149 = vpack.c.bf16 %v3122, %v3121
      %v3150 = vpack.c.bf16 %v3124, %v3123
      %v3151 = vpack.c.bf16 %v3126, %v3125
      %v3152 = vpack.c.bf16 %v3128, %v3127
      %v3153 = vpack.c.bf16 %v3130, %v3129
      %v3154 = vpack.c.bf16 %v3132, %v3131
      %v3155 = vpack.c.bf16 %v3134, %v3133
      %v3156 = vpack.c.bf16 %v3136, %v3135
      %v3157 = vpack.c.bf16 %v3138, %v3137
      %v3158 = vpack.c.bf16 %v3140, %v3139
      %v3159 = vpack.c.bf16 %v3142, %v3141
      %v3160 = vpack.c.bf16 %v3144, %v3143
      %3165 = vrot.lane.b32.xlu0 %v2411, 96
      %v3166 = vpop.permute.xlu0 %3165
      %3167 = vrot.lane.b32.xlu0 %v2412, 96
      %v3168 = vpop.permute.xlu0 %3167
      %3169 = vrot.lane.b32.xlu0 %v2413, 96
      %v3170 = vpop.permute.xlu0 %3169
      %3171 = vrot.lane.b32.xlu0 %v2414, 96
      %v3172 = vpop.permute.xlu0 %3171
      %v3178 = vsel %vm2792, %v3145, 0
      %v3181 = vsel %vm2792, %v3146, 0
      %v3184 = vsel %vm2792, %v3147, 0
      %v3187 = vsel %vm2792, %v3148, 0
      %3189 = vmatprep.subr.bf16.mxu0 0
      %3190 = vmatpush1.bf16.msra.mxu0 0
      %3191 = vmatprep.subr.bf16.mxu0 0
      %3192 = vmatpush1.bf16.msra.mxu0 0
      %3193 = vmatprep.subr.bf16.mxu0 0
      %3194 = vmatpush1.bf16.msra.mxu0 0
      %3195 = vmatprep.subr.bf16.mxu0 0
      %3196 = vmatpush1.bf16.msra.mxu0 0
      %3197 = vmatprep.subr.bf16.mxu0 0
      %3198 = vmatpush1.bf16.msra.mxu0 %v3172
      %3199 = vmatprep.subr.bf16.mxu0 0
      %3200 = vmatpush1.bf16.msra.mxu0 %v3170
      %3201 = vmatprep.subr.bf16.mxu0 0
      %3202 = vmatpush1.bf16.msra.mxu0 %v3168
      %3203 = vmatprep.subr.bf16.mxu0 0
      %3204 = vmatpush1.bf16.msra.mxu0 %v3166
      %3205 = vmatprep.subr.bf16.mxu0 0
      %3206 = vmatpush2.bf16.msra.mxu0 0
      %3207 = vmatprep.subr.bf16.mxu0 0
      %3208 = vmatpush2.bf16.msra.mxu0 0
      %3209 = vmatprep.subr.bf16.mxu0 0
      %3210 = vmatpush2.bf16.msra.mxu0 0
      %3211 = vmatprep.subr.bf16.mxu0 0
      %3212 = vmatpush2.bf16.msra.mxu0 0
      %3213 = vmatprep.subr.bf16.mxu0 0
      %3214 = vmatpush2.bf16.msra.mxu0 0
      %3215 = vmatprep.subr.bf16.mxu0 0
      %3216 = vmatpush2.bf16.msra.mxu0 0
      %3217 = vmatprep.subr.bf16.mxu0 0
      %3218 = vmatpush2.bf16.msra.mxu0 0
      %3219 = vmatprep.subr.bf16.mxu0 0
      %3220 = vmatpush2.bf16.msra.mxu0 0
      %3221 = vmatprep.mubr.bf16.mxu0 0
      %3222 = vmatmul.mubr.bf16.gmra.mxu0 %v3178
      %v3223 = vpop.f32.mrf.mxu0
      %v3224 = vadd.f32 0.0, %v3223
      %v3225 = vpop.f32.mrf.mxu0
      %v3226 = vpop.f32.mrf.mxu0
      %v3227 = vadd.f32 0.0, %v3226
      %v3228 = vpop.f32.mrf.mxu0
      %3229 = vmatprep.mubr.bf16.mxu0 0
      %3230 = vmatmul.mubr.bf16.gmra.mxu0 %v3181
      %v3231 = vpop.f32.mrf.mxu0
      %v3232 = vadd.f32 0.0, %v3231
      %v3233 = vpop.f32.mrf.mxu0
      %v3234 = vpop.f32.mrf.mxu0
      %v3235 = vadd.f32 0.0, %v3234
      %v3236 = vpop.f32.mrf.mxu0
      %3237 = vmatprep.mubr.bf16.mxu0 0
      %3238 = vmatmul.mubr.bf16.gmra.mxu0 %v3184
      %v3239 = vpop.f32.mrf.mxu0
      %v3240 = vadd.f32 0.0, %v3239
      %v3241 = vpop.f32.mrf.mxu0
      %v3242 = vpop.f32.mrf.mxu0
      %v3243 = vadd.f32 0.0, %v3242
      %v3244 = vpop.f32.mrf.mxu0
      %3245 = vmatprep.mubr.bf16.mxu0 0
      %3246 = vmatmul.mubr.bf16.gmra.mxu0 %v3187
      %v3247 = vpop.f32.mrf.mxu0
      %v3248 = vadd.f32 0.0, %v3247
      %v3249 = vpop.f32.mrf.mxu0
      %v3250 = vpop.f32.mrf.mxu0
      %v3251 = vadd.f32 0.0, %v3250
      %v3252 = vpop.f32.mrf.mxu0
      %3253 = vdwg.mxu0
      %3258 = vrot.lane.b32.xlu0 %v2415, 96
      %v3259 = vpop.permute.xlu0 %3258
      %3260 = vrot.lane.b32.xlu0 %v2416, 96
      %v3261 = vpop.permute.xlu0 %3260
      %3262 = vrot.lane.b32.xlu0 %v2417, 96
      %v3263 = vpop.permute.xlu0 %3262
      %3264 = vrot.lane.b32.xlu0 %v2418, 96
      %v3265 = vpop.permute.xlu0 %3264
      %v3271 = vsel %vm2792, %v3149, 0
      %v3274 = vsel %vm2792, %v3150, 0
      %v3277 = vsel %vm2792, %v3151, 0
      %v3280 = vsel %vm2792, %v3152, 0
      %3282 = vmatprep.subr.bf16.mxu0 0
      %3283 = vmatpush1.bf16.msra.mxu0 0
      %3284 = vmatprep.subr.bf16.mxu0 0
      %3285 = vmatpush1.bf16.msra.mxu0 0
      %3286 = vmatprep.subr.bf16.mxu0 0
      %3287 = vmatpush1.bf16.msra.mxu0 0
      %3288 = vmatprep.subr.bf16.mxu0 0
      %3289 = vmatpush1.bf16.msra.mxu0 0
      %3290 = vmatprep.subr.bf16.mxu0 0
      %3291 = vmatpush1.bf16.msra.mxu0 %v3265
      %3292 = vmatprep.subr.bf16.mxu0 0
      %3293 = vmatpush1.bf16.msra.mxu0 %v3263
      %3294 = vmatprep.subr.bf16.mxu0 0
      %3295 = vmatpush1.bf16.msra.mxu0 %v3261
      %3296 = vmatprep.subr.bf16.mxu0 0
      %3297 = vmatpush1.bf16.msra.mxu0 %v3259
      %3298 = vmatprep.subr.bf16.mxu0 0
      %3299 = vmatpush2.bf16.msra.mxu0 0
      %3300 = vmatprep.subr.bf16.mxu0 0
      %3301 = vmatpush2.bf16.msra.mxu0 0
      %3302 = vmatprep.subr.bf16.mxu0 0
      %3303 = vmatpush2.bf16.msra.mxu0 0
      %3304 = vmatprep.subr.bf16.mxu0 0
      %3305 = vmatpush2.bf16.msra.mxu0 0
      %3306 = vmatprep.subr.bf16.mxu0 0
      %3307 = vmatpush2.bf16.msra.mxu0 0
      %3308 = vmatprep.subr.bf16.mxu0 0
      %3309 = vmatpush2.bf16.msra.mxu0 0
      %3310 = vmatprep.subr.bf16.mxu0 0
      %3311 = vmatpush2.bf16.msra.mxu0 0
      %3312 = vmatprep.subr.bf16.mxu0 0
      %3313 = vmatpush2.bf16.msra.mxu0 0
      %3314 = vmatprep.mubr.bf16.mxu0 0
      %3315 = vmatmul.mubr.bf16.gmra.mxu0 %v3271
      %v3316 = vpop.f32.mrf.mxu0
      %v3317 = vadd.f32 0.0, %v3316
      %v3318 = vpop.f32.mrf.mxu0
      %v3319 = vpop.f32.mrf.mxu0
      %v3320 = vadd.f32 0.0, %v3319
      %v3321 = vpop.f32.mrf.mxu0
      %3322 = vmatprep.mubr.bf16.mxu0 0
      %3323 = vmatmul.mubr.bf16.gmra.mxu0 %v3274
      %v3324 = vpop.f32.mrf.mxu0
      %v3325 = vadd.f32 0.0, %v3324
      %v3326 = vpop.f32.mrf.mxu0
      %v3327 = vpop.f32.mrf.mxu0
      %v3328 = vadd.f32 0.0, %v3327
      %v3329 = vpop.f32.mrf.mxu0
      %3330 = vmatprep.mubr.bf16.mxu0 0
      %3331 = vmatmul.mubr.bf16.gmra.mxu0 %v3277
      %v3332 = vpop.f32.mrf.mxu0
      %v3333 = vadd.f32 0.0, %v3332
      %v3334 = vpop.f32.mrf.mxu0
      %v3335 = vpop.f32.mrf.mxu0
      %v3336 = vadd.f32 0.0, %v3335
      %v3337 = vpop.f32.mrf.mxu0
      %3338 = vmatprep.mubr.bf16.mxu0 0
      %3339 = vmatmul.mubr.bf16.gmra.mxu0 %v3280
      %v3340 = vpop.f32.mrf.mxu0
      %v3341 = vadd.f32 0.0, %v3340
      %v3342 = vpop.f32.mrf.mxu0
      %v3343 = vpop.f32.mrf.mxu0
      %v3344 = vadd.f32 0.0, %v3343
      %v3345 = vpop.f32.mrf.mxu0
      %3346 = vdwg.mxu0
      %3351 = vrot.lane.b32.xlu0 %v2419, 96
      %v3352 = vpop.permute.xlu0 %3351
      %3353 = vrot.lane.b32.xlu0 %v2420, 96
      %v3354 = vpop.permute.xlu0 %3353
      %3355 = vrot.lane.b32.xlu0 %v2421, 96
      %v3356 = vpop.permute.xlu0 %3355
      %3357 = vrot.lane.b32.xlu0 %v2422, 96
      %v3358 = vpop.permute.xlu0 %3357
      %v3364 = vsel %vm2792, %v3153, 0
      %v3367 = vsel %vm2792, %v3154, 0
      %v3370 = vsel %vm2792, %v3155, 0
      %v3373 = vsel %vm2792, %v3156, 0
      %3375 = vmatprep.subr.bf16.mxu0 0
      %3376 = vmatpush1.bf16.msra.mxu0 0
      %3377 = vmatprep.subr.bf16.mxu0 0
      %3378 = vmatpush1.bf16.msra.mxu0 0
      %3379 = vmatprep.subr.bf16.mxu0 0
      %3380 = vmatpush1.bf16.msra.mxu0 0
      %3381 = vmatprep.subr.bf16.mxu0 0
      %3382 = vmatpush1.bf16.msra.mxu0 0
      %3383 = vmatprep.subr.bf16.mxu0 0
      %3384 = vmatpush1.bf16.msra.mxu0 %v3358
      %3385 = vmatprep.subr.bf16.mxu0 0
      %3386 = vmatpush1.bf16.msra.mxu0 %v3356
      %3387 = vmatprep.subr.bf16.mxu0 0
      %3388 = vmatpush1.bf16.msra.mxu0 %v3354
      %3389 = vmatprep.subr.bf16.mxu0 0
      %3390 = vmatpush1.bf16.msra.mxu0 %v3352
      %3391 = vmatprep.subr.bf16.mxu0 0
      %3392 = vmatpush2.bf16.msra.mxu0 0
      %3393 = vmatprep.subr.bf16.mxu0 0
      %3394 = vmatpush2.bf16.msra.mxu0 0
      %3395 = vmatprep.subr.bf16.mxu0 0
      %3396 = vmatpush2.bf16.msra.mxu0 0
      %3397 = vmatprep.subr.bf16.mxu0 0
      %3398 = vmatpush2.bf16.msra.mxu0 0
      %3399 = vmatprep.subr.bf16.mxu0 0
      %3400 = vmatpush2.bf16.msra.mxu0 0
      %3401 = vmatprep.subr.bf16.mxu0 0
      %3402 = vmatpush2.bf16.msra.mxu0 0
      %3403 = vmatprep.subr.bf16.mxu0 0
      %3404 = vmatpush2.bf16.msra.mxu0 0
      %3405 = vmatprep.subr.bf16.mxu0 0
      %3406 = vmatpush2.bf16.msra.mxu0 0
      %3407 = vmatprep.mubr.bf16.mxu0 0
      %3408 = vmatmul.mubr.bf16.gmra.mxu0 %v3364
      %v3409 = vpop.f32.mrf.mxu0
      %v3410 = vadd.f32 0.0, %v3409
      %v3411 = vpop.f32.mrf.mxu0
      %v3412 = vpop.f32.mrf.mxu0
      %v3413 = vadd.f32 0.0, %v3412
      %v3414 = vpop.f32.mrf.mxu0
      %3415 = vmatprep.mubr.bf16.mxu0 0
      %3416 = vmatmul.mubr.bf16.gmra.mxu0 %v3367
      %v3417 = vpop.f32.mrf.mxu0
      %v3418 = vadd.f32 0.0, %v3417
      %v3419 = vpop.f32.mrf.mxu0
      %v3420 = vpop.f32.mrf.mxu0
      %v3421 = vadd.f32 0.0, %v3420
      %v3422 = vpop.f32.mrf.mxu0
      %3423 = vmatprep.mubr.bf16.mxu0 0
      %3424 = vmatmul.mubr.bf16.gmra.mxu0 %v3370
      %v3425 = vpop.f32.mrf.mxu0
      %v3426 = vadd.f32 0.0, %v3425
      %v3427 = vpop.f32.mrf.mxu0
      %v3428 = vpop.f32.mrf.mxu0
      %v3429 = vadd.f32 0.0, %v3428
      %v3430 = vpop.f32.mrf.mxu0
      %3431 = vmatprep.mubr.bf16.mxu0 0
      %3432 = vmatmul.mubr.bf16.gmra.mxu0 %v3373
      %v3433 = vpop.f32.mrf.mxu0
      %v3434 = vadd.f32 0.0, %v3433
      %v3435 = vpop.f32.mrf.mxu0
      %v3436 = vpop.f32.mrf.mxu0
      %v3437 = vadd.f32 0.0, %v3436
      %v3438 = vpop.f32.mrf.mxu0
      %3439 = vdwg.mxu0
      %3444 = vrot.lane.b32.xlu0 %v2423, 96
      %v3445 = vpop.permute.xlu0 %3444
      %3446 = vrot.lane.b32.xlu0 %v2424, 96
      %v3447 = vpop.permute.xlu0 %3446
      %3448 = vrot.lane.b32.xlu0 %v2425, 96
      %v3449 = vpop.permute.xlu0 %3448
      %3450 = vrot.lane.b32.xlu0 %v2426, 96
      %v3451 = vpop.permute.xlu0 %3450
      %v3457 = vsel %vm2792, %v3157, 0
      %v3460 = vsel %vm2792, %v3158, 0
      %v3463 = vsel %vm2792, %v3159, 0
      %v3466 = vsel %vm2792, %v3160, 0
      %3468 = vmatprep.subr.bf16.mxu0 0
      %3469 = vmatpush1.bf16.msra.mxu0 0
      %3470 = vmatprep.subr.bf16.mxu0 0
      %3471 = vmatpush1.bf16.msra.mxu0 0
      %3472 = vmatprep.subr.bf16.mxu0 0
      %3473 = vmatpush1.bf16.msra.mxu0 0
      %3474 = vmatprep.subr.bf16.mxu0 0
      %3475 = vmatpush1.bf16.msra.mxu0 0
      %3476 = vmatprep.subr.bf16.mxu0 0
      %3477 = vmatpush1.bf16.msra.mxu0 %v3451
      %3478 = vmatprep.subr.bf16.mxu0 0
      %3479 = vmatpush1.bf16.msra.mxu0 %v3449
      %3480 = vmatprep.subr.bf16.mxu0 0
      %3481 = vmatpush1.bf16.msra.mxu0 %v3447
      %3482 = vmatprep.subr.bf16.mxu0 0
      %3483 = vmatpush1.bf16.msra.mxu0 %v3445
      %3484 = vmatprep.subr.bf16.mxu0 0
      %3485 = vmatpush2.bf16.msra.mxu0 0
      %3486 = vmatprep.subr.bf16.mxu0 0
      %3487 = vmatpush2.bf16.msra.mxu0 0
      %3488 = vmatprep.subr.bf16.mxu0 0
      %3489 = vmatpush2.bf16.msra.mxu0 0
      %3490 = vmatprep.subr.bf16.mxu0 0
      %3491 = vmatpush2.bf16.msra.mxu0 0
      %3492 = vmatprep.subr.bf16.mxu0 0
      %3493 = vmatpush2.bf16.msra.mxu0 0
      %3494 = vmatprep.subr.bf16.mxu0 0
      %3495 = vmatpush2.bf16.msra.mxu0 0
      %3496 = vmatprep.subr.bf16.mxu0 0
      %3497 = vmatpush2.bf16.msra.mxu0 0
      %3498 = vmatprep.subr.bf16.mxu0 0
      %3499 = vmatpush2.bf16.msra.mxu0 0
      %3500 = vmatprep.mubr.bf16.mxu0 0
      %3501 = vmatmul.mubr.bf16.gmra.mxu0 %v3457
      %v3502 = vpop.f32.mrf.mxu0
      %v3503 = vadd.f32 0.0, %v3502
      %v3504 = vpop.f32.mrf.mxu0
      %v3505 = vpop.f32.mrf.mxu0
      %v3506 = vadd.f32 0.0, %v3505
      %v3507 = vpop.f32.mrf.mxu0
      %3508 = vmatprep.mubr.bf16.mxu0 0
      %3509 = vmatmul.mubr.bf16.gmra.mxu0 %v3460
      %v3510 = vpop.f32.mrf.mxu0
      %v3511 = vadd.f32 0.0, %v3510
      %v3512 = vpop.f32.mrf.mxu0
      %v3513 = vpop.f32.mrf.mxu0
      %v3514 = vadd.f32 0.0, %v3513
      %v3515 = vpop.f32.mrf.mxu0
      %3516 = vmatprep.mubr.bf16.mxu0 0
      %3517 = vmatmul.mubr.bf16.gmra.mxu0 %v3463
      %v3518 = vpop.f32.mrf.mxu0
      %v3519 = vadd.f32 0.0, %v3518
      %v3520 = vpop.f32.mrf.mxu0
      %v3521 = vpop.f32.mrf.mxu0
      %v3522 = vadd.f32 0.0, %v3521
      %v3523 = vpop.f32.mrf.mxu0
      %3524 = vmatprep.mubr.bf16.mxu0 0
      %3525 = vmatmul.mubr.bf16.gmra.mxu0 %v3466
      %v3526 = vpop.f32.mrf.mxu0
      %v3527 = vadd.f32 0.0, %v3526
      %v3528 = vpop.f32.mrf.mxu0
      %v3529 = vpop.f32.mrf.mxu0
      %v3530 = vadd.f32 0.0, %v3529
      %v3531 = vpop.f32.mrf.mxu0
      %3532 = vdwg.mxu0
      %v3533 = vpack.c.bf16 %v3227, %v3224
      %v3534 = vpack.c.bf16 %v3235, %v3232
      %v3535 = vpack.c.bf16 %v3243, %v3240
      %v3536 = vpack.c.bf16 %v3251, %v3248
      %v3537 = vpack.c.bf16 %v3320, %v3317
      %v3538 = vpack.c.bf16 %v3328, %v3325
      %v3539 = vpack.c.bf16 %v3336, %v3333
      %v3540 = vpack.c.bf16 %v3344, %v3341
      %v3541 = vpack.c.bf16 %v3413, %v3410
      %v3542 = vpack.c.bf16 %v3421, %v3418
      %v3543 = vpack.c.bf16 %v3429, %v3426
      %v3544 = vpack.c.bf16 %v3437, %v3434
      %v3545 = vpack.c.bf16 %v3506, %v3503
      %v3546 = vpack.c.bf16 %v3514, %v3511
      %v3547 = vpack.c.bf16 %v3522, %v3519
      %v3548 = vpack.c.bf16 %v3530, %v3527
      %v3565 = vunpack.c.l.b16 %v3533
      %v3566 = vunpack.c.h.b16 %v3533
      %v3567 = vunpack.c.l.b16 %v3534
      %v3568 = vunpack.c.h.b16 %v3534
      %v3569 = vunpack.c.l.b16 %v3535
      %v3570 = vunpack.c.h.b16 %v3535
      %v3571 = vunpack.c.l.b16 %v3536
      %v3572 = vunpack.c.h.b16 %v3536
      %v3573 = vunpack.c.l.b16 %v3537
      %v3574 = vunpack.c.h.b16 %v3537
      %v3575 = vunpack.c.l.b16 %v3538
      %v3576 = vunpack.c.h.b16 %v3538
      %v3577 = vunpack.c.l.b16 %v3539
      %v3578 = vunpack.c.h.b16 %v3539
      %v3579 = vunpack.c.l.b16 %v3540
      %v3580 = vunpack.c.h.b16 %v3540
      %v3581 = vunpack.c.l.b16 %v3541
      %v3582 = vunpack.c.h.b16 %v3541
      %v3583 = vunpack.c.l.b16 %v3542
      %v3584 = vunpack.c.h.b16 %v3542
      %v3585 = vunpack.c.l.b16 %v3543
      %v3586 = vunpack.c.h.b16 %v3543
      %v3587 = vunpack.c.l.b16 %v3544
      %v3588 = vunpack.c.h.b16 %v3544
      %v3589 = vunpack.c.l.b16 %v3545
      %v3590 = vunpack.c.h.b16 %v3545
      %v3591 = vunpack.c.l.b16 %v3546
      %v3592 = vunpack.c.h.b16 %v3546
      %v3593 = vunpack.c.l.b16 %v3547
      %v3594 = vunpack.c.h.b16 %v3547
      %v3595 = vunpack.c.l.b16 %v3548
      %v3596 = vunpack.c.h.b16 %v3548
      %v3597 = vpack.c.b16 %v3565, %v3565
      %v3598 = vpack.c.b16 %v3566, %v3566
      %v3599 = vpack.c.b16 %v3567, %v3567
      %v3600 = vpack.c.b16 %v3568, %v3568
      %v3601 = vpack.c.b16 %v3569, %v3569
      %v3602 = vpack.c.b16 %v3570, %v3570
      %v3603 = vpack.c.b16 %v3571, %v3571
      %v3604 = vpack.c.b16 %v3572, %v3572
      %v3605 = vpack.c.b16 %v3573, %v3573
      %v3606 = vpack.c.b16 %v3574, %v3574
      %v3607 = vpack.c.b16 %v3575, %v3575
      %v3608 = vpack.c.b16 %v3576, %v3576
      %v3609 = vpack.c.b16 %v3577, %v3577
      %v3610 = vpack.c.b16 %v3578, %v3578
      %v3611 = vpack.c.b16 %v3579, %v3579
      %v3612 = vpack.c.b16 %v3580, %v3580
      %v3613 = vpack.c.b16 %v3581, %v3581
      %v3614 = vpack.c.b16 %v3582, %v3582
      %v3615 = vpack.c.b16 %v3583, %v3583
      %v3616 = vpack.c.b16 %v3584, %v3584
      %v3617 = vpack.c.b16 %v3585, %v3585
      %v3618 = vpack.c.b16 %v3586, %v3586
      %v3619 = vpack.c.b16 %v3587, %v3587
      %v3620 = vpack.c.b16 %v3588, %v3588
      %v3621 = vpack.c.b16 %v3589, %v3589
      %v3622 = vpack.c.b16 %v3590, %v3590
      %v3623 = vpack.c.b16 %v3591, %v3591
      %v3624 = vpack.c.b16 %v3592, %v3592
      %v3625 = vpack.c.b16 %v3593, %v3593
      %v3626 = vpack.c.b16 %v3594, %v3594
      %v3627 = vpack.c.b16 %v3595, %v3595
      %v3628 = vpack.c.b16 %v3596, %v3596
      %vm3661 = vcmask 60416
      %3662 = vst.msk [vmem:[#allocation4] sm:$0xf] %vm3661, %v3597
      %3663 = vst.msk [vmem:[#allocation4 + $0x4] sm:$0xf] %vm3661, %v3598
      %3664 = vst.msk [vmem:[#allocation4 + $0x8] sm:$0xf] %vm3661, %v3599
      %3665 = vst.msk [vmem:[#allocation4 + $0xc] sm:$0xf] %vm3661, %v3600
      %3666 = vst.msk [vmem:[#allocation4 + $0x10] sm:$0xf] %vm3661, %v3601
      %3667 = vst.msk [vmem:[#allocation4 + $0x14] sm:$0xf] %vm3661, %v3602
      %3668 = vst.msk [vmem:[#allocation4 + $0x18] sm:$0xf] %vm3661, %v3603
      %3669 = vst.msk [vmem:[#allocation4 + $0x1c] sm:$0xf] %vm3661, %v3604
      %3670 = vst.msk [vmem:[#allocation4 + $0x20] sm:$0xf] %vm3661, %v3605
      %3671 = vst.msk [vmem:[#allocation4 + $0x24] sm:$0xf] %vm3661, %v3606
      %3672 = vst.msk [vmem:[#allocation4 + $0x28] sm:$0xf] %vm3661, %v3607
      %3673 = vst.msk [vmem:[#allocation4 + $0x2c] sm:$0xf] %vm3661, %v3608
      %3674 = vst.msk [vmem:[#allocation4 + $0x30] sm:$0xf] %vm3661, %v3609
      %3675 = vst.msk [vmem:[#allocation4 + $0x34] sm:$0xf] %vm3661, %v3610
      %3676 = vst.msk [vmem:[#allocation4 + $0x38] sm:$0xf] %vm3661, %v3611
      %3677 = vst.msk [vmem:[#allocation4 + $0x3c] sm:$0xf] %vm3661, %v3612
      %3678 = vst.msk [vmem:[#allocation4 + $0x40] sm:$0xf] %vm3661, %v3613
      %3679 = vst.msk [vmem:[#allocation4 + $0x44] sm:$0xf] %vm3661, %v3614
      %3680 = vst.msk [vmem:[#allocation4 + $0x48] sm:$0xf] %vm3661, %v3615
      %3681 = vst.msk [vmem:[#allocation4 + $0x4c] sm:$0xf] %vm3661, %v3616
      %3682 = vst.msk [vmem:[#allocation4 + $0x50] sm:$0xf] %vm3661, %v3617
      %3683 = vst.msk [vmem:[#allocation4 + $0x54] sm:$0xf] %vm3661, %v3618
      %3684 = vst.msk [vmem:[#allocation4 + $0x58] sm:$0xf] %vm3661, %v3619
      %3685 = vst.msk [vmem:[#allocation4 + $0x5c] sm:$0xf] %vm3661, %v3620
      %3686 = vst.msk [vmem:[#allocation4 + $0x60] sm:$0xf] %vm3661, %v3621
      %3687 = vst.msk [vmem:[#allocation4 + $0x64] sm:$0xf] %vm3661, %v3622
      %3688 = vst.msk [vmem:[#allocation4 + $0x68] sm:$0xf] %vm3661, %v3623
      %3689 = vst.msk [vmem:[#allocation4 + $0x6c] sm:$0xf] %vm3661, %v3624
      %3690 = vst.msk [vmem:[#allocation4 + $0x70] sm:$0xf] %vm3661, %v3625
      %3691 = vst.msk [vmem:[#allocation4 + $0x74] sm:$0xf] %vm3661, %v3626
      %3692 = vst.msk [vmem:[#allocation4 + $0x78] sm:$0xf] %vm3661, %v3627
      %3693 = vst.msk [vmem:[#allocation4 + $0x7c] sm:$0xf] %vm3661, %v3628
      %s3694 = scalar_lea.vmem %s536, 64
      %v3695 = vld [vmem:[%s3694] sm:$0xff]
      %v3696 = vld [vmem:[%s3694 + $0x8] sm:$0xff]
      %v3697 = vld [vmem:[%s3694 + $0x10] sm:$0xff]
      %v3698 = vld [vmem:[%s3694 + $0x18] sm:$0xff]
      %v3699 = vld [vmem:[%s3694 + $0x20] sm:$0xff]
      %v3700 = vld [vmem:[%s3694 + $0x28] sm:$0xff]
      %v3701 = vld [vmem:[%s3694 + $0x30] sm:$0xff]
      %v3702 = vld [vmem:[%s3694 + $0x38] sm:$0xff]
      %3707 = vrot.lane.b32.xlu0 %v2062, 120
      %v3708 = vpop.permute.xlu0 %3707
      %3709 = vrot.lane.b32.xlu0 %v2063, 120
      %v3710 = vpop.permute.xlu0 %3709
      %3711 = vrot.lane.b32.xlu0 %v2064, 120
      %v3712 = vpop.permute.xlu0 %3711
      %3713 = vrot.lane.b32.xlu0 %v2065, 120
      %v3714 = vpop.permute.xlu0 %3713
      %3719 = vrot.lane.b32.xlu0 %v2355, 120
      %v3720 = vpop.permute.xlu0 %3719
      %3721 = vrot.lane.b32.xlu0 %v2356, 120
      %v3722 = vpop.permute.xlu0 %3721
      %3723 = vrot.lane.b32.xlu0 %v2357, 120
      %v3724 = vpop.permute.xlu0 %3723
      %3725 = vrot.lane.b32.xlu0 %v2358, 120
      %v3726 = vpop.permute.xlu0 %3725
      %v3728 = vsel %vm2435, %v3708, 0
      %v3731 = vsel %vm2435, %v3710, 0
      %v3734 = vsel %vm2435, %v3712, 0
      %v3737 = vsel %vm2435, %v3714, 0
      %v3740 = vsel %vm2435, %v3720, 0
      %v3743 = vsel %vm2435, %v3722, 0
      %v3746 = vsel %vm2435, %v3724, 0
      %v3749 = vsel %vm2435, %v3726, 0
      %3751 = vmatprep.subr.bf16.mxu0 0
      %3752 = vmatpush1.bf16.xpose.msra.mxu0 0
      %3753 = vmatprep.subr.bf16.mxu0 0
      %3754 = vmatpush1.bf16.xpose.msra.mxu0 0
      %3755 = vmatprep.subr.bf16.mxu0 0
      %3756 = vmatpush1.bf16.xpose.msra.mxu0 0
      %3757 = vmatprep.subr.bf16.mxu0 0
      %3758 = vmatpush1.bf16.xpose.msra.mxu0 0
      %3759 = vmatprep.subr.bf16.mxu0 0
      %3760 = vmatpush1.bf16.xpose.msra.mxu0 %v3749
      %3761 = vmatprep.subr.bf16.mxu0 0
      %3762 = vmatpush1.bf16.xpose.msra.mxu0 %v3746
      %3763 = vmatprep.subr.bf16.mxu0 0
      %3764 = vmatpush1.bf16.xpose.msra.mxu0 %v3743
      %3765 = vmatprep.subr.bf16.mxu0 0
      %3766 = vmatpush1.bf16.xpose.msra.mxu0 %v3740
      %3767 = vmatprep.subr.bf16.mxu0 0
      %3768 = vmatpush2.bf16.xpose.msra.mxu0 0
      %3769 = vmatprep.subr.bf16.mxu0 0
      %3770 = vmatpush2.bf16.xpose.msra.mxu0 0
      %3771 = vmatprep.subr.bf16.mxu0 0
      %3772 = vmatpush2.bf16.xpose.msra.mxu0 0
      %3773 = vmatprep.subr.bf16.mxu0 0
      %3774 = vmatpush2.bf16.xpose.msra.mxu0 0
      %3775 = vmatprep.subr.bf16.mxu0 0
      %3776 = vmatpush2.bf16.xpose.msra.mxu0 0
      %3777 = vmatprep.subr.bf16.mxu0 0
      %3778 = vmatpush2.bf16.xpose.msra.mxu0 0
      %3779 = vmatprep.subr.bf16.mxu0 0
      %3780 = vmatpush2.bf16.xpose.msra.mxu0 0
      %3781 = vmatprep.subr.bf16.mxu0 0
      %3782 = vmatpush2.bf16.xpose.msra.mxu0 0
      %3783 = vmatprep.mubr.bf16.mxu0 0
      %3784 = vmatmul.mubr.bf16.gmra.mxu0 %v3728
      %v3785 = vpop.f32.mrf.mxu0
      %v3786 = vadd.f32 %v3695, %v3785
      %v3787 = vpop.f32.mrf.mxu0
      %v3788 = vpop.f32.mrf.mxu0
      %v3789 = vadd.f32 %v3696, %v3788
      %v3790 = vpop.f32.mrf.mxu0
      %3791 = vmatprep.mubr.bf16.mxu0 0
      %3792 = vmatmul.mubr.bf16.gmra.mxu0 %v3731
      %v3793 = vpop.f32.mrf.mxu0
      %v3794 = vadd.f32 %v3697, %v3793
      %v3795 = vpop.f32.mrf.mxu0
      %v3796 = vpop.f32.mrf.mxu0
      %v3797 = vadd.f32 %v3698, %v3796
      %v3798 = vpop.f32.mrf.mxu0
      %3799 = vmatprep.mubr.bf16.mxu0 0
      %3800 = vmatmul.mubr.bf16.gmra.mxu0 %v3734
      %v3801 = vpop.f32.mrf.mxu0
      %v3802 = vadd.f32 %v3699, %v3801
      %v3803 = vpop.f32.mrf.mxu0
      %v3804 = vpop.f32.mrf.mxu0
      %v3805 = vadd.f32 %v3700, %v3804
      %v3806 = vpop.f32.mrf.mxu0
      %3807 = vmatprep.mubr.bf16.mxu0 0
      %3808 = vmatmul.mubr.bf16.gmra.mxu0 %v3737
      %v3809 = vpop.f32.mrf.mxu0
      %v3810 = vadd.f32 %v3701, %v3809
      %v3811 = vpop.f32.mrf.mxu0
      %v3812 = vpop.f32.mrf.mxu0
      %v3813 = vadd.f32 %v3702, %v3812
      %v3814 = vpop.f32.mrf.mxu0
      %3815 = vdwg.mxu0
      %3820 = vrot.lane.b32.xlu0 %v2066, 120
      %v3821 = vpop.permute.xlu0 %3820
      %3822 = vrot.lane.b32.xlu0 %v2067, 120
      %v3823 = vpop.permute.xlu0 %3822
      %3824 = vrot.lane.b32.xlu0 %v2068, 120
      %v3825 = vpop.permute.xlu0 %3824
      %3826 = vrot.lane.b32.xlu0 %v2069, 120
      %v3827 = vpop.permute.xlu0 %3826
      %3832 = vrot.lane.b32.xlu0 %v2359, 120
      %v3833 = vpop.permute.xlu0 %3832
      %3834 = vrot.lane.b32.xlu0 %v2360, 120
      %v3835 = vpop.permute.xlu0 %3834
      %3836 = vrot.lane.b32.xlu0 %v2361, 120
      %v3837 = vpop.permute.xlu0 %3836
      %3838 = vrot.lane.b32.xlu0 %v2362, 120
      %v3839 = vpop.permute.xlu0 %3838
      %v3841 = vsel %vm2435, %v3821, 0
      %v3844 = vsel %vm2435, %v3823, 0
      %v3847 = vsel %vm2435, %v3825, 0
      %v3850 = vsel %vm2435, %v3827, 0
      %v3853 = vsel %vm2435, %v3833, 0
      %v3856 = vsel %vm2435, %v3835, 0
      %v3859 = vsel %vm2435, %v3837, 0
      %v3862 = vsel %vm2435, %v3839, 0
      %3864 = vmatprep.subr.bf16.mxu0 0
      %3865 = vmatpush1.bf16.xpose.msra.mxu0 0
      %3866 = vmatprep.subr.bf16.mxu0 0
      %3867 = vmatpush1.bf16.xpose.msra.mxu0 0
      %3868 = vmatprep.subr.bf16.mxu0 0
      %3869 = vmatpush1.bf16.xpose.msra.mxu0 0
      %3870 = vmatprep.subr.bf16.mxu0 0
      %3871 = vmatpush1.bf16.xpose.msra.mxu0 0
      %3872 = vmatprep.subr.bf16.mxu0 0
      %3873 = vmatpush1.bf16.xpose.msra.mxu0 %v3862
      %3874 = vmatprep.subr.bf16.mxu0 0
      %3875 = vmatpush1.bf16.xpose.msra.mxu0 %v3859
      %3876 = vmatprep.subr.bf16.mxu0 0
      %3877 = vmatpush1.bf16.xpose.msra.mxu0 %v3856
      %3878 = vmatprep.subr.bf16.mxu0 0
      %3879 = vmatpush1.bf16.xpose.msra.mxu0 %v3853
      %3880 = vmatprep.subr.bf16.mxu0 0
      %3881 = vmatpush2.bf16.xpose.msra.mxu0 0
      %3882 = vmatprep.subr.bf16.mxu0 0
      %3883 = vmatpush2.bf16.xpose.msra.mxu0 0
      %3884 = vmatprep.subr.bf16.mxu0 0
      %3885 = vmatpush2.bf16.xpose.msra.mxu0 0
      %3886 = vmatprep.subr.bf16.mxu0 0
      %3887 = vmatpush2.bf16.xpose.msra.mxu0 0
      %3888 = vmatprep.subr.bf16.mxu0 0
      %3889 = vmatpush2.bf16.xpose.msra.mxu0 0
      %3890 = vmatprep.subr.bf16.mxu0 0
      %3891 = vmatpush2.bf16.xpose.msra.mxu0 0
      %3892 = vmatprep.subr.bf16.mxu0 0
      %3893 = vmatpush2.bf16.xpose.msra.mxu0 0
      %3894 = vmatprep.subr.bf16.mxu0 0
      %3895 = vmatpush2.bf16.xpose.msra.mxu0 0
      %3896 = vmatprep.mubr.bf16.mxu0 0
      %3897 = vmatmul.mubr.bf16.gmra.mxu0 %v3841
      %v3898 = vpop.f32.mrf.mxu0
      %v3899 = vadd.f32 %v3695, %v3898
      %v3900 = vpop.f32.mrf.mxu0
      %v3901 = vpop.f32.mrf.mxu0
      %v3902 = vadd.f32 %v3696, %v3901
      %v3903 = vpop.f32.mrf.mxu0
      %3904 = vmatprep.mubr.bf16.mxu0 0
      %3905 = vmatmul.mubr.bf16.gmra.mxu0 %v3844
      %v3906 = vpop.f32.mrf.mxu0
      %v3907 = vadd.f32 %v3697, %v3906
      %v3908 = vpop.f32.mrf.mxu0
      %v3909 = vpop.f32.mrf.mxu0
      %v3910 = vadd.f32 %v3698, %v3909
      %v3911 = vpop.f32.mrf.mxu0
      %3912 = vmatprep.mubr.bf16.mxu0 0
      %3913 = vmatmul.mubr.bf16.gmra.mxu0 %v3847
      %v3914 = vpop.f32.mrf.mxu0
      %v3915 = vadd.f32 %v3699, %v3914
      %v3916 = vpop.f32.mrf.mxu0
      %v3917 = vpop.f32.mrf.mxu0
      %v3918 = vadd.f32 %v3700, %v3917
      %v3919 = vpop.f32.mrf.mxu0
      %3920 = vmatprep.mubr.bf16.mxu0 0
      %3921 = vmatmul.mubr.bf16.gmra.mxu0 %v3850
      %v3922 = vpop.f32.mrf.mxu0
      %v3923 = vadd.f32 %v3701, %v3922
      %v3924 = vpop.f32.mrf.mxu0
      %v3925 = vpop.f32.mrf.mxu0
      %v3926 = vadd.f32 %v3702, %v3925
      %v3927 = vpop.f32.mrf.mxu0
      %3928 = vdwg.mxu0
      %3933 = vrot.lane.b32.xlu0 %v2070, 120
      %v3934 = vpop.permute.xlu0 %3933
      %3935 = vrot.lane.b32.xlu0 %v2071, 120
      %v3936 = vpop.permute.xlu0 %3935
      %3937 = vrot.lane.b32.xlu0 %v2072, 120
      %v3938 = vpop.permute.xlu0 %3937
      %3939 = vrot.lane.b32.xlu0 %v2073, 120
      %v3940 = vpop.permute.xlu0 %3939
      %3945 = vrot.lane.b32.xlu0 %v2363, 120
      %v3946 = vpop.permute.xlu0 %3945
      %3947 = vrot.lane.b32.xlu0 %v2364, 120
      %v3948 = vpop.permute.xlu0 %3947
      %3949 = vrot.lane.b32.xlu0 %v2365, 120
      %v3950 = vpop.permute.xlu0 %3949
      %3951 = vrot.lane.b32.xlu0 %v2366, 120
      %v3952 = vpop.permute.xlu0 %3951
      %v3954 = vsel %vm2435, %v3934, 0
      %v3957 = vsel %vm2435, %v3936, 0
      %v3960 = vsel %vm2435, %v3938, 0
      %v3963 = vsel %vm2435, %v3940, 0
      %v3966 = vsel %vm2435, %v3946, 0
      %v3969 = vsel %vm2435, %v3948, 0
      %v3972 = vsel %vm2435, %v3950, 0
      %v3975 = vsel %vm2435, %v3952, 0
      %3977 = vmatprep.subr.bf16.mxu0 0
      %3978 = vmatpush1.bf16.xpose.msra.mxu0 0
      %3979 = vmatprep.subr.bf16.mxu0 0
      %3980 = vmatpush1.bf16.xpose.msra.mxu0 0
      %3981 = vmatprep.subr.bf16.mxu0 0
      %3982 = vmatpush1.bf16.xpose.msra.mxu0 0
      %3983 = vmatprep.subr.bf16.mxu0 0
      %3984 = vmatpush1.bf16.xpose.msra.mxu0 0
      %3985 = vmatprep.subr.bf16.mxu0 0
      %3986 = vmatpush1.bf16.xpose.msra.mxu0 %v3975
      %3987 = vmatprep.subr.bf16.mxu0 0
      %3988 = vmatpush1.bf16.xpose.msra.mxu0 %v3972
      %3989 = vmatprep.subr.bf16.mxu0 0
      %3990 = vmatpush1.bf16.xpose.msra.mxu0 %v3969
      %3991 = vmatprep.subr.bf16.mxu0 0
      %3992 = vmatpush1.bf16.xpose.msra.mxu0 %v3966
      %3993 = vmatprep.subr.bf16.mxu0 0
      %3994 = vmatpush2.bf16.xpose.msra.mxu0 0
      %3995 = vmatprep.subr.bf16.mxu0 0
      %3996 = vmatpush2.bf16.xpose.msra.mxu0 0
      %3997 = vmatprep.subr.bf16.mxu0 0
      %3998 = vmatpush2.bf16.xpose.msra.mxu0 0
      %3999 = vmatprep.subr.bf16.mxu0 0
      %4000 = vmatpush2.bf16.xpose.msra.mxu0 0
      %4001 = vmatprep.subr.bf16.mxu0 0
      %4002 = vmatpush2.bf16.xpose.msra.mxu0 0
      %4003 = vmatprep.subr.bf16.mxu0 0
      %4004 = vmatpush2.bf16.xpose.msra.mxu0 0
      %4005 = vmatprep.subr.bf16.mxu0 0
      %4006 = vmatpush2.bf16.xpose.msra.mxu0 0
      %4007 = vmatprep.subr.bf16.mxu0 0
      %4008 = vmatpush2.bf16.xpose.msra.mxu0 0
      %4009 = vmatprep.mubr.bf16.mxu0 0
      %4010 = vmatmul.mubr.bf16.gmra.mxu0 %v3954
      %v4011 = vpop.f32.mrf.mxu0
      %v4012 = vadd.f32 %v3695, %v4011
      %v4013 = vpop.f32.mrf.mxu0
      %v4014 = vpop.f32.mrf.mxu0
      %v4015 = vadd.f32 %v3696, %v4014
      %v4016 = vpop.f32.mrf.mxu0
      %4017 = vmatprep.mubr.bf16.mxu0 0
      %4018 = vmatmul.mubr.bf16.gmra.mxu0 %v3957
      %v4019 = vpop.f32.mrf.mxu0
      %v4020 = vadd.f32 %v3697, %v4019
      %v4021 = vpop.f32.mrf.mxu0
      %v4022 = vpop.f32.mrf.mxu0
      %v4023 = vadd.f32 %v3698, %v4022
      %v4024 = vpop.f32.mrf.mxu0
      %4025 = vmatprep.mubr.bf16.mxu0 0
      %4026 = vmatmul.mubr.bf16.gmra.mxu0 %v3960
      %v4027 = vpop.f32.mrf.mxu0
      %v4028 = vadd.f32 %v3699, %v4027
      %v4029 = vpop.f32.mrf.mxu0
      %v4030 = vpop.f32.mrf.mxu0
      %v4031 = vadd.f32 %v3700, %v4030
      %v4032 = vpop.f32.mrf.mxu0
      %4033 = vmatprep.mubr.bf16.mxu0 0
      %4034 = vmatmul.mubr.bf16.gmra.mxu0 %v3963
      %v4035 = vpop.f32.mrf.mxu0
      %v4036 = vadd.f32 %v3701, %v4035
      %v4037 = vpop.f32.mrf.mxu0
      %v4038 = vpop.f32.mrf.mxu0
      %v4039 = vadd.f32 %v3702, %v4038
      %v4040 = vpop.f32.mrf.mxu0
      %4041 = vdwg.mxu0
      %4046 = vrot.lane.b32.xlu0 %v2074, 120
      %v4047 = vpop.permute.xlu0 %4046
      %4048 = vrot.lane.b32.xlu0 %v2075, 120
      %v4049 = vpop.permute.xlu0 %4048
      %4050 = vrot.lane.b32.xlu0 %v2076, 120
      %v4051 = vpop.permute.xlu0 %4050
      %4052 = vrot.lane.b32.xlu0 %v2077, 120
      %v4053 = vpop.permute.xlu0 %4052
      %4058 = vrot.lane.b32.xlu0 %v2367, 120
      %v4059 = vpop.permute.xlu0 %4058
      %4060 = vrot.lane.b32.xlu0 %v2368, 120
      %v4061 = vpop.permute.xlu0 %4060
      %4062 = vrot.lane.b32.xlu0 %v2369, 120
      %v4063 = vpop.permute.xlu0 %4062
      %4064 = vrot.lane.b32.xlu0 %v2370, 120
      %v4065 = vpop.permute.xlu0 %4064
      %v4067 = vsel %vm2435, %v4047, 0
      %v4070 = vsel %vm2435, %v4049, 0
      %v4073 = vsel %vm2435, %v4051, 0
      %v4076 = vsel %vm2435, %v4053, 0
      %v4079 = vsel %vm2435, %v4059, 0
      %v4082 = vsel %vm2435, %v4061, 0
      %v4085 = vsel %vm2435, %v4063, 0
      %v4088 = vsel %vm2435, %v4065, 0
      %4090 = vmatprep.subr.bf16.mxu0 0
      %4091 = vmatpush1.bf16.xpose.msra.mxu0 0
      %4092 = vmatprep.subr.bf16.mxu0 0
      %4093 = vmatpush1.bf16.xpose.msra.mxu0 0
      %4094 = vmatprep.subr.bf16.mxu0 0
      %4095 = vmatpush1.bf16.xpose.msra.mxu0 0
      %4096 = vmatprep.subr.bf16.mxu0 0
      %4097 = vmatpush1.bf16.xpose.msra.mxu0 0
      %4098 = vmatprep.subr.bf16.mxu0 0
      %4099 = vmatpush1.bf16.xpose.msra.mxu0 %v4088
      %4100 = vmatprep.subr.bf16.mxu0 0
      %4101 = vmatpush1.bf16.xpose.msra.mxu0 %v4085
      %4102 = vmatprep.subr.bf16.mxu0 0
      %4103 = vmatpush1.bf16.xpose.msra.mxu0 %v4082
      %4104 = vmatprep.subr.bf16.mxu0 0
      %4105 = vmatpush1.bf16.xpose.msra.mxu0 %v4079
      %4106 = vmatprep.subr.bf16.mxu0 0
      %4107 = vmatpush2.bf16.xpose.msra.mxu0 0
      %4108 = vmatprep.subr.bf16.mxu0 0
      %4109 = vmatpush2.bf16.xpose.msra.mxu0 0
      %4110 = vmatprep.subr.bf16.mxu0 0
      %4111 = vmatpush2.bf16.xpose.msra.mxu0 0
      %4112 = vmatprep.subr.bf16.mxu0 0
      %4113 = vmatpush2.bf16.xpose.msra.mxu0 0
      %4114 = vmatprep.subr.bf16.mxu0 0
      %4115 = vmatpush2.bf16.xpose.msra.mxu0 0
      %4116 = vmatprep.subr.bf16.mxu0 0
      %4117 = vmatpush2.bf16.xpose.msra.mxu0 0
      %4118 = vmatprep.subr.bf16.mxu0 0
      %4119 = vmatpush2.bf16.xpose.msra.mxu0 0
      %4120 = vmatprep.subr.bf16.mxu0 0
      %4121 = vmatpush2.bf16.xpose.msra.mxu0 0
      %4122 = vmatprep.mubr.bf16.mxu0 0
      %4123 = vmatmul.mubr.bf16.gmra.mxu0 %v4067
      %v4124 = vpop.f32.mrf.mxu0
      %v4125 = vadd.f32 %v3695, %v4124
      %v4126 = vpop.f32.mrf.mxu0
      %v4127 = vpop.f32.mrf.mxu0
      %v4128 = vadd.f32 %v3696, %v4127
      %v4129 = vpop.f32.mrf.mxu0
      %4130 = vmatprep.mubr.bf16.mxu0 0
      %4131 = vmatmul.mubr.bf16.gmra.mxu0 %v4070
      %v4132 = vpop.f32.mrf.mxu0
      %v4133 = vadd.f32 %v3697, %v4132
      %v4134 = vpop.f32.mrf.mxu0
      %v4135 = vpop.f32.mrf.mxu0
      %v4136 = vadd.f32 %v3698, %v4135
      %v4137 = vpop.f32.mrf.mxu0
      %4138 = vmatprep.mubr.bf16.mxu0 0
      %4139 = vmatmul.mubr.bf16.gmra.mxu0 %v4073
      %v4140 = vpop.f32.mrf.mxu0
      %v4141 = vadd.f32 %v3699, %v4140
      %v4142 = vpop.f32.mrf.mxu0
      %v4143 = vpop.f32.mrf.mxu0
      %v4144 = vadd.f32 %v3700, %v4143
      %v4145 = vpop.f32.mrf.mxu0
      %4146 = vmatprep.mubr.bf16.mxu0 0
      %4147 = vmatmul.mubr.bf16.gmra.mxu0 %v4076
      %v4148 = vpop.f32.mrf.mxu0
      %v4149 = vadd.f32 %v3701, %v4148
      %v4150 = vpop.f32.mrf.mxu0
      %v4151 = vpop.f32.mrf.mxu0
      %v4152 = vadd.f32 %v3702, %v4151
      %v4153 = vpop.f32.mrf.mxu0
      %4154 = vdwg.mxu0
      %v4155 = vsel %vm2792, %v3786, -inf
      %4156 = vmax.xlane.f32.xlu0 %v4155
      %v4157 = vpop.xlane.xlu0 %4156
      %v4158 = vsel %vm2792, %v3789, -inf
      %4159 = vmax.xlane.f32.xlu0 %v4158
      %v4160 = vpop.xlane.xlu0 %4159
      %v4161 = vsel %vm2792, %v3794, -inf
      %4162 = vmax.xlane.f32.xlu0 %v4161
      %v4163 = vpop.xlane.xlu0 %4162
      %v4164 = vsel %vm2792, %v3797, -inf
      %4165 = vmax.xlane.f32.xlu0 %v4164
      %v4166 = vpop.xlane.xlu0 %4165
      %v4167 = vsel %vm2792, %v3802, -inf
      %4168 = vmax.xlane.f32.xlu0 %v4167
      %v4169 = vpop.xlane.xlu0 %4168
      %v4170 = vsel %vm2792, %v3805, -inf
      %4171 = vmax.xlane.f32.xlu0 %v4170
      %v4172 = vpop.xlane.xlu0 %4171
      %v4173 = vsel %vm2792, %v3810, -inf
      %4174 = vmax.xlane.f32.xlu0 %v4173
      %v4175 = vpop.xlane.xlu0 %4174
      %v4176 = vsel %vm2792, %v3813, -inf
      %4177 = vmax.xlane.f32.xlu0 %v4176
      %v4178 = vpop.xlane.xlu0 %4177
      %v4179 = vsel %vm2792, %v3899, -inf
      %4180 = vmax.xlane.f32.xlu0 %v4179
      %v4181 = vpop.xlane.xlu0 %4180
      %v4182 = vsel %vm2792, %v3902, -inf
      %4183 = vmax.xlane.f32.xlu0 %v4182
      %v4184 = vpop.xlane.xlu0 %4183
      %v4185 = vsel %vm2792, %v3907, -inf
      %4186 = vmax.xlane.f32.xlu0 %v4185
      %v4187 = vpop.xlane.xlu0 %4186
      %v4188 = vsel %vm2792, %v3910, -inf
      %4189 = vmax.xlane.f32.xlu0 %v4188
      %v4190 = vpop.xlane.xlu0 %4189
      %v4191 = vsel %vm2792, %v3915, -inf
      %4192 = vmax.xlane.f32.xlu0 %v4191
      %v4193 = vpop.xlane.xlu0 %4192
      %v4194 = vsel %vm2792, %v3918, -inf
      %4195 = vmax.xlane.f32.xlu0 %v4194
      %v4196 = vpop.xlane.xlu0 %4195
      %v4197 = vsel %vm2792, %v3923, -inf
      %4198 = vmax.xlane.f32.xlu0 %v4197
      %v4199 = vpop.xlane.xlu0 %4198
      %v4200 = vsel %vm2792, %v3926, -inf
      %4201 = vmax.xlane.f32.xlu0 %v4200
      %v4202 = vpop.xlane.xlu0 %4201
      %v4203 = vsel %vm2792, %v4012, -inf
      %4204 = vmax.xlane.f32.xlu0 %v4203
      %v4205 = vpop.xlane.xlu0 %4204
      %v4206 = vsel %vm2792, %v4015, -inf
      %4207 = vmax.xlane.f32.xlu0 %v4206
      %v4208 = vpop.xlane.xlu0 %4207
      %v4209 = vsel %vm2792, %v4020, -inf
      %4210 = vmax.xlane.f32.xlu0 %v4209
      %v4211 = vpop.xlane.xlu0 %4210
      %v4212 = vsel %vm2792, %v4023, -inf
      %4213 = vmax.xlane.f32.xlu0 %v4212
      %v4214 = vpop.xlane.xlu0 %4213
      %v4215 = vsel %vm2792, %v4028, -inf
      %4216 = vmax.xlane.f32.xlu0 %v4215
      %v4217 = vpop.xlane.xlu0 %4216
      %v4218 = vsel %vm2792, %v4031, -inf
      %4219 = vmax.xlane.f32.xlu0 %v4218
      %v4220 = vpop.xlane.xlu0 %4219
      %v4221 = vsel %vm2792, %v4036, -inf
      %4222 = vmax.xlane.f32.xlu0 %v4221
      %v4223 = vpop.xlane.xlu0 %4222
      %v4224 = vsel %vm2792, %v4039, -inf
      %4225 = vmax.xlane.f32.xlu0 %v4224
      %v4226 = vpop.xlane.xlu0 %4225
      %v4227 = vsel %vm2792, %v4125, -inf
      %4228 = vmax.xlane.f32.xlu0 %v4227
      %v4229 = vpop.xlane.xlu0 %4228
      %v4230 = vsel %vm2792, %v4128, -inf
      %4231 = vmax.xlane.f32.xlu0 %v4230
      %v4232 = vpop.xlane.xlu0 %4231
      %v4233 = vsel %vm2792, %v4133, -inf
      %4234 = vmax.xlane.f32.xlu0 %v4233
      %v4235 = vpop.xlane.xlu0 %4234
      %v4236 = vsel %vm2792, %v4136, -inf
      %4237 = vmax.xlane.f32.xlu0 %v4236
      %v4238 = vpop.xlane.xlu0 %4237
      %v4239 = vsel %vm2792, %v4141, -inf
      %4240 = vmax.xlane.f32.xlu0 %v4239
      %v4241 = vpop.xlane.xlu0 %4240
      %v4242 = vsel %vm2792, %v4144, -inf
      %4243 = vmax.xlane.f32.xlu0 %v4242
      %v4244 = vpop.xlane.xlu0 %4243
      %v4245 = vsel %vm2792, %v4149, -inf
      %4246 = vmax.xlane.f32.xlu0 %v4245
      %v4247 = vpop.xlane.xlu0 %4246
      %v4248 = vsel %vm2792, %v4152, -inf
      %4249 = vmax.xlane.f32.xlu0 %v4248
      %v4250 = vpop.xlane.xlu0 %4249
      %v4251 = vsub.f32 %v3786, %v4157
      %v4252 = vsub.f32 %v3789, %v4160
      %v4253 = vsub.f32 %v3794, %v4163
      %v4254 = vsub.f32 %v3797, %v4166
      %v4255 = vsub.f32 %v3802, %v4169
      %v4256 = vsub.f32 %v3805, %v4172
      %v4257 = vsub.f32 %v3810, %v4175
      %v4258 = vsub.f32 %v3813, %v4178
      %v4259 = vsub.f32 %v3899, %v4181
      %v4260 = vsub.f32 %v3902, %v4184
      %v4261 = vsub.f32 %v3907, %v4187
      %v4262 = vsub.f32 %v3910, %v4190
      %v4263 = vsub.f32 %v3915, %v4193
      %v4264 = vsub.f32 %v3918, %v4196
      %v4265 = vsub.f32 %v3923, %v4199
      %v4266 = vsub.f32 %v3926, %v4202
      %v4267 = vsub.f32 %v4012, %v4205
      %v4268 = vsub.f32 %v4015, %v4208
      %v4269 = vsub.f32 %v4020, %v4211
      %v4270 = vsub.f32 %v4023, %v4214
      %v4271 = vsub.f32 %v4028, %v4217
      %v4272 = vsub.f32 %v4031, %v4220
      %v4273 = vsub.f32 %v4036, %v4223
      %v4274 = vsub.f32 %v4039, %v4226
      %v4275 = vsub.f32 %v4125, %v4229
      %v4276 = vsub.f32 %v4128, %v4232
      %v4277 = vsub.f32 %v4133, %v4235
      %v4278 = vsub.f32 %v4136, %v4238
      %v4279 = vsub.f32 %v4141, %v4241
      %v4280 = vsub.f32 %v4144, %v4244
      %v4281 = vsub.f32 %v4149, %v4247
      %v4282 = vsub.f32 %v4152, %v4250
      %v4283 = vmul.f32 %v4251, 1.442695
      %v4284 = vpow.pop %v4283
      %v4285 = vmul.f32 %v4252, 1.442695
      %v4286 = vpow.pop %v4285
      %v4287 = vmul.f32 %v4253, 1.442695
      %v4288 = vpow.pop %v4287
      %v4289 = vmul.f32 %v4254, 1.442695
      %v4290 = vpow.pop %v4289
      %v4291 = vmul.f32 %v4255, 1.442695
      %v4292 = vpow.pop %v4291
      %v4293 = vmul.f32 %v4256, 1.442695
      %v4294 = vpow.pop %v4293
      %v4295 = vmul.f32 %v4257, 1.442695
      %v4296 = vpow.pop %v4295
      %v4297 = vmul.f32 %v4258, 1.442695
      %v4298 = vpow.pop %v4297
      %v4299 = vmul.f32 %v4259, 1.442695
      %v4300 = vpow.pop %v4299
      %v4301 = vmul.f32 %v4260, 1.442695
      %v4302 = vpow.pop %v4301
      %v4303 = vmul.f32 %v4261, 1.442695
      %v4304 = vpow.pop %v4303
      %v4305 = vmul.f32 %v4262, 1.442695
      %v4306 = vpow.pop %v4305
      %v4307 = vmul.f32 %v4263, 1.442695
      %v4308 = vpow.pop %v4307
      %v4309 = vmul.f32 %v4264, 1.442695
      %v4310 = vpow.pop %v4309
      %v4311 = vmul.f32 %v4265, 1.442695
      %v4312 = vpow.pop %v4311
      %v4313 = vmul.f32 %v4266, 1.442695
      %v4314 = vpow.pop %v4313
      %v4315 = vmul.f32 %v4267, 1.442695
      %v4316 = vpow.pop %v4315
      %v4317 = vmul.f32 %v4268, 1.442695
      %v4318 = vpow.pop %v4317
      %v4319 = vmul.f32 %v4269, 1.442695
      %v4320 = vpow.pop %v4319
      %v4321 = vmul.f32 %v4270, 1.442695
      %v4322 = vpow.pop %v4321
      %v4323 = vmul.f32 %v4271, 1.442695
      %v4324 = vpow.pop %v4323
      %v4325 = vmul.f32 %v4272, 1.442695
      %v4326 = vpow.pop %v4325
      %v4327 = vmul.f32 %v4273, 1.442695
      %v4328 = vpow.pop %v4327
      %v4329 = vmul.f32 %v4274, 1.442695
      %v4330 = vpow.pop %v4329
      %v4331 = vmul.f32 %v4275, 1.442695
      %v4332 = vpow.pop %v4331
      %v4333 = vmul.f32 %v4276, 1.442695
      %v4334 = vpow.pop %v4333
      %v4335 = vmul.f32 %v4277, 1.442695
      %v4336 = vpow.pop %v4335
      %v4337 = vmul.f32 %v4278, 1.442695
      %v4338 = vpow.pop %v4337
      %v4339 = vmul.f32 %v4279, 1.442695
      %v4340 = vpow.pop %v4339
      %v4341 = vmul.f32 %v4280, 1.442695
      %v4342 = vpow.pop %v4341
      %v4343 = vmul.f32 %v4281, 1.442695
      %v4344 = vpow.pop %v4343
      %v4345 = vmul.f32 %v4282, 1.442695
      %v4346 = vpow.pop %v4345
      %v4347 = vsel %vm2792, %v4284, 0.0
      %4348 = vadd.xlane.f32.xlu0 %v4347
      %v4349 = vpop.xlane.xlu0 %4348
      %v4350 = vsel %vm2792, %v4286, 0.0
      %4351 = vadd.xlane.f32.xlu0 %v4350
      %v4352 = vpop.xlane.xlu0 %4351
      %v4353 = vsel %vm2792, %v4288, 0.0
      %4354 = vadd.xlane.f32.xlu0 %v4353
      %v4355 = vpop.xlane.xlu0 %4354
      %v4356 = vsel %vm2792, %v4290, 0.0
      %4357 = vadd.xlane.f32.xlu0 %v4356
      %v4358 = vpop.xlane.xlu0 %4357
      %v4359 = vsel %vm2792, %v4292, 0.0
      %4360 = vadd.xlane.f32.xlu0 %v4359
      %v4361 = vpop.xlane.xlu0 %4360
      %v4362 = vsel %vm2792, %v4294, 0.0
      %4363 = vadd.xlane.f32.xlu0 %v4362
      %v4364 = vpop.xlane.xlu0 %4363
      %v4365 = vsel %vm2792, %v4296, 0.0
      %4366 = vadd.xlane.f32.xlu0 %v4365
      %v4367 = vpop.xlane.xlu0 %4366
      %v4368 = vsel %vm2792, %v4298, 0.0
      %4369 = vadd.xlane.f32.xlu0 %v4368
      %v4370 = vpop.xlane.xlu0 %4369
      %v4371 = vsel %vm2792, %v4300, 0.0
      %4372 = vadd.xlane.f32.xlu0 %v4371
      %v4373 = vpop.xlane.xlu0 %4372
      %v4374 = vsel %vm2792, %v4302, 0.0
      %4375 = vadd.xlane.f32.xlu0 %v4374
      %v4376 = vpop.xlane.xlu0 %4375
      %v4377 = vsel %vm2792, %v4304, 0.0
      %4378 = vadd.xlane.f32.xlu0 %v4377
      %v4379 = vpop.xlane.xlu0 %4378
      %v4380 = vsel %vm2792, %v4306, 0.0
      %4381 = vadd.xlane.f32.xlu0 %v4380
      %v4382 = vpop.xlane.xlu0 %4381
      %v4383 = vsel %vm2792, %v4308, 0.0
      %4384 = vadd.xlane.f32.xlu0 %v4383
      %v4385 = vpop.xlane.xlu0 %4384
      %v4386 = vsel %vm2792, %v4310, 0.0
      %4387 = vadd.xlane.f32.xlu0 %v4386
      %v4388 = vpop.xlane.xlu0 %4387
      %v4389 = vsel %vm2792, %v4312, 0.0
      %4390 = vadd.xlane.f32.xlu0 %v4389
      %v4391 = vpop.xlane.xlu0 %4390
      %v4392 = vsel %vm2792, %v4314, 0.0
      %4393 = vadd.xlane.f32.xlu0 %v4392
      %v4394 = vpop.xlane.xlu0 %4393
      %v4395 = vsel %vm2792, %v4316, 0.0
      %4396 = vadd.xlane.f32.xlu0 %v4395
      %v4397 = vpop.xlane.xlu0 %4396
      %v4398 = vsel %vm2792, %v4318, 0.0
      %4399 = vadd.xlane.f32.xlu0 %v4398
      %v4400 = vpop.xlane.xlu0 %4399
      %v4401 = vsel %vm2792, %v4320, 0.0
      %4402 = vadd.xlane.f32.xlu0 %v4401
      %v4403 = vpop.xlane.xlu0 %4402
      %v4404 = vsel %vm2792, %v4322, 0.0
      %4405 = vadd.xlane.f32.xlu0 %v4404
      %v4406 = vpop.xlane.xlu0 %4405
      %v4407 = vsel %vm2792, %v4324, 0.0
      %4408 = vadd.xlane.f32.xlu0 %v4407
      %v4409 = vpop.xlane.xlu0 %4408
      %v4410 = vsel %vm2792, %v4326, 0.0
      %4411 = vadd.xlane.f32.xlu0 %v4410
      %v4412 = vpop.xlane.xlu0 %4411
      %v4413 = vsel %vm2792, %v4328, 0.0
      %4414 = vadd.xlane.f32.xlu0 %v4413
      %v4415 = vpop.xlane.xlu0 %4414
      %v4416 = vsel %vm2792, %v4330, 0.0
      %4417 = vadd.xlane.f32.xlu0 %v4416
      %v4418 = vpop.xlane.xlu0 %4417
      %v4419 = vsel %vm2792, %v4332, 0.0
      %4420 = vadd.xlane.f32.xlu0 %v4419
      %v4421 = vpop.xlane.xlu0 %4420
      %v4422 = vsel %vm2792, %v4334, 0.0
      %4423 = vadd.xlane.f32.xlu0 %v4422
      %v4424 = vpop.xlane.xlu0 %4423
      %v4425 = vsel %vm2792, %v4336, 0.0
      %4426 = vadd.xlane.f32.xlu0 %v4425
      %v4427 = vpop.xlane.xlu0 %4426
      %v4428 = vsel %vm2792, %v4338, 0.0
      %4429 = vadd.xlane.f32.xlu0 %v4428
      %v4430 = vpop.xlane.xlu0 %4429
      %v4431 = vsel %vm2792, %v4340, 0.0
      %4432 = vadd.xlane.f32.xlu0 %v4431
      %v4433 = vpop.xlane.xlu0 %4432
      %v4434 = vsel %vm2792, %v4342, 0.0
      %4435 = vadd.xlane.f32.xlu0 %v4434
      %v4436 = vpop.xlane.xlu0 %4435
      %v4437 = vsel %vm2792, %v4344, 0.0
      %4438 = vadd.xlane.f32.xlu0 %v4437
      %v4439 = vpop.xlane.xlu0 %4438
      %v4440 = vsel %vm2792, %v4346, 0.0
      %4441 = vadd.xlane.f32.xlu0 %v4440
      %v4442 = vpop.xlane.xlu0 %4441
      %v4443 = vrcp.pop %v4349
      %v4444 = vrcp.pop %v4352
      %v4445 = vrcp.pop %v4355
      %v4446 = vrcp.pop %v4358
      %v4447 = vrcp.pop %v4361
      %v4448 = vrcp.pop %v4364
      %v4449 = vrcp.pop %v4367
      %v4450 = vrcp.pop %v4370
      %v4451 = vrcp.pop %v4373
      %v4452 = vrcp.pop %v4376
      %v4453 = vrcp.pop %v4379
      %v4454 = vrcp.pop %v4382
      %v4455 = vrcp.pop %v4385
      %v4456 = vrcp.pop %v4388
      %v4457 = vrcp.pop %v4391
      %v4458 = vrcp.pop %v4394
      %v4459 = vrcp.pop %v4397
      %v4460 = vrcp.pop %v4400
      %v4461 = vrcp.pop %v4403
      %v4462 = vrcp.pop %v4406
      %v4463 = vrcp.pop %v4409
      %v4464 = vrcp.pop %v4412
      %v4465 = vrcp.pop %v4415
      %v4466 = vrcp.pop %v4418
      %v4467 = vrcp.pop %v4421
      %v4468 = vrcp.pop %v4424
      %v4469 = vrcp.pop %v4427
      %v4470 = vrcp.pop %v4430
      %v4471 = vrcp.pop %v4433
      %v4472 = vrcp.pop %v4436
      %v4473 = vrcp.pop %v4439
      %v4474 = vrcp.pop %v4442
      %v4475 = vmul.f32 %v4284, %v4443
      %v4476 = vmul.f32 %v4286, %v4444
      %v4477 = vmul.f32 %v4288, %v4445
      %v4478 = vmul.f32 %v4290, %v4446
      %v4479 = vmul.f32 %v4292, %v4447
      %v4480 = vmul.f32 %v4294, %v4448
      %v4481 = vmul.f32 %v4296, %v4449
      %v4482 = vmul.f32 %v4298, %v4450
      %v4483 = vmul.f32 %v4300, %v4451
      %v4484 = vmul.f32 %v4302, %v4452
      %v4485 = vmul.f32 %v4304, %v4453
      %v4486 = vmul.f32 %v4306, %v4454
      %v4487 = vmul.f32 %v4308, %v4455
      %v4488 = vmul.f32 %v4310, %v4456
      %v4489 = vmul.f32 %v4312, %v4457
      %v4490 = vmul.f32 %v4314, %v4458
      %v4491 = vmul.f32 %v4316, %v4459
      %v4492 = vmul.f32 %v4318, %v4460
      %v4493 = vmul.f32 %v4320, %v4461
      %v4494 = vmul.f32 %v4322, %v4462
      %v4495 = vmul.f32 %v4324, %v4463
      %v4496 = vmul.f32 %v4326, %v4464
      %v4497 = vmul.f32 %v4328, %v4465
      %v4498 = vmul.f32 %v4330, %v4466
      %v4499 = vmul.f32 %v4332, %v4467
      %v4500 = vmul.f32 %v4334, %v4468
      %v4501 = vmul.f32 %v4336, %v4469
      %v4502 = vmul.f32 %v4338, %v4470
      %v4503 = vmul.f32 %v4340, %v4471
      %v4504 = vmul.f32 %v4342, %v4472
      %v4505 = vmul.f32 %v4344, %v4473
      %v4506 = vmul.f32 %v4346, %v4474
      %v4507 = vpack.c.bf16 %v4476, %v4475
      %v4508 = vpack.c.bf16 %v4478, %v4477
      %v4509 = vpack.c.bf16 %v4480, %v4479
      %v4510 = vpack.c.bf16 %v4482, %v4481
      %v4511 = vpack.c.bf16 %v4484, %v4483
      %v4512 = vpack.c.bf16 %v4486, %v4485
      %v4513 = vpack.c.bf16 %v4488, %v4487
      %v4514 = vpack.c.bf16 %v4490, %v4489
      %v4515 = vpack.c.bf16 %v4492, %v4491
      %v4516 = vpack.c.bf16 %v4494, %v4493
      %v4517 = vpack.c.bf16 %v4496, %v4495
      %v4518 = vpack.c.bf16 %v4498, %v4497
      %v4519 = vpack.c.bf16 %v4500, %v4499
      %v4520 = vpack.c.bf16 %v4502, %v4501
      %v4521 = vpack.c.bf16 %v4504, %v4503
      %v4522 = vpack.c.bf16 %v4506, %v4505
      %4523 = vrot.lane.b32.xlu0 %v2411, 88
      %v4524 = vpop.permute.xlu0 %4523
      %4525 = vrot.lane.b32.xlu0 %v2412, 88
      %v4526 = vpop.permute.xlu0 %4525
      %4527 = vrot.lane.b32.xlu0 %v2413, 88
      %v4528 = vpop.permute.xlu0 %4527
      %4529 = vrot.lane.b32.xlu0 %v2414, 88
      %v4530 = vpop.permute.xlu0 %4529
      %v4536 = vsel %vm2792, %v4507, 0
      %v4539 = vsel %vm2792, %v4508, 0
      %v4542 = vsel %vm2792, %v4509, 0
      %v4545 = vsel %vm2792, %v4510, 0
      %4547 = vmatprep.subr.bf16.mxu0 0
      %4548 = vmatpush1.bf16.msra.mxu0 0
      %4549 = vmatprep.subr.bf16.mxu0 0
      %4550 = vmatpush1.bf16.msra.mxu0 0
      %4551 = vmatprep.subr.bf16.mxu0 0
      %4552 = vmatpush1.bf16.msra.mxu0 0
      %4553 = vmatprep.subr.bf16.mxu0 0
      %4554 = vmatpush1.bf16.msra.mxu0 0
      %4555 = vmatprep.subr.bf16.mxu0 0
      %4556 = vmatpush1.bf16.msra.mxu0 %v4530
      %4557 = vmatprep.subr.bf16.mxu0 0
      %4558 = vmatpush1.bf16.msra.mxu0 %v4528
      %4559 = vmatprep.subr.bf16.mxu0 0
      %4560 = vmatpush1.bf16.msra.mxu0 %v4526
      %4561 = vmatprep.subr.bf16.mxu0 0
      %4562 = vmatpush1.bf16.msra.mxu0 %v4524
      %4563 = vmatprep.subr.bf16.mxu0 0
      %4564 = vmatpush2.bf16.msra.mxu0 0
      %4565 = vmatprep.subr.bf16.mxu0 0
      %4566 = vmatpush2.bf16.msra.mxu0 0
      %4567 = vmatprep.subr.bf16.mxu0 0
      %4568 = vmatpush2.bf16.msra.mxu0 0
      %4569 = vmatprep.subr.bf16.mxu0 0
      %4570 = vmatpush2.bf16.msra.mxu0 0
      %4571 = vmatprep.subr.bf16.mxu0 0
      %4572 = vmatpush2.bf16.msra.mxu0 0
      %4573 = vmatprep.subr.bf16.mxu0 0
      %4574 = vmatpush2.bf16.msra.mxu0 0
      %4575 = vmatprep.subr.bf16.mxu0 0
      %4576 = vmatpush2.bf16.msra.mxu0 0
      %4577 = vmatprep.subr.bf16.mxu0 0
      %4578 = vmatpush2.bf16.msra.mxu0 0
      %4579 = vmatprep.mubr.bf16.mxu0 0
      %4580 = vmatmul.mubr.bf16.gmra.mxu0 %v4536
      %v4581 = vpop.f32.mrf.mxu0
      %v4582 = vadd.f32 0.0, %v4581
      %v4583 = vpop.f32.mrf.mxu0
      %v4584 = vpop.f32.mrf.mxu0
      %v4585 = vadd.f32 0.0, %v4584
      %v4586 = vpop.f32.mrf.mxu0
      %4587 = vmatprep.mubr.bf16.mxu0 0
      %4588 = vmatmul.mubr.bf16.gmra.mxu0 %v4539
      %v4589 = vpop.f32.mrf.mxu0
      %v4590 = vadd.f32 0.0, %v4589
      %v4591 = vpop.f32.mrf.mxu0
      %v4592 = vpop.f32.mrf.mxu0
      %v4593 = vadd.f32 0.0, %v4592
      %v4594 = vpop.f32.mrf.mxu0
      %4595 = vmatprep.mubr.bf16.mxu0 0
      %4596 = vmatmul.mubr.bf16.gmra.mxu0 %v4542
      %v4597 = vpop.f32.mrf.mxu0
      %v4598 = vadd.f32 0.0, %v4597
      %v4599 = vpop.f32.mrf.mxu0
      %v4600 = vpop.f32.mrf.mxu0
      %v4601 = vadd.f32 0.0, %v4600
      %v4602 = vpop.f32.mrf.mxu0
      %4603 = vmatprep.mubr.bf16.mxu0 0
      %4604 = vmatmul.mubr.bf16.gmra.mxu0 %v4545
      %v4605 = vpop.f32.mrf.mxu0
      %v4606 = vadd.f32 0.0, %v4605
      %v4607 = vpop.f32.mrf.mxu0
      %v4608 = vpop.f32.mrf.mxu0
      %v4609 = vadd.f32 0.0, %v4608
      %v4610 = vpop.f32.mrf.mxu0
      %4611 = vdwg.mxu0
      %4612 = vrot.lane.b32.xlu0 %v2415, 88
      %v4613 = vpop.permute.xlu0 %4612
      %4614 = vrot.lane.b32.xlu0 %v2416, 88
      %v4615 = vpop.permute.xlu0 %4614
      %4616 = vrot.lane.b32.xlu0 %v2417, 88
      %v4617 = vpop.permute.xlu0 %4616
      %4618 = vrot.lane.b32.xlu0 %v2418, 88
      %v4619 = vpop.permute.xlu0 %4618
      %v4625 = vsel %vm2792, %v4511, 0
      %v4628 = vsel %vm2792, %v4512, 0
      %v4631 = vsel %vm2792, %v4513, 0
      %v4634 = vsel %vm2792, %v4514, 0
      %4636 = vmatprep.subr.bf16.mxu0 0
      %4637 = vmatpush1.bf16.msra.mxu0 0
      %4638 = vmatprep.subr.bf16.mxu0 0
      %4639 = vmatpush1.bf16.msra.mxu0 0
      %4640 = vmatprep.subr.bf16.mxu0 0
      %4641 = vmatpush1.bf16.msra.mxu0 0
      %4642 = vmatprep.subr.bf16.mxu0 0
      %4643 = vmatpush1.bf16.msra.mxu0 0
      %4644 = vmatprep.subr.bf16.mxu0 0
      %4645 = vmatpush1.bf16.msra.mxu0 %v4619
      %4646 = vmatprep.subr.bf16.mxu0 0
      %4647 = vmatpush1.bf16.msra.mxu0 %v4617
      %4648 = vmatprep.subr.bf16.mxu0 0
      %4649 = vmatpush1.bf16.msra.mxu0 %v4615
      %4650 = vmatprep.subr.bf16.mxu0 0
      %4651 = vmatpush1.bf16.msra.mxu0 %v4613
      %4652 = vmatprep.subr.bf16.mxu0 0
      %4653 = vmatpush2.bf16.msra.mxu0 0
      %4654 = vmatprep.subr.bf16.mxu0 0
      %4655 = vmatpush2.bf16.msra.mxu0 0
      %4656 = vmatprep.subr.bf16.mxu0 0
      %4657 = vmatpush2.bf16.msra.mxu0 0
      %4658 = vmatprep.subr.bf16.mxu0 0
      %4659 = vmatpush2.bf16.msra.mxu0 0
      %4660 = vmatprep.subr.bf16.mxu0 0
      %4661 = vmatpush2.bf16.msra.mxu0 0
      %4662 = vmatprep.subr.bf16.mxu0 0
      %4663 = vmatpush2.bf16.msra.mxu0 0
      %4664 = vmatprep.subr.bf16.mxu0 0
      %4665 = vmatpush2.bf16.msra.mxu0 0
      %4666 = vmatprep.subr.bf16.mxu0 0
      %4667 = vmatpush2.bf16.msra.mxu0 0
      %4668 = vmatprep.mubr.bf16.mxu0 0
      %4669 = vmatmul.mubr.bf16.gmra.mxu0 %v4625
      %v4670 = vpop.f32.mrf.mxu0
      %v4671 = vadd.f32 0.0, %v4670
      %v4672 = vpop.f32.mrf.mxu0
      %v4673 = vpop.f32.mrf.mxu0
      %v4674 = vadd.f32 0.0, %v4673
      %v4675 = vpop.f32.mrf.mxu0
      %4676 = vmatprep.mubr.bf16.mxu0 0
      %4677 = vmatmul.mubr.bf16.gmra.mxu0 %v4628
      %v4678 = vpop.f32.mrf.mxu0
      %v4679 = vadd.f32 0.0, %v4678
      %v4680 = vpop.f32.mrf.mxu0
      %v4681 = vpop.f32.mrf.mxu0
      %v4682 = vadd.f32 0.0, %v4681
      %v4683 = vpop.f32.mrf.mxu0
      %4684 = vmatprep.mubr.bf16.mxu0 0
      %4685 = vmatmul.mubr.bf16.gmra.mxu0 %v4631
      %v4686 = vpop.f32.mrf.mxu0
      %v4687 = vadd.f32 0.0, %v4686
      %v4688 = vpop.f32.mrf.mxu0
      %v4689 = vpop.f32.mrf.mxu0
      %v4690 = vadd.f32 0.0, %v4689
      %v4691 = vpop.f32.mrf.mxu0
      %4692 = vmatprep.mubr.bf16.mxu0 0
      %4693 = vmatmul.mubr.bf16.gmra.mxu0 %v4634
      %v4694 = vpop.f32.mrf.mxu0
      %v4695 = vadd.f32 0.0, %v4694
      %v4696 = vpop.f32.mrf.mxu0
      %v4697 = vpop.f32.mrf.mxu0
      %v4698 = vadd.f32 0.0, %v4697
      %v4699 = vpop.f32.mrf.mxu0
      %4700 = vdwg.mxu0
      %4701 = vrot.lane.b32.xlu0 %v2419, 88
      %v4702 = vpop.permute.xlu0 %4701
      %4703 = vrot.lane.b32.xlu0 %v2420, 88
      %v4704 = vpop.permute.xlu0 %4703
      %4705 = vrot.lane.b32.xlu0 %v2421, 88
      %v4706 = vpop.permute.xlu0 %4705
      %4707 = vrot.lane.b32.xlu0 %v2422, 88
      %v4708 = vpop.permute.xlu0 %4707
      %v4714 = vsel %vm2792, %v4515, 0
      %v4717 = vsel %vm2792, %v4516, 0
      %v4720 = vsel %vm2792, %v4517, 0
      %v4723 = vsel %vm2792, %v4518, 0
      %4725 = vmatprep.subr.bf16.mxu0 0
      %4726 = vmatpush1.bf16.msra.mxu0 0
      %4727 = vmatprep.subr.bf16.mxu0 0
      %4728 = vmatpush1.bf16.msra.mxu0 0
      %4729 = vmatprep.subr.bf16.mxu0 0
      %4730 = vmatpush1.bf16.msra.mxu0 0
      %4731 = vmatprep.subr.bf16.mxu0 0
      %4732 = vmatpush1.bf16.msra.mxu0 0
      %4733 = vmatprep.subr.bf16.mxu0 0
      %4734 = vmatpush1.bf16.msra.mxu0 %v4708
      %4735 = vmatprep.subr.bf16.mxu0 0
      %4736 = vmatpush1.bf16.msra.mxu0 %v4706
      %4737 = vmatprep.subr.bf16.mxu0 0
      %4738 = vmatpush1.bf16.msra.mxu0 %v4704
      %4739 = vmatprep.subr.bf16.mxu0 0
      %4740 = vmatpush1.bf16.msra.mxu0 %v4702
      %4741 = vmatprep.subr.bf16.mxu0 0
      %4742 = vmatpush2.bf16.msra.mxu0 0
      %4743 = vmatprep.subr.bf16.mxu0 0
      %4744 = vmatpush2.bf16.msra.mxu0 0
      %4745 = vmatprep.subr.bf16.mxu0 0
      %4746 = vmatpush2.bf16.msra.mxu0 0
      %4747 = vmatprep.subr.bf16.mxu0 0
      %4748 = vmatpush2.bf16.msra.mxu0 0
      %4749 = vmatprep.subr.bf16.mxu0 0
      %4750 = vmatpush2.bf16.msra.mxu0 0
      %4751 = vmatprep.subr.bf16.mxu0 0
      %4752 = vmatpush2.bf16.msra.mxu0 0
      %4753 = vmatprep.subr.bf16.mxu0 0
      %4754 = vmatpush2.bf16.msra.mxu0 0
      %4755 = vmatprep.subr.bf16.mxu0 0
      %4756 = vmatpush2.bf16.msra.mxu0 0
      %4757 = vmatprep.mubr.bf16.mxu0 0
      %4758 = vmatmul.mubr.bf16.gmra.mxu0 %v4714
      %v4759 = vpop.f32.mrf.mxu0
      %v4760 = vadd.f32 0.0, %v4759
      %v4761 = vpop.f32.mrf.mxu0
      %v4762 = vpop.f32.mrf.mxu0
      %v4763 = vadd.f32 0.0, %v4762
      %v4764 = vpop.f32.mrf.mxu0
      %4765 = vmatprep.mubr.bf16.mxu0 0
      %4766 = vmatmul.mubr.bf16.gmra.mxu0 %v4717
      %v4767 = vpop.f32.mrf.mxu0
      %v4768 = vadd.f32 0.0, %v4767
      %v4769 = vpop.f32.mrf.mxu0
      %v4770 = vpop.f32.mrf.mxu0
      %v4771 = vadd.f32 0.0, %v4770
      %v4772 = vpop.f32.mrf.mxu0
      %4773 = vmatprep.mubr.bf16.mxu0 0
      %4774 = vmatmul.mubr.bf16.gmra.mxu0 %v4720
      %v4775 = vpop.f32.mrf.mxu0
      %v4776 = vadd.f32 0.0, %v4775
      %v4777 = vpop.f32.mrf.mxu0
      %v4778 = vpop.f32.mrf.mxu0
      %v4779 = vadd.f32 0.0, %v4778
      %v4780 = vpop.f32.mrf.mxu0
      %4781 = vmatprep.mubr.bf16.mxu0 0
      %4782 = vmatmul.mubr.bf16.gmra.mxu0 %v4723
      %v4783 = vpop.f32.mrf.mxu0
      %v4784 = vadd.f32 0.0, %v4783
      %v4785 = vpop.f32.mrf.mxu0
      %v4786 = vpop.f32.mrf.mxu0
      %v4787 = vadd.f32 0.0, %v4786
      %v4788 = vpop.f32.mrf.mxu0
      %4789 = vdwg.mxu0
      %4790 = vrot.lane.b32.xlu0 %v2423, 88
      %v4791 = vpop.permute.xlu0 %4790
      %4792 = vrot.lane.b32.xlu0 %v2424, 88
      %v4793 = vpop.permute.xlu0 %4792
      %4794 = vrot.lane.b32.xlu0 %v2425, 88
      %v4795 = vpop.permute.xlu0 %4794
      %4796 = vrot.lane.b32.xlu0 %v2426, 88
      %v4797 = vpop.permute.xlu0 %4796
      %v4803 = vsel %vm2792, %v4519, 0
      %v4806 = vsel %vm2792, %v4520, 0
      %v4809 = vsel %vm2792, %v4521, 0
      %v4812 = vsel %vm2792, %v4522, 0
      %4814 = vmatprep.subr.bf16.mxu0 0
      %4815 = vmatpush1.bf16.msra.mxu0 0
      %4816 = vmatprep.subr.bf16.mxu0 0
      %4817 = vmatpush1.bf16.msra.mxu0 0
      %4818 = vmatprep.subr.bf16.mxu0 0
      %4819 = vmatpush1.bf16.msra.mxu0 0
      %4820 = vmatprep.subr.bf16.mxu0 0
      %4821 = vmatpush1.bf16.msra.mxu0 0
      %4822 = vmatprep.subr.bf16.mxu0 0
      %4823 = vmatpush1.bf16.msra.mxu0 %v4797
      %4824 = vmatprep.subr.bf16.mxu0 0
      %4825 = vmatpush1.bf16.msra.mxu0 %v4795
      %4826 = vmatprep.subr.bf16.mxu0 0
      %4827 = vmatpush1.bf16.msra.mxu0 %v4793
      %4828 = vmatprep.subr.bf16.mxu0 0
      %4829 = vmatpush1.bf16.msra.mxu0 %v4791
      %4830 = vmatprep.subr.bf16.mxu0 0
      %4831 = vmatpush2.bf16.msra.mxu0 0
      %4832 = vmatprep.subr.bf16.mxu0 0
      %4833 = vmatpush2.bf16.msra.mxu0 0
      %4834 = vmatprep.subr.bf16.mxu0 0
      %4835 = vmatpush2.bf16.msra.mxu0 0
      %4836 = vmatprep.subr.bf16.mxu0 0
      %4837 = vmatpush2.bf16.msra.mxu0 0
      %4838 = vmatprep.subr.bf16.mxu0 0
      %4839 = vmatpush2.bf16.msra.mxu0 0
      %4840 = vmatprep.subr.bf16.mxu0 0
      %4841 = vmatpush2.bf16.msra.mxu0 0
      %4842 = vmatprep.subr.bf16.mxu0 0
      %4843 = vmatpush2.bf16.msra.mxu0 0
      %4844 = vmatprep.subr.bf16.mxu0 0
      %4845 = vmatpush2.bf16.msra.mxu0 0
      %4846 = vmatprep.mubr.bf16.mxu0 0
      %4847 = vmatmul.mubr.bf16.gmra.mxu0 %v4803
      %v4848 = vpop.f32.mrf.mxu0
      %v4849 = vadd.f32 0.0, %v4848
      %v4850 = vpop.f32.mrf.mxu0
      %v4851 = vpop.f32.mrf.mxu0
      %v4852 = vadd.f32 0.0, %v4851
      %v4853 = vpop.f32.mrf.mxu0
      %4854 = vmatprep.mubr.bf16.mxu0 0
      %4855 = vmatmul.mubr.bf16.gmra.mxu0 %v4806
      %v4856 = vpop.f32.mrf.mxu0
      %v4857 = vadd.f32 0.0, %v4856
      %v4858 = vpop.f32.mrf.mxu0
      %v4859 = vpop.f32.mrf.mxu0
      %v4860 = vadd.f32 0.0, %v4859
      %v4861 = vpop.f32.mrf.mxu0
      %4862 = vmatprep.mubr.bf16.mxu0 0
      %4863 = vmatmul.mubr.bf16.gmra.mxu0 %v4809
      %v4864 = vpop.f32.mrf.mxu0
      %v4865 = vadd.f32 0.0, %v4864
      %v4866 = vpop.f32.mrf.mxu0
      %v4867 = vpop.f32.mrf.mxu0
      %v4868 = vadd.f32 0.0, %v4867
      %v4869 = vpop.f32.mrf.mxu0
      %4870 = vmatprep.mubr.bf16.mxu0 0
      %4871 = vmatmul.mubr.bf16.gmra.mxu0 %v4812
      %v4872 = vpop.f32.mrf.mxu0
      %v4873 = vadd.f32 0.0, %v4872
      %v4874 = vpop.f32.mrf.mxu0
      %v4875 = vpop.f32.mrf.mxu0
      %v4876 = vadd.f32 0.0, %v4875
      %v4877 = vpop.f32.mrf.mxu0
      %4878 = vdwg.mxu0
      %v4879 = vpack.c.bf16 %v4585, %v4582
      %v4880 = vpack.c.bf16 %v4593, %v4590
      %v4881 = vpack.c.bf16 %v4601, %v4598
      %v4882 = vpack.c.bf16 %v4609, %v4606
      %v4883 = vpack.c.bf16 %v4674, %v4671
      %v4884 = vpack.c.bf16 %v4682, %v4679
      %v4885 = vpack.c.bf16 %v4690, %v4687
      %v4886 = vpack.c.bf16 %v4698, %v4695
      %v4887 = vpack.c.bf16 %v4763, %v4760
      %v4888 = vpack.c.bf16 %v4771, %v4768
      %v4889 = vpack.c.bf16 %v4779, %v4776
      %v4890 = vpack.c.bf16 %v4787, %v4784
      %v4891 = vpack.c.bf16 %v4852, %v4849
      %v4892 = vpack.c.bf16 %v4860, %v4857
      %v4893 = vpack.c.bf16 %v4868, %v4865
      %v4894 = vpack.c.bf16 %v4876, %v4873
      %v4911 = vunpack.c.l.b16 %v4879
      %v4912 = vunpack.c.h.b16 %v4879
      %v4913 = vunpack.c.l.b16 %v4880
      %v4914 = vunpack.c.h.b16 %v4880
      %v4915 = vunpack.c.l.b16 %v4881
      %v4916 = vunpack.c.h.b16 %v4881
      %v4917 = vunpack.c.l.b16 %v4882
      %v4918 = vunpack.c.h.b16 %v4882
      %v4919 = vunpack.c.l.b16 %v4883
      %v4920 = vunpack.c.h.b16 %v4883
      %v4921 = vunpack.c.l.b16 %v4884
      %v4922 = vunpack.c.h.b16 %v4884
      %v4923 = vunpack.c.l.b16 %v4885
      %v4924 = vunpack.c.h.b16 %v4885
      %v4925 = vunpack.c.l.b16 %v4886
      %v4926 = vunpack.c.h.b16 %v4886
      %v4927 = vunpack.c.l.b16 %v4887
      %v4928 = vunpack.c.h.b16 %v4887
      %v4929 = vunpack.c.l.b16 %v4888
      %v4930 = vunpack.c.h.b16 %v4888
      %v4931 = vunpack.c.l.b16 %v4889
      %v4932 = vunpack.c.h.b16 %v4889
      %v4933 = vunpack.c.l.b16 %v4890
      %v4934 = vunpack.c.h.b16 %v4890
      %v4935 = vunpack.c.l.b16 %v4891
      %v4936 = vunpack.c.h.b16 %v4891
      %v4937 = vunpack.c.l.b16 %v4892
      %v4938 = vunpack.c.h.b16 %v4892
      %v4939 = vunpack.c.l.b16 %v4893
      %v4940 = vunpack.c.h.b16 %v4893
      %v4941 = vunpack.c.l.b16 %v4894
      %v4942 = vunpack.c.h.b16 %v4894
      %v4943 = vpack.c.b16 %v4911, %v4911
      %v4944 = vpack.c.b16 %v4912, %v4912
      %v4945 = vpack.c.b16 %v4913, %v4913
      %v4946 = vpack.c.b16 %v4914, %v4914
      %v4947 = vpack.c.b16 %v4915, %v4915
      %v4948 = vpack.c.b16 %v4916, %v4916
      %v4949 = vpack.c.b16 %v4917, %v4917
      %v4950 = vpack.c.b16 %v4918, %v4918
      %v4951 = vpack.c.b16 %v4919, %v4919
      %v4952 = vpack.c.b16 %v4920, %v4920
      %v4953 = vpack.c.b16 %v4921, %v4921
      %v4954 = vpack.c.b16 %v4922, %v4922
      %v4955 = vpack.c.b16 %v4923, %v4923
      %v4956 = vpack.c.b16 %v4924, %v4924
      %v4957 = vpack.c.b16 %v4925, %v4925
      %v4958 = vpack.c.b16 %v4926, %v4926
      %v4959 = vpack.c.b16 %v4927, %v4927
      %v4960 = vpack.c.b16 %v4928, %v4928
      %v4961 = vpack.c.b16 %v4929, %v4929
      %v4962 = vpack.c.b16 %v4930, %v4930
      %v4963 = vpack.c.b16 %v4931, %v4931
      %v4964 = vpack.c.b16 %v4932, %v4932
      %v4965 = vpack.c.b16 %v4933, %v4933
      %v4966 = vpack.c.b16 %v4934, %v4934
      %v4967 = vpack.c.b16 %v4935, %v4935
      %v4968 = vpack.c.b16 %v4936, %v4936
      %v4969 = vpack.c.b16 %v4937, %v4937
      %v4970 = vpack.c.b16 %v4938, %v4938
      %v4971 = vpack.c.b16 %v4939, %v4939
      %v4972 = vpack.c.b16 %v4940, %v4940
      %v4973 = vpack.c.b16 %v4941, %v4941
      %v4974 = vpack.c.b16 %v4942, %v4942
      %4975 = vrot.lane.b32.xlu0 %v4943, 8
      %v4976 = vpop.permute.xlu0 %4975
      %4977 = vrot.lane.b32.xlu0 %v4944, 8
      %v4978 = vpop.permute.xlu0 %4977
      %4979 = vrot.lane.b32.xlu0 %v4945, 8
      %v4980 = vpop.permute.xlu0 %4979
      %4981 = vrot.lane.b32.xlu0 %v4946, 8
      %v4982 = vpop.permute.xlu0 %4981
      %4983 = vrot.lane.b32.xlu0 %v4947, 8
      %v4984 = vpop.permute.xlu0 %4983
      %4985 = vrot.lane.b32.xlu0 %v4948, 8
      %v4986 = vpop.permute.xlu0 %4985
      %4987 = vrot.lane.b32.xlu0 %v4949, 8
      %v4988 = vpop.permute.xlu0 %4987
      %4989 = vrot.lane.b32.xlu0 %v4950, 8
      %v4990 = vpop.permute.xlu0 %4989
      %4991 = vrot.lane.b32.xlu0 %v4951, 8
      %v4992 = vpop.permute.xlu0 %4991
      %4993 = vrot.lane.b32.xlu0 %v4952, 8
      %v4994 = vpop.permute.xlu0 %4993
      %4995 = vrot.lane.b32.xlu0 %v4953, 8
      %v4996 = vpop.permute.xlu0 %4995
      %4997 = vrot.lane.b32.xlu0 %v4954, 8
      %v4998 = vpop.permute.xlu0 %4997
      %4999 = vrot.lane.b32.xlu0 %v4955, 8
      %v5000 = vpop.permute.xlu0 %4999
      %5001 = vrot.lane.b32.xlu0 %v4956, 8
      %v5002 = vpop.permute.xlu0 %5001
      %5003 = vrot.lane.b32.xlu0 %v4957, 8
      %v5004 = vpop.permute.xlu0 %5003
      %5005 = vrot.lane.b32.xlu0 %v4958, 8
      %v5006 = vpop.permute.xlu0 %5005
      %5007 = vrot.lane.b32.xlu0 %v4959, 8
      %v5008 = vpop.permute.xlu0 %5007
      %5009 = vrot.lane.b32.xlu0 %v4960, 8
      %v5010 = vpop.permute.xlu0 %5009
      %5011 = vrot.lane.b32.xlu0 %v4961, 8
      %v5012 = vpop.permute.xlu0 %5011
      %5013 = vrot.lane.b32.xlu0 %v4962, 8
      %v5014 = vpop.permute.xlu0 %5013
      %5015 = vrot.lane.b32.xlu0 %v4963, 8
      %v5016 = vpop.permute.xlu0 %5015
      %5017 = vrot.lane.b32.xlu0 %v4964, 8
      %v5018 = vpop.permute.xlu0 %5017
      %5019 = vrot.lane.b32.xlu0 %v4965, 8
      %v5020 = vpop.permute.xlu0 %5019
      %5021 = vrot.lane.b32.xlu0 %v4966, 8
      %v5022 = vpop.permute.xlu0 %5021
      %5023 = vrot.lane.b32.xlu0 %v4967, 8
      %v5024 = vpop.permute.xlu0 %5023
      %5025 = vrot.lane.b32.xlu0 %v4968, 8
      %v5026 = vpop.permute.xlu0 %5025
      %5027 = vrot.lane.b32.xlu0 %v4969, 8
      %v5028 = vpop.permute.xlu0 %5027
      %5029 = vrot.lane.b32.xlu0 %v4970, 8
      %v5030 = vpop.permute.xlu0 %5029
      %5031 = vrot.lane.b32.xlu0 %v4971, 8
      %v5032 = vpop.permute.xlu0 %5031
      %5033 = vrot.lane.b32.xlu0 %v4972, 8
      %v5034 = vpop.permute.xlu0 %5033
      %5035 = vrot.lane.b32.xlu0 %v4973, 8
      %v5036 = vpop.permute.xlu0 %5035
      %5037 = vrot.lane.b32.xlu0 %v4974, 8
      %v5038 = vpop.permute.xlu0 %5037
      %vm5071 = vcmask 126016
      %5072 = vst.msk [vmem:[#allocation4] sm:$0xf] %vm5071, %v4976
      %5073 = vst.msk [vmem:[#allocation4 + $0x4] sm:$0xf] %vm5071, %v4978
      %5074 = vst.msk [vmem:[#allocation4 + $0x8] sm:$0xf] %vm5071, %v4980
      %5075 = vst.msk [vmem:[#allocation4 + $0xc] sm:$0xf] %vm5071, %v4982
      %5076 = vst.msk [vmem:[#allocation4 + $0x10] sm:$0xf] %vm5071, %v4984
      %5077 = vst.msk [vmem:[#allocation4 + $0x14] sm:$0xf] %vm5071, %v4986
      %5078 = vst.msk [vmem:[#allocation4 + $0x18] sm:$0xf] %vm5071, %v4988
      %5079 = vst.msk [vmem:[#allocation4 + $0x1c] sm:$0xf] %vm5071, %v4990
      %5080 = vst.msk [vmem:[#allocation4 + $0x20] sm:$0xf] %vm5071, %v4992
      %5081 = vst.msk [vmem:[#allocation4 + $0x24] sm:$0xf] %vm5071, %v4994
      %5082 = vst.msk [vmem:[#allocation4 + $0x28] sm:$0xf] %vm5071, %v4996
      %5083 = vst.msk [vmem:[#allocation4 + $0x2c] sm:$0xf] %vm5071, %v4998
      %5084 = vst.msk [vmem:[#allocation4 + $0x30] sm:$0xf] %vm5071, %v5000
      %5085 = vst.msk [vmem:[#allocation4 + $0x34] sm:$0xf] %vm5071, %v5002
      %5086 = vst.msk [vmem:[#allocation4 + $0x38] sm:$0xf] %vm5071, %v5004
      %5087 = vst.msk [vmem:[#allocation4 + $0x3c] sm:$0xf] %vm5071, %v5006
      %5088 = vst.msk [vmem:[#allocation4 + $0x40] sm:$0xf] %vm5071, %v5008
      %5089 = vst.msk [vmem:[#allocation4 + $0x44] sm:$0xf] %vm5071, %v5010
      %5090 = vst.msk [vmem:[#allocation4 + $0x48] sm:$0xf] %vm5071, %v5012
      %5091 = vst.msk [vmem:[#allocation4 + $0x4c] sm:$0xf] %vm5071, %v5014
      %5092 = vst.msk [vmem:[#allocation4 + $0x50] sm:$0xf] %vm5071, %v5016
      %5093 = vst.msk [vmem:[#allocation4 + $0x54] sm:$0xf] %vm5071, %v5018
      %5094 = vst.msk [vmem:[#allocation4 + $0x58] sm:$0xf] %vm5071, %v5020
      %5095 = vst.msk [vmem:[#allocation4 + $0x5c] sm:$0xf] %vm5071, %v5022
      %5096 = vst.msk [vmem:[#allocation4 + $0x60] sm:$0xf] %vm5071, %v5024
      %5097 = vst.msk [vmem:[#allocation4 + $0x64] sm:$0xf] %vm5071, %v5026
      %5098 = vst.msk [vmem:[#allocation4 + $0x68] sm:$0xf] %vm5071, %v5028
      %5099 = vst.msk [vmem:[#allocation4 + $0x6c] sm:$0xf] %vm5071, %v5030
      %5100 = vst.msk [vmem:[#allocation4 + $0x70] sm:$0xf] %vm5071, %v5032
      %5101 = vst.msk [vmem:[#allocation4 + $0x74] sm:$0xf] %vm5071, %v5034
      %5102 = vst.msk [vmem:[#allocation4 + $0x78] sm:$0xf] %vm5071, %v5036
      %5103 = vst.msk [vmem:[#allocation4 + $0x7c] sm:$0xf] %vm5071, %v5038
      %s5104 = scalar_lea.vmem %s536, 128
      %v5105 = vld [vmem:[%s5104] sm:$0xff]
      %v5106 = vld [vmem:[%s5104 + $0x8] sm:$0xff]
      %v5107 = vld [vmem:[%s5104 + $0x10] sm:$0xff]
      %v5108 = vld [vmem:[%s5104 + $0x18] sm:$0xff]
      %v5109 = vld [vmem:[%s5104 + $0x20] sm:$0xff]
      %v5110 = vld [vmem:[%s5104 + $0x28] sm:$0xff]
      %v5111 = vld [vmem:[%s5104 + $0x30] sm:$0xff]
      %v5112 = vld [vmem:[%s5104 + $0x38] sm:$0xff]
      %5113 = vrot.lane.b32.xlu0 %v2062, 112
      %v5114 = vpop.permute.xlu0 %5113
      %5115 = vrot.lane.b32.xlu0 %v2063, 112
      %v5116 = vpop.permute.xlu0 %5115
      %5117 = vrot.lane.b32.xlu0 %v2064, 112
      %v5118 = vpop.permute.xlu0 %5117
      %5119 = vrot.lane.b32.xlu0 %v2065, 112
      %v5120 = vpop.permute.xlu0 %5119
      %5121 = vrot.lane.b32.xlu0 %v2355, 112
      %v5122 = vpop.permute.xlu0 %5121
      %5123 = vrot.lane.b32.xlu0 %v2356, 112
      %v5124 = vpop.permute.xlu0 %5123
      %5125 = vrot.lane.b32.xlu0 %v2357, 112
      %v5126 = vpop.permute.xlu0 %5125
      %5127 = vrot.lane.b32.xlu0 %v2358, 112
      %v5128 = vpop.permute.xlu0 %5127
      %v5130 = vsel %vm2435, %v5114, 0
      %v5133 = vsel %vm2435, %v5116, 0
      %v5136 = vsel %vm2435, %v5118, 0
      %v5139 = vsel %vm2435, %v5120, 0
      %v5142 = vsel %vm2435, %v5122, 0
      %v5145 = vsel %vm2435, %v5124, 0
      %v5148 = vsel %vm2435, %v5126, 0
      %v5151 = vsel %vm2435, %v5128, 0
      %5153 = vmatprep.subr.bf16.mxu0 0
      %5154 = vmatpush1.bf16.xpose.msra.mxu0 0
      %5155 = vmatprep.subr.bf16.mxu0 0
      %5156 = vmatpush1.bf16.xpose.msra.mxu0 0
      %5157 = vmatprep.subr.bf16.mxu0 0
      %5158 = vmatpush1.bf16.xpose.msra.mxu0 0
      %5159 = vmatprep.subr.bf16.mxu0 0
      %5160 = vmatpush1.bf16.xpose.msra.mxu0 0
      %5161 = vmatprep.subr.bf16.mxu0 0
      %5162 = vmatpush1.bf16.xpose.msra.mxu0 %v5151
      %5163 = vmatprep.subr.bf16.mxu0 0
      %5164 = vmatpush1.bf16.xpose.msra.mxu0 %v5148
      %5165 = vmatprep.subr.bf16.mxu0 0
      %5166 = vmatpush1.bf16.xpose.msra.mxu0 %v5145
      %5167 = vmatprep.subr.bf16.mxu0 0
      %5168 = vmatpush1.bf16.xpose.msra.mxu0 %v5142
      %5169 = vmatprep.subr.bf16.mxu0 0
      %5170 = vmatpush2.bf16.xpose.msra.mxu0 0
      %5171 = vmatprep.subr.bf16.mxu0 0
      %5172 = vmatpush2.bf16.xpose.msra.mxu0 0
      %5173 = vmatprep.subr.bf16.mxu0 0
      %5174 = vmatpush2.bf16.xpose.msra.mxu0 0
      %5175 = vmatprep.subr.bf16.mxu0 0
      %5176 = vmatpush2.bf16.xpose.msra.mxu0 0
      %5177 = vmatprep.subr.bf16.mxu0 0
      %5178 = vmatpush2.bf16.xpose.msra.mxu0 0
      %5179 = vmatprep.subr.bf16.mxu0 0
      %5180 = vmatpush2.bf16.xpose.msra.mxu0 0
      %5181 = vmatprep.subr.bf16.mxu0 0
      %5182 = vmatpush2.bf16.xpose.msra.mxu0 0
      %5183 = vmatprep.subr.bf16.mxu0 0
      %5184 = vmatpush2.bf16.xpose.msra.mxu0 0
      %5185 = vmatprep.mubr.bf16.mxu0 0
      %5186 = vmatmul.mubr.bf16.gmra.mxu0 %v5130
      %v5187 = vpop.f32.mrf.mxu0
      %v5188 = vadd.f32 %v5105, %v5187
      %v5189 = vpop.f32.mrf.mxu0
      %v5190 = vpop.f32.mrf.mxu0
      %v5191 = vadd.f32 %v5106, %v5190
      %v5192 = vpop.f32.mrf.mxu0
      %5193 = vmatprep.mubr.bf16.mxu0 0
      %5194 = vmatmul.mubr.bf16.gmra.mxu0 %v5133
      %v5195 = vpop.f32.mrf.mxu0
      %v5196 = vadd.f32 %v5107, %v5195
      %v5197 = vpop.f32.mrf.mxu0
      %v5198 = vpop.f32.mrf.mxu0
      %v5199 = vadd.f32 %v5108, %v5198
      %v5200 = vpop.f32.mrf.mxu0
      %5201 = vmatprep.mubr.bf16.mxu0 0
      %5202 = vmatmul.mubr.bf16.gmra.mxu0 %v5136
      %v5203 = vpop.f32.mrf.mxu0
      %v5204 = vadd.f32 %v5109, %v5203
      %v5205 = vpop.f32.mrf.mxu0
      %v5206 = vpop.f32.mrf.mxu0
      %v5207 = vadd.f32 %v5110, %v5206
      %v5208 = vpop.f32.mrf.mxu0
      %5209 = vmatprep.mubr.bf16.mxu0 0
      %5210 = vmatmul.mubr.bf16.gmra.mxu0 %v5139
      %v5211 = vpop.f32.mrf.mxu0
      %v5212 = vadd.f32 %v5111, %v5211
      %v5213 = vpop.f32.mrf.mxu0
      %v5214 = vpop.f32.mrf.mxu0
      %v5215 = vadd.f32 %v5112, %v5214
      %v5216 = vpop.f32.mrf.mxu0
      %5217 = vdwg.mxu0
      %5218 = vrot.lane.b32.xlu0 %v2066, 112
      %v5219 = vpop.permute.xlu0 %5218
      %5220 = vrot.lane.b32.xlu0 %v2067, 112
      %v5221 = vpop.permute.xlu0 %5220
      %5222 = vrot.lane.b32.xlu0 %v2068, 112
      %v5223 = vpop.permute.xlu0 %5222
      %5224 = vrot.lane.b32.xlu0 %v2069, 112
      %v5225 = vpop.permute.xlu0 %5224
      %5226 = vrot.lane.b32.xlu0 %v2359, 112
      %v5227 = vpop.permute.xlu0 %5226
      %5228 = vrot.lane.b32.xlu0 %v2360, 112
      %v5229 = vpop.permute.xlu0 %5228
      %5230 = vrot.lane.b32.xlu0 %v2361, 112
      %v5231 = vpop.permute.xlu0 %5230
      %5232 = vrot.lane.b32.xlu0 %v2362, 112
      %v5233 = vpop.permute.xlu0 %5232
      %v5235 = vsel %vm2435, %v5219, 0
      %v5238 = vsel %vm2435, %v5221, 0
      %v5241 = vsel %vm2435, %v5223, 0
      %v5244 = vsel %vm2435, %v5225, 0
      %v5247 = vsel %vm2435, %v5227, 0
      %v5250 = vsel %vm2435, %v5229, 0
      %v5253 = vsel %vm2435, %v5231, 0
      %v5256 = vsel %vm2435, %v5233, 0
      %5258 = vmatprep.subr.bf16.mxu0 0
      %5259 = vmatpush1.bf16.xpose.msra.mxu0 0
      %5260 = vmatprep.subr.bf16.mxu0 0
      %5261 = vmatpush1.bf16.xpose.msra.mxu0 0
      %5262 = vmatprep.subr.bf16.mxu0 0
      %5263 = vmatpush1.bf16.xpose.msra.mxu0 0
      %5264 = vmatprep.subr.bf16.mxu0 0
      %5265 = vmatpush1.bf16.xpose.msra.mxu0 0
      %5266 = vmatprep.subr.bf16.mxu0 0
      %5267 = vmatpush1.bf16.xpose.msra.mxu0 %v5256
      %5268 = vmatprep.subr.bf16.mxu0 0
      %5269 = vmatpush1.bf16.xpose.msra.mxu0 %v5253
      %5270 = vmatprep.subr.bf16.mxu0 0
      %5271 = vmatpush1.bf16.xpose.msra.mxu0 %v5250
      %5272 = vmatprep.subr.bf16.mxu0 0
      %5273 = vmatpush1.bf16.xpose.msra.mxu0 %v5247
      %5274 = vmatprep.subr.bf16.mxu0 0
      %5275 = vmatpush2.bf16.xpose.msra.mxu0 0
      %5276 = vmatprep.subr.bf16.mxu0 0
      %5277 = vmatpush2.bf16.xpose.msra.mxu0 0
      %5278 = vmatprep.subr.bf16.mxu0 0
      %5279 = vmatpush2.bf16.xpose.msra.mxu0 0
      %5280 = vmatprep.subr.bf16.mxu0 0
      %5281 = vmatpush2.bf16.xpose.msra.mxu0 0
      %5282 = vmatprep.subr.bf16.mxu0 0
      %5283 = vmatpush2.bf16.xpose.msra.mxu0 0
      %5284 = vmatprep.subr.bf16.mxu0 0
      %5285 = vmatpush2.bf16.xpose.msra.mxu0 0
      %5286 = vmatprep.subr.bf16.mxu0 0
      %5287 = vmatpush2.bf16.xpose.msra.mxu0 0
      %5288 = vmatprep.subr.bf16.mxu0 0
      %5289 = vmatpush2.bf16.xpose.msra.mxu0 0
      %5290 = vmatprep.mubr.bf16.mxu0 0
      %5291 = vmatmul.mubr.bf16.gmra.mxu0 %v5235
      %v5292 = vpop.f32.mrf.mxu0
      %v5293 = vadd.f32 %v5105, %v5292
      %v5294 = vpop.f32.mrf.mxu0
      %v5295 = vpop.f32.mrf.mxu0
      %v5296 = vadd.f32 %v5106, %v5295
      %v5297 = vpop.f32.mrf.mxu0
      %5298 = vmatprep.mubr.bf16.mxu0 0
      %5299 = vmatmul.mubr.bf16.gmra.mxu0 %v5238
      %v5300 = vpop.f32.mrf.mxu0
      %v5301 = vadd.f32 %v5107, %v5300
      %v5302 = vpop.f32.mrf.mxu0
      %v5303 = vpop.f32.mrf.mxu0
      %v5304 = vadd.f32 %v5108, %v5303
      %v5305 = vpop.f32.mrf.mxu0
      %5306 = vmatprep.mubr.bf16.mxu0 0
      %5307 = vmatmul.mubr.bf16.gmra.mxu0 %v5241
      %v5308 = vpop.f32.mrf.mxu0
      %v5309 = vadd.f32 %v5109, %v5308
      %v5310 = vpop.f32.mrf.mxu0
      %v5311 = vpop.f32.mrf.mxu0
      %v5312 = vadd.f32 %v5110, %v5311
      %v5313 = vpop.f32.mrf.mxu0
      %5314 = vmatprep.mubr.bf16.mxu0 0
      %5315 = vmatmul.mubr.bf16.gmra.mxu0 %v5244
      %v5316 = vpop.f32.mrf.mxu0
      %v5317 = vadd.f32 %v5111, %v5316
      %v5318 = vpop.f32.mrf.mxu0
      %v5319 = vpop.f32.mrf.mxu0
      %v5320 = vadd.f32 %v5112, %v5319
      %v5321 = vpop.f32.mrf.mxu0
      %5322 = vdwg.mxu0
      %5323 = vrot.lane.b32.xlu0 %v2070, 112
      %v5324 = vpop.permute.xlu0 %5323
      %5325 = vrot.lane.b32.xlu0 %v2071, 112
      %v5326 = vpop.permute.xlu0 %5325
      %5327 = vrot.lane.b32.xlu0 %v2072, 112
      %v5328 = vpop.permute.xlu0 %5327
      %5329 = vrot.lane.b32.xlu0 %v2073, 112
      %v5330 = vpop.permute.xlu0 %5329
      %5331 = vrot.lane.b32.xlu0 %v2363, 112
      %v5332 = vpop.permute.xlu0 %5331
      %5333 = vrot.lane.b32.xlu0 %v2364, 112
      %v5334 = vpop.permute.xlu0 %5333
      %5335 = vrot.lane.b32.xlu0 %v2365, 112
      %v5336 = vpop.permute.xlu0 %5335
      %5337 = vrot.lane.b32.xlu0 %v2366, 112
      %v5338 = vpop.permute.xlu0 %5337
      %v5340 = vsel %vm2435, %v5324, 0
      %v5343 = vsel %vm2435, %v5326, 0
      %v5346 = vsel %vm2435, %v5328, 0
      %v5349 = vsel %vm2435, %v5330, 0
      %v5352 = vsel %vm2435, %v5332, 0
      %v5355 = vsel %vm2435, %v5334, 0
      %v5358 = vsel %vm2435, %v5336, 0
      %v5361 = vsel %vm2435, %v5338, 0
      %5363 = vmatprep.subr.bf16.mxu0 0
      %5364 = vmatpush1.bf16.xpose.msra.mxu0 0
      %5365 = vmatprep.subr.bf16.mxu0 0
      %5366 = vmatpush1.bf16.xpose.msra.mxu0 0
      %5367 = vmatprep.subr.bf16.mxu0 0
      %5368 = vmatpush1.bf16.xpose.msra.mxu0 0
      %5369 = vmatprep.subr.bf16.mxu0 0
      %5370 = vmatpush1.bf16.xpose.msra.mxu0 0
      %5371 = vmatprep.subr.bf16.mxu0 0
      %5372 = vmatpush1.bf16.xpose.msra.mxu0 %v5361
      %5373 = vmatprep.subr.bf16.mxu0 0
      %5374 = vmatpush1.bf16.xpose.msra.mxu0 %v5358
      %5375 = vmatprep.subr.bf16.mxu0 0
      %5376 = vmatpush1.bf16.xpose.msra.mxu0 %v5355
      %5377 = vmatprep.subr.bf16.mxu0 0
      %5378 = vmatpush1.bf16.xpose.msra.mxu0 %v5352
      %5379 = vmatprep.subr.bf16.mxu0 0
      %5380 = vmatpush2.bf16.xpose.msra.mxu0 0
      %5381 = vmatprep.subr.bf16.mxu0 0
      %5382 = vmatpush2.bf16.xpose.msra.mxu0 0
      %5383 = vmatprep.subr.bf16.mxu0 0
      %5384 = vmatpush2.bf16.xpose.msra.mxu0 0
      %5385 = vmatprep.subr.bf16.mxu0 0
      %5386 = vmatpush2.bf16.xpose.msra.mxu0 0
      %5387 = vmatprep.subr.bf16.mxu0 0
      %5388 = vmatpush2.bf16.xpose.msra.mxu0 0
      %5389 = vmatprep.subr.bf16.mxu0 0
      %5390 = vmatpush2.bf16.xpose.msra.mxu0 0
      %5391 = vmatprep.subr.bf16.mxu0 0
      %5392 = vmatpush2.bf16.xpose.msra.mxu0 0
      %5393 = vmatprep.subr.bf16.mxu0 0
      %5394 = vmatpush2.bf16.xpose.msra.mxu0 0
      %5395 = vmatprep.mubr.bf16.mxu0 0
      %5396 = vmatmul.mubr.bf16.gmra.mxu0 %v5340
      %v5397 = vpop.f32.mrf.mxu0
      %v5398 = vadd.f32 %v5105, %v5397
      %v5399 = vpop.f32.mrf.mxu0
      %v5400 = vpop.f32.mrf.mxu0
      %v5401 = vadd.f32 %v5106, %v5400
      %v5402 = vpop.f32.mrf.mxu0
      %5403 = vmatprep.mubr.bf16.mxu0 0
      %5404 = vmatmul.mubr.bf16.gmra.mxu0 %v5343
      %v5405 = vpop.f32.mrf.mxu0
      %v5406 = vadd.f32 %v5107, %v5405
      %v5407 = vpop.f32.mrf.mxu0
      %v5408 = vpop.f32.mrf.mxu0
      %v5409 = vadd.f32 %v5108, %v5408
      %v5410 = vpop.f32.mrf.mxu0
      %5411 = vmatprep.mubr.bf16.mxu0 0
      %5412 = vmatmul.mubr.bf16.gmra.mxu0 %v5346
      %v5413 = vpop.f32.mrf.mxu0
      %v5414 = vadd.f32 %v5109, %v5413
      %v5415 = vpop.f32.mrf.mxu0
      %v5416 = vpop.f32.mrf.mxu0
      %v5417 = vadd.f32 %v5110, %v5416
      %v5418 = vpop.f32.mrf.mxu0
      %5419 = vmatprep.mubr.bf16.mxu0 0
      %5420 = vmatmul.mubr.bf16.gmra.mxu0 %v5349
      %v5421 = vpop.f32.mrf.mxu0
      %v5422 = vadd.f32 %v5111, %v5421
      %v5423 = vpop.f32.mrf.mxu0
      %v5424 = vpop.f32.mrf.mxu0
      %v5425 = vadd.f32 %v5112, %v5424
      %v5426 = vpop.f32.mrf.mxu0
      %5427 = vdwg.mxu0
      %5428 = vrot.lane.b32.xlu0 %v2074, 112
      %v5429 = vpop.permute.xlu0 %5428
      %5430 = vrot.lane.b32.xlu0 %v2075, 112
      %v5431 = vpop.permute.xlu0 %5430
      %5432 = vrot.lane.b32.xlu0 %v2076, 112
      %v5433 = vpop.permute.xlu0 %5432
      %5434 = vrot.lane.b32.xlu0 %v2077, 112
      %v5435 = vpop.permute.xlu0 %5434
      %5436 = vrot.lane.b32.xlu0 %v2367, 112
      %v5437 = vpop.permute.xlu0 %5436
      %5438 = vrot.lane.b32.xlu0 %v2368, 112
      %v5439 = vpop.permute.xlu0 %5438
      %5440 = vrot.lane.b32.xlu0 %v2369, 112
      %v5441 = vpop.permute.xlu0 %5440
      %5442 = vrot.lane.b32.xlu0 %v2370, 112
      %v5443 = vpop.permute.xlu0 %5442
      %v5445 = vsel %vm2435, %v5429, 0
      %v5448 = vsel %vm2435, %v5431, 0
      %v5451 = vsel %vm2435, %v5433, 0
      %v5454 = vsel %vm2435, %v5435, 0
      %v5457 = vsel %vm2435, %v5437, 0
      %v5460 = vsel %vm2435, %v5439, 0
      %v5463 = vsel %vm2435, %v5441, 0
      %v5466 = vsel %vm2435, %v5443, 0
      %5468 = vmatprep.subr.bf16.mxu0 0
      %5469 = vmatpush1.bf16.xpose.msra.mxu0 0
      %5470 = vmatprep.subr.bf16.mxu0 0
      %5471 = vmatpush1.bf16.xpose.msra.mxu0 0
      %5472 = vmatprep.subr.bf16.mxu0 0
      %5473 = vmatpush1.bf16.xpose.msra.mxu0 0
      %5474 = vmatprep.subr.bf16.mxu0 0
      %5475 = vmatpush1.bf16.xpose.msra.mxu0 0
      %5476 = vmatprep.subr.bf16.mxu0 0
      %5477 = vmatpush1.bf16.xpose.msra.mxu0 %v5466
      %5478 = vmatprep.subr.bf16.mxu0 0
      %5479 = vmatpush1.bf16.xpose.msra.mxu0 %v5463
      %5480 = vmatprep.subr.bf16.mxu0 0
      %5481 = vmatpush1.bf16.xpose.msra.mxu0 %v5460
      %5482 = vmatprep.subr.bf16.mxu0 0
      %5483 = vmatpush1.bf16.xpose.msra.mxu0 %v5457
      %5484 = vmatprep.subr.bf16.mxu0 0
      %5485 = vmatpush2.bf16.xpose.msra.mxu0 0
      %5486 = vmatprep.subr.bf16.mxu0 0
      %5487 = vmatpush2.bf16.xpose.msra.mxu0 0
      %5488 = vmatprep.subr.bf16.mxu0 0
      %5489 = vmatpush2.bf16.xpose.msra.mxu0 0
      %5490 = vmatprep.subr.bf16.mxu0 0
      %5491 = vmatpush2.bf16.xpose.msra.mxu0 0
      %5492 = vmatprep.subr.bf16.mxu0 0
      %5493 = vmatpush2.bf16.xpose.msra.mxu0 0
      %5494 = vmatprep.subr.bf16.mxu0 0
      %5495 = vmatpush2.bf16.xpose.msra.mxu0 0
      %5496 = vmatprep.subr.bf16.mxu0 0
      %5497 = vmatpush2.bf16.xpose.msra.mxu0 0
      %5498 = vmatprep.subr.bf16.mxu0 0
      %5499 = vmatpush2.bf16.xpose.msra.mxu0 0
      %5500 = vmatprep.mubr.bf16.mxu0 0
      %5501 = vmatmul.mubr.bf16.gmra.mxu0 %v5445
      %v5502 = vpop.f32.mrf.mxu0
      %v5503 = vadd.f32 %v5105, %v5502
      %v5504 = vpop.f32.mrf.mxu0
      %v5505 = vpop.f32.mrf.mxu0
      %v5506 = vadd.f32 %v5106, %v5505
      %v5507 = vpop.f32.mrf.mxu0
      %5508 = vmatprep.mubr.bf16.mxu0 0
      %5509 = vmatmul.mubr.bf16.gmra.mxu0 %v5448
      %v5510 = vpop.f32.mrf.mxu0
      %v5511 = vadd.f32 %v5107, %v5510
      %v5512 = vpop.f32.mrf.mxu0
      %v5513 = vpop.f32.mrf.mxu0
      %v5514 = vadd.f32 %v5108, %v5513
      %v5515 = vpop.f32.mrf.mxu0
      %5516 = vmatprep.mubr.bf16.mxu0 0
      %5517 = vmatmul.mubr.bf16.gmra.mxu0 %v5451
      %v5518 = vpop.f32.mrf.mxu0
      %v5519 = vadd.f32 %v5109, %v5518
      %v5520 = vpop.f32.mrf.mxu0
      %v5521 = vpop.f32.mrf.mxu0
      %v5522 = vadd.f32 %v5110, %v5521
      %v5523 = vpop.f32.mrf.mxu0
      %5524 = vmatprep.mubr.bf16.mxu0 0
      %5525 = vmatmul.mubr.bf16.gmra.mxu0 %v5454
      %v5526 = vpop.f32.mrf.mxu0
      %v5527 = vadd.f32 %v5111, %v5526
      %v5528 = vpop.f32.mrf.mxu0
      %v5529 = vpop.f32.mrf.mxu0
      %v5530 = vadd.f32 %v5112, %v5529
      %v5531 = vpop.f32.mrf.mxu0
      %5532 = vdwg.mxu0
      %v5533 = vsel %vm2792, %v5188, -inf
      %5534 = vmax.xlane.f32.xlu0 %v5533
      %v5535 = vpop.xlane.xlu0 %5534
      %v5536 = vsel %vm2792, %v5191, -inf
      %5537 = vmax.xlane.f32.xlu0 %v5536
      %v5538 = vpop.xlane.xlu0 %5537
      %v5539 = vsel %vm2792, %v5196, -inf
      %5540 = vmax.xlane.f32.xlu0 %v5539
      %v5541 = vpop.xlane.xlu0 %5540
      %v5542 = vsel %vm2792, %v5199, -inf
      %5543 = vmax.xlane.f32.xlu0 %v5542
      %v5544 = vpop.xlane.xlu0 %5543
      %v5545 = vsel %vm2792, %v5204, -inf
      %5546 = vmax.xlane.f32.xlu0 %v5545
      %v5547 = vpop.xlane.xlu0 %5546
      %v5548 = vsel %vm2792, %v5207, -inf
      %5549 = vmax.xlane.f32.xlu0 %v5548
      %v5550 = vpop.xlane.xlu0 %5549
      %v5551 = vsel %vm2792, %v5212, -inf
      %5552 = vmax.xlane.f32.xlu0 %v5551
      %v5553 = vpop.xlane.xlu0 %5552
      %v5554 = vsel %vm2792, %v5215, -inf
      %5555 = vmax.xlane.f32.xlu0 %v5554
      %v5556 = vpop.xlane.xlu0 %5555
      %v5557 = vsel %vm2792, %v5293, -inf
      %5558 = vmax.xlane.f32.xlu0 %v5557
      %v5559 = vpop.xlane.xlu0 %5558
      %v5560 = vsel %vm2792, %v5296, -inf
      %5561 = vmax.xlane.f32.xlu0 %v5560
      %v5562 = vpop.xlane.xlu0 %5561
      %v5563 = vsel %vm2792, %v5301, -inf
      %5564 = vmax.xlane.f32.xlu0 %v5563
      %v5565 = vpop.xlane.xlu0 %5564
      %v5566 = vsel %vm2792, %v5304, -inf
      %5567 = vmax.xlane.f32.xlu0 %v5566
      %v5568 = vpop.xlane.xlu0 %5567
      %v5569 = vsel %vm2792, %v5309, -inf
      %5570 = vmax.xlane.f32.xlu0 %v5569
      %v5571 = vpop.xlane.xlu0 %5570
      %v5572 = vsel %vm2792, %v5312, -inf
      %5573 = vmax.xlane.f32.xlu0 %v5572
      %v5574 = vpop.xlane.xlu0 %5573
      %v5575 = vsel %vm2792, %v5317, -inf
      %5576 = vmax.xlane.f32.xlu0 %v5575
      %v5577 = vpop.xlane.xlu0 %5576
      %v5578 = vsel %vm2792, %v5320, -inf
      %5579 = vmax.xlane.f32.xlu0 %v5578
      %v5580 = vpop.xlane.xlu0 %5579
      %v5581 = vsel %vm2792, %v5398, -inf
      %5582 = vmax.xlane.f32.xlu0 %v5581
      %v5583 = vpop.xlane.xlu0 %5582
      %v5584 = vsel %vm2792, %v5401, -inf
      %5585 = vmax.xlane.f32.xlu0 %v5584
      %v5586 = vpop.xlane.xlu0 %5585
      %v5587 = vsel %vm2792, %v5406, -inf
      %5588 = vmax.xlane.f32.xlu0 %v5587
      %v5589 = vpop.xlane.xlu0 %5588
      %v5590 = vsel %vm2792, %v5409, -inf
      %5591 = vmax.xlane.f32.xlu0 %v5590
      %v5592 = vpop.xlane.xlu0 %5591
      %v5593 = vsel %vm2792, %v5414, -inf
      %5594 = vmax.xlane.f32.xlu0 %v5593
      %v5595 = vpop.xlane.xlu0 %5594
      %v5596 = vsel %vm2792, %v5417, -inf
      %5597 = vmax.xlane.f32.xlu0 %v5596
      %v5598 = vpop.xlane.xlu0 %5597
      %v5599 = vsel %vm2792, %v5422, -inf
      %5600 = vmax.xlane.f32.xlu0 %v5599
      %v5601 = vpop.xlane.xlu0 %5600
      %v5602 = vsel %vm2792, %v5425, -inf
      %5603 = vmax.xlane.f32.xlu0 %v5602
      %v5604 = vpop.xlane.xlu0 %5603
      %v5605 = vsel %vm2792, %v5503, -inf
      %5606 = vmax.xlane.f32.xlu0 %v5605
      %v5607 = vpop.xlane.xlu0 %5606
      %v5608 = vsel %vm2792, %v5506, -inf
      %5609 = vmax.xlane.f32.xlu0 %v5608
      %v5610 = vpop.xlane.xlu0 %5609
      %v5611 = vsel %vm2792, %v5511, -inf
      %5612 = vmax.xlane.f32.xlu0 %v5611
      %v5613 = vpop.xlane.xlu0 %5612
      %v5614 = vsel %vm2792, %v5514, -inf
      %5615 = vmax.xlane.f32.xlu0 %v5614
      %v5616 = vpop.xlane.xlu0 %5615
      %v5617 = vsel %vm2792, %v5519, -inf
      %5618 = vmax.xlane.f32.xlu0 %v5617
      %v5619 = vpop.xlane.xlu0 %5618
      %v5620 = vsel %vm2792, %v5522, -inf
      %5621 = vmax.xlane.f32.xlu0 %v5620
      %v5622 = vpop.xlane.xlu0 %5621
      %v5623 = vsel %vm2792, %v5527, -inf
      %5624 = vmax.xlane.f32.xlu0 %v5623
      %v5625 = vpop.xlane.xlu0 %5624
      %v5626 = vsel %vm2792, %v5530, -inf
      %5627 = vmax.xlane.f32.xlu0 %v5626
      %v5628 = vpop.xlane.xlu0 %5627
      %v5629 = vsub.f32 %v5188, %v5535
      %v5630 = vsub.f32 %v5191, %v5538
      %v5631 = vsub.f32 %v5196, %v5541
      %v5632 = vsub.f32 %v5199, %v5544
      %v5633 = vsub.f32 %v5204, %v5547
      %v5634 = vsub.f32 %v5207, %v5550
      %v5635 = vsub.f32 %v5212, %v5553
      %v5636 = vsub.f32 %v5215, %v5556
      %v5637 = vsub.f32 %v5293, %v5559
      %v5638 = vsub.f32 %v5296, %v5562
      %v5639 = vsub.f32 %v5301, %v5565
      %v5640 = vsub.f32 %v5304, %v5568
      %v5641 = vsub.f32 %v5309, %v5571
      %v5642 = vsub.f32 %v5312, %v5574
      %v5643 = vsub.f32 %v5317, %v5577
      %v5644 = vsub.f32 %v5320, %v5580
      %v5645 = vsub.f32 %v5398, %v5583
      %v5646 = vsub.f32 %v5401, %v5586
      %v5647 = vsub.f32 %v5406, %v5589
      %v5648 = vsub.f32 %v5409, %v5592
      %v5649 = vsub.f32 %v5414, %v5595
      %v5650 = vsub.f32 %v5417, %v5598
      %v5651 = vsub.f32 %v5422, %v5601
      %v5652 = vsub.f32 %v5425, %v5604
      %v5653 = vsub.f32 %v5503, %v5607
      %v5654 = vsub.f32 %v5506, %v5610
      %v5655 = vsub.f32 %v5511, %v5613
      %v5656 = vsub.f32 %v5514, %v5616
      %v5657 = vsub.f32 %v5519, %v5619
      %v5658 = vsub.f32 %v5522, %v5622
      %v5659 = vsub.f32 %v5527, %v5625
      %v5660 = vsub.f32 %v5530, %v5628
      %v5661 = vmul.f32 %v5629, 1.442695
      %v5662 = vpow.pop %v5661
      %v5663 = vmul.f32 %v5630, 1.442695
      %v5664 = vpow.pop %v5663
      %v5665 = vmul.f32 %v5631, 1.442695
      %v5666 = vpow.pop %v5665
      %v5667 = vmul.f32 %v5632, 1.442695
      %v5668 = vpow.pop %v5667
      %v5669 = vmul.f32 %v5633, 1.442695
      %v5670 = vpow.pop %v5669
      %v5671 = vmul.f32 %v5634, 1.442695
      %v5672 = vpow.pop %v5671
      %v5673 = vmul.f32 %v5635, 1.442695
      %v5674 = vpow.pop %v5673
      %v5675 = vmul.f32 %v5636, 1.442695
      %v5676 = vpow.pop %v5675
      %v5677 = vmul.f32 %v5637, 1.442695
      %v5678 = vpow.pop %v5677
      %v5679 = vmul.f32 %v5638, 1.442695
      %v5680 = vpow.pop %v5679
      %v5681 = vmul.f32 %v5639, 1.442695
      %v5682 = vpow.pop %v5681
      %v5683 = vmul.f32 %v5640, 1.442695
      %v5684 = vpow.pop %v5683
      %v5685 = vmul.f32 %v5641, 1.442695
      %v5686 = vpow.pop %v5685
      %v5687 = vmul.f32 %v5642, 1.442695
      %v5688 = vpow.pop %v5687
      %v5689 = vmul.f32 %v5643, 1.442695
      %v5690 = vpow.pop %v5689
      %v5691 = vmul.f32 %v5644, 1.442695
      %v5692 = vpow.pop %v5691
      %v5693 = vmul.f32 %v5645, 1.442695
      %v5694 = vpow.pop %v5693
      %v5695 = vmul.f32 %v5646, 1.442695
      %v5696 = vpow.pop %v5695
      %v5697 = vmul.f32 %v5647, 1.442695
      %v5698 = vpow.pop %v5697
      %v5699 = vmul.f32 %v5648, 1.442695
      %v5700 = vpow.pop %v5699
      %v5701 = vmul.f32 %v5649, 1.442695
      %v5702 = vpow.pop %v5701
      %v5703 = vmul.f32 %v5650, 1.442695
      %v5704 = vpow.pop %v5703
      %v5705 = vmul.f32 %v5651, 1.442695
      %v5706 = vpow.pop %v5705
      %v5707 = vmul.f32 %v5652, 1.442695
      %v5708 = vpow.pop %v5707
      %v5709 = vmul.f32 %v5653, 1.442695
      %v5710 = vpow.pop %v5709
      %v5711 = vmul.f32 %v5654, 1.442695
      %v5712 = vpow.pop %v5711
      %v5713 = vmul.f32 %v5655, 1.442695
      %v5714 = vpow.pop %v5713
      %v5715 = vmul.f32 %v5656, 1.442695
      %v5716 = vpow.pop %v5715
      %v5717 = vmul.f32 %v5657, 1.442695
      %v5718 = vpow.pop %v5717
      %v5719 = vmul.f32 %v5658, 1.442695
      %v5720 = vpow.pop %v5719
      %v5721 = vmul.f32 %v5659, 1.442695
      %v5722 = vpow.pop %v5721
      %v5723 = vmul.f32 %v5660, 1.442695
      %v5724 = vpow.pop %v5723
      %v5725 = vsel %vm2792, %v5662, 0.0
      %5726 = vadd.xlane.f32.xlu0 %v5725
      %v5727 = vpop.xlane.xlu0 %5726
      %v5728 = vsel %vm2792, %v5664, 0.0
      %5729 = vadd.xlane.f32.xlu0 %v5728
      %v5730 = vpop.xlane.xlu0 %5729
      %v5731 = vsel %vm2792, %v5666, 0.0
      %5732 = vadd.xlane.f32.xlu0 %v5731
      %v5733 = vpop.xlane.xlu0 %5732
      %v5734 = vsel %vm2792, %v5668, 0.0
      %5735 = vadd.xlane.f32.xlu0 %v5734
      %v5736 = vpop.xlane.xlu0 %5735
      %v5737 = vsel %vm2792, %v5670, 0.0
      %5738 = vadd.xlane.f32.xlu0 %v5737
      %v5739 = vpop.xlane.xlu0 %5738
      %v5740 = vsel %vm2792, %v5672, 0.0
      %5741 = vadd.xlane.f32.xlu0 %v5740
      %v5742 = vpop.xlane.xlu0 %5741
      %v5743 = vsel %vm2792, %v5674, 0.0
      %5744 = vadd.xlane.f32.xlu0 %v5743
      %v5745 = vpop.xlane.xlu0 %5744
      %v5746 = vsel %vm2792, %v5676, 0.0
      %5747 = vadd.xlane.f32.xlu0 %v5746
      %v5748 = vpop.xlane.xlu0 %5747
      %v5749 = vsel %vm2792, %v5678, 0.0
      %5750 = vadd.xlane.f32.xlu0 %v5749
      %v5751 = vpop.xlane.xlu0 %5750
      %v5752 = vsel %vm2792, %v5680, 0.0
      %5753 = vadd.xlane.f32.xlu0 %v5752
      %v5754 = vpop.xlane.xlu0 %5753
      %v5755 = vsel %vm2792, %v5682, 0.0
      %5756 = vadd.xlane.f32.xlu0 %v5755
      %v5757 = vpop.xlane.xlu0 %5756
      %v5758 = vsel %vm2792, %v5684, 0.0
      %5759 = vadd.xlane.f32.xlu0 %v5758
      %v5760 = vpop.xlane.xlu0 %5759
      %v5761 = vsel %vm2792, %v5686, 0.0
      %5762 = vadd.xlane.f32.xlu0 %v5761
      %v5763 = vpop.xlane.xlu0 %5762
      %v5764 = vsel %vm2792, %v5688, 0.0
      %5765 = vadd.xlane.f32.xlu0 %v5764
      %v5766 = vpop.xlane.xlu0 %5765
      %v5767 = vsel %vm2792, %v5690, 0.0
      %5768 = vadd.xlane.f32.xlu0 %v5767
      %v5769 = vpop.xlane.xlu0 %5768
      %v5770 = vsel %vm2792, %v5692, 0.0
      %5771 = vadd.xlane.f32.xlu0 %v5770
      %v5772 = vpop.xlane.xlu0 %5771
      %v5773 = vsel %vm2792, %v5694, 0.0
      %5774 = vadd.xlane.f32.xlu0 %v5773
      %v5775 = vpop.xlane.xlu0 %5774
      %v5776 = vsel %vm2792, %v5696, 0.0
      %5777 = vadd.xlane.f32.xlu0 %v5776
      %v5778 = vpop.xlane.xlu0 %5777
      %v5779 = vsel %vm2792, %v5698, 0.0
      %5780 = vadd.xlane.f32.xlu0 %v5779
      %v5781 = vpop.xlane.xlu0 %5780
      %v5782 = vsel %vm2792, %v5700, 0.0
      %5783 = vadd.xlane.f32.xlu0 %v5782
      %v5784 = vpop.xlane.xlu0 %5783
      %v5785 = vsel %vm2792, %v5702, 0.0
      %5786 = vadd.xlane.f32.xlu0 %v5785
      %v5787 = vpop.xlane.xlu0 %5786
      %v5788 = vsel %vm2792, %v5704, 0.0
      %5789 = vadd.xlane.f32.xlu0 %v5788
      %v5790 = vpop.xlane.xlu0 %5789
      %v5791 = vsel %vm2792, %v5706, 0.0
      %5792 = vadd.xlane.f32.xlu0 %v5791
      %v5793 = vpop.xlane.xlu0 %5792
      %v5794 = vsel %vm2792, %v5708, 0.0
      %5795 = vadd.xlane.f32.xlu0 %v5794
      %v5796 = vpop.xlane.xlu0 %5795
      %v5797 = vsel %vm2792, %v5710, 0.0
      %5798 = vadd.xlane.f32.xlu0 %v5797
      %v5799 = vpop.xlane.xlu0 %5798
      %v5800 = vsel %vm2792, %v5712, 0.0
      %5801 = vadd.xlane.f32.xlu0 %v5800
      %v5802 = vpop.xlane.xlu0 %5801
      %v5803 = vsel %vm2792, %v5714, 0.0
      %5804 = vadd.xlane.f32.xlu0 %v5803
      %v5805 = vpop.xlane.xlu0 %5804
      %v5806 = vsel %vm2792, %v5716, 0.0
      %5807 = vadd.xlane.f32.xlu0 %v5806
      %v5808 = vpop.xlane.xlu0 %5807
      %v5809 = vsel %vm2792, %v5718, 0.0
      %5810 = vadd.xlane.f32.xlu0 %v5809
      %v5811 = vpop.xlane.xlu0 %5810
      %v5812 = vsel %vm2792, %v5720, 0.0
      %5813 = vadd.xlane.f32.xlu0 %v5812
      %v5814 = vpop.xlane.xlu0 %5813
      %v5815 = vsel %vm2792, %v5722, 0.0
      %5816 = vadd.xlane.f32.xlu0 %v5815
      %v5817 = vpop.xlane.xlu0 %5816
      %v5818 = vsel %vm2792, %v5724, 0.0
      %5819 = vadd.xlane.f32.xlu0 %v5818
      %v5820 = vpop.xlane.xlu0 %5819
      %v5821 = vrcp.pop %v5727
      %v5822 = vrcp.pop %v5730
      %v5823 = vrcp.pop %v5733
      %v5824 = vrcp.pop %v5736
      %v5825 = vrcp.pop %v5739
      %v5826 = vrcp.pop %v5742
      %v5827 = vrcp.pop %v5745
      %v5828 = vrcp.pop %v5748
      %v5829 = vrcp.pop %v5751
      %v5830 = vrcp.pop %v5754
      %v5831 = vrcp.pop %v5757
      %v5832 = vrcp.pop %v5760
      %v5833 = vrcp.pop %v5763
      %v5834 = vrcp.pop %v5766
      %v5835 = vrcp.pop %v5769
      %v5836 = vrcp.pop %v5772
      %v5837 = vrcp.pop %v5775
      %v5838 = vrcp.pop %v5778
      %v5839 = vrcp.pop %v5781
      %v5840 = vrcp.pop %v5784
      %v5841 = vrcp.pop %v5787
      %v5842 = vrcp.pop %v5790
      %v5843 = vrcp.pop %v5793
      %v5844 = vrcp.pop %v5796
      %v5845 = vrcp.pop %v5799
      %v5846 = vrcp.pop %v5802
      %v5847 = vrcp.pop %v5805
      %v5848 = vrcp.pop %v5808
      %v5849 = vrcp.pop %v5811
      %v5850 = vrcp.pop %v5814
      %v5851 = vrcp.pop %v5817
      %v5852 = vrcp.pop %v5820
      %v5853 = vmul.f32 %v5662, %v5821
      %v5854 = vmul.f32 %v5664, %v5822
      %v5855 = vmul.f32 %v5666, %v5823
      %v5856 = vmul.f32 %v5668, %v5824
      %v5857 = vmul.f32 %v5670, %v5825
      %v5858 = vmul.f32 %v5672, %v5826
      %v5859 = vmul.f32 %v5674, %v5827
      %v5860 = vmul.f32 %v5676, %v5828
      %v5861 = vmul.f32 %v5678, %v5829
      %v5862 = vmul.f32 %v5680, %v5830
      %v5863 = vmul.f32 %v5682, %v5831
      %v5864 = vmul.f32 %v5684, %v5832
      %v5865 = vmul.f32 %v5686, %v5833
      %v5866 = vmul.f32 %v5688, %v5834
      %v5867 = vmul.f32 %v5690, %v5835
      %v5868 = vmul.f32 %v5692, %v5836
      %v5869 = vmul.f32 %v5694, %v5837
      %v5870 = vmul.f32 %v5696, %v5838
      %v5871 = vmul.f32 %v5698, %v5839
      %v5872 = vmul.f32 %v5700, %v5840
      %v5873 = vmul.f32 %v5702, %v5841
      %v5874 = vmul.f32 %v5704, %v5842
      %v5875 = vmul.f32 %v5706, %v5843
      %v5876 = vmul.f32 %v5708, %v5844
      %v5877 = vmul.f32 %v5710, %v5845
      %v5878 = vmul.f32 %v5712, %v5846
      %v5879 = vmul.f32 %v5714, %v5847
      %v5880 = vmul.f32 %v5716, %v5848
      %v5881 = vmul.f32 %v5718, %v5849
      %v5882 = vmul.f32 %v5720, %v5850
      %v5883 = vmul.f32 %v5722, %v5851
      %v5884 = vmul.f32 %v5724, %v5852
      %v5885 = vpack.c.bf16 %v5854, %v5853
      %v5886 = vpack.c.bf16 %v5856, %v5855
      %v5887 = vpack.c.bf16 %v5858, %v5857
      %v5888 = vpack.c.bf16 %v5860, %v5859
      %v5889 = vpack.c.bf16 %v5862, %v5861
      %v5890 = vpack.c.bf16 %v5864, %v5863
      %v5891 = vpack.c.bf16 %v5866, %v5865
      %v5892 = vpack.c.bf16 %v5868, %v5867
      %v5893 = vpack.c.bf16 %v5870, %v5869
      %v5894 = vpack.c.bf16 %v5872, %v5871
      %v5895 = vpack.c.bf16 %v5874, %v5873
      %v5896 = vpack.c.bf16 %v5876, %v5875
      %v5897 = vpack.c.bf16 %v5878, %v5877
      %v5898 = vpack.c.bf16 %v5880, %v5879
      %v5899 = vpack.c.bf16 %v5882, %v5881
      %v5900 = vpack.c.bf16 %v5884, %v5883
      %5901 = vrot.lane.b32.xlu0 %v2411, 80
      %v5902 = vpop.permute.xlu0 %5901
      %5903 = vrot.lane.b32.xlu0 %v2412, 80
      %v5904 = vpop.permute.xlu0 %5903
      %5905 = vrot.lane.b32.xlu0 %v2413, 80
      %v5906 = vpop.permute.xlu0 %5905
      %5907 = vrot.lane.b32.xlu0 %v2414, 80
      %v5908 = vpop.permute.xlu0 %5907
      %v5914 = vsel %vm2792, %v5885, 0
      %v5917 = vsel %vm2792, %v5886, 0
      %v5920 = vsel %vm2792, %v5887, 0
      %v5923 = vsel %vm2792, %v5888, 0
      %5925 = vmatprep.subr.bf16.mxu0 0
      %5926 = vmatpush1.bf16.msra.mxu0 0
      %5927 = vmatprep.subr.bf16.mxu0 0
      %5928 = vmatpush1.bf16.msra.mxu0 0
      %5929 = vmatprep.subr.bf16.mxu0 0
      %5930 = vmatpush1.bf16.msra.mxu0 0
      %5931 = vmatprep.subr.bf16.mxu0 0
      %5932 = vmatpush1.bf16.msra.mxu0 0
      %5933 = vmatprep.subr.bf16.mxu0 0
      %5934 = vmatpush1.bf16.msra.mxu0 %v5908
      %5935 = vmatprep.subr.bf16.mxu0 0
      %5936 = vmatpush1.bf16.msra.mxu0 %v5906
      %5937 = vmatprep.subr.bf16.mxu0 0
      %5938 = vmatpush1.bf16.msra.mxu0 %v5904
      %5939 = vmatprep.subr.bf16.mxu0 0
      %5940 = vmatpush1.bf16.msra.mxu0 %v5902
      %5941 = vmatprep.subr.bf16.mxu0 0
      %5942 = vmatpush2.bf16.msra.mxu0 0
      %5943 = vmatprep.subr.bf16.mxu0 0
      %5944 = vmatpush2.bf16.msra.mxu0 0
      %5945 = vmatprep.subr.bf16.mxu0 0
      %5946 = vmatpush2.bf16.msra.mxu0 0
      %5947 = vmatprep.subr.bf16.mxu0 0
      %5948 = vmatpush2.bf16.msra.mxu0 0
      %5949 = vmatprep.subr.bf16.mxu0 0
      %5950 = vmatpush2.bf16.msra.mxu0 0
      %5951 = vmatprep.subr.bf16.mxu0 0
      %5952 = vmatpush2.bf16.msra.mxu0 0
      %5953 = vmatprep.subr.bf16.mxu0 0
      %5954 = vmatpush2.bf16.msra.mxu0 0
      %5955 = vmatprep.subr.bf16.mxu0 0
      %5956 = vmatpush2.bf16.msra.mxu0 0
      %5957 = vmatprep.mubr.bf16.mxu0 0
      %5958 = vmatmul.mubr.bf16.gmra.mxu0 %v5914
      %v5959 = vpop.f32.mrf.mxu0
      %v5960 = vadd.f32 0.0, %v5959
      %v5961 = vpop.f32.mrf.mxu0
      %v5962 = vpop.f32.mrf.mxu0
      %v5963 = vadd.f32 0.0, %v5962
      %v5964 = vpop.f32.mrf.mxu0
      %5965 = vmatprep.mubr.bf16.mxu0 0
      %5966 = vmatmul.mubr.bf16.gmra.mxu0 %v5917
      %v5967 = vpop.f32.mrf.mxu0
      %v5968 = vadd.f32 0.0, %v5967
      %v5969 = vpop.f32.mrf.mxu0
      %v5970 = vpop.f32.mrf.mxu0
      %v5971 = vadd.f32 0.0, %v5970
      %v5972 = vpop.f32.mrf.mxu0
      %5973 = vmatprep.mubr.bf16.mxu0 0
      %5974 = vmatmul.mubr.bf16.gmra.mxu0 %v5920
      %v5975 = vpop.f32.mrf.mxu0
      %v5976 = vadd.f32 0.0, %v5975
      %v5977 = vpop.f32.mrf.mxu0
      %v5978 = vpop.f32.mrf.mxu0
      %v5979 = vadd.f32 0.0, %v5978
      %v5980 = vpop.f32.mrf.mxu0
      %5981 = vmatprep.mubr.bf16.mxu0 0
      %5982 = vmatmul.mubr.bf16.gmra.mxu0 %v5923
      %v5983 = vpop.f32.mrf.mxu0
      %v5984 = vadd.f32 0.0, %v5983
      %v5985 = vpop.f32.mrf.mxu0
      %v5986 = vpop.f32.mrf.mxu0
      %v5987 = vadd.f32 0.0, %v5986
      %v5988 = vpop.f32.mrf.mxu0
      %5989 = vdwg.mxu0
      %5990 = vrot.lane.b32.xlu0 %v2415, 80
      %v5991 = vpop.permute.xlu0 %5990
      %5992 = vrot.lane.b32.xlu0 %v2416, 80
      %v5993 = vpop.permute.xlu0 %5992
      %5994 = vrot.lane.b32.xlu0 %v2417, 80
      %v5995 = vpop.permute.xlu0 %5994
      %5996 = vrot.lane.b32.xlu0 %v2418, 80
      %v5997 = vpop.permute.xlu0 %5996
      %v6003 = vsel %vm2792, %v5889, 0
      %v6006 = vsel %vm2792, %v5890, 0
      %v6009 = vsel %vm2792, %v5891, 0
      %v6012 = vsel %vm2792, %v5892, 0
      %6014 = vmatprep.subr.bf16.mxu0 0
      %6015 = vmatpush1.bf16.msra.mxu0 0
      %6016 = vmatprep.subr.bf16.mxu0 0
      %6017 = vmatpush1.bf16.msra.mxu0 0
      %6018 = vmatprep.subr.bf16.mxu0 0
      %6019 = vmatpush1.bf16.msra.mxu0 0
      %6020 = vmatprep.subr.bf16.mxu0 0
      %6021 = vmatpush1.bf16.msra.mxu0 0
      %6022 = vmatprep.subr.bf16.mxu0 0
      %6023 = vmatpush1.bf16.msra.mxu0 %v5997
      %6024 = vmatprep.subr.bf16.mxu0 0
      %6025 = vmatpush1.bf16.msra.mxu0 %v5995
      %6026 = vmatprep.subr.bf16.mxu0 0
      %6027 = vmatpush1.bf16.msra.mxu0 %v5993
      %6028 = vmatprep.subr.bf16.mxu0 0
      %6029 = vmatpush1.bf16.msra.mxu0 %v5991
      %6030 = vmatprep.subr.bf16.mxu0 0
      %6031 = vmatpush2.bf16.msra.mxu0 0
      %6032 = vmatprep.subr.bf16.mxu0 0
      %6033 = vmatpush2.bf16.msra.mxu0 0
      %6034 = vmatprep.subr.bf16.mxu0 0
      %6035 = vmatpush2.bf16.msra.mxu0 0
      %6036 = vmatprep.subr.bf16.mxu0 0
      %6037 = vmatpush2.bf16.msra.mxu0 0
      %6038 = vmatprep.subr.bf16.mxu0 0
      %6039 = vmatpush2.bf16.msra.mxu0 0
      %6040 = vmatprep.subr.bf16.mxu0 0
      %6041 = vmatpush2.bf16.msra.mxu0 0
      %6042 = vmatprep.subr.bf16.mxu0 0
      %6043 = vmatpush2.bf16.msra.mxu0 0
      %6044 = vmatprep.subr.bf16.mxu0 0
      %6045 = vmatpush2.bf16.msra.mxu0 0
      %6046 = vmatprep.mubr.bf16.mxu0 0
      %6047 = vmatmul.mubr.bf16.gmra.mxu0 %v6003
      %v6048 = vpop.f32.mrf.mxu0
      %v6049 = vadd.f32 0.0, %v6048
      %v6050 = vpop.f32.mrf.mxu0
      %v6051 = vpop.f32.mrf.mxu0
      %v6052 = vadd.f32 0.0, %v6051
      %v6053 = vpop.f32.mrf.mxu0
      %6054 = vmatprep.mubr.bf16.mxu0 0
      %6055 = vmatmul.mubr.bf16.gmra.mxu0 %v6006
      %v6056 = vpop.f32.mrf.mxu0
      %v6057 = vadd.f32 0.0, %v6056
      %v6058 = vpop.f32.mrf.mxu0
      %v6059 = vpop.f32.mrf.mxu0
      %v6060 = vadd.f32 0.0, %v6059
      %v6061 = vpop.f32.mrf.mxu0
      %6062 = vmatprep.mubr.bf16.mxu0 0
      %6063 = vmatmul.mubr.bf16.gmra.mxu0 %v6009
      %v6064 = vpop.f32.mrf.mxu0
      %v6065 = vadd.f32 0.0, %v6064
      %v6066 = vpop.f32.mrf.mxu0
      %v6067 = vpop.f32.mrf.mxu0
      %v6068 = vadd.f32 0.0, %v6067
      %v6069 = vpop.f32.mrf.mxu0
      %6070 = vmatprep.mubr.bf16.mxu0 0
      %6071 = vmatmul.mubr.bf16.gmra.mxu0 %v6012
      %v6072 = vpop.f32.mrf.mxu0
      %v6073 = vadd.f32 0.0, %v6072
      %v6074 = vpop.f32.mrf.mxu0
      %v6075 = vpop.f32.mrf.mxu0
      %v6076 = vadd.f32 0.0, %v6075
      %v6077 = vpop.f32.mrf.mxu0
      %6078 = vdwg.mxu0
      %6079 = vrot.lane.b32.xlu0 %v2419, 80
      %v6080 = vpop.permute.xlu0 %6079
      %6081 = vrot.lane.b32.xlu0 %v2420, 80
      %v6082 = vpop.permute.xlu0 %6081
      %6083 = vrot.lane.b32.xlu0 %v2421, 80
      %v6084 = vpop.permute.xlu0 %6083
      %6085 = vrot.lane.b32.xlu0 %v2422, 80
      %v6086 = vpop.permute.xlu0 %6085
      %v6092 = vsel %vm2792, %v5893, 0
      %v6095 = vsel %vm2792, %v5894, 0
      %v6098 = vsel %vm2792, %v5895, 0
      %v6101 = vsel %vm2792, %v5896, 0
      %6103 = vmatprep.subr.bf16.mxu0 0
      %6104 = vmatpush1.bf16.msra.mxu0 0
      %6105 = vmatprep.subr.bf16.mxu0 0
      %6106 = vmatpush1.bf16.msra.mxu0 0
      %6107 = vmatprep.subr.bf16.mxu0 0
      %6108 = vmatpush1.bf16.msra.mxu0 0
      %6109 = vmatprep.subr.bf16.mxu0 0
      %6110 = vmatpush1.bf16.msra.mxu0 0
      %6111 = vmatprep.subr.bf16.mxu0 0
      %6112 = vmatpush1.bf16.msra.mxu0 %v6086
      %6113 = vmatprep.subr.bf16.mxu0 0
      %6114 = vmatpush1.bf16.msra.mxu0 %v6084
      %6115 = vmatprep.subr.bf16.mxu0 0
      %6116 = vmatpush1.bf16.msra.mxu0 %v6082
      %6117 = vmatprep.subr.bf16.mxu0 0
      %6118 = vmatpush1.bf16.msra.mxu0 %v6080
      %6119 = vmatprep.subr.bf16.mxu0 0
      %6120 = vmatpush2.bf16.msra.mxu0 0
      %6121 = vmatprep.subr.bf16.mxu0 0
      %6122 = vmatpush2.bf16.msra.mxu0 0
      %6123 = vmatprep.subr.bf16.mxu0 0
      %6124 = vmatpush2.bf16.msra.mxu0 0
      %6125 = vmatprep.subr.bf16.mxu0 0
      %6126 = vmatpush2.bf16.msra.mxu0 0
      %6127 = vmatprep.subr.bf16.mxu0 0
      %6128 = vmatpush2.bf16.msra.mxu0 0
      %6129 = vmatprep.subr.bf16.mxu0 0
      %6130 = vmatpush2.bf16.msra.mxu0 0
      %6131 = vmatprep.subr.bf16.mxu0 0
      %6132 = vmatpush2.bf16.msra.mxu0 0
      %6133 = vmatprep.subr.bf16.mxu0 0
      %6134 = vmatpush2.bf16.msra.mxu0 0
      %6135 = vmatprep.mubr.bf16.mxu0 0
      %6136 = vmatmul.mubr.bf16.gmra.mxu0 %v6092
      %v6137 = vpop.f32.mrf.mxu0
      %v6138 = vadd.f32 0.0, %v6137
      %v6139 = vpop.f32.mrf.mxu0
      %v6140 = vpop.f32.mrf.mxu0
      %v6141 = vadd.f32 0.0, %v6140
      %v6142 = vpop.f32.mrf.mxu0
      %6143 = vmatprep.mubr.bf16.mxu0 0
      %6144 = vmatmul.mubr.bf16.gmra.mxu0 %v6095
      %v6145 = vpop.f32.mrf.mxu0
      %v6146 = vadd.f32 0.0, %v6145
      %v6147 = vpop.f32.mrf.mxu0
      %v6148 = vpop.f32.mrf.mxu0
      %v6149 = vadd.f32 0.0, %v6148
      %v6150 = vpop.f32.mrf.mxu0
      %6151 = vmatprep.mubr.bf16.mxu0 0
      %6152 = vmatmul.mubr.bf16.gmra.mxu0 %v6098
      %v6153 = vpop.f32.mrf.mxu0
      %v6154 = vadd.f32 0.0, %v6153
      %v6155 = vpop.f32.mrf.mxu0
      %v6156 = vpop.f32.mrf.mxu0
      %v6157 = vadd.f32 0.0, %v6156
      %v6158 = vpop.f32.mrf.mxu0
      %6159 = vmatprep.mubr.bf16.mxu0 0
      %6160 = vmatmul.mubr.bf16.gmra.mxu0 %v6101
      %v6161 = vpop.f32.mrf.mxu0
      %v6162 = vadd.f32 0.0, %v6161
      %v6163 = vpop.f32.mrf.mxu0
      %v6164 = vpop.f32.mrf.mxu0
      %v6165 = vadd.f32 0.0, %v6164
      %v6166 = vpop.f32.mrf.mxu0
      %6167 = vdwg.mxu0
      %6168 = vrot.lane.b32.xlu0 %v2423, 80
      %v6169 = vpop.permute.xlu0 %6168
      %6170 = vrot.lane.b32.xlu0 %v2424, 80
      %v6171 = vpop.permute.xlu0 %6170
      %6172 = vrot.lane.b32.xlu0 %v2425, 80
      %v6173 = vpop.permute.xlu0 %6172
      %6174 = vrot.lane.b32.xlu0 %v2426, 80
      %v6175 = vpop.permute.xlu0 %6174
      %v6181 = vsel %vm2792, %v5897, 0
      %v6184 = vsel %vm2792, %v5898, 0
      %v6187 = vsel %vm2792, %v5899, 0
      %v6190 = vsel %vm2792, %v5900, 0
      %6192 = vmatprep.subr.bf16.mxu0 0
      %6193 = vmatpush1.bf16.msra.mxu0 0
      %6194 = vmatprep.subr.bf16.mxu0 0
      %6195 = vmatpush1.bf16.msra.mxu0 0
      %6196 = vmatprep.subr.bf16.mxu0 0
      %6197 = vmatpush1.bf16.msra.mxu0 0
      %6198 = vmatprep.subr.bf16.mxu0 0
      %6199 = vmatpush1.bf16.msra.mxu0 0
      %6200 = vmatprep.subr.bf16.mxu0 0
      %6201 = vmatpush1.bf16.msra.mxu0 %v6175
      %6202 = vmatprep.subr.bf16.mxu0 0
      %6203 = vmatpush1.bf16.msra.mxu0 %v6173
      %6204 = vmatprep.subr.bf16.mxu0 0
      %6205 = vmatpush1.bf16.msra.mxu0 %v6171
      %6206 = vmatprep.subr.bf16.mxu0 0
      %6207 = vmatpush1.bf16.msra.mxu0 %v6169
      %6208 = vmatprep.subr.bf16.mxu0 0
      %6209 = vmatpush2.bf16.msra.mxu0 0
      %6210 = vmatprep.subr.bf16.mxu0 0
      %6211 = vmatpush2.bf16.msra.mxu0 0
      %6212 = vmatprep.subr.bf16.mxu0 0
      %6213 = vmatpush2.bf16.msra.mxu0 0
      %6214 = vmatprep.subr.bf16.mxu0 0
      %6215 = vmatpush2.bf16.msra.mxu0 0
      %6216 = vmatprep.subr.bf16.mxu0 0
      %6217 = vmatpush2.bf16.msra.mxu0 0
      %6218 = vmatprep.subr.bf16.mxu0 0
      %6219 = vmatpush2.bf16.msra.mxu0 0
      %6220 = vmatprep.subr.bf16.mxu0 0
      %6221 = vmatpush2.bf16.msra.mxu0 0
      %6222 = vmatprep.subr.bf16.mxu0 0
      %6223 = vmatpush2.bf16.msra.mxu0 0
      %6224 = vmatprep.mubr.bf16.mxu0 0
      %6225 = vmatmul.mubr.bf16.gmra.mxu0 %v6181
      %v6226 = vpop.f32.mrf.mxu0
      %v6227 = vadd.f32 0.0, %v6226
      %v6228 = vpop.f32.mrf.mxu0
      %v6229 = vpop.f32.mrf.mxu0
      %v6230 = vadd.f32 0.0, %v6229
      %v6231 = vpop.f32.mrf.mxu0
      %6232 = vmatprep.mubr.bf16.mxu0 0
      %6233 = vmatmul.mubr.bf16.gmra.mxu0 %v6184
      %v6234 = vpop.f32.mrf.mxu0
      %v6235 = vadd.f32 0.0, %v6234
      %v6236 = vpop.f32.mrf.mxu0
      %v6237 = vpop.f32.mrf.mxu0
      %v6238 = vadd.f32 0.0, %v6237
      %v6239 = vpop.f32.mrf.mxu0
      %6240 = vmatprep.mubr.bf16.mxu0 0
      %6241 = vmatmul.mubr.bf16.gmra.mxu0 %v6187
      %v6242 = vpop.f32.mrf.mxu0
      %v6243 = vadd.f32 0.0, %v6242
      %v6244 = vpop.f32.mrf.mxu0
      %v6245 = vpop.f32.mrf.mxu0
      %v6246 = vadd.f32 0.0, %v6245
      %v6247 = vpop.f32.mrf.mxu0
      %6248 = vmatprep.mubr.bf16.mxu0 0
      %6249 = vmatmul.mubr.bf16.gmra.mxu0 %v6190
      %v6250 = vpop.f32.mrf.mxu0
      %v6251 = vadd.f32 0.0, %v6250
      %v6252 = vpop.f32.mrf.mxu0
      %v6253 = vpop.f32.mrf.mxu0
      %v6254 = vadd.f32 0.0, %v6253
      %v6255 = vpop.f32.mrf.mxu0
      %6256 = vdwg.mxu0
      %v6257 = vpack.c.bf16 %v5963, %v5960
      %v6258 = vpack.c.bf16 %v5971, %v5968
      %v6259 = vpack.c.bf16 %v5979, %v5976
      %v6260 = vpack.c.bf16 %v5987, %v5984
      %v6261 = vpack.c.bf16 %v6052, %v6049
      %v6262 = vpack.c.bf16 %v6060, %v6057
      %v6263 = vpack.c.bf16 %v6068, %v6065
      %v6264 = vpack.c.bf16 %v6076, %v6073
      %v6265 = vpack.c.bf16 %v6141, %v6138
      %v6266 = vpack.c.bf16 %v6149, %v6146
      %v6267 = vpack.c.bf16 %v6157, %v6154
      %v6268 = vpack.c.bf16 %v6165, %v6162
      %v6269 = vpack.c.bf16 %v6230, %v6227
      %v6270 = vpack.c.bf16 %v6238, %v6235
      %v6271 = vpack.c.bf16 %v6246, %v6243
      %v6272 = vpack.c.bf16 %v6254, %v6251
      %v6289 = vunpack.c.l.b16 %v6257
      %v6290 = vunpack.c.h.b16 %v6257
      %v6291 = vunpack.c.l.b16 %v6258
      %v6292 = vunpack.c.h.b16 %v6258
      %v6293 = vunpack.c.l.b16 %v6259
      %v6294 = vunpack.c.h.b16 %v6259
      %v6295 = vunpack.c.l.b16 %v6260
      %v6296 = vunpack.c.h.b16 %v6260
      %v6297 = vunpack.c.l.b16 %v6261
      %v6298 = vunpack.c.h.b16 %v6261
      %v6299 = vunpack.c.l.b16 %v6262
      %v6300 = vunpack.c.h.b16 %v6262
      %v6301 = vunpack.c.l.b16 %v6263
      %v6302 = vunpack.c.h.b16 %v6263
      %v6303 = vunpack.c.l.b16 %v6264
      %v6304 = vunpack.c.h.b16 %v6264
      %v6305 = vunpack.c.l.b16 %v6265
      %v6306 = vunpack.c.h.b16 %v6265
      %v6307 = vunpack.c.l.b16 %v6266
      %v6308 = vunpack.c.h.b16 %v6266
      %v6309 = vunpack.c.l.b16 %v6267
      %v6310 = vunpack.c.h.b16 %v6267
      %v6311 = vunpack.c.l.b16 %v6268
      %v6312 = vunpack.c.h.b16 %v6268
      %v6313 = vunpack.c.l.b16 %v6269
      %v6314 = vunpack.c.h.b16 %v6269
      %v6315 = vunpack.c.l.b16 %v6270
      %v6316 = vunpack.c.h.b16 %v6270
      %v6317 = vunpack.c.l.b16 %v6271
      %v6318 = vunpack.c.h.b16 %v6271
      %v6319 = vunpack.c.l.b16 %v6272
      %v6320 = vunpack.c.h.b16 %v6272
      %v6321 = vpack.c.b16 %v6289, %v6289
      %v6322 = vpack.c.b16 %v6290, %v6290
      %v6323 = vpack.c.b16 %v6291, %v6291
      %v6324 = vpack.c.b16 %v6292, %v6292
      %v6325 = vpack.c.b16 %v6293, %v6293
      %v6326 = vpack.c.b16 %v6294, %v6294
      %v6327 = vpack.c.b16 %v6295, %v6295
      %v6328 = vpack.c.b16 %v6296, %v6296
      %v6329 = vpack.c.b16 %v6297, %v6297
      %v6330 = vpack.c.b16 %v6298, %v6298
      %v6331 = vpack.c.b16 %v6299, %v6299
      %v6332 = vpack.c.b16 %v6300, %v6300
      %v6333 = vpack.c.b16 %v6301, %v6301
      %v6334 = vpack.c.b16 %v6302, %v6302
      %v6335 = vpack.c.b16 %v6303, %v6303
      %v6336 = vpack.c.b16 %v6304, %v6304
      %v6337 = vpack.c.b16 %v6305, %v6305
      %v6338 = vpack.c.b16 %v6306, %v6306
      %v6339 = vpack.c.b16 %v6307, %v6307
      %v6340 = vpack.c.b16 %v6308, %v6308
      %v6341 = vpack.c.b16 %v6309, %v6309
      %v6342 = vpack.c.b16 %v6310, %v6310
      %v6343 = vpack.c.b16 %v6311, %v6311
      %v6344 = vpack.c.b16 %v6312, %v6312
      %v6345 = vpack.c.b16 %v6313, %v6313
      %v6346 = vpack.c.b16 %v6314, %v6314
      %v6347 = vpack.c.b16 %v6315, %v6315
      %v6348 = vpack.c.b16 %v6316, %v6316
      %v6349 = vpack.c.b16 %v6317, %v6317
      %v6350 = vpack.c.b16 %v6318, %v6318
      %v6351 = vpack.c.b16 %v6319, %v6319
      %v6352 = vpack.c.b16 %v6320, %v6320
      %6353 = vrot.lane.b32.xlu0 %v6321, 16
      %v6354 = vpop.permute.xlu0 %6353
      %6355 = vrot.lane.b32.xlu0 %v6322, 16
      %v6356 = vpop.permute.xlu0 %6355
      %6357 = vrot.lane.b32.xlu0 %v6323, 16
      %v6358 = vpop.permute.xlu0 %6357
      %6359 = vrot.lane.b32.xlu0 %v6324, 16
      %v6360 = vpop.permute.xlu0 %6359
      %6361 = vrot.lane.b32.xlu0 %v6325, 16
      %v6362 = vpop.permute.xlu0 %6361
      %6363 = vrot.lane.b32.xlu0 %v6326, 16
      %v6364 = vpop.permute.xlu0 %6363
      %6365 = vrot.lane.b32.xlu0 %v6327, 16
      %v6366 = vpop.permute.xlu0 %6365
      %6367 = vrot.lane.b32.xlu0 %v6328, 16
      %v6368 = vpop.permute.xlu0 %6367
      %6369 = vrot.lane.b32.xlu0 %v6329, 16
      %v6370 = vpop.permute.xlu0 %6369
      %6371 = vrot.lane.b32.xlu0 %v6330, 16
      %v6372 = vpop.permute.xlu0 %6371
      %6373 = vrot.lane.b32.xlu0 %v6331, 16
      %v6374 = vpop.permute.xlu0 %6373
      %6375 = vrot.lane.b32.xlu0 %v6332, 16
      %v6376 = vpop.permute.xlu0 %6375
      %6377 = vrot.lane.b32.xlu0 %v6333, 16
      %v6378 = vpop.permute.xlu0 %6377
      %6379 = vrot.lane.b32.xlu0 %v6334, 16
      %v6380 = vpop.permute.xlu0 %6379
      %6381 = vrot.lane.b32.xlu0 %v6335, 16
      %v6382 = vpop.permute.xlu0 %6381
      %6383 = vrot.lane.b32.xlu0 %v6336, 16
      %v6384 = vpop.permute.xlu0 %6383
      %6385 = vrot.lane.b32.xlu0 %v6337, 16
      %v6386 = vpop.permute.xlu0 %6385
      %6387 = vrot.lane.b32.xlu0 %v6338, 16
      %v6388 = vpop.permute.xlu0 %6387
      %6389 = vrot.lane.b32.xlu0 %v6339, 16
      %v6390 = vpop.permute.xlu0 %6389
      %6391 = vrot.lane.b32.xlu0 %v6340, 16
      %v6392 = vpop.permute.xlu0 %6391
      %6393 = vrot.lane.b32.xlu0 %v6341, 16
      %v6394 = vpop.permute.xlu0 %6393
      %6395 = vrot.lane.b32.xlu0 %v6342, 16
      %v6396 = vpop.permute.xlu0 %6395
      %6397 = vrot.lane.b32.xlu0 %v6343, 16
      %v6398 = vpop.permute.xlu0 %6397
      %6399 = vrot.lane.b32.xlu0 %v6344, 16
      %v6400 = vpop.permute.xlu0 %6399
      %6401 = vrot.lane.b32.xlu0 %v6345, 16
      %v6402 = vpop.permute.xlu0 %6401
      %6403 = vrot.lane.b32.xlu0 %v6346, 16
      %v6404 = vpop.permute.xlu0 %6403
      %6405 = vrot.lane.b32.xlu0 %v6347, 16
      %v6406 = vpop.permute.xlu0 %6405
      %6407 = vrot.lane.b32.xlu0 %v6348, 16
      %v6408 = vpop.permute.xlu0 %6407
      %6409 = vrot.lane.b32.xlu0 %v6349, 16
      %v6410 = vpop.permute.xlu0 %6409
      %6411 = vrot.lane.b32.xlu0 %v6350, 16
      %v6412 = vpop.permute.xlu0 %6411
      %6413 = vrot.lane.b32.xlu0 %v6351, 16
      %v6414 = vpop.permute.xlu0 %6413
      %6415 = vrot.lane.b32.xlu0 %v6352, 16
      %v6416 = vpop.permute.xlu0 %6415
      %vm6449 = vcmask 191616
      %6450 = vst.msk [vmem:[#allocation4] sm:$0xf] %vm6449, %v6354
      %6451 = vst.msk [vmem:[#allocation4 + $0x4] sm:$0xf] %vm6449, %v6356
      %6452 = vst.msk [vmem:[#allocation4 + $0x8] sm:$0xf] %vm6449, %v6358
      %6453 = vst.msk [vmem:[#allocation4 + $0xc] sm:$0xf] %vm6449, %v6360
      %6454 = vst.msk [vmem:[#allocation4 + $0x10] sm:$0xf] %vm6449, %v6362
      %6455 = vst.msk [vmem:[#allocation4 + $0x14] sm:$0xf] %vm6449, %v6364
      %6456 = vst.msk [vmem:[#allocation4 + $0x18] sm:$0xf] %vm6449, %v6366
      %6457 = vst.msk [vmem:[#allocation4 + $0x1c] sm:$0xf] %vm6449, %v6368
      %6458 = vst.msk [vmem:[#allocation4 + $0x20] sm:$0xf] %vm6449, %v6370
      %6459 = vst.msk [vmem:[#allocation4 + $0x24] sm:$0xf] %vm6449, %v6372
      %6460 = vst.msk [vmem:[#allocation4 + $0x28] sm:$0xf] %vm6449, %v6374
      %6461 = vst.msk [vmem:[#allocation4 + $0x2c] sm:$0xf] %vm6449, %v6376
      %6462 = vst.msk [vmem:[#allocation4 + $0x30] sm:$0xf] %vm6449, %v6378
      %6463 = vst.msk [vmem:[#allocation4 + $0x34] sm:$0xf] %vm6449, %v6380
      %6464 = vst.msk [vmem:[#allocation4 + $0x38] sm:$0xf] %vm6449, %v6382
      %6465 = vst.msk [vmem:[#allocation4 + $0x3c] sm:$0xf] %vm6449, %v6384
      %6466 = vst.msk [vmem:[#allocation4 + $0x40] sm:$0xf] %vm6449, %v6386
      %6467 = vst.msk [vmem:[#allocation4 + $0x44] sm:$0xf] %vm6449, %v6388
      %6468 = vst.msk [vmem:[#allocation4 + $0x48] sm:$0xf] %vm6449, %v6390
      %6469 = vst.msk [vmem:[#allocation4 + $0x4c] sm:$0xf] %vm6449, %v6392
      %6470 = vst.msk [vmem:[#allocation4 + $0x50] sm:$0xf] %vm6449, %v6394
      %6471 = vst.msk [vmem:[#allocation4 + $0x54] sm:$0xf] %vm6449, %v6396
      %6472 = vst.msk [vmem:[#allocation4 + $0x58] sm:$0xf] %vm6449, %v6398
      %6473 = vst.msk [vmem:[#allocation4 + $0x5c] sm:$0xf] %vm6449, %v6400
      %6474 = vst.msk [vmem:[#allocation4 + $0x60] sm:$0xf] %vm6449, %v6402
      %6475 = vst.msk [vmem:[#allocation4 + $0x64] sm:$0xf] %vm6449, %v6404
      %6476 = vst.msk [vmem:[#allocation4 + $0x68] sm:$0xf] %vm6449, %v6406
      %6477 = vst.msk [vmem:[#allocation4 + $0x6c] sm:$0xf] %vm6449, %v6408
      %6478 = vst.msk [vmem:[#allocation4 + $0x70] sm:$0xf] %vm6449, %v6410
      %6479 = vst.msk [vmem:[#allocation4 + $0x74] sm:$0xf] %vm6449, %v6412
      %6480 = vst.msk [vmem:[#allocation4 + $0x78] sm:$0xf] %vm6449, %v6414
      %6481 = vst.msk [vmem:[#allocation4 + $0x7c] sm:$0xf] %vm6449, %v6416
      %s6482 = scalar_lea.vmem %s536, 192
      %v6483 = vld [vmem:[%s6482] sm:$0xff]
      %v6484 = vld [vmem:[%s6482 + $0x8] sm:$0xff]
      %v6485 = vld [vmem:[%s6482 + $0x10] sm:$0xff]
      %v6486 = vld [vmem:[%s6482 + $0x18] sm:$0xff]
      %v6487 = vld [vmem:[%s6482 + $0x20] sm:$0xff]
      %v6488 = vld [vmem:[%s6482 + $0x28] sm:$0xff]
      %v6489 = vld [vmem:[%s6482 + $0x30] sm:$0xff]
      %v6490 = vld [vmem:[%s6482 + $0x38] sm:$0xff]
      %6491 = vrot.lane.b32.xlu0 %v2062, 104
      %v6492 = vpop.permute.xlu0 %6491
      %6493 = vrot.lane.b32.xlu0 %v2063, 104
      %v6494 = vpop.permute.xlu0 %6493
      %6495 = vrot.lane.b32.xlu0 %v2064, 104
      %v6496 = vpop.permute.xlu0 %6495
      %6497 = vrot.lane.b32.xlu0 %v2065, 104
      %v6498 = vpop.permute.xlu0 %6497
      %6499 = vrot.lane.b32.xlu0 %v2355, 104
      %v6500 = vpop.permute.xlu0 %6499
      %6501 = vrot.lane.b32.xlu0 %v2356, 104
      %v6502 = vpop.permute.xlu0 %6501
      %6503 = vrot.lane.b32.xlu0 %v2357, 104
      %v6504 = vpop.permute.xlu0 %6503
      %6505 = vrot.lane.b32.xlu0 %v2358, 104
      %v6506 = vpop.permute.xlu0 %6505
      %v6508 = vsel %vm2435, %v6492, 0
      %v6511 = vsel %vm2435, %v6494, 0
      %v6514 = vsel %vm2435, %v6496, 0
      %v6517 = vsel %vm2435, %v6498, 0
      %v6520 = vsel %vm2435, %v6500, 0
      %v6523 = vsel %vm2435, %v6502, 0
      %v6526 = vsel %vm2435, %v6504, 0
      %v6529 = vsel %vm2435, %v6506, 0
      %6531 = vmatprep.subr.bf16.mxu0 0
      %6532 = vmatpush1.bf16.xpose.msra.mxu0 0
      %6533 = vmatprep.subr.bf16.mxu0 0
      %6534 = vmatpush1.bf16.xpose.msra.mxu0 0
      %6535 = vmatprep.subr.bf16.mxu0 0
      %6536 = vmatpush1.bf16.xpose.msra.mxu0 0
      %6537 = vmatprep.subr.bf16.mxu0 0
      %6538 = vmatpush1.bf16.xpose.msra.mxu0 0
      %6539 = vmatprep.subr.bf16.mxu0 0
      %6540 = vmatpush1.bf16.xpose.msra.mxu0 %v6529
      %6541 = vmatprep.subr.bf16.mxu0 0
      %6542 = vmatpush1.bf16.xpose.msra.mxu0 %v6526
      %6543 = vmatprep.subr.bf16.mxu0 0
      %6544 = vmatpush1.bf16.xpose.msra.mxu0 %v6523
      %6545 = vmatprep.subr.bf16.mxu0 0
      %6546 = vmatpush1.bf16.xpose.msra.mxu0 %v6520
      %6547 = vmatprep.subr.bf16.mxu0 0
      %6548 = vmatpush2.bf16.xpose.msra.mxu0 0
      %6549 = vmatprep.subr.bf16.mxu0 0
      %6550 = vmatpush2.bf16.xpose.msra.mxu0 0
      %6551 = vmatprep.subr.bf16.mxu0 0
      %6552 = vmatpush2.bf16.xpose.msra.mxu0 0
      %6553 = vmatprep.subr.bf16.mxu0 0
      %6554 = vmatpush2.bf16.xpose.msra.mxu0 0
      %6555 = vmatprep.subr.bf16.mxu0 0
      %6556 = vmatpush2.bf16.xpose.msra.mxu0 0
      %6557 = vmatprep.subr.bf16.mxu0 0
      %6558 = vmatpush2.bf16.xpose.msra.mxu0 0
      %6559 = vmatprep.subr.bf16.mxu0 0
      %6560 = vmatpush2.bf16.xpose.msra.mxu0 0
      %6561 = vmatprep.subr.bf16.mxu0 0
      %6562 = vmatpush2.bf16.xpose.msra.mxu0 0
      %6563 = vmatprep.mubr.bf16.mxu0 0
      %6564 = vmatmul.mubr.bf16.gmra.mxu0 %v6508
      %v6565 = vpop.f32.mrf.mxu0
      %v6566 = vadd.f32 %v6483, %v6565
      %v6567 = vpop.f32.mrf.mxu0
      %v6568 = vpop.f32.mrf.mxu0
      %v6569 = vadd.f32 %v6484, %v6568
      %v6570 = vpop.f32.mrf.mxu0
      %6571 = vmatprep.mubr.bf16.mxu0 0
      %6572 = vmatmul.mubr.bf16.gmra.mxu0 %v6511
      %v6573 = vpop.f32.mrf.mxu0
      %v6574 = vadd.f32 %v6485, %v6573
      %v6575 = vpop.f32.mrf.mxu0
      %v6576 = vpop.f32.mrf.mxu0
      %v6577 = vadd.f32 %v6486, %v6576
      %v6578 = vpop.f32.mrf.mxu0
      %6579 = vmatprep.mubr.bf16.mxu0 0
      %6580 = vmatmul.mubr.bf16.gmra.mxu0 %v6514
      %v6581 = vpop.f32.mrf.mxu0
      %v6582 = vadd.f32 %v6487, %v6581
      %v6583 = vpop.f32.mrf.mxu0
      %v6584 = vpop.f32.mrf.mxu0
      %v6585 = vadd.f32 %v6488, %v6584
      %v6586 = vpop.f32.mrf.mxu0
      %6587 = vmatprep.mubr.bf16.mxu0 0
      %6588 = vmatmul.mubr.bf16.gmra.mxu0 %v6517
      %v6589 = vpop.f32.mrf.mxu0
      %v6590 = vadd.f32 %v6489, %v6589
      %v6591 = vpop.f32.mrf.mxu0
      %v6592 = vpop.f32.mrf.mxu0
      %v6593 = vadd.f32 %v6490, %v6592
      %v6594 = vpop.f32.mrf.mxu0
      %6595 = vdwg.mxu0
      %6596 = vrot.lane.b32.xlu0 %v2066, 104
      %v6597 = vpop.permute.xlu0 %6596
      %6598 = vrot.lane.b32.xlu0 %v2067, 104
      %v6599 = vpop.permute.xlu0 %6598
      %6600 = vrot.lane.b32.xlu0 %v2068, 104
      %v6601 = vpop.permute.xlu0 %6600
      %6602 = vrot.lane.b32.xlu0 %v2069, 104
      %v6603 = vpop.permute.xlu0 %6602
      %6604 = vrot.lane.b32.xlu0 %v2359, 104
      %v6605 = vpop.permute.xlu0 %6604
      %6606 = vrot.lane.b32.xlu0 %v2360, 104
      %v6607 = vpop.permute.xlu0 %6606
      %6608 = vrot.lane.b32.xlu0 %v2361, 104
      %v6609 = vpop.permute.xlu0 %6608
      %6610 = vrot.lane.b32.xlu0 %v2362, 104
      %v6611 = vpop.permute.xlu0 %6610
      %v6613 = vsel %vm2435, %v6597, 0
      %v6616 = vsel %vm2435, %v6599, 0
      %v6619 = vsel %vm2435, %v6601, 0
      %v6622 = vsel %vm2435, %v6603, 0
      %v6625 = vsel %vm2435, %v6605, 0
      %v6628 = vsel %vm2435, %v6607, 0
      %v6631 = vsel %vm2435, %v6609, 0
      %v6634 = vsel %vm2435, %v6611, 0
      %6636 = vmatprep.subr.bf16.mxu0 0
      %6637 = vmatpush1.bf16.xpose.msra.mxu0 0
      %6638 = vmatprep.subr.bf16.mxu0 0
      %6639 = vmatpush1.bf16.xpose.msra.mxu0 0
      %6640 = vmatprep.subr.bf16.mxu0 0
      %6641 = vmatpush1.bf16.xpose.msra.mxu0 0
      %6642 = vmatprep.subr.bf16.mxu0 0
      %6643 = vmatpush1.bf16.xpose.msra.mxu0 0
      %6644 = vmatprep.subr.bf16.mxu0 0
      %6645 = vmatpush1.bf16.xpose.msra.mxu0 %v6634
      %6646 = vmatprep.subr.bf16.mxu0 0
      %6647 = vmatpush1.bf16.xpose.msra.mxu0 %v6631
      %6648 = vmatprep.subr.bf16.mxu0 0
      %6649 = vmatpush1.bf16.xpose.msra.mxu0 %v6628
      %6650 = vmatprep.subr.bf16.mxu0 0
      %6651 = vmatpush1.bf16.xpose.msra.mxu0 %v6625
      %6652 = vmatprep.subr.bf16.mxu0 0
      %6653 = vmatpush2.bf16.xpose.msra.mxu0 0
      %6654 = vmatprep.subr.bf16.mxu0 0
      %6655 = vmatpush2.bf16.xpose.msra.mxu0 0
      %6656 = vmatprep.subr.bf16.mxu0 0
      %6657 = vmatpush2.bf16.xpose.msra.mxu0 0
      %6658 = vmatprep.subr.bf16.mxu0 0
      %6659 = vmatpush2.bf16.xpose.msra.mxu0 0
      %6660 = vmatprep.subr.bf16.mxu0 0
      %6661 = vmatpush2.bf16.xpose.msra.mxu0 0
      %6662 = vmatprep.subr.bf16.mxu0 0
      %6663 = vmatpush2.bf16.xpose.msra.mxu0 0
      %6664 = vmatprep.subr.bf16.mxu0 0
      %6665 = vmatpush2.bf16.xpose.msra.mxu0 0
      %6666 = vmatprep.subr.bf16.mxu0 0
      %6667 = vmatpush2.bf16.xpose.msra.mxu0 0
      %6668 = vmatprep.mubr.bf16.mxu0 0
      %6669 = vmatmul.mubr.bf16.gmra.mxu0 %v6613
      %v6670 = vpop.f32.mrf.mxu0
      %v6671 = vadd.f32 %v6483, %v6670
      %v6672 = vpop.f32.mrf.mxu0
      %v6673 = vpop.f32.mrf.mxu0
      %v6674 = vadd.f32 %v6484, %v6673
      %v6675 = vpop.f32.mrf.mxu0
      %6676 = vmatprep.mubr.bf16.mxu0 0
      %6677 = vmatmul.mubr.bf16.gmra.mxu0 %v6616
      %v6678 = vpop.f32.mrf.mxu0
      %v6679 = vadd.f32 %v6485, %v6678
      %v6680 = vpop.f32.mrf.mxu0
      %v6681 = vpop.f32.mrf.mxu0
      %v6682 = vadd.f32 %v6486, %v6681
      %v6683 = vpop.f32.mrf.mxu0
      %6684 = vmatprep.mubr.bf16.mxu0 0
      %6685 = vmatmul.mubr.bf16.gmra.mxu0 %v6619
      %v6686 = vpop.f32.mrf.mxu0
      %v6687 = vadd.f32 %v6487, %v6686
      %v6688 = vpop.f32.mrf.mxu0
      %v6689 = vpop.f32.mrf.mxu0
      %v6690 = vadd.f32 %v6488, %v6689
      %v6691 = vpop.f32.mrf.mxu0
      %6692 = vmatprep.mubr.bf16.mxu0 0
      %6693 = vmatmul.mubr.bf16.gmra.mxu0 %v6622
      %v6694 = vpop.f32.mrf.mxu0
      %v6695 = vadd.f32 %v6489, %v6694
      %v6696 = vpop.f32.mrf.mxu0
      %v6697 = vpop.f32.mrf.mxu0
      %v6698 = vadd.f32 %v6490, %v6697
      %v6699 = vpop.f32.mrf.mxu0
      %6700 = vdwg.mxu0
      %6701 = vrot.lane.b32.xlu0 %v2070, 104
      %v6702 = vpop.permute.xlu0 %6701
      %6703 = vrot.lane.b32.xlu0 %v2071, 104
      %v6704 = vpop.permute.xlu0 %6703
      %6705 = vrot.lane.b32.xlu0 %v2072, 104
      %v6706 = vpop.permute.xlu0 %6705
      %6707 = vrot.lane.b32.xlu0 %v2073, 104
      %v6708 = vpop.permute.xlu0 %6707
      %6709 = vrot.lane.b32.xlu0 %v2363, 104
      %v6710 = vpop.permute.xlu0 %6709
      %6711 = vrot.lane.b32.xlu0 %v2364, 104
      %v6712 = vpop.permute.xlu0 %6711
      %6713 = vrot.lane.b32.xlu0 %v2365, 104
      %v6714 = vpop.permute.xlu0 %6713
      %6715 = vrot.lane.b32.xlu0 %v2366, 104
      %v6716 = vpop.permute.xlu0 %6715
      %v6718 = vsel %vm2435, %v6702, 0
      %v6721 = vsel %vm2435, %v6704, 0
      %v6724 = vsel %vm2435, %v6706, 0
      %v6727 = vsel %vm2435, %v6708, 0
      %v6730 = vsel %vm2435, %v6710, 0
      %v6733 = vsel %vm2435, %v6712, 0
      %v6736 = vsel %vm2435, %v6714, 0
      %v6739 = vsel %vm2435, %v6716, 0
      %6741 = vmatprep.subr.bf16.mxu0 0
      %6742 = vmatpush1.bf16.xpose.msra.mxu0 0
      %6743 = vmatprep.subr.bf16.mxu0 0
      %6744 = vmatpush1.bf16.xpose.msra.mxu0 0
      %6745 = vmatprep.subr.bf16.mxu0 0
      %6746 = vmatpush1.bf16.xpose.msra.mxu0 0
      %6747 = vmatprep.subr.bf16.mxu0 0
      %6748 = vmatpush1.bf16.xpose.msra.mxu0 0
      %6749 = vmatprep.subr.bf16.mxu0 0
      %6750 = vmatpush1.bf16.xpose.msra.mxu0 %v6739
      %6751 = vmatprep.subr.bf16.mxu0 0
      %6752 = vmatpush1.bf16.xpose.msra.mxu0 %v6736
      %6753 = vmatprep.subr.bf16.mxu0 0
      %6754 = vmatpush1.bf16.xpose.msra.mxu0 %v6733
      %6755 = vmatprep.subr.bf16.mxu0 0
      %6756 = vmatpush1.bf16.xpose.msra.mxu0 %v6730
      %6757 = vmatprep.subr.bf16.mxu0 0
      %6758 = vmatpush2.bf16.xpose.msra.mxu0 0
      %6759 = vmatprep.subr.bf16.mxu0 0
      %6760 = vmatpush2.bf16.xpose.msra.mxu0 0
      %6761 = vmatprep.subr.bf16.mxu0 0
      %6762 = vmatpush2.bf16.xpose.msra.mxu0 0
      %6763 = vmatprep.subr.bf16.mxu0 0
      %6764 = vmatpush2.bf16.xpose.msra.mxu0 0
      %6765 = vmatprep.subr.bf16.mxu0 0
      %6766 = vmatpush2.bf16.xpose.msra.mxu0 0
      %6767 = vmatprep.subr.bf16.mxu0 0
      %6768 = vmatpush2.bf16.xpose.msra.mxu0 0
      %6769 = vmatprep.subr.bf16.mxu0 0
      %6770 = vmatpush2.bf16.xpose.msra.mxu0 0
      %6771 = vmatprep.subr.bf16.mxu0 0
      %6772 = vmatpush2.bf16.xpose.msra.mxu0 0
      %6773 = vmatprep.mubr.bf16.mxu0 0
      %6774 = vmatmul.mubr.bf16.gmra.mxu0 %v6718
      %v6775 = vpop.f32.mrf.mxu0
      %v6776 = vadd.f32 %v6483, %v6775
      %v6777 = vpop.f32.mrf.mxu0
      %v6778 = vpop.f32.mrf.mxu0
      %v6779 = vadd.f32 %v6484, %v6778
      %v6780 = vpop.f32.mrf.mxu0
      %6781 = vmatprep.mubr.bf16.mxu0 0
      %6782 = vmatmul.mubr.bf16.gmra.mxu0 %v6721
      %v6783 = vpop.f32.mrf.mxu0
      %v6784 = vadd.f32 %v6485, %v6783
      %v6785 = vpop.f32.mrf.mxu0
      %v6786 = vpop.f32.mrf.mxu0
      %v6787 = vadd.f32 %v6486, %v6786
      %v6788 = vpop.f32.mrf.mxu0
      %6789 = vmatprep.mubr.bf16.mxu0 0
      %6790 = vmatmul.mubr.bf16.gmra.mxu0 %v6724
      %v6791 = vpop.f32.mrf.mxu0
      %v6792 = vadd.f32 %v6487, %v6791
      %v6793 = vpop.f32.mrf.mxu0
      %v6794 = vpop.f32.mrf.mxu0
      %v6795 = vadd.f32 %v6488, %v6794
      %v6796 = vpop.f32.mrf.mxu0
      %6797 = vmatprep.mubr.bf16.mxu0 0
      %6798 = vmatmul.mubr.bf16.gmra.mxu0 %v6727
      %v6799 = vpop.f32.mrf.mxu0
      %v6800 = vadd.f32 %v6489, %v6799
      %v6801 = vpop.f32.mrf.mxu0
      %v6802 = vpop.f32.mrf.mxu0
      %v6803 = vadd.f32 %v6490, %v6802
      %v6804 = vpop.f32.mrf.mxu0
      %6805 = vdwg.mxu0
      %6806 = vrot.lane.b32.xlu0 %v2074, 104
      %v6807 = vpop.permute.xlu0 %6806
      %6808 = vrot.lane.b32.xlu0 %v2075, 104
      %v6809 = vpop.permute.xlu0 %6808
      %6810 = vrot.lane.b32.xlu0 %v2076, 104
      %v6811 = vpop.permute.xlu0 %6810
      %6812 = vrot.lane.b32.xlu0 %v2077, 104
      %v6813 = vpop.permute.xlu0 %6812
      %6814 = vrot.lane.b32.xlu0 %v2367, 104
      %v6815 = vpop.permute.xlu0 %6814
      %6816 = vrot.lane.b32.xlu0 %v2368, 104
      %v6817 = vpop.permute.xlu0 %6816
      %6818 = vrot.lane.b32.xlu0 %v2369, 104
      %v6819 = vpop.permute.xlu0 %6818
      %6820 = vrot.lane.b32.xlu0 %v2370, 104
      %v6821 = vpop.permute.xlu0 %6820
      %v6823 = vsel %vm2435, %v6807, 0
      %v6826 = vsel %vm2435, %v6809, 0
      %v6829 = vsel %vm2435, %v6811, 0
      %v6832 = vsel %vm2435, %v6813, 0
      %v6835 = vsel %vm2435, %v6815, 0
      %v6838 = vsel %vm2435, %v6817, 0
      %v6841 = vsel %vm2435, %v6819, 0
      %v6844 = vsel %vm2435, %v6821, 0
      %6846 = vmatprep.subr.bf16.mxu0 0
      %6847 = vmatpush1.bf16.xpose.msra.mxu0 0
      %6848 = vmatprep.subr.bf16.mxu0 0
      %6849 = vmatpush1.bf16.xpose.msra.mxu0 0
      %6850 = vmatprep.subr.bf16.mxu0 0
      %6851 = vmatpush1.bf16.xpose.msra.mxu0 0
      %6852 = vmatprep.subr.bf16.mxu0 0
      %6853 = vmatpush1.bf16.xpose.msra.mxu0 0
      %6854 = vmatprep.subr.bf16.mxu0 0
      %6855 = vmatpush1.bf16.xpose.msra.mxu0 %v6844
      %6856 = vmatprep.subr.bf16.mxu0 0
      %6857 = vmatpush1.bf16.xpose.msra.mxu0 %v6841
      %6858 = vmatprep.subr.bf16.mxu0 0
      %6859 = vmatpush1.bf16.xpose.msra.mxu0 %v6838
      %6860 = vmatprep.subr.bf16.mxu0 0
      %6861 = vmatpush1.bf16.xpose.msra.mxu0 %v6835
      %6862 = vmatprep.subr.bf16.mxu0 0
      %6863 = vmatpush2.bf16.xpose.msra.mxu0 0
      %6864 = vmatprep.subr.bf16.mxu0 0
      %6865 = vmatpush2.bf16.xpose.msra.mxu0 0
      %6866 = vmatprep.subr.bf16.mxu0 0
      %6867 = vmatpush2.bf16.xpose.msra.mxu0 0
      %6868 = vmatprep.subr.bf16.mxu0 0
      %6869 = vmatpush2.bf16.xpose.msra.mxu0 0
      %6870 = vmatprep.subr.bf16.mxu0 0
      %6871 = vmatpush2.bf16.xpose.msra.mxu0 0
      %6872 = vmatprep.subr.bf16.mxu0 0
      %6873 = vmatpush2.bf16.xpose.msra.mxu0 0
      %6874 = vmatprep.subr.bf16.mxu0 0
      %6875 = vmatpush2.bf16.xpose.msra.mxu0 0
      %6876 = vmatprep.subr.bf16.mxu0 0
      %6877 = vmatpush2.bf16.xpose.msra.mxu0 0
      %6878 = vmatprep.mubr.bf16.mxu0 0
      %6879 = vmatmul.mubr.bf16.gmra.mxu0 %v6823
      %v6880 = vpop.f32.mrf.mxu0
      %v6881 = vadd.f32 %v6483, %v6880
      %v6882 = vpop.f32.mrf.mxu0
      %v6883 = vpop.f32.mrf.mxu0
      %v6884 = vadd.f32 %v6484, %v6883
      %v6885 = vpop.f32.mrf.mxu0
      %6886 = vmatprep.mubr.bf16.mxu0 0
      %6887 = vmatmul.mubr.bf16.gmra.mxu0 %v6826
      %v6888 = vpop.f32.mrf.mxu0
      %v6889 = vadd.f32 %v6485, %v6888
      %v6890 = vpop.f32.mrf.mxu0
      %v6891 = vpop.f32.mrf.mxu0
      %v6892 = vadd.f32 %v6486, %v6891
      %v6893 = vpop.f32.mrf.mxu0
      %6894 = vmatprep.mubr.bf16.mxu0 0
      %6895 = vmatmul.mubr.bf16.gmra.mxu0 %v6829
      %v6896 = vpop.f32.mrf.mxu0
      %v6897 = vadd.f32 %v6487, %v6896
      %v6898 = vpop.f32.mrf.mxu0
      %v6899 = vpop.f32.mrf.mxu0
      %v6900 = vadd.f32 %v6488, %v6899
      %v6901 = vpop.f32.mrf.mxu0
      %6902 = vmatprep.mubr.bf16.mxu0 0
      %6903 = vmatmul.mubr.bf16.gmra.mxu0 %v6832
      %v6904 = vpop.f32.mrf.mxu0
      %v6905 = vadd.f32 %v6489, %v6904
      %v6906 = vpop.f32.mrf.mxu0
      %v6907 = vpop.f32.mrf.mxu0
      %v6908 = vadd.f32 %v6490, %v6907
      %v6909 = vpop.f32.mrf.mxu0
      %6910 = vdwg.mxu0
      %v6911 = vsel %vm2792, %v6566, -inf
      %6912 = vmax.xlane.f32.xlu0 %v6911
      %v6913 = vpop.xlane.xlu0 %6912
      %v6914 = vsel %vm2792, %v6569, -inf
      %6915 = vmax.xlane.f32.xlu0 %v6914
      %v6916 = vpop.xlane.xlu0 %6915
      %v6917 = vsel %vm2792, %v6574, -inf
      %6918 = vmax.xlane.f32.xlu0 %v6917
      %v6919 = vpop.xlane.xlu0 %6918
      %v6920 = vsel %vm2792, %v6577, -inf
      %6921 = vmax.xlane.f32.xlu0 %v6920
      %v6922 = vpop.xlane.xlu0 %6921
      %v6923 = vsel %vm2792, %v6582, -inf
      %6924 = vmax.xlane.f32.xlu0 %v6923
      %v6925 = vpop.xlane.xlu0 %6924
      %v6926 = vsel %vm2792, %v6585, -inf
      %6927 = vmax.xlane.f32.xlu0 %v6926
      %v6928 = vpop.xlane.xlu0 %6927
      %v6929 = vsel %vm2792, %v6590, -inf
      %6930 = vmax.xlane.f32.xlu0 %v6929
      %v6931 = vpop.xlane.xlu0 %6930
      %v6932 = vsel %vm2792, %v6593, -inf
      %6933 = vmax.xlane.f32.xlu0 %v6932
      %v6934 = vpop.xlane.xlu0 %6933
      %v6935 = vsel %vm2792, %v6671, -inf
      %6936 = vmax.xlane.f32.xlu0 %v6935
      %v6937 = vpop.xlane.xlu0 %6936
      %v6938 = vsel %vm2792, %v6674, -inf
      %6939 = vmax.xlane.f32.xlu0 %v6938
      %v6940 = vpop.xlane.xlu0 %6939
      %v6941 = vsel %vm2792, %v6679, -inf
      %6942 = vmax.xlane.f32.xlu0 %v6941
      %v6943 = vpop.xlane.xlu0 %6942
      %v6944 = vsel %vm2792, %v6682, -inf
      %6945 = vmax.xlane.f32.xlu0 %v6944
      %v6946 = vpop.xlane.xlu0 %6945
      %v6947 = vsel %vm2792, %v6687, -inf
      %6948 = vmax.xlane.f32.xlu0 %v6947
      %v6949 = vpop.xlane.xlu0 %6948
      %v6950 = vsel %vm2792, %v6690, -inf
      %6951 = vmax.xlane.f32.xlu0 %v6950
      %v6952 = vpop.xlane.xlu0 %6951
      %v6953 = vsel %vm2792, %v6695, -inf
      %6954 = vmax.xlane.f32.xlu0 %v6953
      %v6955 = vpop.xlane.xlu0 %6954
      %v6956 = vsel %vm2792, %v6698, -inf
      %6957 = vmax.xlane.f32.xlu0 %v6956
      %v6958 = vpop.xlane.xlu0 %6957
      %v6959 = vsel %vm2792, %v6776, -inf
      %6960 = vmax.xlane.f32.xlu0 %v6959
      %v6961 = vpop.xlane.xlu0 %6960
      %v6962 = vsel %vm2792, %v6779, -inf
      %6963 = vmax.xlane.f32.xlu0 %v6962
      %v6964 = vpop.xlane.xlu0 %6963
      %v6965 = vsel %vm2792, %v6784, -inf
      %6966 = vmax.xlane.f32.xlu0 %v6965
      %v6967 = vpop.xlane.xlu0 %6966
      %v6968 = vsel %vm2792, %v6787, -inf
      %6969 = vmax.xlane.f32.xlu0 %v6968
      %v6970 = vpop.xlane.xlu0 %6969
      %v6971 = vsel %vm2792, %v6792, -inf
      %6972 = vmax.xlane.f32.xlu0 %v6971
      %v6973 = vpop.xlane.xlu0 %6972
      %v6974 = vsel %vm2792, %v6795, -inf
      %6975 = vmax.xlane.f32.xlu0 %v6974
      %v6976 = vpop.xlane.xlu0 %6975
      %v6977 = vsel %vm2792, %v6800, -inf
      %6978 = vmax.xlane.f32.xlu0 %v6977
      %v6979 = vpop.xlane.xlu0 %6978
      %v6980 = vsel %vm2792, %v6803, -inf
      %6981 = vmax.xlane.f32.xlu0 %v6980
      %v6982 = vpop.xlane.xlu0 %6981
      %v6983 = vsel %vm2792, %v6881, -inf
      %6984 = vmax.xlane.f32.xlu0 %v6983
      %v6985 = vpop.xlane.xlu0 %6984
      %v6986 = vsel %vm2792, %v6884, -inf
      %6987 = vmax.xlane.f32.xlu0 %v6986
      %v6988 = vpop.xlane.xlu0 %6987
      %v6989 = vsel %vm2792, %v6889, -inf
      %6990 = vmax.xlane.f32.xlu0 %v6989
      %v6991 = vpop.xlane.xlu0 %6990
      %v6992 = vsel %vm2792, %v6892, -inf
      %6993 = vmax.xlane.f32.xlu0 %v6992
      %v6994 = vpop.xlane.xlu0 %6993
      %v6995 = vsel %vm2792, %v6897, -inf
      %6996 = vmax.xlane.f32.xlu0 %v6995
      %v6997 = vpop.xlane.xlu0 %6996
      %v6998 = vsel %vm2792, %v6900, -inf
      %6999 = vmax.xlane.f32.xlu0 %v6998
      %v7000 = vpop.xlane.xlu0 %6999
      %v7001 = vsel %vm2792, %v6905, -inf
      %7002 = vmax.xlane.f32.xlu0 %v7001
      %v7003 = vpop.xlane.xlu0 %7002
      %v7004 = vsel %vm2792, %v6908, -inf
      %7005 = vmax.xlane.f32.xlu0 %v7004
      %v7006 = vpop.xlane.xlu0 %7005
      %v7007 = vsub.f32 %v6566, %v6913
      %v7008 = vsub.f32 %v6569, %v6916
      %v7009 = vsub.f32 %v6574, %v6919
      %v7010 = vsub.f32 %v6577, %v6922
      %v7011 = vsub.f32 %v6582, %v6925
      %v7012 = vsub.f32 %v6585, %v6928
      %v7013 = vsub.f32 %v6590, %v6931
      %v7014 = vsub.f32 %v6593, %v6934
      %v7015 = vsub.f32 %v6671, %v6937
      %v7016 = vsub.f32 %v6674, %v6940
      %v7017 = vsub.f32 %v6679, %v6943
      %v7018 = vsub.f32 %v6682, %v6946
      %v7019 = vsub.f32 %v6687, %v6949
      %v7020 = vsub.f32 %v6690, %v6952
      %v7021 = vsub.f32 %v6695, %v6955
      %v7022 = vsub.f32 %v6698, %v6958
      %v7023 = vsub.f32 %v6776, %v6961
      %v7024 = vsub.f32 %v6779, %v6964
      %v7025 = vsub.f32 %v6784, %v6967
      %v7026 = vsub.f32 %v6787, %v6970
      %v7027 = vsub.f32 %v6792, %v6973
      %v7028 = vsub.f32 %v6795, %v6976
      %v7029 = vsub.f32 %v6800, %v6979
      %v7030 = vsub.f32 %v6803, %v6982
      %v7031 = vsub.f32 %v6881, %v6985
      %v7032 = vsub.f32 %v6884, %v6988
      %v7033 = vsub.f32 %v6889, %v6991
      %v7034 = vsub.f32 %v6892, %v6994
      %v7035 = vsub.f32 %v6897, %v6997
      %v7036 = vsub.f32 %v6900, %v7000
      %v7037 = vsub.f32 %v6905, %v7003
      %v7038 = vsub.f32 %v6908, %v7006
      %v7039 = vmul.f32 %v7007, 1.442695
      %v7040 = vpow.pop %v7039
      %v7041 = vmul.f32 %v7008, 1.442695
      %v7042 = vpow.pop %v7041
      %v7043 = vmul.f32 %v7009, 1.442695
      %v7044 = vpow.pop %v7043
      %v7045 = vmul.f32 %v7010, 1.442695
      %v7046 = vpow.pop %v7045
      %v7047 = vmul.f32 %v7011, 1.442695
      %v7048 = vpow.pop %v7047
      %v7049 = vmul.f32 %v7012, 1.442695
      %v7050 = vpow.pop %v7049
      %v7051 = vmul.f32 %v7013, 1.442695
      %v7052 = vpow.pop %v7051
      %v7053 = vmul.f32 %v7014, 1.442695
      %v7054 = vpow.pop %v7053
      %v7055 = vmul.f32 %v7015, 1.442695
      %v7056 = vpow.pop %v7055
      %v7057 = vmul.f32 %v7016, 1.442695
      %v7058 = vpow.pop %v7057
      %v7059 = vmul.f32 %v7017, 1.442695
      %v7060 = vpow.pop %v7059
      %v7061 = vmul.f32 %v7018, 1.442695
      %v7062 = vpow.pop %v7061
      %v7063 = vmul.f32 %v7019, 1.442695
      %v7064 = vpow.pop %v7063
      %v7065 = vmul.f32 %v7020, 1.442695
      %v7066 = vpow.pop %v7065
      %v7067 = vmul.f32 %v7021, 1.442695
      %v7068 = vpow.pop %v7067
      %v7069 = vmul.f32 %v7022, 1.442695
      %v7070 = vpow.pop %v7069
      %v7071 = vmul.f32 %v7023, 1.442695
      %v7072 = vpow.pop %v7071
      %v7073 = vmul.f32 %v7024, 1.442695
      %v7074 = vpow.pop %v7073
      %v7075 = vmul.f32 %v7025, 1.442695
      %v7076 = vpow.pop %v7075
      %v7077 = vmul.f32 %v7026, 1.442695
      %v7078 = vpow.pop %v7077
      %v7079 = vmul.f32 %v7027, 1.442695
      %v7080 = vpow.pop %v7079
      %v7081 = vmul.f32 %v7028, 1.442695
      %v7082 = vpow.pop %v7081
      %v7083 = vmul.f32 %v7029, 1.442695
      %v7084 = vpow.pop %v7083
      %v7085 = vmul.f32 %v7030, 1.442695
      %v7086 = vpow.pop %v7085
      %v7087 = vmul.f32 %v7031, 1.442695
      %v7088 = vpow.pop %v7087
      %v7089 = vmul.f32 %v7032, 1.442695
      %v7090 = vpow.pop %v7089
      %v7091 = vmul.f32 %v7033, 1.442695
      %v7092 = vpow.pop %v7091
      %v7093 = vmul.f32 %v7034, 1.442695
      %v7094 = vpow.pop %v7093
      %v7095 = vmul.f32 %v7035, 1.442695
      %v7096 = vpow.pop %v7095
      %v7097 = vmul.f32 %v7036, 1.442695
      %v7098 = vpow.pop %v7097
      %v7099 = vmul.f32 %v7037, 1.442695
      %v7100 = vpow.pop %v7099
      %v7101 = vmul.f32 %v7038, 1.442695
      %v7102 = vpow.pop %v7101
      %v7103 = vsel %vm2792, %v7040, 0.0
      %7104 = vadd.xlane.f32.xlu0 %v7103
      %v7105 = vpop.xlane.xlu0 %7104
      %v7106 = vsel %vm2792, %v7042, 0.0
      %7107 = vadd.xlane.f32.xlu0 %v7106
      %v7108 = vpop.xlane.xlu0 %7107
      %v7109 = vsel %vm2792, %v7044, 0.0
      %7110 = vadd.xlane.f32.xlu0 %v7109
      %v7111 = vpop.xlane.xlu0 %7110
      %v7112 = vsel %vm2792, %v7046, 0.0
      %7113 = vadd.xlane.f32.xlu0 %v7112
      %v7114 = vpop.xlane.xlu0 %7113
      %v7115 = vsel %vm2792, %v7048, 0.0
      %7116 = vadd.xlane.f32.xlu0 %v7115
      %v7117 = vpop.xlane.xlu0 %7116
      %v7118 = vsel %vm2792, %v7050, 0.0
      %7119 = vadd.xlane.f32.xlu0 %v7118
      %v7120 = vpop.xlane.xlu0 %7119
      %v7121 = vsel %vm2792, %v7052, 0.0
      %7122 = vadd.xlane.f32.xlu0 %v7121
      %v7123 = vpop.xlane.xlu0 %7122
      %v7124 = vsel %vm2792, %v7054, 0.0
      %7125 = vadd.xlane.f32.xlu0 %v7124
      %v7126 = vpop.xlane.xlu0 %7125
      %v7127 = vsel %vm2792, %v7056, 0.0
      %7128 = vadd.xlane.f32.xlu0 %v7127
      %v7129 = vpop.xlane.xlu0 %7128
      %v7130 = vsel %vm2792, %v7058, 0.0
      %7131 = vadd.xlane.f32.xlu0 %v7130
      %v7132 = vpop.xlane.xlu0 %7131
      %v7133 = vsel %vm2792, %v7060, 0.0
      %7134 = vadd.xlane.f32.xlu0 %v7133
      %v7135 = vpop.xlane.xlu0 %7134
      %v7136 = vsel %vm2792, %v7062, 0.0
      %7137 = vadd.xlane.f32.xlu0 %v7136
      %v7138 = vpop.xlane.xlu0 %7137
      %v7139 = vsel %vm2792, %v7064, 0.0
      %7140 = vadd.xlane.f32.xlu0 %v7139
      %v7141 = vpop.xlane.xlu0 %7140
      %v7142 = vsel %vm2792, %v7066, 0.0
      %7143 = vadd.xlane.f32.xlu0 %v7142
      %v7144 = vpop.xlane.xlu0 %7143
      %v7145 = vsel %vm2792, %v7068, 0.0
      %7146 = vadd.xlane.f32.xlu0 %v7145
      %v7147 = vpop.xlane.xlu0 %7146
      %v7148 = vsel %vm2792, %v7070, 0.0
      %7149 = vadd.xlane.f32.xlu0 %v7148
      %v7150 = vpop.xlane.xlu0 %7149
      %v7151 = vsel %vm2792, %v7072, 0.0
      %7152 = vadd.xlane.f32.xlu0 %v7151
      %v7153 = vpop.xlane.xlu0 %7152
      %v7154 = vsel %vm2792, %v7074, 0.0
      %7155 = vadd.xlane.f32.xlu0 %v7154
      %v7156 = vpop.xlane.xlu0 %7155
      %v7157 = vsel %vm2792, %v7076, 0.0
      %7158 = vadd.xlane.f32.xlu0 %v7157
      %v7159 = vpop.xlane.xlu0 %7158
      %v7160 = vsel %vm2792, %v7078, 0.0
      %7161 = vadd.xlane.f32.xlu0 %v7160
      %v7162 = vpop.xlane.xlu0 %7161
      %v7163 = vsel %vm2792, %v7080, 0.0
      %7164 = vadd.xlane.f32.xlu0 %v7163
      %v7165 = vpop.xlane.xlu0 %7164
      %v7166 = vsel %vm2792, %v7082, 0.0
      %7167 = vadd.xlane.f32.xlu0 %v7166
      %v7168 = vpop.xlane.xlu0 %7167
      %v7169 = vsel %vm2792, %v7084, 0.0
      %7170 = vadd.xlane.f32.xlu0 %v7169
      %v7171 = vpop.xlane.xlu0 %7170
      %v7172 = vsel %vm2792, %v7086, 0.0
      %7173 = vadd.xlane.f32.xlu0 %v7172
      %v7174 = vpop.xlane.xlu0 %7173
      %v7175 = vsel %vm2792, %v7088, 0.0
      %7176 = vadd.xlane.f32.xlu0 %v7175
      %v7177 = vpop.xlane.xlu0 %7176
      %v7178 = vsel %vm2792, %v7090, 0.0
      %7179 = vadd.xlane.f32.xlu0 %v7178
      %v7180 = vpop.xlane.xlu0 %7179
      %v7181 = vsel %vm2792, %v7092, 0.0
      %7182 = vadd.xlane.f32.xlu0 %v7181
      %v7183 = vpop.xlane.xlu0 %7182
      %v7184 = vsel %vm2792, %v7094, 0.0
      %7185 = vadd.xlane.f32.xlu0 %v7184
      %v7186 = vpop.xlane.xlu0 %7185
      %v7187 = vsel %vm2792, %v7096, 0.0
      %7188 = vadd.xlane.f32.xlu0 %v7187
      %v7189 = vpop.xlane.xlu0 %7188
      %v7190 = vsel %vm2792, %v7098, 0.0
      %7191 = vadd.xlane.f32.xlu0 %v7190
      %v7192 = vpop.xlane.xlu0 %7191
      %v7193 = vsel %vm2792, %v7100, 0.0
      %7194 = vadd.xlane.f32.xlu0 %v7193
      %v7195 = vpop.xlane.xlu0 %7194
      %v7196 = vsel %vm2792, %v7102, 0.0
      %7197 = vadd.xlane.f32.xlu0 %v7196
      %v7198 = vpop.xlane.xlu0 %7197
      %v7199 = vrcp.pop %v7105
      %v7200 = vrcp.pop %v7108
      %v7201 = vrcp.pop %v7111
      %v7202 = vrcp.pop %v7114
      %v7203 = vrcp.pop %v7117
      %v7204 = vrcp.pop %v7120
      %v7205 = vrcp.pop %v7123
      %v7206 = vrcp.pop %v7126
      %v7207 = vrcp.pop %v7129
      %v7208 = vrcp.pop %v7132
      %v7209 = vrcp.pop %v7135
      %v7210 = vrcp.pop %v7138
      %v7211 = vrcp.pop %v7141
      %v7212 = vrcp.pop %v7144
      %v7213 = vrcp.pop %v7147
      %v7214 = vrcp.pop %v7150
      %v7215 = vrcp.pop %v7153
      %v7216 = vrcp.pop %v7156
      %v7217 = vrcp.pop %v7159
      %v7218 = vrcp.pop %v7162
      %v7219 = vrcp.pop %v7165
      %v7220 = vrcp.pop %v7168
      %v7221 = vrcp.pop %v7171
      %v7222 = vrcp.pop %v7174
      %v7223 = vrcp.pop %v7177
      %v7224 = vrcp.pop %v7180
      %v7225 = vrcp.pop %v7183
      %v7226 = vrcp.pop %v7186
      %v7227 = vrcp.pop %v7189
      %v7228 = vrcp.pop %v7192
      %v7229 = vrcp.pop %v7195
      %v7230 = vrcp.pop %v7198
      %v7231 = vmul.f32 %v7040, %v7199
      %v7232 = vmul.f32 %v7042, %v7200
      %v7233 = vmul.f32 %v7044, %v7201
      %v7234 = vmul.f32 %v7046, %v7202
      %v7235 = vmul.f32 %v7048, %v7203
      %v7236 = vmul.f32 %v7050, %v7204
      %v7237 = vmul.f32 %v7052, %v7205
      %v7238 = vmul.f32 %v7054, %v7206
      %v7239 = vmul.f32 %v7056, %v7207
      %v7240 = vmul.f32 %v7058, %v7208
      %v7241 = vmul.f32 %v7060, %v7209
      %v7242 = vmul.f32 %v7062, %v7210
      %v7243 = vmul.f32 %v7064, %v7211
      %v7244 = vmul.f32 %v7066, %v7212
      %v7245 = vmul.f32 %v7068, %v7213
      %v7246 = vmul.f32 %v7070, %v7214
      %v7247 = vmul.f32 %v7072, %v7215
      %v7248 = vmul.f32 %v7074, %v7216
      %v7249 = vmul.f32 %v7076, %v7217
      %v7250 = vmul.f32 %v7078, %v7218
      %v7251 = vmul.f32 %v7080, %v7219
      %v7252 = vmul.f32 %v7082, %v7220
      %v7253 = vmul.f32 %v7084, %v7221
      %v7254 = vmul.f32 %v7086, %v7222
      %v7255 = vmul.f32 %v7088, %v7223
      %v7256 = vmul.f32 %v7090, %v7224
      %v7257 = vmul.f32 %v7092, %v7225
      %v7258 = vmul.f32 %v7094, %v7226
      %v7259 = vmul.f32 %v7096, %v7227
      %v7260 = vmul.f32 %v7098, %v7228
      %v7261 = vmul.f32 %v7100, %v7229
      %v7262 = vmul.f32 %v7102, %v7230
      %v7263 = vpack.c.bf16 %v7232, %v7231
      %v7264 = vpack.c.bf16 %v7234, %v7233
      %v7265 = vpack.c.bf16 %v7236, %v7235
      %v7266 = vpack.c.bf16 %v7238, %v7237
      %v7267 = vpack.c.bf16 %v7240, %v7239
      %v7268 = vpack.c.bf16 %v7242, %v7241
      %v7269 = vpack.c.bf16 %v7244, %v7243
      %v7270 = vpack.c.bf16 %v7246, %v7245
      %v7271 = vpack.c.bf16 %v7248, %v7247
      %v7272 = vpack.c.bf16 %v7250, %v7249
      %v7273 = vpack.c.bf16 %v7252, %v7251
      %v7274 = vpack.c.bf16 %v7254, %v7253
      %v7275 = vpack.c.bf16 %v7256, %v7255
      %v7276 = vpack.c.bf16 %v7258, %v7257
      %v7277 = vpack.c.bf16 %v7260, %v7259
      %v7278 = vpack.c.bf16 %v7262, %v7261
      %7279 = vrot.lane.b32.xlu0 %v2411, 72
      %v7280 = vpop.permute.xlu0 %7279
      %7281 = vrot.lane.b32.xlu0 %v2412, 72
      %v7282 = vpop.permute.xlu0 %7281
      %7283 = vrot.lane.b32.xlu0 %v2413, 72
      %v7284 = vpop.permute.xlu0 %7283
      %7285 = vrot.lane.b32.xlu0 %v2414, 72
      %v7286 = vpop.permute.xlu0 %7285
      %v7292 = vsel %vm2792, %v7263, 0
      %v7295 = vsel %vm2792, %v7264, 0
      %v7298 = vsel %vm2792, %v7265, 0
      %v7301 = vsel %vm2792, %v7266, 0
      %7303 = vmatprep.subr.bf16.mxu0 0
      %7304 = vmatpush1.bf16.msra.mxu0 0
      %7305 = vmatprep.subr.bf16.mxu0 0
      %7306 = vmatpush1.bf16.msra.mxu0 0
      %7307 = vmatprep.subr.bf16.mxu0 0
      %7308 = vmatpush1.bf16.msra.mxu0 0
      %7309 = vmatprep.subr.bf16.mxu0 0
      %7310 = vmatpush1.bf16.msra.mxu0 0
      %7311 = vmatprep.subr.bf16.mxu0 0
      %7312 = vmatpush1.bf16.msra.mxu0 %v7286
      %7313 = vmatprep.subr.bf16.mxu0 0
      %7314 = vmatpush1.bf16.msra.mxu0 %v7284
      %7315 = vmatprep.subr.bf16.mxu0 0
      %7316 = vmatpush1.bf16.msra.mxu0 %v7282
      %7317 = vmatprep.subr.bf16.mxu0 0
      %7318 = vmatpush1.bf16.msra.mxu0 %v7280
      %7319 = vmatprep.subr.bf16.mxu0 0
      %7320 = vmatpush2.bf16.msra.mxu0 0
      %7321 = vmatprep.subr.bf16.mxu0 0
      %7322 = vmatpush2.bf16.msra.mxu0 0
      %7323 = vmatprep.subr.bf16.mxu0 0
      %7324 = vmatpush2.bf16.msra.mxu0 0
      %7325 = vmatprep.subr.bf16.mxu0 0
      %7326 = vmatpush2.bf16.msra.mxu0 0
      %7327 = vmatprep.subr.bf16.mxu0 0
      %7328 = vmatpush2.bf16.msra.mxu0 0
      %7329 = vmatprep.subr.bf16.mxu0 0
      %7330 = vmatpush2.bf16.msra.mxu0 0
      %7331 = vmatprep.subr.bf16.mxu0 0
      %7332 = vmatpush2.bf16.msra.mxu0 0
      %7333 = vmatprep.subr.bf16.mxu0 0
      %7334 = vmatpush2.bf16.msra.mxu0 0
      %7335 = vmatprep.mubr.bf16.mxu0 0
      %7336 = vmatmul.mubr.bf16.gmra.mxu0 %v7292
      %v7337 = vpop.f32.mrf.mxu0
      %v7338 = vadd.f32 0.0, %v7337
      %v7339 = vpop.f32.mrf.mxu0
      %v7340 = vpop.f32.mrf.mxu0
      %v7341 = vadd.f32 0.0, %v7340
      %v7342 = vpop.f32.mrf.mxu0
      %7343 = vmatprep.mubr.bf16.mxu0 0
      %7344 = vmatmul.mubr.bf16.gmra.mxu0 %v7295
      %v7345 = vpop.f32.mrf.mxu0
      %v7346 = vadd.f32 0.0, %v7345
      %v7347 = vpop.f32.mrf.mxu0
      %v7348 = vpop.f32.mrf.mxu0
      %v7349 = vadd.f32 0.0, %v7348
      %v7350 = vpop.f32.mrf.mxu0
      %7351 = vmatprep.mubr.bf16.mxu0 0
      %7352 = vmatmul.mubr.bf16.gmra.mxu0 %v7298
      %v7353 = vpop.f32.mrf.mxu0
      %v7354 = vadd.f32 0.0, %v7353
      %v7355 = vpop.f32.mrf.mxu0
      %v7356 = vpop.f32.mrf.mxu0
      %v7357 = vadd.f32 0.0, %v7356
      %v7358 = vpop.f32.mrf.mxu0
      %7359 = vmatprep.mubr.bf16.mxu0 0
      %7360 = vmatmul.mubr.bf16.gmra.mxu0 %v7301
      %v7361 = vpop.f32.mrf.mxu0
      %v7362 = vadd.f32 0.0, %v7361
      %v7363 = vpop.f32.mrf.mxu0
      %v7364 = vpop.f32.mrf.mxu0
      %v7365 = vadd.f32 0.0, %v7364
      %v7366 = vpop.f32.mrf.mxu0
      %7367 = vdwg.mxu0
      %7368 = vrot.lane.b32.xlu0 %v2415, 72
      %v7369 = vpop.permute.xlu0 %7368
      %7370 = vrot.lane.b32.xlu0 %v2416, 72
      %v7371 = vpop.permute.xlu0 %7370
      %7372 = vrot.lane.b32.xlu0 %v2417, 72
      %v7373 = vpop.permute.xlu0 %7372
      %7374 = vrot.lane.b32.xlu0 %v2418, 72
      %v7375 = vpop.permute.xlu0 %7374
      %v7381 = vsel %vm2792, %v7267, 0
      %v7384 = vsel %vm2792, %v7268, 0
      %v7387 = vsel %vm2792, %v7269, 0
      %v7390 = vsel %vm2792, %v7270, 0
      %7392 = vmatprep.subr.bf16.mxu0 0
      %7393 = vmatpush1.bf16.msra.mxu0 0
      %7394 = vmatprep.subr.bf16.mxu0 0
      %7395 = vmatpush1.bf16.msra.mxu0 0
      %7396 = vmatprep.subr.bf16.mxu0 0
      %7397 = vmatpush1.bf16.msra.mxu0 0
      %7398 = vmatprep.subr.bf16.mxu0 0
      %7399 = vmatpush1.bf16.msra.mxu0 0
      %7400 = vmatprep.subr.bf16.mxu0 0
      %7401 = vmatpush1.bf16.msra.mxu0 %v7375
      %7402 = vmatprep.subr.bf16.mxu0 0
      %7403 = vmatpush1.bf16.msra.mxu0 %v7373
      %7404 = vmatprep.subr.bf16.mxu0 0
      %7405 = vmatpush1.bf16.msra.mxu0 %v7371
      %7406 = vmatprep.subr.bf16.mxu0 0
      %7407 = vmatpush1.bf16.msra.mxu0 %v7369
      %7408 = vmatprep.subr.bf16.mxu0 0
      %7409 = vmatpush2.bf16.msra.mxu0 0
      %7410 = vmatprep.subr.bf16.mxu0 0
      %7411 = vmatpush2.bf16.msra.mxu0 0
      %7412 = vmatprep.subr.bf16.mxu0 0
      %7413 = vmatpush2.bf16.msra.mxu0 0
      %7414 = vmatprep.subr.bf16.mxu0 0
      %7415 = vmatpush2.bf16.msra.mxu0 0
      %7416 = vmatprep.subr.bf16.mxu0 0
      %7417 = vmatpush2.bf16.msra.mxu0 0
      %7418 = vmatprep.subr.bf16.mxu0 0
      %7419 = vmatpush2.bf16.msra.mxu0 0
      %7420 = vmatprep.subr.bf16.mxu0 0
      %7421 = vmatpush2.bf16.msra.mxu0 0
      %7422 = vmatprep.subr.bf16.mxu0 0
      %7423 = vmatpush2.bf16.msra.mxu0 0
      %7424 = vmatprep.mubr.bf16.mxu0 0
      %7425 = vmatmul.mubr.bf16.gmra.mxu0 %v7381
      %v7426 = vpop.f32.mrf.mxu0
      %v7427 = vadd.f32 0.0, %v7426
      %v7428 = vpop.f32.mrf.mxu0
      %v7429 = vpop.f32.mrf.mxu0
      %v7430 = vadd.f32 0.0, %v7429
      %v7431 = vpop.f32.mrf.mxu0
      %7432 = vmatprep.mubr.bf16.mxu0 0
      %7433 = vmatmul.mubr.bf16.gmra.mxu0 %v7384
      %v7434 = vpop.f32.mrf.mxu0
      %v7435 = vadd.f32 0.0, %v7434
      %v7436 = vpop.f32.mrf.mxu0
      %v7437 = vpop.f32.mrf.mxu0
      %v7438 = vadd.f32 0.0, %v7437
      %v7439 = vpop.f32.mrf.mxu0
      %7440 = vmatprep.mubr.bf16.mxu0 0
      %7441 = vmatmul.mubr.bf16.gmra.mxu0 %v7387
      %v7442 = vpop.f32.mrf.mxu0
      %v7443 = vadd.f32 0.0, %v7442
      %v7444 = vpop.f32.mrf.mxu0
      %v7445 = vpop.f32.mrf.mxu0
      %v7446 = vadd.f32 0.0, %v7445
      %v7447 = vpop.f32.mrf.mxu0
      %7448 = vmatprep.mubr.bf16.mxu0 0
      %7449 = vmatmul.mubr.bf16.gmra.mxu0 %v7390
      %v7450 = vpop.f32.mrf.mxu0
      %v7451 = vadd.f32 0.0, %v7450
      %v7452 = vpop.f32.mrf.mxu0
      %v7453 = vpop.f32.mrf.mxu0
      %v7454 = vadd.f32 0.0, %v7453
      %v7455 = vpop.f32.mrf.mxu0
      %7456 = vdwg.mxu0
      %7457 = vrot.lane.b32.xlu0 %v2419, 72
      %v7458 = vpop.permute.xlu0 %7457
      %7459 = vrot.lane.b32.xlu0 %v2420, 72
      %v7460 = vpop.permute.xlu0 %7459
      %7461 = vrot.lane.b32.xlu0 %v2421, 72
      %v7462 = vpop.permute.xlu0 %7461
      %7463 = vrot.lane.b32.xlu0 %v2422, 72
      %v7464 = vpop.permute.xlu0 %7463
      %v7470 = vsel %vm2792, %v7271, 0
      %v7473 = vsel %vm2792, %v7272, 0
      %v7476 = vsel %vm2792, %v7273, 0
      %v7479 = vsel %vm2792, %v7274, 0
      %7481 = vmatprep.subr.bf16.mxu0 0
      %7482 = vmatpush1.bf16.msra.mxu0 0
      %7483 = vmatprep.subr.bf16.mxu0 0
      %7484 = vmatpush1.bf16.msra.mxu0 0
      %7485 = vmatprep.subr.bf16.mxu0 0
      %7486 = vmatpush1.bf16.msra.mxu0 0
      %7487 = vmatprep.subr.bf16.mxu0 0
      %7488 = vmatpush1.bf16.msra.mxu0 0
      %7489 = vmatprep.subr.bf16.mxu0 0
      %7490 = vmatpush1.bf16.msra.mxu0 %v7464
      %7491 = vmatprep.subr.bf16.mxu0 0
      %7492 = vmatpush1.bf16.msra.mxu0 %v7462
      %7493 = vmatprep.subr.bf16.mxu0 0
      %7494 = vmatpush1.bf16.msra.mxu0 %v7460
      %7495 = vmatprep.subr.bf16.mxu0 0
      %7496 = vmatpush1.bf16.msra.mxu0 %v7458
      %7497 = vmatprep.subr.bf16.mxu0 0
      %7498 = vmatpush2.bf16.msra.mxu0 0
      %7499 = vmatprep.subr.bf16.mxu0 0
      %7500 = vmatpush2.bf16.msra.mxu0 0
      %7501 = vmatprep.subr.bf16.mxu0 0
      %7502 = vmatpush2.bf16.msra.mxu0 0
      %7503 = vmatprep.subr.bf16.mxu0 0
      %7504 = vmatpush2.bf16.msra.mxu0 0
      %7505 = vmatprep.subr.bf16.mxu0 0
      %7506 = vmatpush2.bf16.msra.mxu0 0
      %7507 = vmatprep.subr.bf16.mxu0 0
      %7508 = vmatpush2.bf16.msra.mxu0 0
      %7509 = vmatprep.subr.bf16.mxu0 0
      %7510 = vmatpush2.bf16.msra.mxu0 0
      %7511 = vmatprep.subr.bf16.mxu0 0
      %7512 = vmatpush2.bf16.msra.mxu0 0
      %7513 = vmatprep.mubr.bf16.mxu0 0
      %7514 = vmatmul.mubr.bf16.gmra.mxu0 %v7470
      %v7515 = vpop.f32.mrf.mxu0
      %v7516 = vadd.f32 0.0, %v7515
      %v7517 = vpop.f32.mrf.mxu0
      %v7518 = vpop.f32.mrf.mxu0
      %v7519 = vadd.f32 0.0, %v7518
      %v7520 = vpop.f32.mrf.mxu0
      %7521 = vmatprep.mubr.bf16.mxu0 0
      %7522 = vmatmul.mubr.bf16.gmra.mxu0 %v7473
      %v7523 = vpop.f32.mrf.mxu0
      %v7524 = vadd.f32 0.0, %v7523
      %v7525 = vpop.f32.mrf.mxu0
      %v7526 = vpop.f32.mrf.mxu0
      %v7527 = vadd.f32 0.0, %v7526
      %v7528 = vpop.f32.mrf.mxu0
      %7529 = vmatprep.mubr.bf16.mxu0 0
      %7530 = vmatmul.mubr.bf16.gmra.mxu0 %v7476
      %v7531 = vpop.f32.mrf.mxu0
      %v7532 = vadd.f32 0.0, %v7531
      %v7533 = vpop.f32.mrf.mxu0
      %v7534 = vpop.f32.mrf.mxu0
      %v7535 = vadd.f32 0.0, %v7534
      %v7536 = vpop.f32.mrf.mxu0
      %7537 = vmatprep.mubr.bf16.mxu0 0
      %7538 = vmatmul.mubr.bf16.gmra.mxu0 %v7479
      %v7539 = vpop.f32.mrf.mxu0
      %v7540 = vadd.f32 0.0, %v7539
      %v7541 = vpop.f32.mrf.mxu0
      %v7542 = vpop.f32.mrf.mxu0
      %v7543 = vadd.f32 0.0, %v7542
      %v7544 = vpop.f32.mrf.mxu0
      %7545 = vdwg.mxu0
      %7546 = vrot.lane.b32.xlu0 %v2423, 72
      %v7547 = vpop.permute.xlu0 %7546
      %7548 = vrot.lane.b32.xlu0 %v2424, 72
      %v7549 = vpop.permute.xlu0 %7548
      %7550 = vrot.lane.b32.xlu0 %v2425, 72
      %v7551 = vpop.permute.xlu0 %7550
      %7552 = vrot.lane.b32.xlu0 %v2426, 72
      %v7553 = vpop.permute.xlu0 %7552
      %v7559 = vsel %vm2792, %v7275, 0
      %v7562 = vsel %vm2792, %v7276, 0
      %v7565 = vsel %vm2792, %v7277, 0
      %v7568 = vsel %vm2792, %v7278, 0
      %7570 = vmatprep.subr.bf16.mxu0 0
      %7571 = vmatpush1.bf16.msra.mxu0 0
      %7572 = vmatprep.subr.bf16.mxu0 0
      %7573 = vmatpush1.bf16.msra.mxu0 0
      %7574 = vmatprep.subr.bf16.mxu0 0
      %7575 = vmatpush1.bf16.msra.mxu0 0
      %7576 = vmatprep.subr.bf16.mxu0 0
      %7577 = vmatpush1.bf16.msra.mxu0 0
      %7578 = vmatprep.subr.bf16.mxu0 0
      %7579 = vmatpush1.bf16.msra.mxu0 %v7553
      %7580 = vmatprep.subr.bf16.mxu0 0
      %7581 = vmatpush1.bf16.msra.mxu0 %v7551
      %7582 = vmatprep.subr.bf16.mxu0 0
      %7583 = vmatpush1.bf16.msra.mxu0 %v7549
      %7584 = vmatprep.subr.bf16.mxu0 0
      %7585 = vmatpush1.bf16.msra.mxu0 %v7547
      %7586 = vmatprep.subr.bf16.mxu0 0
      %7587 = vmatpush2.bf16.msra.mxu0 0
      %7588 = vmatprep.subr.bf16.mxu0 0
      %7589 = vmatpush2.bf16.msra.mxu0 0
      %7590 = vmatprep.subr.bf16.mxu0 0
      %7591 = vmatpush2.bf16.msra.mxu0 0
      %7592 = vmatprep.subr.bf16.mxu0 0
      %7593 = vmatpush2.bf16.msra.mxu0 0
      %7594 = vmatprep.subr.bf16.mxu0 0
      %7595 = vmatpush2.bf16.msra.mxu0 0
      %7596 = vmatprep.subr.bf16.mxu0 0
      %7597 = vmatpush2.bf16.msra.mxu0 0
      %7598 = vmatprep.subr.bf16.mxu0 0
      %7599 = vmatpush2.bf16.msra.mxu0 0
      %7600 = vmatprep.subr.bf16.mxu0 0
      %7601 = vmatpush2.bf16.msra.mxu0 0
      %7602 = vmatprep.mubr.bf16.mxu0 0
      %7603 = vmatmul.mubr.bf16.gmra.mxu0 %v7559
      %v7604 = vpop.f32.mrf.mxu0
      %v7605 = vadd.f32 0.0, %v7604
      %v7606 = vpop.f32.mrf.mxu0
      %v7607 = vpop.f32.mrf.mxu0
      %v7608 = vadd.f32 0.0, %v7607
      %v7609 = vpop.f32.mrf.mxu0
      %7610 = vmatprep.mubr.bf16.mxu0 0
      %7611 = vmatmul.mubr.bf16.gmra.mxu0 %v7562
      %v7612 = vpop.f32.mrf.mxu0
      %v7613 = vadd.f32 0.0, %v7612
      %v7614 = vpop.f32.mrf.mxu0
      %v7615 = vpop.f32.mrf.mxu0
      %v7616 = vadd.f32 0.0, %v7615
      %v7617 = vpop.f32.mrf.mxu0
      %7618 = vmatprep.mubr.bf16.mxu0 0
      %7619 = vmatmul.mubr.bf16.gmra.mxu0 %v7565
      %v7620 = vpop.f32.mrf.mxu0
      %v7621 = vadd.f32 0.0, %v7620
      %v7622 = vpop.f32.mrf.mxu0
      %v7623 = vpop.f32.mrf.mxu0
      %v7624 = vadd.f32 0.0, %v7623
      %v7625 = vpop.f32.mrf.mxu0
      %7626 = vmatprep.mubr.bf16.mxu0 0
      %7627 = vmatmul.mubr.bf16.gmra.mxu0 %v7568
      %v7628 = vpop.f32.mrf.mxu0
      %v7629 = vadd.f32 0.0, %v7628
      %v7630 = vpop.f32.mrf.mxu0
      %v7631 = vpop.f32.mrf.mxu0
      %v7632 = vadd.f32 0.0, %v7631
      %v7633 = vpop.f32.mrf.mxu0
      %7634 = vdwg.mxu0
      %v7635 = vpack.c.bf16 %v7341, %v7338
      %v7636 = vpack.c.bf16 %v7349, %v7346
      %v7637 = vpack.c.bf16 %v7357, %v7354
      %v7638 = vpack.c.bf16 %v7365, %v7362
      %v7639 = vpack.c.bf16 %v7430, %v7427
      %v7640 = vpack.c.bf16 %v7438, %v7435
      %v7641 = vpack.c.bf16 %v7446, %v7443
      %v7642 = vpack.c.bf16 %v7454, %v7451
      %v7643 = vpack.c.bf16 %v7519, %v7516
      %v7644 = vpack.c.bf16 %v7527, %v7524
      %v7645 = vpack.c.bf16 %v7535, %v7532
      %v7646 = vpack.c.bf16 %v7543, %v7540
      %v7647 = vpack.c.bf16 %v7608, %v7605
      %v7648 = vpack.c.bf16 %v7616, %v7613
      %v7649 = vpack.c.bf16 %v7624, %v7621
      %v7650 = vpack.c.bf16 %v7632, %v7629
      %v7667 = vunpack.c.l.b16 %v7635
      %v7668 = vunpack.c.h.b16 %v7635
      %v7669 = vunpack.c.l.b16 %v7636
      %v7670 = vunpack.c.h.b16 %v7636
      %v7671 = vunpack.c.l.b16 %v7637
      %v7672 = vunpack.c.h.b16 %v7637
      %v7673 = vunpack.c.l.b16 %v7638
      %v7674 = vunpack.c.h.b16 %v7638
      %v7675 = vunpack.c.l.b16 %v7639
      %v7676 = vunpack.c.h.b16 %v7639
      %v7677 = vunpack.c.l.b16 %v7640
      %v7678 = vunpack.c.h.b16 %v7640
      %v7679 = vunpack.c.l.b16 %v7641
      %v7680 = vunpack.c.h.b16 %v7641
      %v7681 = vunpack.c.l.b16 %v7642
      %v7682 = vunpack.c.h.b16 %v7642
      %v7683 = vunpack.c.l.b16 %v7643
      %v7684 = vunpack.c.h.b16 %v7643
      %v7685 = vunpack.c.l.b16 %v7644
      %v7686 = vunpack.c.h.b16 %v7644
      %v7687 = vunpack.c.l.b16 %v7645
      %v7688 = vunpack.c.h.b16 %v7645
      %v7689 = vunpack.c.l.b16 %v7646
      %v7690 = vunpack.c.h.b16 %v7646
      %v7691 = vunpack.c.l.b16 %v7647
      %v7692 = vunpack.c.h.b16 %v7647
      %v7693 = vunpack.c.l.b16 %v7648
      %v7694 = vunpack.c.h.b16 %v7648
      %v7695 = vunpack.c.l.b16 %v7649
      %v7696 = vunpack.c.h.b16 %v7649
      %v7697 = vunpack.c.l.b16 %v7650
      %v7698 = vunpack.c.h.b16 %v7650
      %v7699 = vpack.c.b16 %v7667, %v7667
      %v7700 = vpack.c.b16 %v7668, %v7668
      %v7701 = vpack.c.b16 %v7669, %v7669
      %v7702 = vpack.c.b16 %v7670, %v7670
      %v7703 = vpack.c.b16 %v7671, %v7671
      %v7704 = vpack.c.b16 %v7672, %v7672
      %v7705 = vpack.c.b16 %v7673, %v7673
      %v7706 = vpack.c.b16 %v7674, %v7674
      %v7707 = vpack.c.b16 %v7675, %v7675
      %v7708 = vpack.c.b16 %v7676, %v7676
      %v7709 = vpack.c.b16 %v7677, %v7677
      %v7710 = vpack.c.b16 %v7678, %v7678
      %v7711 = vpack.c.b16 %v7679, %v7679
      %v7712 = vpack.c.b16 %v7680, %v7680
      %v7713 = vpack.c.b16 %v7681, %v7681
      %v7714 = vpack.c.b16 %v7682, %v7682
      %v7715 = vpack.c.b16 %v7683, %v7683
      %v7716 = vpack.c.b16 %v7684, %v7684
      %v7717 = vpack.c.b16 %v7685, %v7685
      %v7718 = vpack.c.b16 %v7686, %v7686
      %v7719 = vpack.c.b16 %v7687, %v7687
      %v7720 = vpack.c.b16 %v7688, %v7688
      %v7721 = vpack.c.b16 %v7689, %v7689
      %v7722 = vpack.c.b16 %v7690, %v7690
      %v7723 = vpack.c.b16 %v7691, %v7691
      %v7724 = vpack.c.b16 %v7692, %v7692
      %v7725 = vpack.c.b16 %v7693, %v7693
      %v7726 = vpack.c.b16 %v7694, %v7694
      %v7727 = vpack.c.b16 %v7695, %v7695
      %v7728 = vpack.c.b16 %v7696, %v7696
      %v7729 = vpack.c.b16 %v7697, %v7697
      %v7730 = vpack.c.b16 %v7698, %v7698
      %7731 = vrot.lane.b32.xlu0 %v7699, 24
      %v7732 = vpop.permute.xlu0 %7731
      %7733 = vrot.lane.b32.xlu0 %v7700, 24
      %v7734 = vpop.permute.xlu0 %7733
      %7735 = vrot.lane.b32.xlu0 %v7701, 24
      %v7736 = vpop.permute.xlu0 %7735
      %7737 = vrot.lane.b32.xlu0 %v7702, 24
      %v7738 = vpop.permute.xlu0 %7737
      %7739 = vrot.lane.b32.xlu0 %v7703, 24
      %v7740 = vpop.permute.xlu0 %7739
      %7741 = vrot.lane.b32.xlu0 %v7704, 24
      %v7742 = vpop.permute.xlu0 %7741
      %7743 = vrot.lane.b32.xlu0 %v7705, 24
      %v7744 = vpop.permute.xlu0 %7743
      %7745 = vrot.lane.b32.xlu0 %v7706, 24
      %v7746 = vpop.permute.xlu0 %7745
      %7747 = vrot.lane.b32.xlu0 %v7707, 24
      %v7748 = vpop.permute.xlu0 %7747
      %7749 = vrot.lane.b32.xlu0 %v7708, 24
      %v7750 = vpop.permute.xlu0 %7749
      %7751 = vrot.lane.b32.xlu0 %v7709, 24
      %v7752 = vpop.permute.xlu0 %7751
      %7753 = vrot.lane.b32.xlu0 %v7710, 24
      %v7754 = vpop.permute.xlu0 %7753
      %7755 = vrot.lane.b32.xlu0 %v7711, 24
      %v7756 = vpop.permute.xlu0 %7755
      %7757 = vrot.lane.b32.xlu0 %v7712, 24
      %v7758 = vpop.permute.xlu0 %7757
      %7759 = vrot.lane.b32.xlu0 %v7713, 24
      %v7760 = vpop.permute.xlu0 %7759
      %7761 = vrot.lane.b32.xlu0 %v7714, 24
      %v7762 = vpop.permute.xlu0 %7761
      %7763 = vrot.lane.b32.xlu0 %v7715, 24
      %v7764 = vpop.permute.xlu0 %7763
      %7765 = vrot.lane.b32.xlu0 %v7716, 24
      %v7766 = vpop.permute.xlu0 %7765
      %7767 = vrot.lane.b32.xlu0 %v7717, 24
      %v7768 = vpop.permute.xlu0 %7767
      %7769 = vrot.lane.b32.xlu0 %v7718, 24
      %v7770 = vpop.permute.xlu0 %7769
      %7771 = vrot.lane.b32.xlu0 %v7719, 24
      %v7772 = vpop.permute.xlu0 %7771
      %7773 = vrot.lane.b32.xlu0 %v7720, 24
      %v7774 = vpop.permute.xlu0 %7773
      %7775 = vrot.lane.b32.xlu0 %v7721, 24
      %v7776 = vpop.permute.xlu0 %7775
      %7777 = vrot.lane.b32.xlu0 %v7722, 24
      %v7778 = vpop.permute.xlu0 %7777
      %7779 = vrot.lane.b32.xlu0 %v7723, 24
      %v7780 = vpop.permute.xlu0 %7779
      %7781 = vrot.lane.b32.xlu0 %v7724, 24
      %v7782 = vpop.permute.xlu0 %7781
      %7783 = vrot.lane.b32.xlu0 %v7725, 24
      %v7784 = vpop.permute.xlu0 %7783
      %7785 = vrot.lane.b32.xlu0 %v7726, 24
      %v7786 = vpop.permute.xlu0 %7785
      %7787 = vrot.lane.b32.xlu0 %v7727, 24
      %v7788 = vpop.permute.xlu0 %7787
      %7789 = vrot.lane.b32.xlu0 %v7728, 24
      %v7790 = vpop.permute.xlu0 %7789
      %7791 = vrot.lane.b32.xlu0 %v7729, 24
      %v7792 = vpop.permute.xlu0 %7791
      %7793 = vrot.lane.b32.xlu0 %v7730, 24
      %v7794 = vpop.permute.xlu0 %7793
      %vm7827 = vcmask 257216
      %7828 = vst.msk [vmem:[#allocation4] sm:$0xf] %vm7827, %v7732
      %7829 = vst.msk [vmem:[#allocation4 + $0x4] sm:$0xf] %vm7827, %v7734
      %7830 = vst.msk [vmem:[#allocation4 + $0x8] sm:$0xf] %vm7827, %v7736
      %7831 = vst.msk [vmem:[#allocation4 + $0xc] sm:$0xf] %vm7827, %v7738
      %7832 = vst.msk [vmem:[#allocation4 + $0x10] sm:$0xf] %vm7827, %v7740
      %7833 = vst.msk [vmem:[#allocation4 + $0x14] sm:$0xf] %vm7827, %v7742
      %7834 = vst.msk [vmem:[#allocation4 + $0x18] sm:$0xf] %vm7827, %v7744
      %7835 = vst.msk [vmem:[#allocation4 + $0x1c] sm:$0xf] %vm7827, %v7746
      %7836 = vst.msk [vmem:[#allocation4 + $0x20] sm:$0xf] %vm7827, %v7748
      %7837 = vst.msk [vmem:[#allocation4 + $0x24] sm:$0xf] %vm7827, %v7750
      %7838 = vst.msk [vmem:[#allocation4 + $0x28] sm:$0xf] %vm7827, %v7752
      %7839 = vst.msk [vmem:[#allocation4 + $0x2c] sm:$0xf] %vm7827, %v7754
      %7840 = vst.msk [vmem:[#allocation4 + $0x30] sm:$0xf] %vm7827, %v7756
      %7841 = vst.msk [vmem:[#allocation4 + $0x34] sm:$0xf] %vm7827, %v7758
      %7842 = vst.msk [vmem:[#allocation4 + $0x38] sm:$0xf] %vm7827, %v7760
      %7843 = vst.msk [vmem:[#allocation4 + $0x3c] sm:$0xf] %vm7827, %v7762
      %7844 = vst.msk [vmem:[#allocation4 + $0x40] sm:$0xf] %vm7827, %v7764
      %7845 = vst.msk [vmem:[#allocation4 + $0x44] sm:$0xf] %vm7827, %v7766
      %7846 = vst.msk [vmem:[#allocation4 + $0x48] sm:$0xf] %vm7827, %v7768
      %7847 = vst.msk [vmem:[#allocation4 + $0x4c] sm:$0xf] %vm7827, %v7770
      %7848 = vst.msk [vmem:[#allocation4 + $0x50] sm:$0xf] %vm7827, %v7772
      %7849 = vst.msk [vmem:[#allocation4 + $0x54] sm:$0xf] %vm7827, %v7774
      %7850 = vst.msk [vmem:[#allocation4 + $0x58] sm:$0xf] %vm7827, %v7776
      %7851 = vst.msk [vmem:[#allocation4 + $0x5c] sm:$0xf] %vm7827, %v7778
      %7852 = vst.msk [vmem:[#allocation4 + $0x60] sm:$0xf] %vm7827, %v7780
      %7853 = vst.msk [vmem:[#allocation4 + $0x64] sm:$0xf] %vm7827, %v7782
      %7854 = vst.msk [vmem:[#allocation4 + $0x68] sm:$0xf] %vm7827, %v7784
      %7855 = vst.msk [vmem:[#allocation4 + $0x6c] sm:$0xf] %vm7827, %v7786
      %7856 = vst.msk [vmem:[#allocation4 + $0x70] sm:$0xf] %vm7827, %v7788
      %7857 = vst.msk [vmem:[#allocation4 + $0x74] sm:$0xf] %vm7827, %v7790
      %7858 = vst.msk [vmem:[#allocation4 + $0x78] sm:$0xf] %vm7827, %v7792
      %7859 = vst.msk [vmem:[#allocation4 + $0x7c] sm:$0xf] %vm7827, %v7794
      %v7860 = vld [vmem:[#allocation4] sm:$0xf]
      %v7861 = vld [vmem:[#allocation4 + $0x4] sm:$0xf]
      %v7862 = vld [vmem:[#allocation4 + $0x8] sm:$0xf]
      %v7863 = vld [vmem:[#allocation4 + $0xc] sm:$0xf]
      %v7864 = vld [vmem:[#allocation4 + $0x10] sm:$0xf]
      %v7865 = vld [vmem:[#allocation4 + $0x14] sm:$0xf]
      %v7866 = vld [vmem:[#allocation4 + $0x18] sm:$0xf]
      %v7867 = vld [vmem:[#allocation4 + $0x1c] sm:$0xf]
      %v7868 = vld [vmem:[#allocation4 + $0x20] sm:$0xf]
      %v7869 = vld [vmem:[#allocation4 + $0x24] sm:$0xf]
      %v7870 = vld [vmem:[#allocation4 + $0x28] sm:$0xf]
      %v7871 = vld [vmem:[#allocation4 + $0x2c] sm:$0xf]
      %v7872 = vld [vmem:[#allocation4 + $0x30] sm:$0xf]
      %v7873 = vld [vmem:[#allocation4 + $0x34] sm:$0xf]
      %v7874 = vld [vmem:[#allocation4 + $0x38] sm:$0xf]
      %v7875 = vld [vmem:[#allocation4 + $0x3c] sm:$0xf]
      %v7876 = vld [vmem:[#allocation4 + $0x40] sm:$0xf]
      %v7877 = vld [vmem:[#allocation4 + $0x44] sm:$0xf]
      %v7878 = vld [vmem:[#allocation4 + $0x48] sm:$0xf]
      %v7879 = vld [vmem:[#allocation4 + $0x4c] sm:$0xf]
      %v7880 = vld [vmem:[#allocation4 + $0x50] sm:$0xf]
      %v7881 = vld [vmem:[#allocation4 + $0x54] sm:$0xf]
      %v7882 = vld [vmem:[#allocation4 + $0x58] sm:$0xf]
      %v7883 = vld [vmem:[#allocation4 + $0x5c] sm:$0xf]
      %v7884 = vld [vmem:[#allocation4 + $0x60] sm:$0xf]
      %v7885 = vld [vmem:[#allocation4 + $0x64] sm:$0xf]
      %v7886 = vld [vmem:[#allocation4 + $0x68] sm:$0xf]
      %v7887 = vld [vmem:[#allocation4 + $0x6c] sm:$0xf]
      %v7888 = vld [vmem:[#allocation4 + $0x70] sm:$0xf]
      %v7889 = vld [vmem:[#allocation4 + $0x74] sm:$0xf]
      %v7890 = vld [vmem:[#allocation4 + $0x78] sm:$0xf]
      %v7891 = vld [vmem:[#allocation4 + $0x7c] sm:$0xf]
      %v7892 = vld [vmem:[%s521] sm:$0xf]
      %v7893 = vld [vmem:[%s521 + $0x4] sm:$0xf]
      %v7894 = vld [vmem:[%s521 + $0x8] sm:$0xf]
      %v7895 = vld [vmem:[%s521 + $0xc] sm:$0xf]
      %v7896 = vlaneseq
      %v7897 = vshrl.u32 %v7896, 7
      %v7898 = vsub.s32 5, %v7897
      %v7899 = vrot.slane %v749, %v7898
      %v7932 = vunpack.c.l.b16 %v7860
      %v7933 = vunpack.c.l.b16 %v7861
      %v7934 = vunpack.c.l.b16 %v7862
      %v7935 = vunpack.c.l.b16 %v7863
      %v7936 = vunpack.c.l.b16 %v7864
      %v7937 = vunpack.c.l.b16 %v7865
      %v7938 = vunpack.c.l.b16 %v7866
      %v7939 = vunpack.c.l.b16 %v7867
      %v7940 = vunpack.c.l.b16 %v7868
      %v7941 = vunpack.c.l.b16 %v7869
      %v7942 = vunpack.c.l.b16 %v7870
      %v7943 = vunpack.c.l.b16 %v7871
      %v7944 = vunpack.c.l.b16 %v7872
      %v7945 = vunpack.c.l.b16 %v7873
      %v7946 = vunpack.c.l.b16 %v7874
      %v7947 = vunpack.c.l.b16 %v7875
      %v7948 = vunpack.c.l.b16 %v7876
      %v7949 = vunpack.c.l.b16 %v7877
      %v7950 = vunpack.c.l.b16 %v7878
      %v7951 = vunpack.c.l.b16 %v7879
      %v7952 = vunpack.c.l.b16 %v7880
      %v7953 = vunpack.c.l.b16 %v7881
      %v7954 = vunpack.c.l.b16 %v7882
      %v7955 = vunpack.c.l.b16 %v7883
      %v7956 = vunpack.c.l.b16 %v7884
      %v7957 = vunpack.c.l.b16 %v7885
      %v7958 = vunpack.c.l.b16 %v7886
      %v7959 = vunpack.c.l.b16 %v7887
      %v7960 = vunpack.c.l.b16 %v7888
      %v7961 = vunpack.c.l.b16 %v7889
      %v7962 = vunpack.c.l.b16 %v7890
      %v7963 = vunpack.c.l.b16 %v7891
      %v7964 = vpack.c.b16 %v7933, %v7932
      %v7965 = vpack.c.b16 %v7935, %v7934
      %v7966 = vpack.c.b16 %v7937, %v7936
      %v7967 = vpack.c.b16 %v7939, %v7938
      %v7968 = vpack.c.b16 %v7941, %v7940
      %v7969 = vpack.c.b16 %v7943, %v7942
      %v7970 = vpack.c.b16 %v7945, %v7944
      %v7971 = vpack.c.b16 %v7947, %v7946
      %v7972 = vpack.c.b16 %v7949, %v7948
      %v7973 = vpack.c.b16 %v7951, %v7950
      %v7974 = vpack.c.b16 %v7953, %v7952
      %v7975 = vpack.c.b16 %v7955, %v7954
      %v7976 = vpack.c.b16 %v7957, %v7956
      %v7977 = vpack.c.b16 %v7959, %v7958
      %v7978 = vpack.c.b16 %v7961, %v7960
      %v7979 = vpack.c.b16 %v7963, %v7962
      %v7984 = vunpack.c.l.b16 %v7892
      %v7985 = vunpack.c.l.b16 %v7893
      %v7986 = vunpack.c.l.b16 %v7894
      %v7987 = vunpack.c.l.b16 %v7895
      %v7988 = vpack.c.b16 %v7985, %v7984
      %v7989 = vpack.c.b16 %v7987, %v7986
      %v7993 = vsel %vm783, %v7964, 0
      %v7996 = vsel %vm783, %v7965, 0
      %v7999 = vsel %vm783, %v7966, 0
      %v8002 = vsel %vm783, %v7967, 0
      %v8005 = vsel %vm783, %v7968, 0
      %v8008 = vsel %vm783, %v7969, 0
      %v8011 = vsel %vm783, %v7970, 0
      %v8014 = vsel %vm783, %v7971, 0
      %v8017 = vsel %vm783, %v7972, 0
      %v8020 = vsel %vm783, %v7973, 0
      %v8023 = vsel %vm783, %v7974, 0
      %v8026 = vsel %vm783, %v7975, 0
      %v8029 = vsel %vm783, %v7976, 0
      %v8032 = vsel %vm783, %v7977, 0
      %v8035 = vsel %vm783, %v7978, 0
      %v8038 = vsel %vm783, %v7979, 0
      %8040 = vmatprep.subr.bf16.mxu0 0
      %8041 = vmatpush1.bf16.msra.mxu0 0
      %8042 = vmatprep.subr.bf16.mxu0 0
      %8043 = vmatpush1.bf16.msra.mxu0 0
      %8044 = vmatprep.subr.bf16.mxu0 0
      %8045 = vmatpush1.bf16.msra.mxu0 0
      %8046 = vmatprep.subr.bf16.mxu0 0
      %8047 = vmatpush1.bf16.msra.mxu0 0
      %8048 = vmatprep.subr.bf16.mxu0 0
      %8049 = vmatpush1.bf16.msra.mxu0 0
      %8050 = vmatprep.subr.bf16.mxu0 0
      %8051 = vmatpush1.bf16.msra.mxu0 0
      %8052 = vmatprep.subr.bf16.mxu0 0
      %8053 = vmatpush1.bf16.msra.mxu0 %v7989
      %8054 = vmatprep.subr.bf16.mxu0 0
      %8055 = vmatpush1.bf16.msra.mxu0 %v7988
      %8056 = vmatprep.subr.bf16.mxu0 0
      %8057 = vmatpush2.bf16.msra.mxu0 0
      %8058 = vmatprep.subr.bf16.mxu0 0
      %8059 = vmatpush2.bf16.msra.mxu0 0
      %8060 = vmatprep.subr.bf16.mxu0 0
      %8061 = vmatpush2.bf16.msra.mxu0 0
      %8062 = vmatprep.subr.bf16.mxu0 0
      %8063 = vmatpush2.bf16.msra.mxu0 0
      %8064 = vmatprep.subr.bf16.mxu0 0
      %8065 = vmatpush2.bf16.msra.mxu0 0
      %8066 = vmatprep.subr.bf16.mxu0 0
      %8067 = vmatpush2.bf16.msra.mxu0 0
      %8068 = vmatprep.subr.bf16.mxu0 0
      %8069 = vmatpush2.bf16.msra.mxu0 0
      %8070 = vmatprep.subr.bf16.mxu0 0
      %8071 = vmatpush2.bf16.msra.mxu0 0
      %8072 = vmatprep.mubr.bf16.mxu0 0
      %8073 = vmatmul.mubr.bf16.gmra.mxu0 %v7993
      %v8074 = vpop.f32.mrf.mxu0
      %v8075 = vadd.f32 %v7899, %v8074
      %v8076 = vpop.f32.mrf.mxu0
      %v8077 = vpop.f32.mrf.mxu0
      %v8078 = vadd.f32 %v7899, %v8077
      %v8079 = vpop.f32.mrf.mxu0
      %8080 = vmatprep.mubr.bf16.mxu0 0
      %8081 = vmatmul.mubr.bf16.gmra.mxu0 %v7996
      %v8082 = vpop.f32.mrf.mxu0
      %v8083 = vadd.f32 %v7899, %v8082
      %v8084 = vpop.f32.mrf.mxu0
      %v8085 = vpop.f32.mrf.mxu0
      %v8086 = vadd.f32 %v7899, %v8085
      %v8087 = vpop.f32.mrf.mxu0
      %8088 = vmatprep.mubr.bf16.mxu0 0
      %8089 = vmatmul.mubr.bf16.gmra.mxu0 %v7999
      %v8090 = vpop.f32.mrf.mxu0
      %v8091 = vadd.f32 %v7899, %v8090
      %v8092 = vpop.f32.mrf.mxu0
      %v8093 = vpop.f32.mrf.mxu0
      %v8094 = vadd.f32 %v7899, %v8093
      %v8095 = vpop.f32.mrf.mxu0
      %8096 = vmatprep.mubr.bf16.mxu0 0
      %8097 = vmatmul.mubr.bf16.gmra.mxu0 %v8002
      %v8098 = vpop.f32.mrf.mxu0
      %v8099 = vadd.f32 %v7899, %v8098
      %v8100 = vpop.f32.mrf.mxu0
      %v8101 = vpop.f32.mrf.mxu0
      %v8102 = vadd.f32 %v7899, %v8101
      %v8103 = vpop.f32.mrf.mxu0
      %8104 = vmatprep.mubr.bf16.mxu0 0
      %8105 = vmatmul.mubr.bf16.gmra.mxu0 %v8005
      %v8106 = vpop.f32.mrf.mxu0
      %v8107 = vadd.f32 %v7899, %v8106
      %v8108 = vpop.f32.mrf.mxu0
      %v8109 = vpop.f32.mrf.mxu0
      %v8110 = vadd.f32 %v7899, %v8109
      %v8111 = vpop.f32.mrf.mxu0
      %8112 = vmatprep.mubr.bf16.mxu0 0
      %8113 = vmatmul.mubr.bf16.gmra.mxu0 %v8008
      %v8114 = vpop.f32.mrf.mxu0
      %v8115 = vadd.f32 %v7899, %v8114
      %v8116 = vpop.f32.mrf.mxu0
      %v8117 = vpop.f32.mrf.mxu0
      %v8118 = vadd.f32 %v7899, %v8117
      %v8119 = vpop.f32.mrf.mxu0
      %8120 = vmatprep.mubr.bf16.mxu0 0
      %8121 = vmatmul.mubr.bf16.gmra.mxu0 %v8011
      %v8122 = vpop.f32.mrf.mxu0
      %v8123 = vadd.f32 %v7899, %v8122
      %v8124 = vpop.f32.mrf.mxu0
      %v8125 = vpop.f32.mrf.mxu0
      %v8126 = vadd.f32 %v7899, %v8125
      %v8127 = vpop.f32.mrf.mxu0
      %8128 = vmatprep.mubr.bf16.mxu0 0
      %8129 = vmatmul.mubr.bf16.gmra.mxu0 %v8014
      %v8130 = vpop.f32.mrf.mxu0
      %v8131 = vadd.f32 %v7899, %v8130
      %v8132 = vpop.f32.mrf.mxu0
      %v8133 = vpop.f32.mrf.mxu0
      %v8134 = vadd.f32 %v7899, %v8133
      %v8135 = vpop.f32.mrf.mxu0
      %8136 = vmatprep.mubr.bf16.mxu0 0
      %8137 = vmatmul.mubr.bf16.gmra.mxu0 %v8017
      %v8138 = vpop.f32.mrf.mxu0
      %v8139 = vadd.f32 %v7899, %v8138
      %v8140 = vpop.f32.mrf.mxu0
      %v8141 = vpop.f32.mrf.mxu0
      %v8142 = vadd.f32 %v7899, %v8141
      %v8143 = vpop.f32.mrf.mxu0
      %8144 = vmatprep.mubr.bf16.mxu0 0
      %8145 = vmatmul.mubr.bf16.gmra.mxu0 %v8020
      %v8146 = vpop.f32.mrf.mxu0
      %v8147 = vadd.f32 %v7899, %v8146
      %v8148 = vpop.f32.mrf.mxu0
      %v8149 = vpop.f32.mrf.mxu0
      %v8150 = vadd.f32 %v7899, %v8149
      %v8151 = vpop.f32.mrf.mxu0
      %8152 = vmatprep.mubr.bf16.mxu0 0
      %8153 = vmatmul.mubr.bf16.gmra.mxu0 %v8023
      %v8154 = vpop.f32.mrf.mxu0
      %v8155 = vadd.f32 %v7899, %v8154
      %v8156 = vpop.f32.mrf.mxu0
      %v8157 = vpop.f32.mrf.mxu0
      %v8158 = vadd.f32 %v7899, %v8157
      %v8159 = vpop.f32.mrf.mxu0
      %8160 = vmatprep.mubr.bf16.mxu0 0
      %8161 = vmatmul.mubr.bf16.gmra.mxu0 %v8026
      %v8162 = vpop.f32.mrf.mxu0
      %v8163 = vadd.f32 %v7899, %v8162
      %v8164 = vpop.f32.mrf.mxu0
      %v8165 = vpop.f32.mrf.mxu0
      %v8166 = vadd.f32 %v7899, %v8165
      %v8167 = vpop.f32.mrf.mxu0
      %8168 = vmatprep.mubr.bf16.mxu0 0
      %8169 = vmatmul.mubr.bf16.gmra.mxu0 %v8029
      %v8170 = vpop.f32.mrf.mxu0
      %v8171 = vadd.f32 %v7899, %v8170
      %v8172 = vpop.f32.mrf.mxu0
      %v8173 = vpop.f32.mrf.mxu0
      %v8174 = vadd.f32 %v7899, %v8173
      %v8175 = vpop.f32.mrf.mxu0
      %8176 = vmatprep.mubr.bf16.mxu0 0
      %8177 = vmatmul.mubr.bf16.gmra.mxu0 %v8032
      %v8178 = vpop.f32.mrf.mxu0
      %v8179 = vadd.f32 %v7899, %v8178
      %v8180 = vpop.f32.mrf.mxu0
      %v8181 = vpop.f32.mrf.mxu0
      %v8182 = vadd.f32 %v7899, %v8181
      %v8183 = vpop.f32.mrf.mxu0
      %8184 = vmatprep.mubr.bf16.mxu0 0
      %8185 = vmatmul.mubr.bf16.gmra.mxu0 %v8035
      %v8186 = vpop.f32.mrf.mxu0
      %v8187 = vadd.f32 %v7899, %v8186
      %v8188 = vpop.f32.mrf.mxu0
      %v8189 = vpop.f32.mrf.mxu0
      %v8190 = vadd.f32 %v7899, %v8189
      %v8191 = vpop.f32.mrf.mxu0
      %8192 = vmatprep.mubr.bf16.mxu0 0
      %8193 = vmatmul.mubr.bf16.gmra.mxu0 %v8038
      %v8194 = vpop.f32.mrf.mxu0
      %v8195 = vadd.f32 %v7899, %v8194
      %v8196 = vpop.f32.mrf.mxu0
      %v8197 = vpop.f32.mrf.mxu0
      %v8198 = vadd.f32 %v7899, %v8197
      %v8199 = vpop.f32.mrf.mxu0
      %8200 = vdwg.mxu0
      %v8201 = vadd.f32 %v8075, %v751
      %v8202 = vadd.f32 %v8078, %v752
      %v8203 = vadd.f32 %v8083, %v753
      %v8204 = vadd.f32 %v8086, %v754
      %v8205 = vadd.f32 %v8091, %v755
      %v8206 = vadd.f32 %v8094, %v756
      %v8207 = vadd.f32 %v8099, %v757
      %v8208 = vadd.f32 %v8102, %v758
      %v8209 = vadd.f32 %v8107, %v759
      %v8210 = vadd.f32 %v8110, %v760
      %v8211 = vadd.f32 %v8115, %v761
      %v8212 = vadd.f32 %v8118, %v762
      %v8213 = vadd.f32 %v8123, %v763
      %v8214 = vadd.f32 %v8126, %v764
      %v8215 = vadd.f32 %v8131, %v765
      %v8216 = vadd.f32 %v8134, %v766
      %v8217 = vadd.f32 %v8139, %v767
      %v8218 = vadd.f32 %v8142, %v768
      %v8219 = vadd.f32 %v8147, %v769
      %v8220 = vadd.f32 %v8150, %v770
      %v8221 = vadd.f32 %v8155, %v771
      %v8222 = vadd.f32 %v8158, %v772
      %v8223 = vadd.f32 %v8163, %v773
      %v8224 = vadd.f32 %v8166, %v774
      %v8225 = vadd.f32 %v8171, %v775
      %v8226 = vadd.f32 %v8174, %v776
      %v8227 = vadd.f32 %v8179, %v777
      %v8228 = vadd.f32 %v8182, %v778
      %v8229 = vadd.f32 %v8187, %v779
      %v8230 = vadd.f32 %v8190, %v780
      %v8231 = vadd.f32 %v8195, %v781
      %v8232 = vadd.f32 %v8198, %v782
      %v8233 = vsel %vm783, %v8201, 0.0
      %8234 = vadd.xlane.f32.xlu0 %v8233
      %v8235 = vpop.xlane.xlu0 %8234
      %v8236 = vsel %vm783, %v8202, 0.0
      %8237 = vadd.xlane.f32.xlu0 %v8236
      %v8238 = vpop.xlane.xlu0 %8237
      %v8239 = vsel %vm783, %v8203, 0.0
      %8240 = vadd.xlane.f32.xlu0 %v8239
      %v8241 = vpop.xlane.xlu0 %8240
      %v8242 = vsel %vm783, %v8204, 0.0
      %8243 = vadd.xlane.f32.xlu0 %v8242
      %v8244 = vpop.xlane.xlu0 %8243
      %v8245 = vsel %vm783, %v8205, 0.0
      %8246 = vadd.xlane.f32.xlu0 %v8245
      %v8247 = vpop.xlane.xlu0 %8246
      %v8248 = vsel %vm783, %v8206, 0.0
      %8249 = vadd.xlane.f32.xlu0 %v8248
      %v8250 = vpop.xlane.xlu0 %8249
      %v8251 = vsel %vm783, %v8207, 0.0
      %8252 = vadd.xlane.f32.xlu0 %v8251
      %v8253 = vpop.xlane.xlu0 %8252
      %v8254 = vsel %vm783, %v8208, 0.0
      %8255 = vadd.xlane.f32.xlu0 %v8254
      %v8256 = vpop.xlane.xlu0 %8255
      %v8257 = vsel %vm783, %v8209, 0.0
      %8258 = vadd.xlane.f32.xlu0 %v8257
      %v8259 = vpop.xlane.xlu0 %8258
      %v8260 = vsel %vm783, %v8210, 0.0
      %8261 = vadd.xlane.f32.xlu0 %v8260
      %v8262 = vpop.xlane.xlu0 %8261
      %v8263 = vsel %vm783, %v8211, 0.0
      %8264 = vadd.xlane.f32.xlu0 %v8263
      %v8265 = vpop.xlane.xlu0 %8264
      %v8266 = vsel %vm783, %v8212, 0.0
      %8267 = vadd.xlane.f32.xlu0 %v8266
      %v8268 = vpop.xlane.xlu0 %8267
      %v8269 = vsel %vm783, %v8213, 0.0
      %8270 = vadd.xlane.f32.xlu0 %v8269
      %v8271 = vpop.xlane.xlu0 %8270
      %v8272 = vsel %vm783, %v8214, 0.0
      %8273 = vadd.xlane.f32.xlu0 %v8272
      %v8274 = vpop.xlane.xlu0 %8273
      %v8275 = vsel %vm783, %v8215, 0.0
      %8276 = vadd.xlane.f32.xlu0 %v8275
      %v8277 = vpop.xlane.xlu0 %8276
      %v8278 = vsel %vm783, %v8216, 0.0
      %8279 = vadd.xlane.f32.xlu0 %v8278
      %v8280 = vpop.xlane.xlu0 %8279
      %v8281 = vsel %vm783, %v8217, 0.0
      %8282 = vadd.xlane.f32.xlu0 %v8281
      %v8283 = vpop.xlane.xlu0 %8282
      %v8284 = vsel %vm783, %v8218, 0.0
      %8285 = vadd.xlane.f32.xlu0 %v8284
      %v8286 = vpop.xlane.xlu0 %8285
      %v8287 = vsel %vm783, %v8219, 0.0
      %8288 = vadd.xlane.f32.xlu0 %v8287
      %v8289 = vpop.xlane.xlu0 %8288
      %v8290 = vsel %vm783, %v8220, 0.0
      %8291 = vadd.xlane.f32.xlu0 %v8290
      %v8292 = vpop.xlane.xlu0 %8291
      %v8293 = vsel %vm783, %v8221, 0.0
      %8294 = vadd.xlane.f32.xlu0 %v8293
      %v8295 = vpop.xlane.xlu0 %8294
      %v8296 = vsel %vm783, %v8222, 0.0
      %8297 = vadd.xlane.f32.xlu0 %v8296
      %v8298 = vpop.xlane.xlu0 %8297
      %v8299 = vsel %vm783, %v8223, 0.0
      %8300 = vadd.xlane.f32.xlu0 %v8299
      %v8301 = vpop.xlane.xlu0 %8300
      %v8302 = vsel %vm783, %v8224, 0.0
      %8303 = vadd.xlane.f32.xlu0 %v8302
      %v8304 = vpop.xlane.xlu0 %8303
      %v8305 = vsel %vm783, %v8225, 0.0
      %8306 = vadd.xlane.f32.xlu0 %v8305
      %v8307 = vpop.xlane.xlu0 %8306
      %v8308 = vsel %vm783, %v8226, 0.0
      %8309 = vadd.xlane.f32.xlu0 %v8308
      %v8310 = vpop.xlane.xlu0 %8309
      %v8311 = vsel %vm783, %v8227, 0.0
      %8312 = vadd.xlane.f32.xlu0 %v8311
      %v8313 = vpop.xlane.xlu0 %8312
      %v8314 = vsel %vm783, %v8228, 0.0
      %8315 = vadd.xlane.f32.xlu0 %v8314
      %v8316 = vpop.xlane.xlu0 %8315
      %v8317 = vsel %vm783, %v8229, 0.0
      %8318 = vadd.xlane.f32.xlu0 %v8317
      %v8319 = vpop.xlane.xlu0 %8318
      %v8320 = vsel %vm783, %v8230, 0.0
      %8321 = vadd.xlane.f32.xlu0 %v8320
      %v8322 = vpop.xlane.xlu0 %8321
      %v8323 = vsel %vm783, %v8231, 0.0
      %8324 = vadd.xlane.f32.xlu0 %v8323
      %v8325 = vpop.xlane.xlu0 %8324
      %v8326 = vsel %vm783, %v8232, 0.0
      %8327 = vadd.xlane.f32.xlu0 %v8326
      %v8328 = vpop.xlane.xlu0 %8327
      %v8329 = vmul.f32 %v8235, %v880
      %v8330 = vmul.f32 %v8238, %v880
      %v8331 = vmul.f32 %v8241, %v880
      %v8332 = vmul.f32 %v8244, %v880
      %v8333 = vmul.f32 %v8247, %v880
      %v8334 = vmul.f32 %v8250, %v880
      %v8335 = vmul.f32 %v8253, %v880
      %v8336 = vmul.f32 %v8256, %v880
      %v8337 = vmul.f32 %v8259, %v880
      %v8338 = vmul.f32 %v8262, %v880
      %v8339 = vmul.f32 %v8265, %v880
      %v8340 = vmul.f32 %v8268, %v880
      %v8341 = vmul.f32 %v8271, %v880
      %v8342 = vmul.f32 %v8274, %v880
      %v8343 = vmul.f32 %v8277, %v880
      %v8344 = vmul.f32 %v8280, %v880
      %v8345 = vmul.f32 %v8283, %v880
      %v8346 = vmul.f32 %v8286, %v880
      %v8347 = vmul.f32 %v8289, %v880
      %v8348 = vmul.f32 %v8292, %v880
      %v8349 = vmul.f32 %v8295, %v880
      %v8350 = vmul.f32 %v8298, %v880
      %v8351 = vmul.f32 %v8301, %v880
      %v8352 = vmul.f32 %v8304, %v880
      %v8353 = vmul.f32 %v8307, %v880
      %v8354 = vmul.f32 %v8310, %v880
      %v8355 = vmul.f32 %v8313, %v880
      %v8356 = vmul.f32 %v8316, %v880
      %v8357 = vmul.f32 %v8319, %v880
      %v8358 = vmul.f32 %v8322, %v880
      %v8359 = vmul.f32 %v8325, %v880
      %v8360 = vmul.f32 %v8328, %v880
      %v8361 = vsub.f32 %v8201, %v8329
      %v8362 = vsub.f32 %v8202, %v8330
      %v8363 = vsub.f32 %v8203, %v8331
      %v8364 = vsub.f32 %v8204, %v8332
      %v8365 = vsub.f32 %v8205, %v8333
      %v8366 = vsub.f32 %v8206, %v8334
      %v8367 = vsub.f32 %v8207, %v8335
      %v8368 = vsub.f32 %v8208, %v8336
      %v8369 = vsub.f32 %v8209, %v8337
      %v8370 = vsub.f32 %v8210, %v8338
      %v8371 = vsub.f32 %v8211, %v8339
      %v8372 = vsub.f32 %v8212, %v8340
      %v8373 = vsub.f32 %v8213, %v8341
      %v8374 = vsub.f32 %v8214, %v8342
      %v8375 = vsub.f32 %v8215, %v8343
      %v8376 = vsub.f32 %v8216, %v8344
      %v8377 = vsub.f32 %v8217, %v8345
      %v8378 = vsub.f32 %v8218, %v8346
      %v8379 = vsub.f32 %v8219, %v8347
      %v8380 = vsub.f32 %v8220, %v8348
      %v8381 = vsub.f32 %v8221, %v8349
      %v8382 = vsub.f32 %v8222, %v8350
      %v8383 = vsub.f32 %v8223, %v8351
      %v8384 = vsub.f32 %v8224, %v8352
      %v8385 = vsub.f32 %v8225, %v8353
      %v8386 = vsub.f32 %v8226, %v8354
      %v8387 = vsub.f32 %v8227, %v8355
      %v8388 = vsub.f32 %v8228, %v8356
      %v8389 = vsub.f32 %v8229, %v8357
      %v8390 = vsub.f32 %v8230, %v8358
      %v8391 = vsub.f32 %v8231, %v8359
      %v8392 = vsub.f32 %v8232, %v8360
      %v8393 = vmul.f32 %v8361, %v8361
      %v8394 = vmul.f32 %v8362, %v8362
      %v8395 = vmul.f32 %v8363, %v8363
      %v8396 = vmul.f32 %v8364, %v8364
      %v8397 = vmul.f32 %v8365, %v8365
      %v8398 = vmul.f32 %v8366, %v8366
      %v8399 = vmul.f32 %v8367, %v8367
      %v8400 = vmul.f32 %v8368, %v8368
      %v8401 = vmul.f32 %v8369, %v8369
      %v8402 = vmul.f32 %v8370, %v8370
      %v8403 = vmul.f32 %v8371, %v8371
      %v8404 = vmul.f32 %v8372, %v8372
      %v8405 = vmul.f32 %v8373, %v8373
      %v8406 = vmul.f32 %v8374, %v8374
      %v8407 = vmul.f32 %v8375, %v8375
      %v8408 = vmul.f32 %v8376, %v8376
      %v8409 = vmul.f32 %v8377, %v8377
      %v8410 = vmul.f32 %v8378, %v8378
      %v8411 = vmul.f32 %v8379, %v8379
      %v8412 = vmul.f32 %v8380, %v8380
      %v8413 = vmul.f32 %v8381, %v8381
      %v8414 = vmul.f32 %v8382, %v8382
      %v8415 = vmul.f32 %v8383, %v8383
      %v8416 = vmul.f32 %v8384, %v8384
      %v8417 = vmul.f32 %v8385, %v8385
      %v8418 = vmul.f32 %v8386, %v8386
      %v8419 = vmul.f32 %v8387, %v8387
      %v8420 = vmul.f32 %v8388, %v8388
      %v8421 = vmul.f32 %v8389, %v8389
      %v8422 = vmul.f32 %v8390, %v8390
      %v8423 = vmul.f32 %v8391, %v8391
      %v8424 = vmul.f32 %v8392, %v8392
      %v8425 = vsel %vm783, %v8393, 0.0
      %8426 = vadd.xlane.f32.xlu0 %v8425
      %v8427 = vpop.xlane.xlu0 %8426
      %v8428 = vsel %vm783, %v8394, 0.0
      %8429 = vadd.xlane.f32.xlu0 %v8428
      %v8430 = vpop.xlane.xlu0 %8429
      %v8431 = vsel %vm783, %v8395, 0.0
      %8432 = vadd.xlane.f32.xlu0 %v8431
      %v8433 = vpop.xlane.xlu0 %8432
      %v8434 = vsel %vm783, %v8396, 0.0
      %8435 = vadd.xlane.f32.xlu0 %v8434
      %v8436 = vpop.xlane.xlu0 %8435
      %v8437 = vsel %vm783, %v8397, 0.0
      %8438 = vadd.xlane.f32.xlu0 %v8437
      %v8439 = vpop.xlane.xlu0 %8438
      %v8440 = vsel %vm783, %v8398, 0.0
      %8441 = vadd.xlane.f32.xlu0 %v8440
      %v8442 = vpop.xlane.xlu0 %8441
      %v8443 = vsel %vm783, %v8399, 0.0
      %8444 = vadd.xlane.f32.xlu0 %v8443
      %v8445 = vpop.xlane.xlu0 %8444
      %v8446 = vsel %vm783, %v8400, 0.0
      %8447 = vadd.xlane.f32.xlu0 %v8446
      %v8448 = vpop.xlane.xlu0 %8447
      %v8449 = vsel %vm783, %v8401, 0.0
      %8450 = vadd.xlane.f32.xlu0 %v8449
      %v8451 = vpop.xlane.xlu0 %8450
      %v8452 = vsel %vm783, %v8402, 0.0
      %8453 = vadd.xlane.f32.xlu0 %v8452
      %v8454 = vpop.xlane.xlu0 %8453
      %v8455 = vsel %vm783, %v8403, 0.0
      %8456 = vadd.xlane.f32.xlu0 %v8455
      %v8457 = vpop.xlane.xlu0 %8456
      %v8458 = vsel %vm783, %v8404, 0.0
      %8459 = vadd.xlane.f32.xlu0 %v8458
      %v8460 = vpop.xlane.xlu0 %8459
      %v8461 = vsel %vm783, %v8405, 0.0
      %8462 = vadd.xlane.f32.xlu0 %v8461
      %v8463 = vpop.xlane.xlu0 %8462
      %v8464 = vsel %vm783, %v8406, 0.0
      %8465 = vadd.xlane.f32.xlu0 %v8464
      %v8466 = vpop.xlane.xlu0 %8465
      %v8467 = vsel %vm783, %v8407, 0.0
      %8468 = vadd.xlane.f32.xlu0 %v8467
      %v8469 = vpop.xlane.xlu0 %8468
      %v8470 = vsel %vm783, %v8408, 0.0
      %8471 = vadd.xlane.f32.xlu0 %v8470
      %v8472 = vpop.xlane.xlu0 %8471
      %v8473 = vsel %vm783, %v8409, 0.0
      %8474 = vadd.xlane.f32.xlu0 %v8473
      %v8475 = vpop.xlane.xlu0 %8474
      %v8476 = vsel %vm783, %v8410, 0.0
      %8477 = vadd.xlane.f32.xlu0 %v8476
      %v8478 = vpop.xlane.xlu0 %8477
      %v8479 = vsel %vm783, %v8411, 0.0
      %8480 = vadd.xlane.f32.xlu0 %v8479
      %v8481 = vpop.xlane.xlu0 %8480
      %v8482 = vsel %vm783, %v8412, 0.0
      %8483 = vadd.xlane.f32.xlu0 %v8482
      %v8484 = vpop.xlane.xlu0 %8483
      %v8485 = vsel %vm783, %v8413, 0.0
      %8486 = vadd.xlane.f32.xlu0 %v8485
      %v8487 = vpop.xlane.xlu0 %8486
      %v8488 = vsel %vm783, %v8414, 0.0
      %8489 = vadd.xlane.f32.xlu0 %v8488
      %v8490 = vpop.xlane.xlu0 %8489
      %v8491 = vsel %vm783, %v8415, 0.0
      %8492 = vadd.xlane.f32.xlu0 %v8491
      %v8493 = vpop.xlane.xlu0 %8492
      %v8494 = vsel %vm783, %v8416, 0.0
      %8495 = vadd.xlane.f32.xlu0 %v8494
      %v8496 = vpop.xlane.xlu0 %8495
      %v8497 = vsel %vm783, %v8417, 0.0
      %8498 = vadd.xlane.f32.xlu0 %v8497
      %v8499 = vpop.xlane.xlu0 %8498
      %v8500 = vsel %vm783, %v8418, 0.0
      %8501 = vadd.xlane.f32.xlu0 %v8500
      %v8502 = vpop.xlane.xlu0 %8501
      %v8503 = vsel %vm783, %v8419, 0.0
      %8504 = vadd.xlane.f32.xlu0 %v8503
      %v8505 = vpop.xlane.xlu0 %8504
      %v8506 = vsel %vm783, %v8420, 0.0
      %8507 = vadd.xlane.f32.xlu0 %v8506
      %v8508 = vpop.xlane.xlu0 %8507
      %v8509 = vsel %vm783, %v8421, 0.0
      %8510 = vadd.xlane.f32.xlu0 %v8509
      %v8511 = vpop.xlane.xlu0 %8510
      %v8512 = vsel %vm783, %v8422, 0.0
      %8513 = vadd.xlane.f32.xlu0 %v8512
      %v8514 = vpop.xlane.xlu0 %8513
      %v8515 = vsel %vm783, %v8423, 0.0
      %8516 = vadd.xlane.f32.xlu0 %v8515
      %v8517 = vpop.xlane.xlu0 %8516
      %v8518 = vsel %vm783, %v8424, 0.0
      %8519 = vadd.xlane.f32.xlu0 %v8518
      %v8520 = vpop.xlane.xlu0 %8519
      %v8521 = vmul.f32 %v8427, %v880
      %v8522 = vmul.f32 %v8430, %v880
      %v8523 = vmul.f32 %v8433, %v880
      %v8524 = vmul.f32 %v8436, %v880
      %v8525 = vmul.f32 %v8439, %v880
      %v8526 = vmul.f32 %v8442, %v880
      %v8527 = vmul.f32 %v8445, %v880
      %v8528 = vmul.f32 %v8448, %v880
      %v8529 = vmul.f32 %v8451, %v880
      %v8530 = vmul.f32 %v8454, %v880
      %v8531 = vmul.f32 %v8457, %v880
      %v8532 = vmul.f32 %v8460, %v880
      %v8533 = vmul.f32 %v8463, %v880
      %v8534 = vmul.f32 %v8466, %v880
      %v8535 = vmul.f32 %v8469, %v880
      %v8536 = vmul.f32 %v8472, %v880
      %v8537 = vmul.f32 %v8475, %v880
      %v8538 = vmul.f32 %v8478, %v880
      %v8539 = vmul.f32 %v8481, %v880
      %v8540 = vmul.f32 %v8484, %v880
      %v8541 = vmul.f32 %v8487, %v880
      %v8542 = vmul.f32 %v8490, %v880
      %v8543 = vmul.f32 %v8493, %v880
      %v8544 = vmul.f32 %v8496, %v880
      %v8545 = vmul.f32 %v8499, %v880
      %v8546 = vmul.f32 %v8502, %v880
      %v8547 = vmul.f32 %v8505, %v880
      %v8548 = vmul.f32 %v8508, %v880
      %v8549 = vmul.f32 %v8511, %v880
      %v8550 = vmul.f32 %v8514, %v880
      %v8551 = vmul.f32 %v8517, %v880
      %v8552 = vmul.f32 %v8520, %v880
      %v8553 = vadd.f32 %v8521, 1e-05
      %v8554 = vadd.f32 %v8522, 1e-05
      %v8555 = vadd.f32 %v8523, 1e-05
      %v8556 = vadd.f32 %v8524, 1e-05
      %v8557 = vadd.f32 %v8525, 1e-05
      %v8558 = vadd.f32 %v8526, 1e-05
      %v8559 = vadd.f32 %v8527, 1e-05
      %v8560 = vadd.f32 %v8528, 1e-05
      %v8561 = vadd.f32 %v8529, 1e-05
      %v8562 = vadd.f32 %v8530, 1e-05
      %v8563 = vadd.f32 %v8531, 1e-05
      %v8564 = vadd.f32 %v8532, 1e-05
      %v8565 = vadd.f32 %v8533, 1e-05
      %v8566 = vadd.f32 %v8534, 1e-05
      %v8567 = vadd.f32 %v8535, 1e-05
      %v8568 = vadd.f32 %v8536, 1e-05
      %v8569 = vadd.f32 %v8537, 1e-05
      %v8570 = vadd.f32 %v8538, 1e-05
      %v8571 = vadd.f32 %v8539, 1e-05
      %v8572 = vadd.f32 %v8540, 1e-05
      %v8573 = vadd.f32 %v8541, 1e-05
      %v8574 = vadd.f32 %v8542, 1e-05
      %v8575 = vadd.f32 %v8543, 1e-05
      %v8576 = vadd.f32 %v8544, 1e-05
      %v8577 = vadd.f32 %v8545, 1e-05
      %v8578 = vadd.f32 %v8546, 1e-05
      %v8579 = vadd.f32 %v8547, 1e-05
      %v8580 = vadd.f32 %v8548, 1e-05
      %v8581 = vadd.f32 %v8549, 1e-05
      %v8582 = vadd.f32 %v8550, 1e-05
      %v8583 = vadd.f32 %v8551, 1e-05
      %v8584 = vadd.f32 %v8552, 1e-05
      %v8585 = vrsqrt.pop %v8553
      %v8586 = vrsqrt.pop %v8554
      %v8587 = vrsqrt.pop %v8555
      %v8588 = vrsqrt.pop %v8556
      %v8589 = vrsqrt.pop %v8557
      %v8590 = vrsqrt.pop %v8558
      %v8591 = vrsqrt.pop %v8559
      %v8592 = vrsqrt.pop %v8560
      %v8593 = vrsqrt.pop %v8561
      %v8594 = vrsqrt.pop %v8562
      %v8595 = vrsqrt.pop %v8563
      %v8596 = vrsqrt.pop %v8564
      %v8597 = vrsqrt.pop %v8565
      %v8598 = vrsqrt.pop %v8566
      %v8599 = vrsqrt.pop %v8567
      %v8600 = vrsqrt.pop %v8568
      %v8601 = vrsqrt.pop %v8569
      %v8602 = vrsqrt.pop %v8570
      %v8603 = vrsqrt.pop %v8571
      %v8604 = vrsqrt.pop %v8572
      %v8605 = vrsqrt.pop %v8573
      %v8606 = vrsqrt.pop %v8574
      %v8607 = vrsqrt.pop %v8575
      %v8608 = vrsqrt.pop %v8576
      %v8609 = vrsqrt.pop %v8577
      %v8610 = vrsqrt.pop %v8578
      %v8611 = vrsqrt.pop %v8579
      %v8612 = vrsqrt.pop %v8580
      %v8613 = vrsqrt.pop %v8581
      %v8614 = vrsqrt.pop %v8582
      %v8615 = vrsqrt.pop %v8583
      %v8616 = vrsqrt.pop %v8584
      %v8617 = vmul.f32 %v8361, %v8585
      %v8618 = vmul.f32 %v8362, %v8586
      %v8619 = vmul.f32 %v8363, %v8587
      %v8620 = vmul.f32 %v8364, %v8588
      %v8621 = vmul.f32 %v8365, %v8589
      %v8622 = vmul.f32 %v8366, %v8590
      %v8623 = vmul.f32 %v8367, %v8591
      %v8624 = vmul.f32 %v8368, %v8592
      %v8625 = vmul.f32 %v8369, %v8593
      %v8626 = vmul.f32 %v8370, %v8594
      %v8627 = vmul.f32 %v8371, %v8595
      %v8628 = vmul.f32 %v8372, %v8596
      %v8629 = vmul.f32 %v8373, %v8597
      %v8630 = vmul.f32 %v8374, %v8598
      %v8631 = vmul.f32 %v8375, %v8599
      %v8632 = vmul.f32 %v8376, %v8600
      %v8633 = vmul.f32 %v8377, %v8601
      %v8634 = vmul.f32 %v8378, %v8602
      %v8635 = vmul.f32 %v8379, %v8603
      %v8636 = vmul.f32 %v8380, %v8604
      %v8637 = vmul.f32 %v8381, %v8605
      %v8638 = vmul.f32 %v8382, %v8606
      %v8639 = vmul.f32 %v8383, %v8607
      %v8640 = vmul.f32 %v8384, %v8608
      %v8641 = vmul.f32 %v8385, %v8609
      %v8642 = vmul.f32 %v8386, %v8610
      %v8643 = vmul.f32 %v8387, %v8611
      %v8644 = vmul.f32 %v8388, %v8612
      %v8645 = vmul.f32 %v8389, %v8613
      %v8646 = vmul.f32 %v8390, %v8614
      %v8647 = vmul.f32 %v8391, %v8615
      %v8648 = vmul.f32 %v8392, %v8616
      %v8649 = vlaneseq
      %v8650 = vshrl.u32 %v8649, 7
      %v8651 = vsub.s32 6, %v8650
      %v8652 = vrot.slane %v749, %v8651
      %v8653 = vmul.f32 %v8617, %v8652
      %v8654 = vmul.f32 %v8618, %v8652
      %v8655 = vmul.f32 %v8619, %v8652
      %v8656 = vmul.f32 %v8620, %v8652
      %v8657 = vmul.f32 %v8621, %v8652
      %v8658 = vmul.f32 %v8622, %v8652
      %v8659 = vmul.f32 %v8623, %v8652
      %v8660 = vmul.f32 %v8624, %v8652
      %v8661 = vmul.f32 %v8625, %v8652
      %v8662 = vmul.f32 %v8626, %v8652
      %v8663 = vmul.f32 %v8627, %v8652
      %v8664 = vmul.f32 %v8628, %v8652
      %v8665 = vmul.f32 %v8629, %v8652
      %v8666 = vmul.f32 %v8630, %v8652
      %v8667 = vmul.f32 %v8631, %v8652
      %v8668 = vmul.f32 %v8632, %v8652
      %v8669 = vmul.f32 %v8633, %v8652
      %v8670 = vmul.f32 %v8634, %v8652
      %v8671 = vmul.f32 %v8635, %v8652
      %v8672 = vmul.f32 %v8636, %v8652
      %v8673 = vmul.f32 %v8637, %v8652
      %v8674 = vmul.f32 %v8638, %v8652
      %v8675 = vmul.f32 %v8639, %v8652
      %v8676 = vmul.f32 %v8640, %v8652
      %v8677 = vmul.f32 %v8641, %v8652
      %v8678 = vmul.f32 %v8642, %v8652
      %v8679 = vmul.f32 %v8643, %v8652
      %v8680 = vmul.f32 %v8644, %v8652
      %v8681 = vmul.f32 %v8645, %v8652
      %v8682 = vmul.f32 %v8646, %v8652
      %v8683 = vmul.f32 %v8647, %v8652
      %v8684 = vmul.f32 %v8648, %v8652
      %v8685 = vlaneseq
      %v8686 = vshrl.u32 %v8685, 7
      %v8687 = vsub.s32 7, %v8686
      %v8688 = vrot.slane %v749, %v8687
      %v8689 = vadd.f32 %v8653, %v8688
      %v8690 = vadd.f32 %v8654, %v8688
      %v8691 = vadd.f32 %v8655, %v8688
      %v8692 = vadd.f32 %v8656, %v8688
      %v8693 = vadd.f32 %v8657, %v8688
      %v8694 = vadd.f32 %v8658, %v8688
      %v8695 = vadd.f32 %v8659, %v8688
      %v8696 = vadd.f32 %v8660, %v8688
      %v8697 = vadd.f32 %v8661, %v8688
      %v8698 = vadd.f32 %v8662, %v8688
      %v8699 = vadd.f32 %v8663, %v8688
      %v8700 = vadd.f32 %v8664, %v8688
      %v8701 = vadd.f32 %v8665, %v8688
      %v8702 = vadd.f32 %v8666, %v8688
      %v8703 = vadd.f32 %v8667, %v8688
      %v8704 = vadd.f32 %v8668, %v8688
      %v8705 = vadd.f32 %v8669, %v8688
      %v8706 = vadd.f32 %v8670, %v8688
      %v8707 = vadd.f32 %v8671, %v8688
      %v8708 = vadd.f32 %v8672, %v8688
      %v8709 = vadd.f32 %v8673, %v8688
      %v8710 = vadd.f32 %v8674, %v8688
      %v8711 = vadd.f32 %v8675, %v8688
      %v8712 = vadd.f32 %v8676, %v8688
      %v8713 = vadd.f32 %v8677, %v8688
      %v8714 = vadd.f32 %v8678, %v8688
      %v8715 = vadd.f32 %v8679, %v8688
      %v8716 = vadd.f32 %v8680, %v8688
      %v8717 = vadd.f32 %v8681, %v8688
      %v8718 = vadd.f32 %v8682, %v8688
      %v8719 = vadd.f32 %v8683, %v8688
      %v8720 = vadd.f32 %v8684, %v8688
      %v8721 = vpack.c.bf16 %v8690, %v8689
      %v8722 = vpack.c.bf16 %v8692, %v8691
      %v8723 = vpack.c.bf16 %v8694, %v8693
      %v8724 = vpack.c.bf16 %v8696, %v8695
      %v8725 = vpack.c.bf16 %v8698, %v8697
      %v8726 = vpack.c.bf16 %v8700, %v8699
      %v8727 = vpack.c.bf16 %v8702, %v8701
      %v8728 = vpack.c.bf16 %v8704, %v8703
      %v8729 = vpack.c.bf16 %v8706, %v8705
      %v8730 = vpack.c.bf16 %v8708, %v8707
      %v8731 = vpack.c.bf16 %v8710, %v8709
      %v8732 = vpack.c.bf16 %v8712, %v8711
      %v8733 = vpack.c.bf16 %v8714, %v8713
      %v8734 = vpack.c.bf16 %v8716, %v8715
      %v8735 = vpack.c.bf16 %v8718, %v8717
      %v8736 = vpack.c.bf16 %v8720, %v8719
      %v8737 = vld [vmem:[%s526] sm:$0xf]
      %v8738 = vld [vmem:[%s526 + $0x4] sm:$0xf]
      %v8739 = vld [vmem:[%s526 + $0x8] sm:$0xf]
      %v8740 = vld [vmem:[%s526 + $0xc] sm:$0xf]
      %v8741 = vld [vmem:[%s544] sm:$0x1]
      %v8743 = vlaneseq
      %v8744 = vshrl.u32 %v8743, 7
      %v8745 = vsub.s32 0, %v8744
      %v8746 = vrot.slane %v8741, %v8745
      %v8752 = vunpack.c.l.b16 %v8737
      %v8753 = vunpack.c.l.b16 %v8738
      %v8754 = vunpack.c.l.b16 %v8739
      %v8755 = vunpack.c.l.b16 %v8740
      %v8756 = vpack.c.b16 %v8753, %v8752
      %v8757 = vpack.c.b16 %v8755, %v8754
      %v8761 = vsel %vm783, %v8721, 0
      %v8764 = vsel %vm783, %v8722, 0
      %v8767 = vsel %vm783, %v8723, 0
      %v8770 = vsel %vm783, %v8724, 0
      %v8773 = vsel %vm783, %v8725, 0
      %v8776 = vsel %vm783, %v8726, 0
      %v8779 = vsel %vm783, %v8727, 0
      %v8782 = vsel %vm783, %v8728, 0
      %v8785 = vsel %vm783, %v8729, 0
      %v8788 = vsel %vm783, %v8730, 0
      %v8791 = vsel %vm783, %v8731, 0
      %v8794 = vsel %vm783, %v8732, 0
      %v8797 = vsel %vm783, %v8733, 0
      %v8800 = vsel %vm783, %v8734, 0
      %v8803 = vsel %vm783, %v8735, 0
      %v8806 = vsel %vm783, %v8736, 0
      %8808 = vmatprep.subr.bf16.mxu0 0
      %8809 = vmatpush1.bf16.msra.mxu0 0
      %8810 = vmatprep.subr.bf16.mxu0 0
      %8811 = vmatpush1.bf16.msra.mxu0 0
      %8812 = vmatprep.subr.bf16.mxu0 0
      %8813 = vmatpush1.bf16.msra.mxu0 0
      %8814 = vmatprep.subr.bf16.mxu0 0
      %8815 = vmatpush1.bf16.msra.mxu0 0
      %8816 = vmatprep.subr.bf16.mxu0 0
      %8817 = vmatpush1.bf16.msra.mxu0 0
      %8818 = vmatprep.subr.bf16.mxu0 0
      %8819 = vmatpush1.bf16.msra.mxu0 0
      %8820 = vmatprep.subr.bf16.mxu0 0
      %8821 = vmatpush1.bf16.msra.mxu0 %v8757
      %8822 = vmatprep.subr.bf16.mxu0 0
      %8823 = vmatpush1.bf16.msra.mxu0 %v8756
      %8824 = vmatprep.subr.bf16.mxu0 0
      %8825 = vmatpush2.bf16.msra.mxu0 0
      %8826 = vmatprep.subr.bf16.mxu0 0
      %8827 = vmatpush2.bf16.msra.mxu0 0
      %8828 = vmatprep.subr.bf16.mxu0 0
      %8829 = vmatpush2.bf16.msra.mxu0 0
      %8830 = vmatprep.subr.bf16.mxu0 0
      %8831 = vmatpush2.bf16.msra.mxu0 0
      %8832 = vmatprep.subr.bf16.mxu0 0
      %8833 = vmatpush2.bf16.msra.mxu0 0
      %8834 = vmatprep.subr.bf16.mxu0 0
      %8835 = vmatpush2.bf16.msra.mxu0 0
      %8836 = vmatprep.subr.bf16.mxu0 0
      %8837 = vmatpush2.bf16.msra.mxu0 0
      %8838 = vmatprep.subr.bf16.mxu0 0
      %8839 = vmatpush2.bf16.msra.mxu0 0
      %8840 = vmatprep.mubr.bf16.mxu0 0
      %8841 = vmatmul.mubr.bf16.gmra.mxu0 %v8761
      %v8842 = vpop.f32.mrf.mxu0
      %v8843 = vadd.f32 %v8746, %v8842
      %v8844 = vpop.f32.mrf.mxu0
      %v8845 = vpop.f32.mrf.mxu0
      %v8846 = vadd.f32 %v8746, %v8845
      %v8847 = vpop.f32.mrf.mxu0
      %8848 = vmatprep.mubr.bf16.mxu0 0
      %8849 = vmatmul.mubr.bf16.gmra.mxu0 %v8764
      %v8850 = vpop.f32.mrf.mxu0
      %v8851 = vadd.f32 %v8746, %v8850
      %v8852 = vpop.f32.mrf.mxu0
      %v8853 = vpop.f32.mrf.mxu0
      %v8854 = vadd.f32 %v8746, %v8853
      %v8855 = vpop.f32.mrf.mxu0
      %8856 = vmatprep.mubr.bf16.mxu0 0
      %8857 = vmatmul.mubr.bf16.gmra.mxu0 %v8767
      %v8858 = vpop.f32.mrf.mxu0
      %v8859 = vadd.f32 %v8746, %v8858
      %v8860 = vpop.f32.mrf.mxu0
      %v8861 = vpop.f32.mrf.mxu0
      %v8862 = vadd.f32 %v8746, %v8861
      %v8863 = vpop.f32.mrf.mxu0
      %8864 = vmatprep.mubr.bf16.mxu0 0
      %8865 = vmatmul.mubr.bf16.gmra.mxu0 %v8770
      %v8866 = vpop.f32.mrf.mxu0
      %v8867 = vadd.f32 %v8746, %v8866
      %v8868 = vpop.f32.mrf.mxu0
      %v8869 = vpop.f32.mrf.mxu0
      %v8870 = vadd.f32 %v8746, %v8869
      %v8871 = vpop.f32.mrf.mxu0
      %8872 = vmatprep.mubr.bf16.mxu0 0
      %8873 = vmatmul.mubr.bf16.gmra.mxu0 %v8773
      %v8874 = vpop.f32.mrf.mxu0
      %v8875 = vadd.f32 %v8746, %v8874
      %v8876 = vpop.f32.mrf.mxu0
      %v8877 = vpop.f32.mrf.mxu0
      %v8878 = vadd.f32 %v8746, %v8877
      %v8879 = vpop.f32.mrf.mxu0
      %8880 = vmatprep.mubr.bf16.mxu0 0
      %8881 = vmatmul.mubr.bf16.gmra.mxu0 %v8776
      %v8882 = vpop.f32.mrf.mxu0
      %v8883 = vadd.f32 %v8746, %v8882
      %v8884 = vpop.f32.mrf.mxu0
      %v8885 = vpop.f32.mrf.mxu0
      %v8886 = vadd.f32 %v8746, %v8885
      %v8887 = vpop.f32.mrf.mxu0
      %8888 = vmatprep.mubr.bf16.mxu0 0
      %8889 = vmatmul.mubr.bf16.gmra.mxu0 %v8779
      %v8890 = vpop.f32.mrf.mxu0
      %v8891 = vadd.f32 %v8746, %v8890
      %v8892 = vpop.f32.mrf.mxu0
      %v8893 = vpop.f32.mrf.mxu0
      %v8894 = vadd.f32 %v8746, %v8893
      %v8895 = vpop.f32.mrf.mxu0
      %8896 = vmatprep.mubr.bf16.mxu0 0
      %8897 = vmatmul.mubr.bf16.gmra.mxu0 %v8782
      %v8898 = vpop.f32.mrf.mxu0
      %v8899 = vadd.f32 %v8746, %v8898
      %v8900 = vpop.f32.mrf.mxu0
      %v8901 = vpop.f32.mrf.mxu0
      %v8902 = vadd.f32 %v8746, %v8901
      %v8903 = vpop.f32.mrf.mxu0
      %8904 = vmatprep.mubr.bf16.mxu0 0
      %8905 = vmatmul.mubr.bf16.gmra.mxu0 %v8785
      %v8906 = vpop.f32.mrf.mxu0
      %v8907 = vadd.f32 %v8746, %v8906
      %v8908 = vpop.f32.mrf.mxu0
      %v8909 = vpop.f32.mrf.mxu0
      %v8910 = vadd.f32 %v8746, %v8909
      %v8911 = vpop.f32.mrf.mxu0
      %8912 = vmatprep.mubr.bf16.mxu0 0
      %8913 = vmatmul.mubr.bf16.gmra.mxu0 %v8788
      %v8914 = vpop.f32.mrf.mxu0
      %v8915 = vadd.f32 %v8746, %v8914
      %v8916 = vpop.f32.mrf.mxu0
      %v8917 = vpop.f32.mrf.mxu0
      %v8918 = vadd.f32 %v8746, %v8917
      %v8919 = vpop.f32.mrf.mxu0
      %8920 = vmatprep.mubr.bf16.mxu0 0
      %8921 = vmatmul.mubr.bf16.gmra.mxu0 %v8791
      %v8922 = vpop.f32.mrf.mxu0
      %v8923 = vadd.f32 %v8746, %v8922
      %v8924 = vpop.f32.mrf.mxu0
      %v8925 = vpop.f32.mrf.mxu0
      %v8926 = vadd.f32 %v8746, %v8925
      %v8927 = vpop.f32.mrf.mxu0
      %8928 = vmatprep.mubr.bf16.mxu0 0
      %8929 = vmatmul.mubr.bf16.gmra.mxu0 %v8794
      %v8930 = vpop.f32.mrf.mxu0
      %v8931 = vadd.f32 %v8746, %v8930
      %v8932 = vpop.f32.mrf.mxu0
      %v8933 = vpop.f32.mrf.mxu0
      %v8934 = vadd.f32 %v8746, %v8933
      %v8935 = vpop.f32.mrf.mxu0
      %8936 = vmatprep.mubr.bf16.mxu0 0
      %8937 = vmatmul.mubr.bf16.gmra.mxu0 %v8797
      %v8938 = vpop.f32.mrf.mxu0
      %v8939 = vadd.f32 %v8746, %v8938
      %v8940 = vpop.f32.mrf.mxu0
      %v8941 = vpop.f32.mrf.mxu0
      %v8942 = vadd.f32 %v8746, %v8941
      %v8943 = vpop.f32.mrf.mxu0
      %8944 = vmatprep.mubr.bf16.mxu0 0
      %8945 = vmatmul.mubr.bf16.gmra.mxu0 %v8800
      %v8946 = vpop.f32.mrf.mxu0
      %v8947 = vadd.f32 %v8746, %v8946
      %v8948 = vpop.f32.mrf.mxu0
      %v8949 = vpop.f32.mrf.mxu0
      %v8950 = vadd.f32 %v8746, %v8949
      %v8951 = vpop.f32.mrf.mxu0
      %8952 = vmatprep.mubr.bf16.mxu0 0
      %8953 = vmatmul.mubr.bf16.gmra.mxu0 %v8803
      %v8954 = vpop.f32.mrf.mxu0
      %v8955 = vadd.f32 %v8746, %v8954
      %v8956 = vpop.f32.mrf.mxu0
      %v8957 = vpop.f32.mrf.mxu0
      %v8958 = vadd.f32 %v8746, %v8957
      %v8959 = vpop.f32.mrf.mxu0
      %8960 = vmatprep.mubr.bf16.mxu0 0
      %8961 = vmatmul.mubr.bf16.gmra.mxu0 %v8806
      %v8962 = vpop.f32.mrf.mxu0
      %v8963 = vadd.f32 %v8746, %v8962
      %v8964 = vpop.f32.mrf.mxu0
      %v8965 = vpop.f32.mrf.mxu0
      %v8966 = vadd.f32 %v8746, %v8965
      %v8967 = vpop.f32.mrf.mxu0
      %8968 = vdwg.mxu0
      %v8969 = vmul.f32 %v8843, 0.5
      %v8970 = vmul.f32 %v8846, 0.5
      %v8971 = vmul.f32 %v8851, 0.5
      %v8972 = vmul.f32 %v8854, 0.5
      %v8973 = vmul.f32 %v8859, 0.5
      %v8974 = vmul.f32 %v8862, 0.5
      %v8975 = vmul.f32 %v8867, 0.5
      %v8976 = vmul.f32 %v8870, 0.5
      %v8977 = vmul.f32 %v8875, 0.5
      %v8978 = vmul.f32 %v8878, 0.5
      %v8979 = vmul.f32 %v8883, 0.5
      %v8980 = vmul.f32 %v8886, 0.5
      %v8981 = vmul.f32 %v8891, 0.5
      %v8982 = vmul.f32 %v8894, 0.5
      %v8983 = vmul.f32 %v8899, 0.5
      %v8984 = vmul.f32 %v8902, 0.5
      %v8985 = vmul.f32 %v8907, 0.5
      %v8986 = vmul.f32 %v8910, 0.5
      %v8987 = vmul.f32 %v8915, 0.5
      %v8988 = vmul.f32 %v8918, 0.5
      %v8989 = vmul.f32 %v8923, 0.5
      %v8990 = vmul.f32 %v8926, 0.5
      %v8991 = vmul.f32 %v8931, 0.5
      %v8992 = vmul.f32 %v8934, 0.5
      %v8993 = vmul.f32 %v8939, 0.5
      %v8994 = vmul.f32 %v8942, 0.5
      %v8995 = vmul.f32 %v8947, 0.5
      %v8996 = vmul.f32 %v8950, 0.5
      %v8997 = vmul.f32 %v8955, 0.5
      %v8998 = vmul.f32 %v8958, 0.5
      %v8999 = vmul.f32 %v8963, 0.5
      %v9000 = vmul.f32 %v8966, 0.5
      %v9001 = vmul.f32 %v8843, 0.044715
      %v9002 = vmul.f32 %v8846, 0.044715
      %v9003 = vmul.f32 %v8851, 0.044715
      %v9004 = vmul.f32 %v8854, 0.044715
      %v9005 = vmul.f32 %v8859, 0.044715
      %v9006 = vmul.f32 %v8862, 0.044715
      %v9007 = vmul.f32 %v8867, 0.044715
      %v9008 = vmul.f32 %v8870, 0.044715
      %v9009 = vmul.f32 %v8875, 0.044715
      %v9010 = vmul.f32 %v8878, 0.044715
      %v9011 = vmul.f32 %v8883, 0.044715
      %v9012 = vmul.f32 %v8886, 0.044715
      %v9013 = vmul.f32 %v8891, 0.044715
      %v9014 = vmul.f32 %v8894, 0.044715
      %v9015 = vmul.f32 %v8899, 0.044715
      %v9016 = vmul.f32 %v8902, 0.044715
      %v9017 = vmul.f32 %v8907, 0.044715
      %v9018 = vmul.f32 %v8910, 0.044715
      %v9019 = vmul.f32 %v8915, 0.044715
      %v9020 = vmul.f32 %v8918, 0.044715
      %v9021 = vmul.f32 %v8923, 0.044715
      %v9022 = vmul.f32 %v8926, 0.044715
      %v9023 = vmul.f32 %v8931, 0.044715
      %v9024 = vmul.f32 %v8934, 0.044715
      %v9025 = vmul.f32 %v8939, 0.044715
      %v9026 = vmul.f32 %v8942, 0.044715
      %v9027 = vmul.f32 %v8947, 0.044715
      %v9028 = vmul.f32 %v8950, 0.044715
      %v9029 = vmul.f32 %v8955, 0.044715
      %v9030 = vmul.f32 %v8958, 0.044715
      %v9031 = vmul.f32 %v8963, 0.044715
      %v9032 = vmul.f32 %v8966, 0.044715
      %v9033 = vmul.f32 %v9001, %v8843
      %v9034 = vmul.f32 %v9002, %v8846
      %v9035 = vmul.f32 %v9003, %v8851
      %v9036 = vmul.f32 %v9004, %v8854
      %v9037 = vmul.f32 %v9005, %v8859
      %v9038 = vmul.f32 %v9006, %v8862
      %v9039 = vmul.f32 %v9007, %v8867
      %v9040 = vmul.f32 %v9008, %v8870
      %v9041 = vmul.f32 %v9009, %v8875
      %v9042 = vmul.f32 %v9010, %v8878
      %v9043 = vmul.f32 %v9011, %v8883
      %v9044 = vmul.f32 %v9012, %v8886
      %v9045 = vmul.f32 %v9013, %v8891
      %v9046 = vmul.f32 %v9014, %v8894
      %v9047 = vmul.f32 %v9015, %v8899
      %v9048 = vmul.f32 %v9016, %v8902
      %v9049 = vmul.f32 %v9017, %v8907
      %v9050 = vmul.f32 %v9018, %v8910
      %v9051 = vmul.f32 %v9019, %v8915
      %v9052 = vmul.f32 %v9020, %v8918
      %v9053 = vmul.f32 %v9021, %v8923
      %v9054 = vmul.f32 %v9022, %v8926
      %v9055 = vmul.f32 %v9023, %v8931
      %v9056 = vmul.f32 %v9024, %v8934
      %v9057 = vmul.f32 %v9025, %v8939
      %v9058 = vmul.f32 %v9026, %v8942
      %v9059 = vmul.f32 %v9027, %v8947
      %v9060 = vmul.f32 %v9028, %v8950
      %v9061 = vmul.f32 %v9029, %v8955
      %v9062 = vmul.f32 %v9030, %v8958
      %v9063 = vmul.f32 %v9031, %v8963
      %v9064 = vmul.f32 %v9032, %v8966
      %v9065 = vmul.f32 %v9033, %v8843
      %v9066 = vmul.f32 %v9034, %v8846
      %v9067 = vmul.f32 %v9035, %v8851
      %v9068 = vmul.f32 %v9036, %v8854
      %v9069 = vmul.f32 %v9037, %v8859
      %v9070 = vmul.f32 %v9038, %v8862
      %v9071 = vmul.f32 %v9039, %v8867
      %v9072 = vmul.f32 %v9040, %v8870
      %v9073 = vmul.f32 %v9041, %v8875
      %v9074 = vmul.f32 %v9042, %v8878
      %v9075 = vmul.f32 %v9043, %v8883
      %v9076 = vmul.f32 %v9044, %v8886
      %v9077 = vmul.f32 %v9045, %v8891
      %v9078 = vmul.f32 %v9046, %v8894
      %v9079 = vmul.f32 %v9047, %v8899
      %v9080 = vmul.f32 %v9048, %v8902
      %v9081 = vmul.f32 %v9049, %v8907
      %v9082 = vmul.f32 %v9050, %v8910
      %v9083 = vmul.f32 %v9051, %v8915
      %v9084 = vmul.f32 %v9052, %v8918
      %v9085 = vmul.f32 %v9053, %v8923
      %v9086 = vmul.f32 %v9054, %v8926
      %v9087 = vmul.f32 %v9055, %v8931
      %v9088 = vmul.f32 %v9056, %v8934
      %v9089 = vmul.f32 %v9057, %v8939
      %v9090 = vmul.f32 %v9058, %v8942
      %v9091 = vmul.f32 %v9059, %v8947
      %v9092 = vmul.f32 %v9060, %v8950
      %v9093 = vmul.f32 %v9061, %v8955
      %v9094 = vmul.f32 %v9062, %v8958
      %v9095 = vmul.f32 %v9063, %v8963
      %v9096 = vmul.f32 %v9064, %v8966
      %v9097 = vadd.f32 %v8843, %v9065
      %v9098 = vadd.f32 %v8846, %v9066
      %v9099 = vadd.f32 %v8851, %v9067
      %v9100 = vadd.f32 %v8854, %v9068
      %v9101 = vadd.f32 %v8859, %v9069
      %v9102 = vadd.f32 %v8862, %v9070
      %v9103 = vadd.f32 %v8867, %v9071
      %v9104 = vadd.f32 %v8870, %v9072
      %v9105 = vadd.f32 %v8875, %v9073
      %v9106 = vadd.f32 %v8878, %v9074
      %v9107 = vadd.f32 %v8883, %v9075
      %v9108 = vadd.f32 %v8886, %v9076
      %v9109 = vadd.f32 %v8891, %v9077
      %v9110 = vadd.f32 %v8894, %v9078
      %v9111 = vadd.f32 %v8899, %v9079
      %v9112 = vadd.f32 %v8902, %v9080
      %v9113 = vadd.f32 %v8907, %v9081
      %v9114 = vadd.f32 %v8910, %v9082
      %v9115 = vadd.f32 %v8915, %v9083
      %v9116 = vadd.f32 %v8918, %v9084
      %v9117 = vadd.f32 %v8923, %v9085
      %v9118 = vadd.f32 %v8926, %v9086
      %v9119 = vadd.f32 %v8931, %v9087
      %v9120 = vadd.f32 %v8934, %v9088
      %v9121 = vadd.f32 %v8939, %v9089
      %v9122 = vadd.f32 %v8942, %v9090
      %v9123 = vadd.f32 %v8947, %v9091
      %v9124 = vadd.f32 %v8950, %v9092
      %v9125 = vadd.f32 %v8955, %v9093
      %v9126 = vadd.f32 %v8958, %v9094
      %v9127 = vadd.f32 %v8963, %v9095
      %v9128 = vadd.f32 %v8966, %v9096
      %v9129 = vmul.f32 %v9097, 0.7978846
      %v9130 = vmul.f32 %v9098, 0.7978846
      %v9131 = vmul.f32 %v9099, 0.7978846
      %v9132 = vmul.f32 %v9100, 0.7978846
      %v9133 = vmul.f32 %v9101, 0.7978846
      %v9134 = vmul.f32 %v9102, 0.7978846
      %v9135 = vmul.f32 %v9103, 0.7978846
      %v9136 = vmul.f32 %v9104, 0.7978846
      %v9137 = vmul.f32 %v9105, 0.7978846
      %v9138 = vmul.f32 %v9106, 0.7978846
      %v9139 = vmul.f32 %v9107, 0.7978846
      %v9140 = vmul.f32 %v9108, 0.7978846
      %v9141 = vmul.f32 %v9109, 0.7978846
      %v9142 = vmul.f32 %v9110, 0.7978846
      %v9143 = vmul.f32 %v9111, 0.7978846
      %v9144 = vmul.f32 %v9112, 0.7978846
      %v9145 = vmul.f32 %v9113, 0.7978846
      %v9146 = vmul.f32 %v9114, 0.7978846
      %v9147 = vmul.f32 %v9115, 0.7978846
      %v9148 = vmul.f32 %v9116, 0.7978846
      %v9149 = vmul.f32 %v9117, 0.7978846
      %v9150 = vmul.f32 %v9118, 0.7978846
      %v9151 = vmul.f32 %v9119, 0.7978846
      %v9152 = vmul.f32 %v9120, 0.7978846
      %v9153 = vmul.f32 %v9121, 0.7978846
      %v9154 = vmul.f32 %v9122, 0.7978846
      %v9155 = vmul.f32 %v9123, 0.7978846
      %v9156 = vmul.f32 %v9124, 0.7978846
      %v9157 = vmul.f32 %v9125, 0.7978846
      %v9158 = vmul.f32 %v9126, 0.7978846
      %v9159 = vmul.f32 %v9127, 0.7978846
      %v9160 = vmul.f32 %v9128, 0.7978846
      %v9161 = vtanh.pop %v9129
      %v9162 = vtanh.pop %v9130
      %v9163 = vtanh.pop %v9131
      %v9164 = vtanh.pop %v9132
      %v9165 = vtanh.pop %v9133
      %v9166 = vtanh.pop %v9134
      %v9167 = vtanh.pop %v9135
      %v9168 = vtanh.pop %v9136
      %v9169 = vtanh.pop %v9137
      %v9170 = vtanh.pop %v9138
      %v9171 = vtanh.pop %v9139
      %v9172 = vtanh.pop %v9140
      %v9173 = vtanh.pop %v9141
      %v9174 = vtanh.pop %v9142
      %v9175 = vtanh.pop %v9143
      %v9176 = vtanh.pop %v9144
      %v9177 = vtanh.pop %v9145
      %v9178 = vtanh.pop %v9146
      %v9179 = vtanh.pop %v9147
      %v9180 = vtanh.pop %v9148
      %v9181 = vtanh.pop %v9149
      %v9182 = vtanh.pop %v9150
      %v9183 = vtanh.pop %v9151
      %v9184 = vtanh.pop %v9152
      %v9185 = vtanh.pop %v9153
      %v9186 = vtanh.pop %v9154
      %v9187 = vtanh.pop %v9155
      %v9188 = vtanh.pop %v9156
      %v9189 = vtanh.pop %v9157
      %v9190 = vtanh.pop %v9158
      %v9191 = vtanh.pop %v9159
      %v9192 = vtanh.pop %v9160
      %v9193 = vadd.f32 %v9161, 1.0
      %v9194 = vadd.f32 %v9162, 1.0
      %v9195 = vadd.f32 %v9163, 1.0
      %v9196 = vadd.f32 %v9164, 1.0
      %v9197 = vadd.f32 %v9165, 1.0
      %v9198 = vadd.f32 %v9166, 1.0
      %v9199 = vadd.f32 %v9167, 1.0
      %v9200 = vadd.f32 %v9168, 1.0
      %v9201 = vadd.f32 %v9169, 1.0
      %v9202 = vadd.f32 %v9170, 1.0
      %v9203 = vadd.f32 %v9171, 1.0
      %v9204 = vadd.f32 %v9172, 1.0
      %v9205 = vadd.f32 %v9173, 1.0
      %v9206 = vadd.f32 %v9174, 1.0
      %v9207 = vadd.f32 %v9175, 1.0
      %v9208 = vadd.f32 %v9176, 1.0
      %v9209 = vadd.f32 %v9177, 1.0
      %v9210 = vadd.f32 %v9178, 1.0
      %v9211 = vadd.f32 %v9179, 1.0
      %v9212 = vadd.f32 %v9180, 1.0
      %v9213 = vadd.f32 %v9181, 1.0
      %v9214 = vadd.f32 %v9182, 1.0
      %v9215 = vadd.f32 %v9183, 1.0
      %v9216 = vadd.f32 %v9184, 1.0
      %v9217 = vadd.f32 %v9185, 1.0
      %v9218 = vadd.f32 %v9186, 1.0
      %v9219 = vadd.f32 %v9187, 1.0
      %v9220 = vadd.f32 %v9188, 1.0
      %v9221 = vadd.f32 %v9189, 1.0
      %v9222 = vadd.f32 %v9190, 1.0
      %v9223 = vadd.f32 %v9191, 1.0
      %v9224 = vadd.f32 %v9192, 1.0
      %v9225 = vmul.f32 %v8969, %v9193
      %v9226 = vmul.f32 %v8970, %v9194
      %v9227 = vmul.f32 %v8971, %v9195
      %v9228 = vmul.f32 %v8972, %v9196
      %v9229 = vmul.f32 %v8973, %v9197
      %v9230 = vmul.f32 %v8974, %v9198
      %v9231 = vmul.f32 %v8975, %v9199
      %v9232 = vmul.f32 %v8976, %v9200
      %v9233 = vmul.f32 %v8977, %v9201
      %v9234 = vmul.f32 %v8978, %v9202
      %v9235 = vmul.f32 %v8979, %v9203
      %v9236 = vmul.f32 %v8980, %v9204
      %v9237 = vmul.f32 %v8981, %v9205
      %v9238 = vmul.f32 %v8982, %v9206
      %v9239 = vmul.f32 %v8983, %v9207
      %v9240 = vmul.f32 %v8984, %v9208
      %v9241 = vmul.f32 %v8985, %v9209
      %v9242 = vmul.f32 %v8986, %v9210
      %v9243 = vmul.f32 %v8987, %v9211
      %v9244 = vmul.f32 %v8988, %v9212
      %v9245 = vmul.f32 %v8989, %v9213
      %v9246 = vmul.f32 %v8990, %v9214
      %v9247 = vmul.f32 %v8991, %v9215
      %v9248 = vmul.f32 %v8992, %v9216
      %v9249 = vmul.f32 %v8993, %v9217
      %v9250 = vmul.f32 %v8994, %v9218
      %v9251 = vmul.f32 %v8995, %v9219
      %v9252 = vmul.f32 %v8996, %v9220
      %v9253 = vmul.f32 %v8997, %v9221
      %v9254 = vmul.f32 %v8998, %v9222
      %v9255 = vmul.f32 %v8999, %v9223
      %v9256 = vmul.f32 %v9000, %v9224
      %v9257 = vpack.c.bf16 %v9226, %v9225
      %v9258 = vpack.c.bf16 %v9228, %v9227
      %v9259 = vpack.c.bf16 %v9230, %v9229
      %v9260 = vpack.c.bf16 %v9232, %v9231
      %v9261 = vpack.c.bf16 %v9234, %v9233
      %v9262 = vpack.c.bf16 %v9236, %v9235
      %v9263 = vpack.c.bf16 %v9238, %v9237
      %v9264 = vpack.c.bf16 %v9240, %v9239
      %v9265 = vpack.c.bf16 %v9242, %v9241
      %v9266 = vpack.c.bf16 %v9244, %v9243
      %v9267 = vpack.c.bf16 %v9246, %v9245
      %v9268 = vpack.c.bf16 %v9248, %v9247
      %v9269 = vpack.c.bf16 %v9250, %v9249
      %v9270 = vpack.c.bf16 %v9252, %v9251
      %v9271 = vpack.c.bf16 %v9254, %v9253
      %v9272 = vpack.c.bf16 %v9256, %v9255
      %v9273 = vld [vmem:[%s531] sm:$0xf]
      %v9274 = vld [vmem:[%s531 + $0x4] sm:$0xf]
      %v9275 = vld [vmem:[%s531 + $0x8] sm:$0xf]
      %v9276 = vld [vmem:[%s531 + $0xc] sm:$0xf]
      %v9277 = vld [vmem:[%s531 + $0x10] sm:$0xf]
      %v9278 = vld [vmem:[%s531 + $0x14] sm:$0xf]
      %v9279 = vld [vmem:[%s531 + $0x18] sm:$0xf]
      %v9280 = vld [vmem:[%s531 + $0x1c] sm:$0xf]
      %v9281 = vlaneseq
      %v9282 = vshrl.u32 %v9281, 7
      %v9283 = vsub.s32 0, %v9282
      %v9284 = vrot.slane %v750, %v9283
      %v9293 = vunpack.c.l.b16 %v9273
      %v9294 = vunpack.c.l.b16 %v9274
      %v9295 = vunpack.c.l.b16 %v9275
      %v9296 = vunpack.c.l.b16 %v9276
      %v9297 = vunpack.c.l.b16 %v9277
      %v9298 = vunpack.c.l.b16 %v9278
      %v9299 = vunpack.c.l.b16 %v9279
      %v9300 = vunpack.c.l.b16 %v9280
      %v9301 = vpack.c.b16 %v9294, %v9293
      %v9302 = vpack.c.b16 %v9296, %v9295
      %v9303 = vpack.c.b16 %v9298, %v9297
      %v9304 = vpack.c.b16 %v9300, %v9299
      %v9310 = vsel %vm2792, %v9257, 0
      %v9313 = vsel %vm2792, %v9258, 0
      %v9316 = vsel %vm2792, %v9259, 0
      %v9319 = vsel %vm2792, %v9260, 0
      %v9322 = vsel %vm2792, %v9261, 0
      %v9325 = vsel %vm2792, %v9262, 0
      %v9328 = vsel %vm2792, %v9263, 0
      %v9331 = vsel %vm2792, %v9264, 0
      %v9334 = vsel %vm2792, %v9265, 0
      %v9337 = vsel %vm2792, %v9266, 0
      %v9340 = vsel %vm2792, %v9267, 0
      %v9343 = vsel %vm2792, %v9268, 0
      %v9346 = vsel %vm2792, %v9269, 0
      %v9349 = vsel %vm2792, %v9270, 0
      %v9352 = vsel %vm2792, %v9271, 0
      %v9355 = vsel %vm2792, %v9272, 0
      %9357 = vmatprep.subr.bf16.mxu0 0
      %9358 = vmatpush1.bf16.msra.mxu0 0
      %9359 = vmatprep.subr.bf16.mxu0 0
      %9360 = vmatpush1.bf16.msra.mxu0 0
      %9361 = vmatprep.subr.bf16.mxu0 0
      %9362 = vmatpush1.bf16.msra.mxu0 0
      %9363 = vmatprep.subr.bf16.mxu0 0
      %9364 = vmatpush1.bf16.msra.mxu0 0
      %9365 = vmatprep.subr.bf16.mxu0 0
      %9366 = vmatpush1.bf16.msra.mxu0 %v9304
      %9367 = vmatprep.subr.bf16.mxu0 0
      %9368 = vmatpush1.bf16.msra.mxu0 %v9303
      %9369 = vmatprep.subr.bf16.mxu0 0
      %9370 = vmatpush1.bf16.msra.mxu0 %v9302
      %9371 = vmatprep.subr.bf16.mxu0 0
      %9372 = vmatpush1.bf16.msra.mxu0 %v9301
      %9373 = vmatprep.subr.bf16.mxu0 0
      %9374 = vmatpush2.bf16.msra.mxu0 0
      %9375 = vmatprep.subr.bf16.mxu0 0
      %9376 = vmatpush2.bf16.msra.mxu0 0
      %9377 = vmatprep.subr.bf16.mxu0 0
      %9378 = vmatpush2.bf16.msra.mxu0 0
      %9379 = vmatprep.subr.bf16.mxu0 0
      %9380 = vmatpush2.bf16.msra.mxu0 0
      %9381 = vmatprep.subr.bf16.mxu0 0
      %9382 = vmatpush2.bf16.msra.mxu0 0
      %9383 = vmatprep.subr.bf16.mxu0 0
      %9384 = vmatpush2.bf16.msra.mxu0 0
      %9385 = vmatprep.subr.bf16.mxu0 0
      %9386 = vmatpush2.bf16.msra.mxu0 0
      %9387 = vmatprep.subr.bf16.mxu0 0
      %9388 = vmatpush2.bf16.msra.mxu0 0
      %9389 = vmatprep.mubr.bf16.mxu0 0
      %9390 = vmatmul.mubr.bf16.gmra.mxu0 %v9310
      %v9391 = vpop.f32.mrf.mxu0
      %v9392 = vadd.f32 %v9284, %v9391
      %v9393 = vpop.f32.mrf.mxu0
      %v9394 = vpop.f32.mrf.mxu0
      %v9395 = vadd.f32 %v9284, %v9394
      %v9396 = vpop.f32.mrf.mxu0
      %9397 = vmatprep.mubr.bf16.mxu0 0
      %9398 = vmatmul.mubr.bf16.gmra.mxu0 %v9313
      %v9399 = vpop.f32.mrf.mxu0
      %v9400 = vadd.f32 %v9284, %v9399
      %v9401 = vpop.f32.mrf.mxu0
      %v9402 = vpop.f32.mrf.mxu0
      %v9403 = vadd.f32 %v9284, %v9402
      %v9404 = vpop.f32.mrf.mxu0
      %9405 = vmatprep.mubr.bf16.mxu0 0
      %9406 = vmatmul.mubr.bf16.gmra.mxu0 %v9316
      %v9407 = vpop.f32.mrf.mxu0
      %v9408 = vadd.f32 %v9284, %v9407
      %v9409 = vpop.f32.mrf.mxu0
      %v9410 = vpop.f32.mrf.mxu0
      %v9411 = vadd.f32 %v9284, %v9410
      %v9412 = vpop.f32.mrf.mxu0
      %9413 = vmatprep.mubr.bf16.mxu0 0
      %9414 = vmatmul.mubr.bf16.gmra.mxu0 %v9319
      %v9415 = vpop.f32.mrf.mxu0
      %v9416 = vadd.f32 %v9284, %v9415
      %v9417 = vpop.f32.mrf.mxu0
      %v9418 = vpop.f32.mrf.mxu0
      %v9419 = vadd.f32 %v9284, %v9418
      %v9420 = vpop.f32.mrf.mxu0
      %9421 = vmatprep.mubr.bf16.mxu0 0
      %9422 = vmatmul.mubr.bf16.gmra.mxu0 %v9322
      %v9423 = vpop.f32.mrf.mxu0
      %v9424 = vadd.f32 %v9284, %v9423
      %v9425 = vpop.f32.mrf.mxu0
      %v9426 = vpop.f32.mrf.mxu0
      %v9427 = vadd.f32 %v9284, %v9426
      %v9428 = vpop.f32.mrf.mxu0
      %9429 = vmatprep.mubr.bf16.mxu0 0
      %9430 = vmatmul.mubr.bf16.gmra.mxu0 %v9325
      %v9431 = vpop.f32.mrf.mxu0
      %v9432 = vadd.f32 %v9284, %v9431
      %v9433 = vpop.f32.mrf.mxu0
      %v9434 = vpop.f32.mrf.mxu0
      %v9435 = vadd.f32 %v9284, %v9434
      %v9436 = vpop.f32.mrf.mxu0
      %9437 = vmatprep.mubr.bf16.mxu0 0
      %9438 = vmatmul.mubr.bf16.gmra.mxu0 %v9328
      %v9439 = vpop.f32.mrf.mxu0
      %v9440 = vadd.f32 %v9284, %v9439
      %v9441 = vpop.f32.mrf.mxu0
      %v9442 = vpop.f32.mrf.mxu0
      %v9443 = vadd.f32 %v9284, %v9442
      %v9444 = vpop.f32.mrf.mxu0
      %9445 = vmatprep.mubr.bf16.mxu0 0
      %9446 = vmatmul.mubr.bf16.gmra.mxu0 %v9331
      %v9447 = vpop.f32.mrf.mxu0
      %v9448 = vadd.f32 %v9284, %v9447
      %v9449 = vpop.f32.mrf.mxu0
      %v9450 = vpop.f32.mrf.mxu0
      %v9451 = vadd.f32 %v9284, %v9450
      %v9452 = vpop.f32.mrf.mxu0
      %9453 = vmatprep.mubr.bf16.mxu0 0
      %9454 = vmatmul.mubr.bf16.gmra.mxu0 %v9334
      %v9455 = vpop.f32.mrf.mxu0
      %v9456 = vadd.f32 %v9284, %v9455
      %v9457 = vpop.f32.mrf.mxu0
      %v9458 = vpop.f32.mrf.mxu0
      %v9459 = vadd.f32 %v9284, %v9458
      %v9460 = vpop.f32.mrf.mxu0
      %9461 = vmatprep.mubr.bf16.mxu0 0
      %9462 = vmatmul.mubr.bf16.gmra.mxu0 %v9337
      %v9463 = vpop.f32.mrf.mxu0
      %v9464 = vadd.f32 %v9284, %v9463
      %v9465 = vpop.f32.mrf.mxu0
      %v9466 = vpop.f32.mrf.mxu0
      %v9467 = vadd.f32 %v9284, %v9466
      %v9468 = vpop.f32.mrf.mxu0
      %9469 = vmatprep.mubr.bf16.mxu0 0
      %9470 = vmatmul.mubr.bf16.gmra.mxu0 %v9340
      %v9471 = vpop.f32.mrf.mxu0
      %v9472 = vadd.f32 %v9284, %v9471
      %v9473 = vpop.f32.mrf.mxu0
      %v9474 = vpop.f32.mrf.mxu0
      %v9475 = vadd.f32 %v9284, %v9474
      %v9476 = vpop.f32.mrf.mxu0
      %9477 = vmatprep.mubr.bf16.mxu0 0
      %9478 = vmatmul.mubr.bf16.gmra.mxu0 %v9343
      %v9479 = vpop.f32.mrf.mxu0
      %v9480 = vadd.f32 %v9284, %v9479
      %v9481 = vpop.f32.mrf.mxu0
      %v9482 = vpop.f32.mrf.mxu0
      %v9483 = vadd.f32 %v9284, %v9482
      %v9484 = vpop.f32.mrf.mxu0
      %9485 = vmatprep.mubr.bf16.mxu0 0
      %9486 = vmatmul.mubr.bf16.gmra.mxu0 %v9346
      %v9487 = vpop.f32.mrf.mxu0
      %v9488 = vadd.f32 %v9284, %v9487
      %v9489 = vpop.f32.mrf.mxu0
      %v9490 = vpop.f32.mrf.mxu0
      %v9491 = vadd.f32 %v9284, %v9490
      %v9492 = vpop.f32.mrf.mxu0
      %9493 = vmatprep.mubr.bf16.mxu0 0
      %9494 = vmatmul.mubr.bf16.gmra.mxu0 %v9349
      %v9495 = vpop.f32.mrf.mxu0
      %v9496 = vadd.f32 %v9284, %v9495
      %v9497 = vpop.f32.mrf.mxu0
      %v9498 = vpop.f32.mrf.mxu0
      %v9499 = vadd.f32 %v9284, %v9498
      %v9500 = vpop.f32.mrf.mxu0
      %9501 = vmatprep.mubr.bf16.mxu0 0
      %9502 = vmatmul.mubr.bf16.gmra.mxu0 %v9352
      %v9503 = vpop.f32.mrf.mxu0
      %v9504 = vadd.f32 %v9284, %v9503
      %v9505 = vpop.f32.mrf.mxu0
      %v9506 = vpop.f32.mrf.mxu0
      %v9507 = vadd.f32 %v9284, %v9506
      %v9508 = vpop.f32.mrf.mxu0
      %9509 = vmatprep.mubr.bf16.mxu0 0
      %9510 = vmatmul.mubr.bf16.gmra.mxu0 %v9355
      %v9511 = vpop.f32.mrf.mxu0
      %v9512 = vadd.f32 %v9284, %v9511
      %v9513 = vpop.f32.mrf.mxu0
      %v9514 = vpop.f32.mrf.mxu0
      %v9515 = vadd.f32 %v9284, %v9514
      %v9516 = vpop.f32.mrf.mxu0
      %9517 = vdwg.mxu0
      %v9518 = vadd.f32 %v8201, %v9392
      %v9519 = vadd.f32 %v8202, %v9395
      %v9520 = vadd.f32 %v8203, %v9400
      %v9521 = vadd.f32 %v8204, %v9403
      %v9522 = vadd.f32 %v8205, %v9408
      %v9523 = vadd.f32 %v8206, %v9411
      %v9524 = vadd.f32 %v8207, %v9416
      %v9525 = vadd.f32 %v8208, %v9419
      %v9526 = vadd.f32 %v8209, %v9424
      %v9527 = vadd.f32 %v8210, %v9427
      %v9528 = vadd.f32 %v8211, %v9432
      %v9529 = vadd.f32 %v8212, %v9435
      %v9530 = vadd.f32 %v8213, %v9440
      %v9531 = vadd.f32 %v8214, %v9443
      %v9532 = vadd.f32 %v8215, %v9448
      %v9533 = vadd.f32 %v8216, %v9451
      %v9534 = vadd.f32 %v8217, %v9456
      %v9535 = vadd.f32 %v8218, %v9459
      %v9536 = vadd.f32 %v8219, %v9464
      %v9537 = vadd.f32 %v8220, %v9467
      %v9538 = vadd.f32 %v8221, %v9472
      %v9539 = vadd.f32 %v8222, %v9475
      %v9540 = vadd.f32 %v8223, %v9480
      %v9541 = vadd.f32 %v8224, %v9483
      %v9542 = vadd.f32 %v8225, %v9488
      %v9543 = vadd.f32 %v8226, %v9491
      %v9544 = vadd.f32 %v8227, %v9496
      %v9545 = vadd.f32 %v8228, %v9499
      %v9546 = vadd.f32 %v8229, %v9504
      %v9547 = vadd.f32 %v8230, %v9507
      %v9548 = vadd.f32 %v8231, %v9512
      %v9549 = vadd.f32 %v8232, %v9515
      %9550 = vst.msk [vmem:[#allocation2] sm:$0xff] %vm783, %v9518
      %9551 = vst.msk [vmem:[#allocation2 + $0x8] sm:$0xff] %vm783, %v9519
      %9552 = vst.msk [vmem:[#allocation2 + $0x10] sm:$0xff] %vm783, %v9520
      %9553 = vst.msk [vmem:[#allocation2 + $0x18] sm:$0xff] %vm783, %v9521
      %9554 = vst.msk [vmem:[#allocation2 + $0x20] sm:$0xff] %vm783, %v9522
      %9555 = vst.msk [vmem:[#allocation2 + $0x28] sm:$0xff] %vm783, %v9523
      %9556 = vst.msk [vmem:[#allocation2 + $0x30] sm:$0xff] %vm783, %v9524
      %9557 = vst.msk [vmem:[#allocation2 + $0x38] sm:$0xff] %vm783, %v9525
      %9558 = vst.msk [vmem:[#allocation2 + $0x40] sm:$0xff] %vm783, %v9526
      %9559 = vst.msk [vmem:[#allocation2 + $0x48] sm:$0xff] %vm783, %v9527
      %9560 = vst.msk [vmem:[#allocation2 + $0x50] sm:$0xff] %vm783, %v9528
      %9561 = vst.msk [vmem:[#allocation2 + $0x58] sm:$0xff] %vm783, %v9529
      %9562 = vst.msk [vmem:[#allocation2 + $0x60] sm:$0xff] %vm783, %v9530
      %9563 = vst.msk [vmem:[#allocation2 + $0x68] sm:$0xff] %vm783, %v9531
      %9564 = vst.msk [vmem:[#allocation2 + $0x70] sm:$0xff] %vm783, %v9532
      %9565 = vst.msk [vmem:[#allocation2 + $0x78] sm:$0xff] %vm783, %v9533
      %9566 = vst.msk [vmem:[#allocation2 + $0x80] sm:$0xff] %vm783, %v9534
      %9567 = vst.msk [vmem:[#allocation2 + $0x88] sm:$0xff] %vm783, %v9535
      %9568 = vst.msk [vmem:[#allocation2 + $0x90] sm:$0xff] %vm783, %v9536
      %9569 = vst.msk [vmem:[#allocation2 + $0x98] sm:$0xff] %vm783, %v9537
      %9570 = vst.msk [vmem:[#allocation2 + $0xa0] sm:$0xff] %vm783, %v9538
      %9571 = vst.msk [vmem:[#allocation2 + $0xa8] sm:$0xff] %vm783, %v9539
      %9572 = vst.msk [vmem:[#allocation2 + $0xb0] sm:$0xff] %vm783, %v9540
      %9573 = vst.msk [vmem:[#allocation2 + $0xb8] sm:$0xff] %vm783, %v9541
      %9574 = vst.msk [vmem:[#allocation2 + $0xc0] sm:$0xff] %vm783, %v9542
      %9575 = vst.msk [vmem:[#allocation2 + $0xc8] sm:$0xff] %vm783, %v9543
      %9576 = vst.msk [vmem:[#allocation2 + $0xd0] sm:$0xff] %vm783, %v9544
      %9577 = vst.msk [vmem:[#allocation2 + $0xd8] sm:$0xff] %vm783, %v9545
      %9578 = vst.msk [vmem:[#allocation2 + $0xe0] sm:$0xff] %vm783, %v9546
      %9579 = vst.msk [vmem:[#allocation2 + $0xe8] sm:$0xff] %vm783, %v9547
      %9580 = vst.msk [vmem:[#allocation2 + $0xf0] sm:$0xff] %vm783, %v9548
      %9581 = vst.msk [vmem:[#allocation2 + $0xf8] sm:$0xff] %vm783, %v9549
      %p9582 = scmp.eq.s32.totalorder %s26, 1
      // Predicated region
      $region65: #{tpu_custom_call.1} parent=59 // pred_check
        %p9583 = pneg %p9582
      $region66: #{tpu_custom_call.1} parent=59 // pred_check_branch
        %9585 = sbr.rel (%p9583) target = $region68
      $region67: #{tpu_custom_call.1} parent=59 // pred_region
        %9586 = vst.msk [vmem:[%s549] sm:$0xff] %vm783, %v9518
        %9587 = vst.msk [vmem:[%s549 + $0x8] sm:$0xff] %vm783, %v9519
        %9588 = vst.msk [vmem:[%s549 + $0x10] sm:$0xff] %vm783, %v9520
        %9589 = vst.msk [vmem:[%s549 + $0x18] sm:$0xff] %vm783, %v9521
        %9590 = vst.msk [vmem:[%s549 + $0x20] sm:$0xff] %vm783, %v9522
        %9591 = vst.msk [vmem:[%s549 + $0x28] sm:$0xff] %vm783, %v9523
        %9592 = vst.msk [vmem:[%s549 + $0x30] sm:$0xff] %vm783, %v9524
        %9593 = vst.msk [vmem:[%s549 + $0x38] sm:$0xff] %vm783, %v9525
        %9594 = vst.msk [vmem:[%s549 + $0x40] sm:$0xff] %vm783, %v9526
        %9595 = vst.msk [vmem:[%s549 + $0x48] sm:$0xff] %vm783, %v9527
        %9596 = vst.msk [vmem:[%s549 + $0x50] sm:$0xff] %vm783, %v9528
        %9597 = vst.msk [vmem:[%s549 + $0x58] sm:$0xff] %vm783, %v9529
        %9598 = vst.msk [vmem:[%s549 + $0x60] sm:$0xff] %vm783, %v9530
        %9599 = vst.msk [vmem:[%s549 + $0x68] sm:$0xff] %vm783, %v9531
        %9600 = vst.msk [vmem:[%s549 + $0x70] sm:$0xff] %vm783, %v9532
        %9601 = vst.msk [vmem:[%s549 + $0x78] sm:$0xff] %vm783, %v9533
        %9602 = vst.msk [vmem:[%s549 + $0x80] sm:$0xff] %vm783, %v9534
        %9603 = vst.msk [vmem:[%s549 + $0x88] sm:$0xff] %vm783, %v9535
        %9604 = vst.msk [vmem:[%s549 + $0x90] sm:$0xff] %vm783, %v9536
        %9605 = vst.msk [vmem:[%s549 + $0x98] sm:$0xff] %vm783, %v9537
        %9606 = vst.msk [vmem:[%s549 + $0xa0] sm:$0xff] %vm783, %v9538
        %9607 = vst.msk [vmem:[%s549 + $0xa8] sm:$0xff] %vm783, %v9539
        %9608 = vst.msk [vmem:[%s549 + $0xb0] sm:$0xff] %vm783, %v9540
        %9609 = vst.msk [vmem:[%s549 + $0xb8] sm:$0xff] %vm783, %v9541
        %9610 = vst.msk [vmem:[%s549 + $0xc0] sm:$0xff] %vm783, %v9542
        %9611 = vst.msk [vmem:[%s549 + $0xc8] sm:$0xff] %vm783, %v9543
        %9612 = vst.msk [vmem:[%s549 + $0xd0] sm:$0xff] %vm783, %v9544
        %9613 = vst.msk [vmem:[%s549 + $0xd8] sm:$0xff] %vm783, %v9545
        %9614 = vst.msk [vmem:[%s549 + $0xe0] sm:$0xff] %vm783, %v9546
        %9615 = vst.msk [vmem:[%s549 + $0xe8] sm:$0xff] %vm783, %v9547
        %9616 = vst.msk [vmem:[%s549 + $0xf0] sm:$0xff] %vm783, %v9548
        %9617 = vst.msk [vmem:[%s549 + $0xf8] sm:$0xff] %vm783, %v9549
      $region68: #{tpu_custom_call.1} parent=59 // pred_fallthru
        _
      %s9618 = smul.u32 32, %s25
      %p9619 = scmp.lt.s32.totalorder %s9618, 63
      %s9620 = scalar_select %p9619, %s9618, 63
      %s9621 = smul.addr %s9620, 8
      %s9622 = scalar_lea.vmem %s10, %s9621
      // Predicated region
      $region69: #{tpu_custom_call.1} parent=59 // pred_check
        %p9623 = pneg %p311
      $region70: #{tpu_custom_call.1} parent=59 // pred_check_branch
        %9625 = sbr.rel (%p9623) target = $region72
      $region71: #{tpu_custom_call.1} parent=59 // pred_region
        %s9626 = smul.u32 32, %s25
      $region72: #{tpu_custom_call.1} parent=59 // pred_fallthru
        _
    $region60: #{tpu_custom_call.1} parent=5 // pred_fallthru
      _
    %p9627 = scmp.le.s32.totalorder 2, %s16
    // Predicated region
    $region73: #{tpu_custom_call.1} parent=5 // pred_check
      %p9628 = pneg %p9627
    $region74: #{tpu_custom_call.1} parent=5 // pred_check_branch
      %9630 = sbr.rel (%p9628) target = $region76
    $region75: #{tpu_custom_call.1} parent=5 // pred_region
      %s9631 = ssub.s32 %s16, 2
      // Predicated region
      $region77: #{tpu_custom_call.1} parent=75 // pred_check
        %p9632 = pneg %p317
      $region78: #{tpu_custom_call.1} parent=75 // pred_check_branch
        %9634 = sbr.rel (%p9632) target = $region80
      $region79: #{tpu_custom_call.1} parent=75 // pred_region
        %s9635 = smul.u32 32, %s27
        %p9636 = scmp.lt.s32.totalorder %s9635, 63
        %s9637 = scalar_select %p9636, %s9635, 63
        %s9638 = smul.addr %s9637, 8
        %s9639 = scalar_lea.vmem %s10, %s9638
      $region80: #{tpu_custom_call.1} parent=75 // pred_fallthru
        _
    $region76: #{tpu_custom_call.1} parent=5 // pred_fallthru
      _
  $region6: #{tpu_custom_call.1} parent=0 // loop_footer
    %s20 = sadd.s32 1, %s16
  $region7: #{tpu_custom_call.1} parent=0 // loop_footer_branch
    %15 = sbr.rel target = $region3
  $region8: #{tpu_custom_call.1} parent=0 // loop_exit
    _

</llo_original>
